<compile_context>
chip_gen: v5e
topology: v5e:2x2
jax: 0.10.0
libtpu: 0.0.40
codegen_flags: <defaults>
</compile_context>

<pallas_src>
import functools
from collections import OrderedDict

import jax
import jax.numpy as jnp
from jax.experimental import pallas as pl
from jax.experimental.pallas import tpu as pltpu


_COMPILER_PARAMS = pltpu.CompilerParams(
    dimension_semantics=("parallel",),      # batch axis -> megacore / 2nd TC on v7x
    vmem_limit_bytes=32 * 1024 * 1024,      # explicit scoped-VMEM budget
)


# ----------------------------- Pallas kernels ------------------------------

def _conv_kernel(x_ref, w_ref, b_ref, o_ref, *, kh, kw, oh, ow, relu):
    """Fused direct conv (stem): o = relu((sum over taps of x_tap @ w_tap) + bias).

    x_ref: (1, Hp, Wp, Cin)   bf16 padded image (space-to-depth'ed if stride 2)
    w_ref: (kh*kw, Cin, Cout) bf16 weights (BN scale folded in)
    b_ref: (1, Cout)          f32 folded BN bias
    o_ref: (1, oh*ow, Cout)   bf16
    """
    cin = x_ref.shape[-1]
    cout = o_ref.shape[-1]
    acc = jnp.zeros((oh * ow, cout), jnp.float32)
    # Taps unrolled (<= 16 after space-to-depth); each tap is a unit-stride slice
    # of the VMEM-resident block feeding one MXU matmul with f32 accumulation.
    for i in range(kh):
        for j in range(kw):
            xs = x_ref[0, i:i + oh, j:j + ow, :]
            acc += jnp.dot(xs.reshape(oh * ow, cin), w_ref[i * kw + j],
                           preferred_element_type=jnp.float32)
    y = acc + b_ref[...]
    if relu:
        y = jnp.maximum(y, 0.0)
    o_ref[0] = y.astype(o_ref.dtype)


def _block_kernel(*refs, kh1, kw1, oh, ow, res_i0, res_j0, res_c0, res_cin, has_down):
    """Fused ResNet BasicBlock: conv1(3x3)+BN+ReLU -> conv2(3x3)+BN -> +shortcut -> ReLU.

    refs (has_down=False): x, w1, b1, w2, b2, o, ypad_scratch
    refs (has_down=True) : x, w1, b1, w2, b2, wd, bd, o, ypad_scratch
    x   : (1, Hp, Wp, Cin)    bf16, zero-padded (and s2d'ed when stride 2)
    w1  : (kh1*kw1, Cin, Cout) bf16 ; w2 : (9, Cout, Cout) bf16 ; wd : (1, res_cin, Cout) bf16
    b*  : (1, Cout) f32
    o   : (1, oh*ow, Cout) bf16
    ypad: (oh+2, ow+2, Cout) bf16 VMEM halo scratch (conv1 output, zero border)
    """
    if has_down:
        (x_ref, w1_ref, b1_ref, w2_ref, b2_ref,
         wd_ref, bd_ref, o_ref, ypad_ref) = refs
    else:
        x_ref, w1_ref, b1_ref, w2_ref, b2_ref, o_ref, ypad_ref = refs
    cin = x_ref.shape[-1]
    cout = o_ref.shape[-1]
    m = oh * ow

    # ---- conv1 + folded-BN bias + ReLU -> zero-padded VMEM halo scratch ----
    acc = jnp.zeros((m, cout), jnp.float32)
    for i in range(kh1):
        for j in range(kw1):
            xs = x_ref[0, i:i + oh, j:j + ow, :]
            acc += jnp.dot(xs.reshape(m, cin), w1_ref[i * kw1 + j],
                           preferred_element_type=jnp.float32)
    y = jnp.maximum(acc + b1_ref[...], 0.0)
    ypad_ref[...] = jnp.zeros_like(ypad_ref)
    ypad_ref[1:1 + oh, 1:1 + ow, :] = y.reshape(oh, ow, cout).astype(ypad_ref.dtype)

    # ---- shortcut from the already-resident input block ----
    xr = x_ref[0, res_i0:res_i0 + oh, res_j0:res_j0 + ow,
               res_c0:res_c0 + res_cin].reshape(m, res_cin)
    if has_down:
        res = jnp.dot(xr, wd_ref[0], preferred_element_type=jnp.float32) + bd_ref[...]
    else:
        res = xr.astype(jnp.float32)

    # ---- conv2 (3x3, pad 1, stride 1) + folded-BN bias + shortcut + ReLU ----
    acc2 = jnp.zeros((m, cout), jnp.float32)
    for i in range(3):
        for j in range(3):
            ys = ypad_ref[i:i + oh, j:j + ow, :]
            acc2 += jnp.dot(ys.reshape(m, cout), w2_ref[i * 3 + j],
                            preferred_element_type=jnp.float32)
    out = jnp.maximum(acc2 + b2_ref[...] + res, 0.0)
    o_ref[0] = out.astype(o_ref.dtype)


def _maxpool_kernel(z_ref, o_ref, *, oh, ow):
    """3x3 / stride-2 max pool on a space-to-depth (grouped) input.

    z_ref: (1, 4, U, V, C) bf16 with z[:, 2p+q, u, v] = x_pad[2u+p, 2v+q]
    o_ref: (1, oh, ow, C)
    """
    taps = ((0, 0), (0, 1), (1, 0))       # (s2d offset a, phase p): 2a+p in {0,1,2}
    out = None
    for a, p in taps:
        for c, q in taps:
            s = z_ref[0, 2 * p + q, a:a + oh, c:c + ow, :]
            out = s if out is None else jnp.maximum(out, s)
    o_ref[0] = out


# ------------------------- JAX glue (layout only) ---------------------------

def _space_to_depth(x, pad_value=0.0):
    """(B, H, W, C) -> (B, ceil(H/2), ceil(W/2), 4C); channel (2p+q)*C+c = x[2u+p, 2v+q, c]."""
    B, H, W, C = x.shape
    ph, pw = H % 2, W % 2
    if ph or pw:
        x = jnp.pad(x, ((0, 0), (0, ph), (0, pw), (0, 0)), constant_values=pad_value)
        H, W = H + ph, W + pw
    z = x.reshape(B, H // 2, 2, W // 2, 2, C).transpose(0, 1, 3, 2, 4, 5)
    return z.reshape(B, H // 2, W // 2, 4 * C)


def _space_to_depth_grouped(x, pad_value):
    """(B, H, W, C) -> (B, 4, ceil(H/2), ceil(W/2), C); group g = 2p+q."""
    B, H, W, C = x.shape
    ph, pw = H % 2, W % 2
    if ph or pw:
        x = jnp.pad(x, ((0, 0), (0, ph), (0, pw), (0, 0)), constant_values=pad_value)
        H, W = H + ph, W + pw
    z = x.reshape(B, H // 2, 2, W // 2, 2, C).transpose(0, 2, 4, 1, 3, 5)
    return z.reshape(B, 4, H // 2, W // 2, C)


def _weight_to_s2d(w):
    """Stride-2 (kh, kw, Cin, Cout) weight -> stride-1 weight on the s2d input:
    (ceil(kh/2), ceil(kw/2), 4*Cin, Cout), zero-filled where 2a+p >= kh / 2c+q >= kw."""
    kh, kw, cin, cout = w.shape
    ph, pw = kh % 2, kw % 2
    w = jnp.pad(w, ((0, ph), (0, pw), (0, 0), (0, 0)))
    a, c = (kh + ph) // 2, (kw + pw) // 2
    w = w.reshape(a, 2, c, 2, cin, cout).transpose(0, 2, 1, 3, 4, 5)
    return w.reshape(a, c, 4 * cin, cout)


def conv2d_bn_act(x, w, bias, *, stride=1, pad=0, relu=True):
    """NHWC conv + folded-BN bias (+ ReLU) as ONE pallas_call (used for the stem)."""
    kh, kw, _, cout = w.shape
    B, H, W, _ = x.shape
    oh = (H + 2 * pad - kh) // stride + 1
    ow = (W + 2 * pad - kw) // stride + 1

    if pad:
        x = jnp.pad(x, ((0, 0), (pad, pad), (pad, pad), (0, 0)))
    if stride == 2:
        x = _space_to_depth(x)              # stride handled as s2d -> stride-1 taps
        w = _weight_to_s2d(w)
        kh, kw = w.shape[0], w.shape[1]
    elif stride != 1:
        raise NotImplementedError("only stride 1 or 2 (ResNet) supported")

    B, Hp, Wp, cin = x.shape
    w_flat = w.reshape(kh * kw, cin, cout)

    kernel = functools.partial(_conv_kernel, kh=kh, kw=kw, oh=oh, ow=ow, relu=relu)
    out = pl.pallas_call(
        kernel,
        grid=(B,),
        in_specs=[
            pl.BlockSpec((1, Hp, Wp, cin), lambda b: (b, 0, 0, 0)),
            pl.BlockSpec((kh * kw, cin, cout), lambda b: (0, 0, 0)),
            pl.BlockSpec((1, cout), lambda b: (0, 0)),
        ],
        out_specs=pl.BlockSpec((1, oh * ow, cout), lambda b: (b, 0, 0)),
        out_shape=jax.ShapeDtypeStruct((B, oh * ow, cout), jnp.bfloat16),
        compiler_params=_COMPILER_PARAMS,
    )(x, w_flat, bias)
    return out.reshape(B, oh, ow, cout)


def maxpool_3x3_s2(x):
    """3x3 / stride-2 / pad-1 max pool (ResNet stem); no HBM patch materialization."""
    B, H, W, C = x.shape
    oh = (H + 2 - 3) // 2 + 1
    ow = (W + 2 - 3) // 2 + 1
    xp = jnp.pad(x, ((0, 0), (1, 1), (1, 1), (0, 0)), constant_values=-jnp.inf)
    z = _space_to_depth_grouped(xp, pad_value=-jnp.inf)
    _, _, U, V, _ = z.shape
    kernel = functools.partial(_maxpool_kernel, oh=oh, ow=ow)
    return pl.pallas_call(
        kernel,
        grid=(B,),
        in_specs=[pl.BlockSpec((1, 4, U, V, C), lambda b: (b, 0, 0, 0, 0))],
        out_specs=pl.BlockSpec((1, oh, ow, C), lambda b: (b, 0, 0, 0)),
        out_shape=jax.ShapeDtypeStruct((B, oh, ow, C), jnp.bfloat16),
        compiler_params=_COMPILER_PARAMS,
    )(z)


def basic_block(x, p, stride):
    """ResNet BasicBlock as ONE fused pallas_call (conv1+ReLU+conv2+shortcut+ReLU)."""
    B, H, W, cin0 = x.shape
    w1, b1 = p['conv1_w'], p['bn1_b']
    w2, b2 = p['conv2_w'], p['bn2_b']
    has_down = 'down_w' in p
    cout = w1.shape[-1]
    oh = (H + 2 - 3) // stride + 1
    ow = (W + 2 - 3) // stride + 1

    xp = jnp.pad(x, ((0, 0), (1, 1), (1, 1), (0, 0)))
    if stride == 2:
        xp = _space_to_depth(xp)
        w1 = _weight_to_s2d(w1)
        # identity sample x[2u, 2v] = x_pad[2u+1, 2v+1] = s2d group 3 of the block
        res_i0, res_j0, res_c0 = 0, 0, 3 * cin0
    elif stride == 1:
        res_i0, res_j0, res_c0 = 1, 1, 0
    else:
        raise NotImplementedError("only stride 1 or 2 (ResNet) supported")

    kh1, kw1 = w1.shape[0], w1.shape[1]
    B, Hp, Wp, cin = xp.shape
    w1_flat = w1.reshape(kh1 * kw1, cin, cout)
    w2_flat = w2.reshape(9, cout, cout)

    args = [xp, w1_flat, b1, w2_flat, b2]
    in_specs = [
        pl.BlockSpec((1, Hp, Wp, cin), lambda b: (b, 0, 0, 0)),
        pl.BlockSpec((kh1 * kw1, cin, cout), lambda b: (0, 0, 0)),
        pl.BlockSpec((1, cout), lambda b: (0, 0)),
        pl.BlockSpec((9, cout, cout), lambda b: (0, 0, 0)),
        pl.BlockSpec((1, cout), lambda b: (0, 0)),
    ]
    res_cin = cin0 if has_down else cout
    if has_down:
        args += [p['down_w'].reshape(1, cin0, cout), p['dbn_b']]
        in_specs += [pl.BlockSpec((1, cin0, cout), lambda b: (0, 0, 0)),
                     pl.BlockSpec((1, cout), lambda b: (0, 0))]

    kernel = functools.partial(
        _block_kernel, kh1=kh1, kw1=kw1, oh=oh, ow=ow,
        res_i0=res_i0, res_j0=res_j0, res_c0=res_c0,
        res_cin=res_cin, has_down=has_down)

    out = pl.pallas_call(
        kernel,
        grid=(B,),
        in_specs=in_specs,
        out_specs=pl.BlockSpec((1, oh * ow, cout), lambda b: (b, 0, 0)),
        out_shape=jax.ShapeDtypeStruct((B, oh * ow, cout), jnp.bfloat16),
        scratch_shapes=[pltpu.VMEM((oh + 2, ow + 2, cout), jnp.bfloat16)],
        compiler_params=_COMPILER_PARAMS,
    )(*args)
    return out.reshape(B, oh, ow, cout)


# ------------------------------- Parameters ---------------------------------

def init_params(key, in_channels=4, multi_scale=2):
    """Deterministic synthetic parameters with inference-time folding applied:
       * eval-mode BN -> per-channel (scale, bias); scale folded into the conv weight
       * 1x1 adjustment conv (in_channels -> 3) folded into the 7x7 stem weights
       * conv weights cast to bf16 for the MXU, biases kept f32."""
    keys = jax.random.split(key, 64)
    ki = iter(keys)

    def conv_w(kh, kw, cin, cout):
        fan_in = kh * kw * cin
        return (jax.random.normal(next(ki), (kh, kw, cin, cout), jnp.float32)
                * (2.0 / fan_in) ** 0.5)

    def bn(c):
        s = 1.0 + 0.1 * jax.random.normal(next(ki), (1, c), jnp.float32)
        b = 0.1 * jax.random.normal(next(ki), (1, c), jnp.float32)
        return s, b

    def fold(w, s):
        return (w * s[0]).astype(jnp.bfloat16)   # per-output-channel BN scale into w

    params = {}
    # adjustment layer (active iff in_channels != 3) folded into the stem conv.
    adjust_w = conv_w(1, 1, in_channels, 3) if in_channels != 3 else None
    stem_w = conv_w(7, 7, 3, 64)
    stem_s, stem_b = bn(64)
    if adjust_w is not None:
        stem_w = jnp.einsum('cd,hwde->hwce', adjust_w[0, 0], stem_w)   # (7,7,Cin,64)
    params['stem_w'] = fold(stem_w, stem_s)
    params['stem_b'] = stem_b

    widths = [64, 128, 256, 512]
    cin = 64
    for li in range(multi_scale):
        cout = widths[li]
        blocks = []
        for bi in range(2):
            stride = 2 if (li > 0 and bi == 0) else 1
            p = {}
            s1, b1 = bn(cout)
            p['conv1_w'] = fold(conv_w(3, 3, cin, cout), s1)
            p['bn1_b'] = b1
            s2, b2 = bn(cout)
            p['conv2_w'] = fold(conv_w(3, 3, cout, cout), s2)
            p['bn2_b'] = b2
            if stride != 1 or cin != cout:
                sd, bd = bn(cout)
                p['down_w'] = fold(conv_w(1, 1, cin, cout), sd)
                p['dbn_b'] = bd
            blocks.append(p)
            cin = cout
        params[f'layer{li + 1}'] = blocks
    return params


# -------------------------------- Forward -----------------------------------

def backbone_base_forward(batch, params, multi_scale=2, channel_last=True):
    """Mirror of BackboneBase.forward: OrderedDict {'1': layer1_out, '2': layer2_out, ...}.

    Outputs are channel-last (B, H, W, C) f32 when channel_last=True, else NCHW f32.
    """
    x = batch
    if not channel_last:
        x = jnp.moveaxis(x, 1, -1)     # kernels run NHWC internally
    x = x.astype(jnp.bfloat16)

    # adjustment layer is folded into the stem weights (see init_params); stem + pool.
    x = conv2d_bn_act(x, params['stem_w'], params['stem_b'], stride=2, pad=3, relu=True)
    x = maxpool_3x3_s2(x)

    # IntermediateLayerGetter over layer1..layer{multi_scale}
    out = OrderedDict()
    for li in range(1, multi_scale + 1):
        for bi, bp in enumerate(params[f'layer{li}']):
            stride = 2 if (li > 1 and bi == 0) else 1
            x = basic_block(x, bp, stride=stride)
        out[str(li)] = x.astype(jnp.float32)   # returned maps in f32 (PyTorch dtype)

    if not channel_last:
        out = OrderedDict((k, jnp.moveaxis(v, -1, 1)) for k, v in out.items())
    return out


if __name__ == "__main__":
    key = jax.random.PRNGKey(0)
    kx, kp = jax.random.split(key)

    # channel-last input (B, H, W, C) with in_channels != 3 -> adjustment conv active
    B, H, W, Cin = 2, 16, 16, 4
    x = jax.random.normal(kx, (B, H, W, Cin), jnp.float32)

    params = init_params(kp, in_channels=Cin, multi_scale=2)
    fwd = jax.jit(functools.partial(backbone_base_forward,
                                    multi_scale=2, channel_last=True))
    out = fwd(x, params)
    out = jax.block_until_ready(out)

    assert list(out.keys()) == ['1', '2']
    assert out['1'].shape == (B, 4, 4, 64)
    assert out['2'].shape == (B, 2, 2, 128)
    assert all(v.dtype == jnp.float32 for v in out.values())
    assert all(bool(jnp.all(jnp.isfinite(v))) for v in out.values())
    print("KERNEL_OK")
</pallas_src>

<mosaic_0001>
module attributes {stable_mosaic.version = 11 : i64} {
  func.func @_maxpool_kernel(%arg0: i32, %arg1: memref<1x4x5x5x64xbf16, #tpu.memory_space<vmem>>, %arg2: memref<1x4x4x64xbf16, #tpu.memory_space<vmem>>) attributes {dimension_semantics = [#tpu.dimension_semantics<parallel>], iteration_bounds = array<i64: 2>, scalar_prefetch = 0 : i64, scratch_operands = 0 : i64, tpu.core_type = #tpu.core_type<tc>, window_params = [{transform_indices = @transform_0, window_bounds = array<i64: 1, 4, 5, 5, 64>}, {transform_indices = @transform_1, window_bounds = array<i64: 1, 4, 4, 64>}]} {
    %c0 = arith.constant 0 : index
    %c0_0 = arith.constant 0 : index
    %c0_1 = arith.constant 0 : index
    %c0_2 = arith.constant 0 : index
    %c0_3 = arith.constant 0 : index
    %0 = vector.load %arg1[%c0, %c0_0, %c0_1, %c0_2, %c0_3] : memref<1x4x5x5x64xbf16, #tpu.memory_space<vmem>>, vector<1x1x4x4x64xbf16>
    %1 = vector.shape_cast %0 : vector<1x1x4x4x64xbf16> to vector<4x4x64xbf16>
    %c0_4 = arith.constant 0 : index
    %c1 = arith.constant 1 : index
    %c0_5 = arith.constant 0 : index
    %c0_6 = arith.constant 0 : index
    %c0_7 = arith.constant 0 : index
    %2 = vector.load %arg1[%c0_4, %c1, %c0_5, %c0_6, %c0_7] : memref<1x4x5x5x64xbf16, #tpu.memory_space<vmem>>, vector<1x1x4x4x64xbf16>
    %3 = vector.shape_cast %2 : vector<1x1x4x4x64xbf16> to vector<4x4x64xbf16>
    %4 = arith.maximumf %1, %3 : vector<4x4x64xbf16>
    %c0_8 = arith.constant 0 : index
    %c0_9 = arith.constant 0 : index
    %c0_10 = arith.constant 0 : index
    %c1_11 = arith.constant 1 : index
    %c0_12 = arith.constant 0 : index
    %5 = vector.load %arg1[%c0_8, %c0_9, %c0_10, %c1_11, %c0_12] : memref<1x4x5x5x64xbf16, #tpu.memory_space<vmem>>, vector<1x1x4x4x64xbf16>
    %6 = vector.shape_cast %5 : vector<1x1x4x4x64xbf16> to vector<4x4x64xbf16>
    %7 = arith.maximumf %4, %6 : vector<4x4x64xbf16>
    %c0_13 = arith.constant 0 : index
    %c2 = arith.constant 2 : index
    %c0_14 = arith.constant 0 : index
    %c0_15 = arith.constant 0 : index
    %c0_16 = arith.constant 0 : index
    %8 = vector.load %arg1[%c0_13, %c2, %c0_14, %c0_15, %c0_16] : memref<1x4x5x5x64xbf16, #tpu.memory_space<vmem>>, vector<1x1x4x4x64xbf16>
    %9 = vector.shape_cast %8 : vector<1x1x4x4x64xbf16> to vector<4x4x64xbf16>
    %10 = arith.maximumf %7, %9 : vector<4x4x64xbf16>
    %c0_17 = arith.constant 0 : index
    %c3 = arith.constant 3 : index
    %c0_18 = arith.constant 0 : index
    %c0_19 = arith.constant 0 : index
    %c0_20 = arith.constant 0 : index
    %11 = vector.load %arg1[%c0_17, %c3, %c0_18, %c0_19, %c0_20] : memref<1x4x5x5x64xbf16, #tpu.memory_space<vmem>>, vector<1x1x4x4x64xbf16>
    %12 = vector.shape_cast %11 : vector<1x1x4x4x64xbf16> to vector<4x4x64xbf16>
    %13 = arith.maximumf %10, %12 : vector<4x4x64xbf16>
    %c0_21 = arith.constant 0 : index
    %c2_22 = arith.constant 2 : index
    %c0_23 = arith.constant 0 : index
    %c1_24 = arith.constant 1 : index
    %c0_25 = arith.constant 0 : index
    %14 = vector.load %arg1[%c0_21, %c2_22, %c0_23, %c1_24, %c0_25] : memref<1x4x5x5x64xbf16, #tpu.memory_space<vmem>>, vector<1x1x4x4x64xbf16>
    %15 = vector.shape_cast %14 : vector<1x1x4x4x64xbf16> to vector<4x4x64xbf16>
    %16 = arith.maximumf %13, %15 : vector<4x4x64xbf16>
    %c0_26 = arith.constant 0 : index
    %c0_27 = arith.constant 0 : index
    %c1_28 = arith.constant 1 : index
    %c0_29 = arith.constant 0 : index
    %c0_30 = arith.constant 0 : index
    %17 = vector.load %arg1[%c0_26, %c0_27, %c1_28, %c0_29, %c0_30] : memref<1x4x5x5x64xbf16, #tpu.memory_space<vmem>>, vector<1x1x4x4x64xbf16>
    %18 = vector.shape_cast %17 : vector<1x1x4x4x64xbf16> to vector<4x4x64xbf16>
    %19 = arith.maximumf %16, %18 : vector<4x4x64xbf16>
    %c0_31 = arith.constant 0 : index
    %c1_32 = arith.constant 1 : index
    %c1_33 = arith.constant 1 : index
    %c0_34 = arith.constant 0 : index
    %c0_35 = arith.constant 0 : index
    %20 = vector.load %arg1[%c0_31, %c1_32, %c1_33, %c0_34, %c0_35] : memref<1x4x5x5x64xbf16, #tpu.memory_space<vmem>>, vector<1x1x4x4x64xbf16>
    %21 = vector.shape_cast %20 : vector<1x1x4x4x64xbf16> to vector<4x4x64xbf16>
    %22 = arith.maximumf %19, %21 : vector<4x4x64xbf16>
    %c0_36 = arith.constant 0 : index
    %c0_37 = arith.constant 0 : index
    %c1_38 = arith.constant 1 : index
    %c1_39 = arith.constant 1 : index
    %c0_40 = arith.constant 0 : index
    %23 = vector.load %arg1[%c0_36, %c0_37, %c1_38, %c1_39, %c0_40] : memref<1x4x5x5x64xbf16, #tpu.memory_space<vmem>>, vector<1x1x4x4x64xbf16>
    %24 = vector.shape_cast %23 : vector<1x1x4x4x64xbf16> to vector<4x4x64xbf16>
    %25 = arith.maximumf %22, %24 : vector<4x4x64xbf16>
    %c0_41 = arith.constant 0 : index
    %c0_42 = arith.constant 0 : index
    %c0_43 = arith.constant 0 : index
    %c0_44 = arith.constant 0 : index
    %26 = vector.load %arg2[%c0_41, %c0_42, %c0_43, %c0_44] : memref<1x4x4x64xbf16, #tpu.memory_space<vmem>>, vector<1x4x4x64xbf16>
    %27 = vector.shape_cast %26 : vector<1x4x4x64xbf16> to vector<4x4x64xbf16>
    %28 = vector.shape_cast %25 : vector<4x4x64xbf16> to vector<1x4x4x64xbf16>
    tpu.vector_store %arg2[%c0_41, %c0_42, %c0_43, %c0_44], %28 {strides = array<i32>} : memref<1x4x4x64xbf16, #tpu.memory_space<vmem>>, vector<1x4x4x64xbf16>,
    return
  }
  func.func @transform_0(%arg0: i32) -> (i32, i32, i32, i32, i32) {
    %c0_i32 = arith.constant 0 : i32
    %c0_i32_0 = arith.constant 0 : i32
    %c0_i32_1 = arith.constant 0 : i32
    %c0_i32_2 = arith.constant 0 : i32
    %c0_i32_3 = arith.constant 0 : i32
    return %arg0, %c0_i32, %c0_i32_0, %c0_i32_1, %c0_i32_2 : i32, i32, i32, i32, i32
  }
  func.func @transform_1(%arg0: i32) -> (i32, i32, i32, i32) {
    %c0_i32 = arith.constant 0 : i32
    %c0_i32_0 = arith.constant 0 : i32
    %c0_i32_1 = arith.constant 0 : i32
    %c0_i32_2 = arith.constant 0 : i32
    return %arg0, %c0_i32, %c0_i32_0, %c0_i32_1 : i32, i32, i32, i32
  }
}

module attributes {stable_mosaic.version = 11 : i64} {
  func.func @_conv_kernel(%arg0: i32, %arg1: memref<1x11x11x16xbf16, #tpu.memory_space<vmem>>, %arg2: memref<16x16x64xbf16, #tpu.memory_space<vmem>>, %arg3: memref<1x64xf32, #tpu.memory_space<vmem>>, %arg4: memref<1x64x64xbf16, #tpu.memory_space<vmem>>) attributes {dimension_semantics = [#tpu.dimension_semantics<parallel>], iteration_bounds = array<i64: 2>, scalar_prefetch = 0 : i64, scratch_operands = 0 : i64, tpu.core_type = #tpu.core_type<tc>, window_params = [{transform_indices = @transform_0, window_bounds = array<i64: 1, 11, 11, 16>}, {pipeline_mode = #tpu.pipeline_mode<synchronous>, transform_indices = @transform_1, window_bounds = array<i64: 16, 16, 64>}, {pipeline_mode = #tpu.pipeline_mode<synchronous>, transform_indices = @transform_2, window_bounds = array<i64: 1, 64>}, {transform_indices = @transform_3, window_bounds = array<i64: 1, 64, 64>}]} {
    %cst = arith.constant 0.000000e+00 : f32
    %0 = vector.broadcast %cst : f32 to vector<64x64xf32>
    %c0 = arith.constant 0 : index
    %c0_0 = arith.constant 0 : index
    %c0_1 = arith.constant 0 : index
    %c0_2 = arith.constant 0 : index
    %1 = vector.load %arg1[%c0, %c0_0, %c0_1, %c0_2] : memref<1x11x11x16xbf16, #tpu.memory_space<vmem>>, vector<1x8x8x16xbf16>
    %2 = vector.shape_cast %1 : vector<1x8x8x16xbf16> to vector<8x8x16xbf16>
    %3 = vector.shape_cast %2 : vector<8x8x16xbf16> to vector<64x16xbf16>
    %c0_3 = arith.constant 0 : index
    %c0_4 = arith.constant 0 : index
    %c0_5 = arith.constant 0 : index
    %4 = vector.load %arg2[%c0_3, %c0_4, %c0_5] : memref<16x16x64xbf16, #tpu.memory_space<vmem>>, vector<1x16x64xbf16>
    %5 = vector.shape_cast %4 : vector<1x16x64xbf16> to vector<16x64xbf16>
    %cst_6 = arith.constant dense<0.000000e+00> : vector<64x64xf32>
    %6 = tpu.matmul %3, %5, %cst_6 {dimension_numbers = #tpu.dot_dimension_numbers<[1], [0], [0], [1], [0, 0, 1, 1], [], []>} : vector<64x16xbf16>, vector<16x64xbf16>, vector<64x64xf32> -> vector<64x64xf32>
    %7 = arith.addf %0, %6 : vector<64x64xf32>
    %c0_7 = arith.constant 0 : index
    %c0_8 = arith.constant 0 : index
    %c1 = arith.constant 1 : index
    %c0_9 = arith.constant 0 : index
    %8 = vector.load %arg1[%c0_7, %c0_8, %c1, %c0_9] : memref<1x11x11x16xbf16, #tpu.memory_space<vmem>>, vector<1x8x8x16xbf16>
    %9 = vector.shape_cast %8 : vector<1x8x8x16xbf16> to vector<8x8x16xbf16>
    %10 = vector.shape_cast %9 : vector<8x8x16xbf16> to vector<64x16xbf16>
    %c1_10 = arith.constant 1 : index
    %c0_11 = arith.constant 0 : index
    %c0_12 = arith.constant 0 : index
    %11 = vector.load %arg2[%c1_10, %c0_11, %c0_12] : memref<16x16x64xbf16, #tpu.memory_space<vmem>>, vector<1x16x64xbf16>
    %12 = vector.shape_cast %11 : vector<1x16x64xbf16> to vector<16x64xbf16>
    %cst_13 = arith.constant dense<0.000000e+00> : vector<64x64xf32>
    %13 = tpu.matmul %10, %12, %cst_13 {dimension_numbers = #tpu.dot_dimension_numbers<[1], [0], [0], [1], [0, 0, 1, 1], [], []>} : vector<64x16xbf16>, vector<16x64xbf16>, vector<64x64xf32> -> vector<64x64xf32>
    %14 = arith.addf %7, %13 : vector<64x64xf32>
    %c0_14 = arith.constant 0 : index
    %c0_15 = arith.constant 0 : index
    %c2 = arith.constant 2 : index
    %c0_16 = arith.constant 0 : index
    %15 = vector.load %arg1[%c0_14, %c0_15, %c2, %c0_16] : memref<1x11x11x16xbf16, #tpu.memory_space<vmem>>, vector<1x8x8x16xbf16>
    %16 = vector.shape_cast %15 : vector<1x8x8x16xbf16> to vector<8x8x16xbf16>
    %17 = vector.shape_cast %16 : vector<8x8x16xbf16> to vector<64x16xbf16>
    %c2_17 = arith.constant 2 : index
    %c0_18 = arith.constant 0 : index
    %c0_19 = arith.constant 0 : index
    %18 = vector.load %arg2[%c2_17, %c0_18, %c0_19] : memref<16x16x64xbf16, #tpu.memory_space<vmem>>, vector<1x16x64xbf16>
    %19 = vector.shape_cast %18 : vector<1x16x64xbf16> to vector<16x64xbf16>
    %cst_20 = arith.constant dense<0.000000e+00> : vector<64x64xf32>
    %20 = tpu.matmul %17, %19, %cst_20 {dimension_numbers = #tpu.dot_dimension_numbers<[1], [0], [0], [1], [0, 0, 1, 1], [], []>} : vector<64x16xbf16>, vector<16x64xbf16>, vector<64x64xf32> -> vector<64x64xf32>
    %21 = arith.addf %14, %20 : vector<64x64xf32>
    %c0_21 = arith.constant 0 : index
    %c0_22 = arith.constant 0 : index
    %c3 = arith.constant 3 : index
    %c0_23 = arith.constant 0 : index
    %22 = vector.load %arg1[%c0_21, %c0_22, %c3, %c0_23] : memref<1x11x11x16xbf16, #tpu.memory_space<vmem>>, vector<1x8x8x16xbf16>
    %23 = vector.shape_cast %22 : vector<1x8x8x16xbf16> to vector<8x8x16xbf16>
    %24 = vector.shape_cast %23 : vector<8x8x16xbf16> to vector<64x16xbf16>
    %c3_24 = arith.constant 3 : index
    %c0_25 = arith.constant 0 : index
    %c0_26 = arith.constant 0 : index
    %25 = vector.load %arg2[%c3_24, %c0_25, %c0_26] : memref<16x16x64xbf16, #tpu.memory_space<vmem>>, vector<1x16x64xbf16>
    %26 = vector.shape_cast %25 : vector<1x16x64xbf16> to vector<16x64xbf16>
    %cst_27 = arith.constant dense<0.000000e+00> : vector<64x64xf32>
    %27 = tpu.matmul %24, %26, %cst_27 {dimension_numbers = #tpu.dot_dimension_numbers<[1], [0], [0], [1], [0, 0, 1, 1], [], []>} : vector<64x16xbf16>, vector<16x64xbf16>, vector<64x64xf32> -> vector<64x64xf32>
    %28 = arith.addf %21, %27 : vector<64x64xf32>
    %c0_28 = arith.constant 0 : index
    %c1_29 = arith.constant 1 : index
    %c0_30 = arith.constant 0 : index
    %c0_31 = arith.constant 0 : index
    %29 = vector.load %arg1[%c0_28, %c1_29, %c0_30, %c0_31] : memref<1x11x11x16xbf16, #tpu.memory_space<vmem>>, vector<1x8x8x16xbf16>
    %30 = vector.shape_cast %29 : vector<1x8x8x16xbf16> to vector<8x8x16xbf16>
    %31 = vector.shape_cast %30 : vector<8x8x16xbf16> to vector<64x16xbf16>
    %c4 = arith.constant 4 : index
    %c0_32 = arith.constant 0 : index
    %c0_33 = arith.constant 0 : index
    %32 = vector.load %arg2[%c4, %c0_32, %c0_33] : memref<16x16x64xbf16, #tpu.memory_space<vmem>>, vector<1x16x64xbf16>
    %33 = vector.shape_cast %32 : vector<1x16x64xbf16> to vector<16x64xbf16>
    %cst_34 = arith.constant dense<0.000000e+00> : vector<64x64xf32>
    %34 = tpu.matmul %31, %33, %cst_34 {dimension_numbers = #tpu.dot_dimension_numbers<[1], [0], [0], [1], [0, 0, 1, 1], [], []>} : vector<64x16xbf16>, vector<16x64xbf16>, vector<64x64xf32> -> vector<64x64xf32>
    %35 = arith.addf %28, %34 : vector<64x64xf32>
    %c0_35 = arith.constant 0 : index
    %c1_36 = arith.constant 1 : index
    %c1_37 = arith.constant 1 : index
    %c0_38 = arith.constant 0 : index
    %36 = vector.load %arg1[%c0_35, %c1_36, %c1_37, %c0_38] : memref<1x11x11x16xbf16, #tpu.memory_space<vmem>>, vector<1x8x8x16xbf16>
    %37 = vector.shape_cast %36 : vector<1x8x8x16xbf16> to vector<8x8x16xbf16>
    %38 = vector.shape_cast %37 : vector<8x8x16xbf16> to vector<64x16xbf16>
    %c5 = arith.constant 5 : index
    %c0_39 = arith.constant 0 : index
    %c0_40 = arith.constant 0 : index
    %39 = vector.load %arg2[%c5, %c0_39, %c0_40] : memref<16x16x64xbf16, #tpu.memory_space<vmem>>, vector<1x16x64xbf16>
    %40 = vector.shape_cast %39 : vector<1x16x64xbf16> to vector<16x64xbf16>
    %cst_41 = arith.constant dense<0.000000e+00> : vector<64x64xf32>
    %41 = tpu.matmul %38, %40, %cst_41 {dimension_numbers = #tpu.dot_dimension_numbers<[1], [0], [0], [1], [0, 0, 1, 1], [], []>} : vector<64x16xbf16>, vector<16x64xbf16>, vector<64x64xf32> -> vector<64x64xf32>
    %42 = arith.addf %35, %41 : vector<64x64xf32>
    %c0_42 = arith.constant 0 : index
    %c1_43 = arith.constant 1 : index
    %c2_44 = arith.constant 2 : index
    %c0_45 = arith.constant 0 : index
    %43 = vector.load %arg1[%c0_42, %c1_43, %c2_44, %c0_45] : memref<1x11x11x16xbf16, #tpu.memory_space<vmem>>, vector<1x8x8x16xbf16>
    %44 = vector.shape_cast %43 : vector<1x8x8x16xbf16> to vector<8x8x16xbf16>
    %45 = vector.shape_cast %44 : vector<8x8x16xbf16> to vector<64x16xbf16>
    %c6 = arith.constant 6 : index
    %c0_46 = arith.constant 0 : index
    %c0_47 = arith.constant 0 : index
    %46 = vector.load %arg2[%c6, %c0_46, %c0_47] : memref<16x16x64xbf16, #tpu.memory_space<vmem>>, vector<1x16x64xbf16>
    %47 = vector.shape_cast %46 : vector<1x16x64xbf16> to vector<16x64xbf16>
    %cst_48 = arith.constant dense<0.000000e+00> : vector<64x64xf32>
    %48 = tpu.matmul %45, %47, %cst_48 {dimension_numbers = #tpu.dot_dimension_numbers<[1], [0], [0], [1], [0, 0, 1, 1], [], []>} : vector<64x16xbf16>, vector<16x64xbf16>, vector<64x64xf32> -> vector<64x64xf32>
    %49 = arith.addf %42, %48 : vector<64x64xf32>
    %c0_49 = arith.constant 0 : index
    %c1_50 = arith.constant 1 : index
    %c3_51 = arith.constant 3 : index
    %c0_52 = arith.constant 0 : index
    %50 = vector.load %arg1[%c0_49, %c1_50, %c3_51, %c0_52] : memref<1x11x11x16xbf16, #tpu.memory_space<vmem>>, vector<1x8x8x16xbf16>
    %51 = vector.shape_cast %50 : vector<1x8x8x16xbf16> to vector<8x8x16xbf16>
    %52 = vector.shape_cast %51 : vector<8x8x16xbf16> to vector<64x16xbf16>
    %c7 = arith.constant 7 : index
    %c0_53 = arith.constant 0 : index
    %c0_54 = arith.constant 0 : index
    %53 = vector.load %arg2[%c7, %c0_53, %c0_54] : memref<16x16x64xbf16, #tpu.memory_space<vmem>>, vector<1x16x64xbf16>
    %54 = vector.shape_cast %53 : vector<1x16x64xbf16> to vector<16x64xbf16>
    %cst_55 = arith.constant dense<0.000000e+00> : vector<64x64xf32>
    %55 = tpu.matmul %52, %54, %cst_55 {dimension_numbers = #tpu.dot_dimension_numbers<[1], [0], [0], [1], [0, 0, 1, 1], [], []>} : vector<64x16xbf16>, vector<16x64xbf16>, vector<64x64xf32> -> vector<64x64xf32>
    %56 = arith.addf %49, %55 : vector<64x64xf32>
    %c0_56 = arith.constant 0 : index
    %c2_57 = arith.constant 2 : index
    %c0_58 = arith.constant 0 : index
    %c0_59 = arith.constant 0 : index
    %57 = vector.load %arg1[%c0_56, %c2_57, %c0_58, %c0_59] : memref<1x11x11x16xbf16, #tpu.memory_space<vmem>>, vector<1x8x8x16xbf16>
    %58 = vector.shape_cast %57 : vector<1x8x8x16xbf16> to vector<8x8x16xbf16>
    %59 = vector.shape_cast %58 : vector<8x8x16xbf16> to vector<64x16xbf16>
    %c8 = arith.constant 8 : index
    %c0_60 = arith.constant 0 : index
    %c0_61 = arith.constant 0 : index
    %60 = vector.load %arg2[%c8, %c0_60, %c0_61] : memref<16x16x64xbf16, #tpu.memory_space<vmem>>, vector<1x16x64xbf16>
    %61 = vector.shape_cast %60 : vector<1x16x64xbf16> to vector<16x64xbf16>
    %cst_62 = arith.constant dense<0.000000e+00> : vector<64x64xf32>
    %62 = tpu.matmul %59, %61, %cst_62 {dimension_numbers = #tpu.dot_dimension_numbers<[1], [0], [0], [1], [0, 0, 1, 1], [], []>} : vector<64x16xbf16>, vector<16x64xbf16>, vector<64x64xf32> -> vector<64x64xf32>
    %63 = arith.addf %56, %62 : vector<64x64xf32>
    %c0_63 = arith.constant 0 : index
    %c2_64 = arith.constant 2 : index
    %c1_65 = arith.constant 1 : index
    %c0_66 = arith.constant 0 : index
    %64 = vector.load %arg1[%c0_63, %c2_64, %c1_65, %c0_66] : memref<1x11x11x16xbf16, #tpu.memory_space<vmem>>, vector<1x8x8x16xbf16>
    %65 = vector.shape_cast %64 : vector<1x8x8x16xbf16> to vector<8x8x16xbf16>
    %66 = vector.shape_cast %65 : vector<8x8x16xbf16> to vector<64x16xbf16>
    %c9 = arith.constant 9 : index
    %c0_67 = arith.constant 0 : index
    %c0_68 = arith.constant 0 : index
    %67 = vector.load %arg2[%c9, %c0_67, %c0_68] : memref<16x16x64xbf16, #tpu.memory_space<vmem>>, vector<1x16x64xbf16>
    %68 = vector.shape_cast %67 : vector<1x16x64xbf16> to vector<16x64xbf16>
    %cst_69 = arith.constant dense<0.000000e+00> : vector<64x64xf32>
    %69 = tpu.matmul %66, %68, %cst_69 {dimension_numbers = #tpu.dot_dimension_numbers<[1], [0], [0], [1], [0, 0, 1, 1], [], []>} : vector<64x16xbf16>, vector<16x64xbf16>, vector<64x64xf32> -> vector<64x64xf32>
    %70 = arith.addf %63, %69 : vector<64x64xf32>
    %c0_70 = arith.constant 0 : index
    %c2_71 = arith.constant 2 : index
    %c2_72 = arith.constant 2 : index
    %c0_73 = arith.constant 0 : index
    %71 = vector.load %arg1[%c0_70, %c2_71, %c2_72, %c0_73] : memref<1x11x11x16xbf16, #tpu.memory_space<vmem>>, vector<1x8x8x16xbf16>
    %72 = vector.shape_cast %71 : vector<1x8x8x16xbf16> to vector<8x8x16xbf16>
    %73 = vector.shape_cast %72 : vector<8x8x16xbf16> to vector<64x16xbf16>
    %c10 = arith.constant 10 : index
    %c0_74 = arith.constant 0 : index
    %c0_75 = arith.constant 0 : index
    %74 = vector.load %arg2[%c10, %c0_74, %c0_75] : memref<16x16x64xbf16, #tpu.memory_space<vmem>>, vector<1x16x64xbf16>
    %75 = vector.shape_cast %74 : vector<1x16x64xbf16> to vector<16x64xbf16>
    %cst_76 = arith.constant dense<0.000000e+00> : vector<64x64xf32>
    %76 = tpu.matmul %73, %75, %cst_76 {dimension_numbers = #tpu.dot_dimension_numbers<[1], [0], [0], [1], [0, 0, 1, 1], [], []>} : vector<64x16xbf16>, vector<16x64xbf16>, vector<64x64xf32> -> vector<64x64xf32>
    %77 = arith.addf %70, %76 : vector<64x64xf32>
    %c0_77 = arith.constant 0 : index
    %c2_78 = arith.constant 2 : index
    %c3_79 = arith.constant 3 : index
    %c0_80 = arith.constant 0 : index
    %78 = vector.load %arg1[%c0_77, %c2_78, %c3_79, %c0_80] : memref<1x11x11x16xbf16, #tpu.memory_space<vmem>>, vector<1x8x8x16xbf16>
    %79 = vector.shape_cast %78 : vector<1x8x8x16xbf16> to vector<8x8x16xbf16>
    %80 = vector.shape_cast %79 : vector<8x8x16xbf16> to vector<64x16xbf16>
    %c11 = arith.constant 11 : index
    %c0_81 = arith.constant 0 : index
    %c0_82 = arith.constant 0 : index
    %81 = vector.load %arg2[%c11, %c0_81, %c0_82] : memref<16x16x64xbf16, #tpu.memory_space<vmem>>, vector<1x16x64xbf16>
    %82 = vector.shape_cast %81 : vector<1x16x64xbf16> to vector<16x64xbf16>
    %cst_83 = arith.constant dense<0.000000e+00> : vector<64x64xf32>
    %83 = tpu.matmul %80, %82, %cst_83 {dimension_numbers = #tpu.dot_dimension_numbers<[1], [0], [0], [1], [0, 0, 1, 1], [], []>} : vector<64x16xbf16>, vector<16x64xbf16>, vector<64x64xf32> -> vector<64x64xf32>
    %84 = arith.addf %77, %83 : vector<64x64xf32>
    %c0_84 = arith.constant 0 : index
    %c3_85 = arith.constant 3 : index
    %c0_86 = arith.constant 0 : index
    %c0_87 = arith.constant 0 : index
    %85 = vector.load %arg1[%c0_84, %c3_85, %c0_86, %c0_87] : memref<1x11x11x16xbf16, #tpu.memory_space<vmem>>, vector<1x8x8x16xbf16>
    %86 = vector.shape_cast %85 : vector<1x8x8x16xbf16> to vector<8x8x16xbf16>
    %87 = vector.shape_cast %86 : vector<8x8x16xbf16> to vector<64x16xbf16>
    %c12 = arith.constant 12 : index
    %c0_88 = arith.constant 0 : index
    %c0_89 = arith.constant 0 : index
    %88 = vector.load %arg2[%c12, %c0_88, %c0_89] : memref<16x16x64xbf16, #tpu.memory_space<vmem>>, vector<1x16x64xbf16>
    %89 = vector.shape_cast %88 : vector<1x16x64xbf16> to vector<16x64xbf16>
    %cst_90 = arith.constant dense<0.000000e+00> : vector<64x64xf32>
    %90 = tpu.matmul %87, %89, %cst_90 {dimension_numbers = #tpu.dot_dimension_numbers<[1], [0], [0], [1], [0, 0, 1, 1], [], []>} : vector<64x16xbf16>, vector<16x64xbf16>, vector<64x64xf32> -> vector<64x64xf32>
    %91 = arith.addf %84, %90 : vector<64x64xf32>
    %c0_91 = arith.constant 0 : index
    %c3_92 = arith.constant 3 : index
    %c1_93 = arith.constant 1 : index
    %c0_94 = arith.constant 0 : index
    %92 = vector.load %arg1[%c0_91, %c3_92, %c1_93, %c0_94] : memref<1x11x11x16xbf16, #tpu.memory_space<vmem>>, vector<1x8x8x16xbf16>
    %93 = vector.shape_cast %92 : vector<1x8x8x16xbf16> to vector<8x8x16xbf16>
    %94 = vector.shape_cast %93 : vector<8x8x16xbf16> to vector<64x16xbf16>
    %c13 = arith.constant 13 : index
    %c0_95 = arith.constant 0 : index
    %c0_96 = arith.constant 0 : index
    %95 = vector.load %arg2[%c13, %c0_95, %c0_96] : memref<16x16x64xbf16, #tpu.memory_space<vmem>>, vector<1x16x64xbf16>
    %96 = vector.shape_cast %95 : vector<1x16x64xbf16> to vector<16x64xbf16>
    %cst_97 = arith.constant dense<0.000000e+00> : vector<64x64xf32>
    %97 = tpu.matmul %94, %96, %cst_97 {dimension_numbers = #tpu.dot_dimension_numbers<[1], [0], [0], [1], [0, 0, 1, 1], [], []>} : vector<64x16xbf16>, vector<16x64xbf16>, vector<64x64xf32> -> vector<64x64xf32>
    %98 = arith.addf %91, %97 : vector<64x64xf32>
    %c0_98 = arith.constant 0 : index
    %c3_99 = arith.constant 3 : index
    %c2_100 = arith.constant 2 : index
    %c0_101 = arith.constant 0 : index
    %99 = vector.load %arg1[%c0_98, %c3_99, %c2_100, %c0_101] : memref<1x11x11x16xbf16, #tpu.memory_space<vmem>>, vector<1x8x8x16xbf16>
    %100 = vector.shape_cast %99 : vector<1x8x8x16xbf16> to vector<8x8x16xbf16>
    %101 = vector.shape_cast %100 : vector<8x8x16xbf16> to vector<64x16xbf16>
    %c14 = arith.constant 14 : index
    %c0_102 = arith.constant 0 : index
    %c0_103 = arith.constant 0 : index
    %102 = vector.load %arg2[%c14, %c0_102, %c0_103] : memref<16x16x64xbf16, #tpu.memory_space<vmem>>, vector<1x16x64xbf16>
    %103 = vector.shape_cast %102 : vector<1x16x64xbf16> to vector<16x64xbf16>
    %cst_104 = arith.constant dense<0.000000e+00> : vector<64x64xf32>
    %104 = tpu.matmul %101, %103, %cst_104 {dimension_numbers = #tpu.dot_dimension_numbers<[1], [0], [0], [1], [0, 0, 1, 1], [], []>} : vector<64x16xbf16>, vector<16x64xbf16>, vector<64x64xf32> -> vector<64x64xf32>
    %105 = arith.addf %98, %104 : vector<64x64xf32>
    %c0_105 = arith.constant 0 : index
    %c3_106 = arith.constant 3 : index
    %c3_107 = arith.constant 3 : index
    %c0_108 = arith.constant 0 : index
    %106 = vector.load %arg1[%c0_105, %c3_106, %c3_107, %c0_108] : memref<1x11x11x16xbf16, #tpu.memory_space<vmem>>, vector<1x8x8x16xbf16>
    %107 = vector.shape_cast %106 : vector<1x8x8x16xbf16> to vector<8x8x16xbf16>
    %108 = vector.shape_cast %107 : vector<8x8x16xbf16> to vector<64x16xbf16>
    %c15 = arith.constant 15 : index
    %c0_109 = arith.constant 0 : index
    %c0_110 = arith.constant 0 : index
    %109 = vector.load %arg2[%c15, %c0_109, %c0_110] : memref<16x16x64xbf16, #tpu.memory_space<vmem>>, vector<1x16x64xbf16>
    %110 = vector.shape_cast %109 : vector<1x16x64xbf16> to vector<16x64xbf16>
    %cst_111 = arith.constant dense<0.000000e+00> : vector<64x64xf32>
    %111 = tpu.matmul %108, %110, %cst_111 {dimension_numbers = #tpu.dot_dimension_numbers<[1], [0], [0], [1], [0, 0, 1, 1], [], []>} : vector<64x16xbf16>, vector<16x64xbf16>, vector<64x64xf32> -> vector<64x64xf32>
    %112 = arith.addf %105, %111 : vector<64x64xf32>
    %c0_112 = arith.constant 0 : index
    %c0_113 = arith.constant 0 : index
    %113 = vector.load %arg3[%c0_112, %c0_113] : memref<1x64xf32, #tpu.memory_space<vmem>>, vector<1x64xf32>
    %114 = vector.broadcast %113 : vector<1x64xf32> to vector<64x64xf32>
    %115 = arith.addf %112, %114 : vector<64x64xf32>
    %cst_114 = arith.constant 0.000000e+00 : f32
    %116 = vector.broadcast %cst_114 : f32 to vector<64x64xf32>
    %117 = arith.maximumf %115, %116 : vector<64x64xf32>
    %118 = arith.truncf %117 : vector<64x64xf32> to vector<64x64xbf16>
    %c0_115 = arith.constant 0 : index
    %c0_116 = arith.constant 0 : index
    %c0_117 = arith.constant 0 : index
    %119 = vector.load %arg4[%c0_115, %c0_116, %c0_117] : memref<1x64x64xbf16, #tpu.memory_space<vmem>>, vector<1x64x64xbf16>
    %120 = vector.shape_cast %119 : vector<1x64x64xbf16> to vector<64x64xbf16>
    %121 = vector.shape_cast %118 : vector<64x64xbf16> to vector<1x64x64xbf16>
    tpu.vector_store %arg4[%c0_115, %c0_116, %c0_117], %121 {strides = array<i32>} : memref<1x64x64xbf16, #tpu.memory_space<vmem>>, vector<1x64x64xbf16>,
    return
  }
  func.func @transform_0(%arg0: i32) -> (i32, i32, i32, i32) {
    %c0_i32 = arith.constant 0 : i32
    %c0_i32_0 = arith.constant 0 : i32
    %c0_i32_1 = arith.constant 0 : i32
    %c0_i32_2 = arith.constant 0 : i32
    return %arg0, %c0_i32, %c0_i32_0, %c0_i32_1 : i32, i32, i32, i32
  }
  func.func @transform_1(%arg0: i32) -> (i32, i32, i32) {
    %c0_i32 = arith.constant 0 : i32
    %c0_i32_0 = arith.constant 0 : i32
    %c0_i32_1 = arith.constant 0 : i32
    %c0_i32_2 = arith.constant 0 : i32
    return %c0_i32, %c0_i32_0, %c0_i32_1 : i32, i32, i32
  }
  func.func @transform_2(%arg0: i32) -> (i32, i32) {
    %c0_i32 = arith.constant 0 : i32
    %c0_i32_0 = arith.constant 0 : i32
    %c0_i32_1 = arith.constant 0 : i32
    return %c0_i32, %c0_i32_0 : i32, i32
  }
  func.func @transform_3(%arg0: i32) -> (i32, i32, i32) {
    %c0_i32 = arith.constant 0 : i32
    %c0_i32_0 = arith.constant 0 : i32
    %c0_i32_1 = arith.constant 0 : i32
    return %arg0, %c0_i32, %c0_i32_0 : i32, i32, i32
  }
}

module attributes {stable_mosaic.version = 11 : i64} {
  func.func @_block_kernel(%arg0: i32, %arg1: memref<1x6x6x64xbf16, #tpu.memory_space<vmem>>, %arg2: memref<9x64x64xbf16, #tpu.memory_space<vmem>>, %arg3: memref<1x64xf32, #tpu.memory_space<vmem>>, %arg4: memref<9x64x64xbf16, #tpu.memory_space<vmem>>, %arg5: memref<1x64xf32, #tpu.memory_space<vmem>>, %arg6: memref<1x16x64xbf16, #tpu.memory_space<vmem>>, %arg7: memref<6x6x64xbf16, #tpu.memory_space<vmem>>) attributes {dimension_semantics = [#tpu.dimension_semantics<parallel>], iteration_bounds = array<i64: 2>, scalar_prefetch = 0 : i64, scratch_operands = 1 : i64, tpu.core_type = #tpu.core_type<tc>, window_params = [{transform_indices = @transform_0, window_bounds = array<i64: 1, 6, 6, 64>}, {pipeline_mode = #tpu.pipeline_mode<synchronous>, transform_indices = @transform_1, window_bounds = array<i64: 9, 64, 64>}, {pipeline_mode = #tpu.pipeline_mode<synchronous>, transform_indices = @transform_2, window_bounds = array<i64: 1, 64>}, {pipeline_mode = #tpu.pipeline_mode<synchronous>, transform_indices = @transform_3, window_bounds = array<i64: 9, 64, 64>}, {pipeline_mode = #tpu.pipeline_mode<synchronous>, transform_indices = @transform_4, window_bounds = array<i64: 1, 64>}, {transform_indices = @transform_5, window_bounds = array<i64: 1, 16, 64>}]} {
    %cst = arith.constant 0.000000e+00 : f32
    %0 = vector.broadcast %cst : f32 to vector<16x64xf32>
    %c0 = arith.constant 0 : index
    %c0_0 = arith.constant 0 : index
    %c0_1 = arith.constant 0 : index
    %c0_2 = arith.constant 0 : index
    %1 = vector.load %arg1[%c0, %c0_0, %c0_1, %c0_2] : memref<1x6x6x64xbf16, #tpu.memory_space<vmem>>, vector<1x4x4x64xbf16>
    %2 = vector.shape_cast %1 : vector<1x4x4x64xbf16> to vector<4x4x64xbf16>
    %3 = vector.shape_cast %2 : vector<4x4x64xbf16> to vector<16x64xbf16>
    %c0_3 = arith.constant 0 : index
    %c0_4 = arith.constant 0 : index
    %c0_5 = arith.constant 0 : index
    %4 = vector.load %arg2[%c0_3, %c0_4, %c0_5] : memref<9x64x64xbf16, #tpu.memory_space<vmem>>, vector<1x64x64xbf16>
    %5 = vector.shape_cast %4 : vector<1x64x64xbf16> to vector<64x64xbf16>
    %cst_6 = arith.constant dense<0.000000e+00> : vector<16x64xf32>
    %6 = tpu.matmul %3, %5, %cst_6 {dimension_numbers = #tpu.dot_dimension_numbers<[1], [0], [0], [1], [0, 0, 1, 1], [], []>} : vector<16x64xbf16>, vector<64x64xbf16>, vector<16x64xf32> -> vector<16x64xf32>
    %7 = arith.addf %0, %6 : vector<16x64xf32>
    %c0_7 = arith.constant 0 : index
    %c0_8 = arith.constant 0 : index
    %c1 = arith.constant 1 : index
    %c0_9 = arith.constant 0 : index
    %8 = vector.load %arg1[%c0_7, %c0_8, %c1, %c0_9] : memref<1x6x6x64xbf16, #tpu.memory_space<vmem>>, vector<1x4x4x64xbf16>
    %9 = vector.shape_cast %8 : vector<1x4x4x64xbf16> to vector<4x4x64xbf16>
    %10 = vector.shape_cast %9 : vector<4x4x64xbf16> to vector<16x64xbf16>
    %c1_10 = arith.constant 1 : index
    %c0_11 = arith.constant 0 : index
    %c0_12 = arith.constant 0 : index
    %11 = vector.load %arg2[%c1_10, %c0_11, %c0_12] : memref<9x64x64xbf16, #tpu.memory_space<vmem>>, vector<1x64x64xbf16>
    %12 = vector.shape_cast %11 : vector<1x64x64xbf16> to vector<64x64xbf16>
    %cst_13 = arith.constant dense<0.000000e+00> : vector<16x64xf32>
    %13 = tpu.matmul %10, %12, %cst_13 {dimension_numbers = #tpu.dot_dimension_numbers<[1], [0], [0], [1], [0, 0, 1, 1], [], []>} : vector<16x64xbf16>, vector<64x64xbf16>, vector<16x64xf32> -> vector<16x64xf32>
    %14 = arith.addf %7, %13 : vector<16x64xf32>
    %c0_14 = arith.constant 0 : index
    %c0_15 = arith.constant 0 : index
    %c2 = arith.constant 2 : index
    %c0_16 = arith.constant 0 : index
    %15 = vector.load %arg1[%c0_14, %c0_15, %c2, %c0_16] : memref<1x6x6x64xbf16, #tpu.memory_space<vmem>>, vector<1x4x4x64xbf16>
    %16 = vector.shape_cast %15 : vector<1x4x4x64xbf16> to vector<4x4x64xbf16>
    %17 = vector.shape_cast %16 : vector<4x4x64xbf16> to vector<16x64xbf16>
    %c2_17 = arith.constant 2 : index
    %c0_18 = arith.constant 0 : index
    %c0_19 = arith.constant 0 : index
    %18 = vector.load %arg2[%c2_17, %c0_18, %c0_19] : memref<9x64x64xbf16, #tpu.memory_space<vmem>>, vector<1x64x64xbf16>
    %19 = vector.shape_cast %18 : vector<1x64x64xbf16> to vector<64x64xbf16>
    %cst_20 = arith.constant dense<0.000000e+00> : vector<16x64xf32>
    %20 = tpu.matmul %17, %19, %cst_20 {dimension_numbers = #tpu.dot_dimension_numbers<[1], [0], [0], [1], [0, 0, 1, 1], [], []>} : vector<16x64xbf16>, vector<64x64xbf16>, vector<16x64xf32> -> vector<16x64xf32>
    %21 = arith.addf %14, %20 : vector<16x64xf32>
    %c0_21 = arith.constant 0 : index
    %c1_22 = arith.constant 1 : index
    %c0_23 = arith.constant 0 : index
    %c0_24 = arith.constant 0 : index
    %22 = vector.load %arg1[%c0_21, %c1_22, %c0_23, %c0_24] : memref<1x6x6x64xbf16, #tpu.memory_space<vmem>>, vector<1x4x4x64xbf16>
    %23 = vector.shape_cast %22 : vector<1x4x4x64xbf16> to vector<4x4x64xbf16>
    %24 = vector.shape_cast %23 : vector<4x4x64xbf16> to vector<16x64xbf16>
    %c3 = arith.constant 3 : index
    %c0_25 = arith.constant 0 : index
    %c0_26 = arith.constant 0 : index
    %25 = vector.load %arg2[%c3, %c0_25, %c0_26] : memref<9x64x64xbf16, #tpu.memory_space<vmem>>, vector<1x64x64xbf16>
    %26 = vector.shape_cast %25 : vector<1x64x64xbf16> to vector<64x64xbf16>
    %cst_27 = arith.constant dense<0.000000e+00> : vector<16x64xf32>
    %27 = tpu.matmul %24, %26, %cst_27 {dimension_numbers = #tpu.dot_dimension_numbers<[1], [0], [0], [1], [0, 0, 1, 1], [], []>} : vector<16x64xbf16>, vector<64x64xbf16>, vector<16x64xf32> -> vector<16x64xf32>
    %28 = arith.addf %21, %27 : vector<16x64xf32>
    %c0_28 = arith.constant 0 : index
    %c1_29 = arith.constant 1 : index
    %c1_30 = arith.constant 1 : index
    %c0_31 = arith.constant 0 : index
    %29 = vector.load %arg1[%c0_28, %c1_29, %c1_30, %c0_31] : memref<1x6x6x64xbf16, #tpu.memory_space<vmem>>, vector<1x4x4x64xbf16>
    %30 = vector.shape_cast %29 : vector<1x4x4x64xbf16> to vector<4x4x64xbf16>
    %31 = vector.shape_cast %30 : vector<4x4x64xbf16> to vector<16x64xbf16>
    %c4 = arith.constant 4 : index
    %c0_32 = arith.constant 0 : index
    %c0_33 = arith.constant 0 : index
    %32 = vector.load %arg2[%c4, %c0_32, %c0_33] : memref<9x64x64xbf16, #tpu.memory_space<vmem>>, vector<1x64x64xbf16>
    %33 = vector.shape_cast %32 : vector<1x64x64xbf16> to vector<64x64xbf16>
    %cst_34 = arith.constant dense<0.000000e+00> : vector<16x64xf32>
    %34 = tpu.matmul %31, %33, %cst_34 {dimension_numbers = #tpu.dot_dimension_numbers<[1], [0], [0], [1], [0, 0, 1, 1], [], []>} : vector<16x64xbf16>, vector<64x64xbf16>, vector<16x64xf32> -> vector<16x64xf32>
    %35 = arith.addf %28, %34 : vector<16x64xf32>
    %c0_35 = arith.constant 0 : index
    %c1_36 = arith.constant 1 : index
    %c2_37 = arith.constant 2 : index
    %c0_38 = arith.constant 0 : index
    %36 = vector.load %arg1[%c0_35, %c1_36, %c2_37, %c0_38] : memref<1x6x6x64xbf16, #tpu.memory_space<vmem>>, vector<1x4x4x64xbf16>
    %37 = vector.shape_cast %36 : vector<1x4x4x64xbf16> to vector<4x4x64xbf16>
    %38 = vector.shape_cast %37 : vector<4x4x64xbf16> to vector<16x64xbf16>
    %c5 = arith.constant 5 : index
    %c0_39 = arith.constant 0 : index
    %c0_40 = arith.constant 0 : index
    %39 = vector.load %arg2[%c5, %c0_39, %c0_40] : memref<9x64x64xbf16, #tpu.memory_space<vmem>>, vector<1x64x64xbf16>
    %40 = vector.shape_cast %39 : vector<1x64x64xbf16> to vector<64x64xbf16>
    %cst_41 = arith.constant dense<0.000000e+00> : vector<16x64xf32>
    %41 = tpu.matmul %38, %40, %cst_41 {dimension_numbers = #tpu.dot_dimension_numbers<[1], [0], [0], [1], [0, 0, 1, 1], [], []>} : vector<16x64xbf16>, vector<64x64xbf16>, vector<16x64xf32> -> vector<16x64xf32>
    %42 = arith.addf %35, %41 : vector<16x64xf32>
    %c0_42 = arith.constant 0 : index
    %c2_43 = arith.constant 2 : index
    %c0_44 = arith.constant 0 : index
    %c0_45 = arith.constant 0 : index
    %43 = vector.load %arg1[%c0_42, %c2_43, %c0_44, %c0_45] : memref<1x6x6x64xbf16, #tpu.memory_space<vmem>>, vector<1x4x4x64xbf16>
    %44 = vector.shape_cast %43 : vector<1x4x4x64xbf16> to vector<4x4x64xbf16>
    %45 = vector.shape_cast %44 : vector<4x4x64xbf16> to vector<16x64xbf16>
    %c6 = arith.constant 6 : index
    %c0_46 = arith.constant 0 : index
    %c0_47 = arith.constant 0 : index
    %46 = vector.load %arg2[%c6, %c0_46, %c0_47] : memref<9x64x64xbf16, #tpu.memory_space<vmem>>, vector<1x64x64xbf16>
    %47 = vector.shape_cast %46 : vector<1x64x64xbf16> to vector<64x64xbf16>
    %cst_48 = arith.constant dense<0.000000e+00> : vector<16x64xf32>
    %48 = tpu.matmul %45, %47, %cst_48 {dimension_numbers = #tpu.dot_dimension_numbers<[1], [0], [0], [1], [0, 0, 1, 1], [], []>} : vector<16x64xbf16>, vector<64x64xbf16>, vector<16x64xf32> -> vector<16x64xf32>
    %49 = arith.addf %42, %48 : vector<16x64xf32>
    %c0_49 = arith.constant 0 : index
    %c2_50 = arith.constant 2 : index
    %c1_51 = arith.constant 1 : index
    %c0_52 = arith.constant 0 : index
    %50 = vector.load %arg1[%c0_49, %c2_50, %c1_51, %c0_52] : memref<1x6x6x64xbf16, #tpu.memory_space<vmem>>, vector<1x4x4x64xbf16>
    %51 = vector.shape_cast %50 : vector<1x4x4x64xbf16> to vector<4x4x64xbf16>
    %52 = vector.shape_cast %51 : vector<4x4x64xbf16> to vector<16x64xbf16>
    %c7 = arith.constant 7 : index
    %c0_53 = arith.constant 0 : index
    %c0_54 = arith.constant 0 : index
    %53 = vector.load %arg2[%c7, %c0_53, %c0_54] : memref<9x64x64xbf16, #tpu.memory_space<vmem>>, vector<1x64x64xbf16>
    %54 = vector.shape_cast %53 : vector<1x64x64xbf16> to vector<64x64xbf16>
    %cst_55 = arith.constant dense<0.000000e+00> : vector<16x64xf32>
    %55 = tpu.matmul %52, %54, %cst_55 {dimension_numbers = #tpu.dot_dimension_numbers<[1], [0], [0], [1], [0, 0, 1, 1], [], []>} : vector<16x64xbf16>, vector<64x64xbf16>, vector<16x64xf32> -> vector<16x64xf32>
    %56 = arith.addf %49, %55 : vector<16x64xf32>
    %c0_56 = arith.constant 0 : index
    %c2_57 = arith.constant 2 : index
    %c2_58 = arith.constant 2 : index
    %c0_59 = arith.constant 0 : index
    %57 = vector.load %arg1[%c0_56, %c2_57, %c2_58, %c0_59] : memref<1x6x6x64xbf16, #tpu.memory_space<vmem>>, vector<1x4x4x64xbf16>
    %58 = vector.shape_cast %57 : vector<1x4x4x64xbf16> to vector<4x4x64xbf16>
    %59 = vector.shape_cast %58 : vector<4x4x64xbf16> to vector<16x64xbf16>
    %c8 = arith.constant 8 : index
    %c0_60 = arith.constant 0 : index
    %c0_61 = arith.constant 0 : index
    %60 = vector.load %arg2[%c8, %c0_60, %c0_61] : memref<9x64x64xbf16, #tpu.memory_space<vmem>>, vector<1x64x64xbf16>
    %61 = vector.shape_cast %60 : vector<1x64x64xbf16> to vector<64x64xbf16>
    %cst_62 = arith.constant dense<0.000000e+00> : vector<16x64xf32>
    %62 = tpu.matmul %59, %61, %cst_62 {dimension_numbers = #tpu.dot_dimension_numbers<[1], [0], [0], [1], [0, 0, 1, 1], [], []>} : vector<16x64xbf16>, vector<64x64xbf16>, vector<16x64xf32> -> vector<16x64xf32>
    %63 = arith.addf %56, %62 : vector<16x64xf32>
    %c0_63 = arith.constant 0 : index
    %c0_64 = arith.constant 0 : index
    %64 = vector.load %arg3[%c0_63, %c0_64] : memref<1x64xf32, #tpu.memory_space<vmem>>, vector<1x64xf32>
    %65 = vector.broadcast %64 : vector<1x64xf32> to vector<16x64xf32>
    %66 = arith.addf %63, %65 : vector<16x64xf32>
    %cst_65 = arith.constant 0.000000e+00 : f32
    %67 = vector.broadcast %cst_65 : f32 to vector<16x64xf32>
    %68 = arith.maximumf %66, %67 : vector<16x64xf32>
    %cst_66 = arith.constant 0.000000e+00 : bf16
    %69 = vector.broadcast %cst_66 : bf16 to vector<6x6x64xbf16>
    %c0_67 = arith.constant 0 : index
    %c0_68 = arith.constant 0 : index
    %c0_69 = arith.constant 0 : index
    %70 = vector.load %arg7[%c0_67, %c0_68, %c0_69] : memref<6x6x64xbf16, #tpu.memory_space<vmem>>, vector<6x6x64xbf16>
    tpu.vector_store %arg7[%c0_67, %c0_68, %c0_69], %69 {strides = array<i32>} : memref<6x6x64xbf16, #tpu.memory_space<vmem>>, vector<6x6x64xbf16>,
    %71 = vector.shape_cast %68 : vector<16x64xf32> to vector<4x4x64xf32>
    %72 = arith.truncf %71 : vector<4x4x64xf32> to vector<4x4x64xbf16>
    %c1_70 = arith.constant 1 : index
    %c1_71 = arith.constant 1 : index
    %c0_72 = arith.constant 0 : index
    %73 = vector.load %arg7[%c1_70, %c1_71, %c0_72] : memref<6x6x64xbf16, #tpu.memory_space<vmem>>, vector<4x4x64xbf16>
    tpu.vector_store %arg7[%c1_70, %c1_71, %c0_72], %72 {strides = array<i32>} : memref<6x6x64xbf16, #tpu.memory_space<vmem>>, vector<4x4x64xbf16>,
    %c0_73 = arith.constant 0 : index
    %c1_74 = arith.constant 1 : index
    %c1_75 = arith.constant 1 : index
    %c0_76 = arith.constant 0 : index
    %74 = vector.load %arg1[%c0_73, %c1_74, %c1_75, %c0_76] : memref<1x6x6x64xbf16, #tpu.memory_space<vmem>>, vector<1x4x4x64xbf16>
    %75 = vector.shape_cast %74 : vector<1x4x4x64xbf16> to vector<4x4x64xbf16>
    %76 = vector.shape_cast %75 : vector<4x4x64xbf16> to vector<16x64xbf16>
    %77 = arith.extf %76 : vector<16x64xbf16> to vector<16x64xf32>
    %cst_77 = arith.constant 0.000000e+00 : f32
    %78 = vector.broadcast %cst_77 : f32 to vector<16x64xf32>
    %c0_78 = arith.constant 0 : index
    %c0_79 = arith.constant 0 : index
    %c0_80 = arith.constant 0 : index
    %79 = vector.load %arg7[%c0_78, %c0_79, %c0_80] : memref<6x6x64xbf16, #tpu.memory_space<vmem>>, vector<4x4x64xbf16>
    %80 = vector.shape_cast %79 : vector<4x4x64xbf16> to vector<16x64xbf16>
    %c0_81 = arith.constant 0 : index
    %c0_82 = arith.constant 0 : index
    %c0_83 = arith.constant 0 : index
    %81 = vector.load %arg4[%c0_81, %c0_82, %c0_83] : memref<9x64x64xbf16, #tpu.memory_space<vmem>>, vector<1x64x64xbf16>
    %82 = vector.shape_cast %81 : vector<1x64x64xbf16> to vector<64x64xbf16>
    %cst_84 = arith.constant dense<0.000000e+00> : vector<16x64xf32>
    %83 = tpu.matmul %80, %82, %cst_84 {dimension_numbers = #tpu.dot_dimension_numbers<[1], [0], [0], [1], [0, 0, 1, 1], [], []>} : vector<16x64xbf16>, vector<64x64xbf16>, vector<16x64xf32> -> vector<16x64xf32>
    %84 = arith.addf %78, %83 : vector<16x64xf32>
    %c0_85 = arith.constant 0 : index
    %c1_86 = arith.constant 1 : index
    %c0_87 = arith.constant 0 : index
    %85 = vector.load %arg7[%c0_85, %c1_86, %c0_87] : memref<6x6x64xbf16, #tpu.memory_space<vmem>>, vector<4x4x64xbf16>
    %86 = vector.shape_cast %85 : vector<4x4x64xbf16> to vector<16x64xbf16>
    %c1_88 = arith.constant 1 : index
    %c0_89 = arith.constant 0 : index
    %c0_90 = arith.constant 0 : index
    %87 = vector.load %arg4[%c1_88, %c0_89, %c0_90] : memref<9x64x64xbf16, #tpu.memory_space<vmem>>, vector<1x64x64xbf16>
    %88 = vector.shape_cast %87 : vector<1x64x64xbf16> to vector<64x64xbf16>
    %cst_91 = arith.constant dense<0.000000e+00> : vector<16x64xf32>
    %89 = tpu.matmul %86, %88, %cst_91 {dimension_numbers = #tpu.dot_dimension_numbers<[1], [0], [0], [1], [0, 0, 1, 1], [], []>} : vector<16x64xbf16>, vector<64x64xbf16>, vector<16x64xf32> -> vector<16x64xf32>
    %90 = arith.addf %84, %89 : vector<16x64xf32>
    %c0_92 = arith.constant 0 : index
    %c2_93 = arith.constant 2 : index
    %c0_94 = arith.constant 0 : index
    %91 = vector.load %arg7[%c0_92, %c2_93, %c0_94] : memref<6x6x64xbf16, #tpu.memory_space<vmem>>, vector<4x4x64xbf16>
    %92 = vector.shape_cast %91 : vector<4x4x64xbf16> to vector<16x64xbf16>
    %c2_95 = arith.constant 2 : index
    %c0_96 = arith.constant 0 : index
    %c0_97 = arith.constant 0 : index
    %93 = vector.load %arg4[%c2_95, %c0_96, %c0_97] : memref<9x64x64xbf16, #tpu.memory_space<vmem>>, vector<1x64x64xbf16>
    %94 = vector.shape_cast %93 : vector<1x64x64xbf16> to vector<64x64xbf16>
    %cst_98 = arith.constant dense<0.000000e+00> : vector<16x64xf32>
    %95 = tpu.matmul %92, %94, %cst_98 {dimension_numbers = #tpu.dot_dimension_numbers<[1], [0], [0], [1], [0, 0, 1, 1], [], []>} : vector<16x64xbf16>, vector<64x64xbf16>, vector<16x64xf32> -> vector<16x64xf32>
    %96 = arith.addf %90, %95 : vector<16x64xf32>
    %c1_99 = arith.constant 1 : index
    %c0_100 = arith.constant 0 : index
    %c0_101 = arith.constant 0 : index
    %97 = vector.load %arg7[%c1_99, %c0_100, %c0_101] : memref<6x6x64xbf16, #tpu.memory_space<vmem>>, vector<4x4x64xbf16>
    %98 = vector.shape_cast %97 : vector<4x4x64xbf16> to vector<16x64xbf16>
    %c3_102 = arith.constant 3 : index
    %c0_103 = arith.constant 0 : index
    %c0_104 = arith.constant 0 : index
    %99 = vector.load %arg4[%c3_102, %c0_103, %c0_104] : memref<9x64x64xbf16, #tpu.memory_space<vmem>>, vector<1x64x64xbf16>
    %100 = vector.shape_cast %99 : vector<1x64x64xbf16> to vector<64x64xbf16>
    %cst_105 = arith.constant dense<0.000000e+00> : vector<16x64xf32>
    %101 = tpu.matmul %98, %100, %cst_105 {dimension_numbers = #tpu.dot_dimension_numbers<[1], [0], [0], [1], [0, 0, 1, 1], [], []>} : vector<16x64xbf16>, vector<64x64xbf16>, vector<16x64xf32> -> vector<16x64xf32>
    %102 = arith.addf %96, %101 : vector<16x64xf32>
    %c1_106 = arith.constant 1 : index
    %c1_107 = arith.constant 1 : index
    %c0_108 = arith.constant 0 : index
    %103 = vector.load %arg7[%c1_106, %c1_107, %c0_108] : memref<6x6x64xbf16, #tpu.memory_space<vmem>>, vector<4x4x64xbf16>
    %104 = vector.shape_cast %103 : vector<4x4x64xbf16> to vector<16x64xbf16>
    %c4_109 = arith.constant 4 : index
    %c0_110 = arith.constant 0 : index
    %c0_111 = arith.constant 0 : index
    %105 = vector.load %arg4[%c4_109, %c0_110, %c0_111] : memref<9x64x64xbf16, #tpu.memory_space<vmem>>, vector<1x64x64xbf16>
    %106 = vector.shape_cast %105 : vector<1x64x64xbf16> to vector<64x64xbf16>
    %cst_112 = arith.constant dense<0.000000e+00> : vector<16x64xf32>
    %107 = tpu.matmul %104, %106, %cst_112 {dimension_numbers = #tpu.dot_dimension_numbers<[1], [0], [0], [1], [0, 0, 1, 1], [], []>} : vector<16x64xbf16>, vector<64x64xbf16>, vector<16x64xf32> -> vector<16x64xf32>
    %108 = arith.addf %102, %107 : vector<16x64xf32>
    %c1_113 = arith.constant 1 : index
    %c2_114 = arith.constant 2 : index
    %c0_115 = arith.constant 0 : index
    %109 = vector.load %arg7[%c1_113, %c2_114, %c0_115] : memref<6x6x64xbf16, #tpu.memory_space<vmem>>, vector<4x4x64xbf16>
    %110 = vector.shape_cast %109 : vector<4x4x64xbf16> to vector<16x64xbf16>
    %c5_116 = arith.constant 5 : index
    %c0_117 = arith.constant 0 : index
    %c0_118 = arith.constant 0 : index
    %111 = vector.load %arg4[%c5_116, %c0_117, %c0_118] : memref<9x64x64xbf16, #tpu.memory_space<vmem>>, vector<1x64x64xbf16>
    %112 = vector.shape_cast %111 : vector<1x64x64xbf16> to vector<64x64xbf16>
    %cst_119 = arith.constant dense<0.000000e+00> : vector<16x64xf32>
    %113 = tpu.matmul %110, %112, %cst_119 {dimension_numbers = #tpu.dot_dimension_numbers<[1], [0], [0], [1], [0, 0, 1, 1], [], []>} : vector<16x64xbf16>, vector<64x64xbf16>, vector<16x64xf32> -> vector<16x64xf32>
    %114 = arith.addf %108, %113 : vector<16x64xf32>
    %c2_120 = arith.constant 2 : index
    %c0_121 = arith.constant 0 : index
    %c0_122 = arith.constant 0 : index
    %115 = vector.load %arg7[%c2_120, %c0_121, %c0_122] : memref<6x6x64xbf16, #tpu.memory_space<vmem>>, vector<4x4x64xbf16>
    %116 = vector.shape_cast %115 : vector<4x4x64xbf16> to vector<16x64xbf16>
    %c6_123 = arith.constant 6 : index
    %c0_124 = arith.constant 0 : index
    %c0_125 = arith.constant 0 : index
    %117 = vector.load %arg4[%c6_123, %c0_124, %c0_125] : memref<9x64x64xbf16, #tpu.memory_space<vmem>>, vector<1x64x64xbf16>
    %118 = vector.shape_cast %117 : vector<1x64x64xbf16> to vector<64x64xbf16>
    %cst_126 = arith.constant dense<0.000000e+00> : vector<16x64xf32>
    %119 = tpu.matmul %116, %118, %cst_126 {dimension_numbers = #tpu.dot_dimension_numbers<[1], [0], [0], [1], [0, 0, 1, 1], [], []>} : vector<16x64xbf16>, vector<64x64xbf16>, vector<16x64xf32> -> vector<16x64xf32>
    %120 = arith.addf %114, %119 : vector<16x64xf32>
    %c2_127 = arith.constant 2 : index
    %c1_128 = arith.constant 1 : index
    %c0_129 = arith.constant 0 : index
    %121 = vector.load %arg7[%c2_127, %c1_128, %c0_129] : memref<6x6x64xbf16, #tpu.memory_space<vmem>>, vector<4x4x64xbf16>
    %122 = vector.shape_cast %121 : vector<4x4x64xbf16> to vector<16x64xbf16>
    %c7_130 = arith.constant 7 : index
    %c0_131 = arith.constant 0 : index
    %c0_132 = arith.constant 0 : index
    %123 = vector.load %arg4[%c7_130, %c0_131, %c0_132] : memref<9x64x64xbf16, #tpu.memory_space<vmem>>, vector<1x64x64xbf16>
    %124 = vector.shape_cast %123 : vector<1x64x64xbf16> to vector<64x64xbf16>
    %cst_133 = arith.constant dense<0.000000e+00> : vector<16x64xf32>
    %125 = tpu.matmul %122, %124, %cst_133 {dimension_numbers = #tpu.dot_dimension_numbers<[1], [0], [0], [1], [0, 0, 1, 1], [], []>} : vector<16x64xbf16>, vector<64x64xbf16>, vector<16x64xf32> -> vector<16x64xf32>
    %126 = arith.addf %120, %125 : vector<16x64xf32>
    %c2_134 = arith.constant 2 : index
    %c2_135 = arith.constant 2 : index
    %c0_136 = arith.constant 0 : index
    %127 = vector.load %arg7[%c2_134, %c2_135, %c0_136] : memref<6x6x64xbf16, #tpu.memory_space<vmem>>, vector<4x4x64xbf16>
    %128 = vector.shape_cast %127 : vector<4x4x64xbf16> to vector<16x64xbf16>
    %c8_137 = arith.constant 8 : index
    %c0_138 = arith.constant 0 : index
    %c0_139 = arith.constant 0 : index
    %129 = vector.load %arg4[%c8_137, %c0_138, %c0_139] : memref<9x64x64xbf16, #tpu.memory_space<vmem>>, vector<1x64x64xbf16>
    %130 = vector.shape_cast %129 : vector<1x64x64xbf16> to vector<64x64xbf16>
    %cst_140 = arith.constant dense<0.000000e+00> : vector<16x64xf32>
    %131 = tpu.matmul %128, %130, %cst_140 {dimension_numbers = #tpu.dot_dimension_numbers<[1], [0], [0], [1], [0, 0, 1, 1], [], []>} : vector<16x64xbf16>, vector<64x64xbf16>, vector<16x64xf32> -> vector<16x64xf32>
    %132 = arith.addf %126, %131 : vector<16x64xf32>
    %c0_141 = arith.constant 0 : index
    %c0_142 = arith.constant 0 : index
    %133 = vector.load %arg5[%c0_141, %c0_142] : memref<1x64xf32, #tpu.memory_space<vmem>>, vector<1x64xf32>
    %134 = vector.broadcast %133 : vector<1x64xf32> to vector<16x64xf32>
    %135 = arith.addf %132, %134 : vector<16x64xf32>
    %136 = arith.addf %135, %77 : vector<16x64xf32>
    %cst_143 = arith.constant 0.000000e+00 : f32
    %137 = vector.broadcast %cst_143 : f32 to vector<16x64xf32>
    %138 = arith.maximumf %136, %137 : vector<16x64xf32>
    %139 = arith.truncf %138 : vector<16x64xf32> to vector<16x64xbf16>
    %c0_144 = arith.constant 0 : index
    %c0_145 = arith.constant 0 : index
    %c0_146 = arith.constant 0 : index
    %140 = vector.load %arg6[%c0_144, %c0_145, %c0_146] : memref<1x16x64xbf16, #tpu.memory_space<vmem>>, vector<1x16x64xbf16>
    %141 = vector.shape_cast %140 : vector<1x16x64xbf16> to vector<16x64xbf16>
    %142 = vector.shape_cast %139 : vector<16x64xbf16> to vector<1x16x64xbf16>
    tpu.vector_store %arg6[%c0_144, %c0_145, %c0_146], %142 {strides = array<i32>} : memref<1x16x64xbf16, #tpu.memory_space<vmem>>, vector<1x16x64xbf16>,
    return
  }
  func.func @transform_0(%arg0: i32) -> (i32, i32, i32, i32) {
    %c0_i32 = arith.constant 0 : i32
    %c0_i32_0 = arith.constant 0 : i32
    %c0_i32_1 = arith.constant 0 : i32
    %c0_i32_2 = arith.constant 0 : i32
    return %arg0, %c0_i32, %c0_i32_0, %c0_i32_1 : i32, i32, i32, i32
  }
  func.func @transform_1(%arg0: i32) -> (i32, i32, i32) {
    %c0_i32 = arith.constant 0 : i32
    %c0_i32_0 = arith.constant 0 : i32
    %c0_i32_1 = arith.constant 0 : i32
    %c0_i32_2 = arith.constant 0 : i32
    return %c0_i32, %c0_i32_0, %c0_i32_1 : i32, i32, i32
  }
  func.func @transform_2(%arg0: i32) -> (i32, i32) {
    %c0_i32 = arith.constant 0 : i32
    %c0_i32_0 = arith.constant 0 : i32
    %c0_i32_1 = arith.constant 0 : i32
    return %c0_i32, %c0_i32_0 : i32, i32
  }
  func.func @transform_3(%arg0: i32) -> (i32, i32, i32) {
    %c0_i32 = arith.constant 0 : i32
    %c0_i32_0 = arith.constant 0 : i32
    %c0_i32_1 = arith.constant 0 : i32
    %c0_i32_2 = arith.constant 0 : i32
    return %c0_i32, %c0_i32_0, %c0_i32_1 : i32, i32, i32
  }
  func.func @transform_4(%arg0: i32) -> (i32, i32) {
    %c0_i32 = arith.constant 0 : i32
    %c0_i32_0 = arith.constant 0 : i32
    %c0_i32_1 = arith.constant 0 : i32
    return %c0_i32, %c0_i32_0 : i32, i32
  }
  func.func @transform_5(%arg0: i32) -> (i32, i32, i32) {
    %c0_i32 = arith.constant 0 : i32
    %c0_i32_0 = arith.constant 0 : i32
    %c0_i32_1 = arith.constant 0 : i32
    return %arg0, %c0_i32, %c0_i32_0 : i32, i32, i32
  }
}

module attributes {stable_mosaic.version = 11 : i64} {
  func.func @_block_kernel(%arg0: i32, %arg1: memref<1x3x3x256xbf16, #tpu.memory_space<vmem>>, %arg2: memref<4x256x128xbf16, #tpu.memory_space<vmem>>, %arg3: memref<1x128xf32, #tpu.memory_space<vmem>>, %arg4: memref<9x128x128xbf16, #tpu.memory_space<vmem>>, %arg5: memref<1x128xf32, #tpu.memory_space<vmem>>, %arg6: memref<1x64x128xbf16, #tpu.memory_space<vmem>>, %arg7: memref<1x128xf32, #tpu.memory_space<vmem>>, %arg8: memref<1x4x128xbf16, #tpu.memory_space<vmem>>, %arg9: memref<4x4x128xbf16, #tpu.memory_space<vmem>>) attributes {dimension_semantics = [#tpu.dimension_semantics<parallel>], iteration_bounds = array<i64: 2>, scalar_prefetch = 0 : i64, scratch_operands = 1 : i64, tpu.core_type = #tpu.core_type<tc>, window_params = [{transform_indices = @transform_0, window_bounds = array<i64: 1, 3, 3, 256>}, {pipeline_mode = #tpu.pipeline_mode<synchronous>, transform_indices = @transform_1, window_bounds = array<i64: 4, 256, 128>}, {pipeline_mode = #tpu.pipeline_mode<synchronous>, transform_indices = @transform_2, window_bounds = array<i64: 1, 128>}, {pipeline_mode = #tpu.pipeline_mode<synchronous>, transform_indices = @transform_3, window_bounds = array<i64: 9, 128, 128>}, {pipeline_mode = #tpu.pipeline_mode<synchronous>, transform_indices = @transform_4, window_bounds = array<i64: 1, 128>}, {pipeline_mode = #tpu.pipeline_mode<synchronous>, transform_indices = @transform_5, window_bounds = array<i64: 1, 64, 128>}, {pipeline_mode = #tpu.pipeline_mode<synchronous>, transform_indices = @transform_6, window_bounds = array<i64: 1, 128>}, {transform_indices = @transform_7, window_bounds = array<i64: 1, 4, 128>}]} {
    %cst = arith.constant 0.000000e+00 : f32
    %0 = vector.broadcast %cst : f32 to vector<4x128xf32>
    %c0 = arith.constant 0 : index
    %c0_0 = arith.constant 0 : index
    %c0_1 = arith.constant 0 : index
    %c0_2 = arith.constant 0 : index
    %1 = vector.load %arg1[%c0, %c0_0, %c0_1, %c0_2] : memref<1x3x3x256xbf16, #tpu.memory_space<vmem>>, vector<1x2x2x256xbf16>
    %2 = vector.shape_cast %1 : vector<1x2x2x256xbf16> to vector<2x2x256xbf16>
    %3 = vector.shape_cast %2 : vector<2x2x256xbf16> to vector<4x256xbf16>
    %c0_3 = arith.constant 0 : index
    %c0_4 = arith.constant 0 : index
    %c0_5 = arith.constant 0 : index
    %4 = vector.load %arg2[%c0_3, %c0_4, %c0_5] : memref<4x256x128xbf16, #tpu.memory_space<vmem>>, vector<1x256x128xbf16>
    %5 = vector.shape_cast %4 : vector<1x256x128xbf16> to vector<256x128xbf16>
    %cst_6 = arith.constant dense<0.000000e+00> : vector<4x128xf32>
    %6 = tpu.matmul %3, %5, %cst_6 {dimension_numbers = #tpu.dot_dimension_numbers<[1], [0], [0], [1], [0, 0, 1, 1], [], []>} : vector<4x256xbf16>, vector<256x128xbf16>, vector<4x128xf32> -> vector<4x128xf32>
    %7 = arith.addf %0, %6 : vector<4x128xf32>
    %c0_7 = arith.constant 0 : index
    %c0_8 = arith.constant 0 : index
    %c1 = arith.constant 1 : index
    %c0_9 = arith.constant 0 : index
    %8 = vector.load %arg1[%c0_7, %c0_8, %c1, %c0_9] : memref<1x3x3x256xbf16, #tpu.memory_space<vmem>>, vector<1x2x2x256xbf16>
    %9 = vector.shape_cast %8 : vector<1x2x2x256xbf16> to vector<2x2x256xbf16>
    %10 = vector.shape_cast %9 : vector<2x2x256xbf16> to vector<4x256xbf16>
    %c1_10 = arith.constant 1 : index
    %c0_11 = arith.constant 0 : index
    %c0_12 = arith.constant 0 : index
    %11 = vector.load %arg2[%c1_10, %c0_11, %c0_12] : memref<4x256x128xbf16, #tpu.memory_space<vmem>>, vector<1x256x128xbf16>
    %12 = vector.shape_cast %11 : vector<1x256x128xbf16> to vector<256x128xbf16>
    %cst_13 = arith.constant dense<0.000000e+00> : vector<4x128xf32>
    %13 = tpu.matmul %10, %12, %cst_13 {dimension_numbers = #tpu.dot_dimension_numbers<[1], [0], [0], [1], [0, 0, 1, 1], [], []>} : vector<4x256xbf16>, vector<256x128xbf16>, vector<4x128xf32> -> vector<4x128xf32>
    %14 = arith.addf %7, %13 : vector<4x128xf32>
    %c0_14 = arith.constant 0 : index
    %c1_15 = arith.constant 1 : index
    %c0_16 = arith.constant 0 : index
    %c0_17 = arith.constant 0 : index
    %15 = vector.load %arg1[%c0_14, %c1_15, %c0_16, %c0_17] : memref<1x3x3x256xbf16, #tpu.memory_space<vmem>>, vector<1x2x2x256xbf16>
    %16 = vector.shape_cast %15 : vector<1x2x2x256xbf16> to vector<2x2x256xbf16>
    %17 = vector.shape_cast %16 : vector<2x2x256xbf16> to vector<4x256xbf16>
    %c2 = arith.constant 2 : index
    %c0_18 = arith.constant 0 : index
    %c0_19 = arith.constant 0 : index
    %18 = vector.load %arg2[%c2, %c0_18, %c0_19] : memref<4x256x128xbf16, #tpu.memory_space<vmem>>, vector<1x256x128xbf16>
    %19 = vector.shape_cast %18 : vector<1x256x128xbf16> to vector<256x128xbf16>
    %cst_20 = arith.constant dense<0.000000e+00> : vector<4x128xf32>
    %20 = tpu.matmul %17, %19, %cst_20 {dimension_numbers = #tpu.dot_dimension_numbers<[1], [0], [0], [1], [0, 0, 1, 1], [], []>} : vector<4x256xbf16>, vector<256x128xbf16>, vector<4x128xf32> -> vector<4x128xf32>
    %21 = arith.addf %14, %20 : vector<4x128xf32>
    %c0_21 = arith.constant 0 : index
    %c1_22 = arith.constant 1 : index
    %c1_23 = arith.constant 1 : index
    %c0_24 = arith.constant 0 : index
    %22 = vector.load %arg1[%c0_21, %c1_22, %c1_23, %c0_24] : memref<1x3x3x256xbf16, #tpu.memory_space<vmem>>, vector<1x2x2x256xbf16>
    %23 = vector.shape_cast %22 : vector<1x2x2x256xbf16> to vector<2x2x256xbf16>
    %24 = vector.shape_cast %23 : vector<2x2x256xbf16> to vector<4x256xbf16>
    %c3 = arith.constant 3 : index
    %c0_25 = arith.constant 0 : index
    %c0_26 = arith.constant 0 : index
    %25 = vector.load %arg2[%c3, %c0_25, %c0_26] : memref<4x256x128xbf16, #tpu.memory_space<vmem>>, vector<1x256x128xbf16>
    %26 = vector.shape_cast %25 : vector<1x256x128xbf16> to vector<256x128xbf16>
    %cst_27 = arith.constant dense<0.000000e+00> : vector<4x128xf32>
    %27 = tpu.matmul %24, %26, %cst_27 {dimension_numbers = #tpu.dot_dimension_numbers<[1], [0], [0], [1], [0, 0, 1, 1], [], []>} : vector<4x256xbf16>, vector<256x128xbf16>, vector<4x128xf32> -> vector<4x128xf32>
    %28 = arith.addf %21, %27 : vector<4x128xf32>
    %c0_28 = arith.constant 0 : index
    %c0_29 = arith.constant 0 : index
    %29 = vector.load %arg3[%c0_28, %c0_29] : memref<1x128xf32, #tpu.memory_space<vmem>>, vector<1x128xf32>
    %30 = vector.broadcast %29 : vector<1x128xf32> to vector<4x128xf32>
    %31 = arith.addf %28, %30 : vector<4x128xf32>
    %cst_30 = arith.constant 0.000000e+00 : f32
    %32 = vector.broadcast %cst_30 : f32 to vector<4x128xf32>
    %33 = arith.maximumf %31, %32 : vector<4x128xf32>
    %cst_31 = arith.constant 0.000000e+00 : bf16
    %34 = vector.broadcast %cst_31 : bf16 to vector<4x4x128xbf16>
    %c0_32 = arith.constant 0 : index
    %c0_33 = arith.constant 0 : index
    %c0_34 = arith.constant 0 : index
    %35 = vector.load %arg9[%c0_32, %c0_33, %c0_34] : memref<4x4x128xbf16, #tpu.memory_space<vmem>>, vector<4x4x128xbf16>
    tpu.vector_store %arg9[%c0_32, %c0_33, %c0_34], %34 {strides = array<i32>} : memref<4x4x128xbf16, #tpu.memory_space<vmem>>, vector<4x4x128xbf16>,
    %36 = vector.shape_cast %33 : vector<4x128xf32> to vector<2x2x128xf32>
    %37 = arith.truncf %36 : vector<2x2x128xf32> to vector<2x2x128xbf16>
    %c1_35 = arith.constant 1 : index
    %c1_36 = arith.constant 1 : index
    %c0_37 = arith.constant 0 : index
    %38 = vector.load %arg9[%c1_35, %c1_36, %c0_37] : memref<4x4x128xbf16, #tpu.memory_space<vmem>>, vector<2x2x128xbf16>
    tpu.vector_store %arg9[%c1_35, %c1_36, %c0_37], %37 {strides = array<i32>} : memref<4x4x128xbf16, #tpu.memory_space<vmem>>, vector<2x2x128xbf16>,
    %c0_38 = arith.constant 0 : index
    %c0_39 = arith.constant 0 : index
    %c0_40 = arith.constant 0 : index
    %c192 = arith.constant 192 : index
    %39 = vector.load %arg1[%c0_38, %c0_39, %c0_40, %c192] : memref<1x3x3x256xbf16, #tpu.memory_space<vmem>>, vector<1x2x2x64xbf16>
    %40 = vector.shape_cast %39 : vector<1x2x2x64xbf16> to vector<2x2x64xbf16>
    %41 = vector.shape_cast %40 : vector<2x2x64xbf16> to vector<4x64xbf16>
    %c0_41 = arith.constant 0 : index
    %c0_42 = arith.constant 0 : index
    %c0_43 = arith.constant 0 : index
    %42 = vector.load %arg6[%c0_41, %c0_42, %c0_43] : memref<1x64x128xbf16, #tpu.memory_space<vmem>>, vector<1x64x128xbf16>
    %43 = vector.shape_cast %42 : vector<1x64x128xbf16> to vector<64x128xbf16>
    %cst_44 = arith.constant dense<0.000000e+00> : vector<4x128xf32>
    %44 = tpu.matmul %41, %43, %cst_44 {dimension_numbers = #tpu.dot_dimension_numbers<[1], [0], [0], [1], [0, 0, 1, 1], [], []>} : vector<4x64xbf16>, vector<64x128xbf16>, vector<4x128xf32> -> vector<4x128xf32>
    %c0_45 = arith.constant 0 : index
    %c0_46 = arith.constant 0 : index
    %45 = vector.load %arg7[%c0_45, %c0_46] : memref<1x128xf32, #tpu.memory_space<vmem>>, vector<1x128xf32>
    %46 = vector.broadcast %45 : vector<1x128xf32> to vector<4x128xf32>
    %47 = arith.addf %44, %46 : vector<4x128xf32>
    %cst_47 = arith.constant 0.000000e+00 : f32
    %48 = vector.broadcast %cst_47 : f32 to vector<4x128xf32>
    %c0_48 = arith.constant 0 : index
    %c0_49 = arith.constant 0 : index
    %c0_50 = arith.constant 0 : index
    %49 = vector.load %arg9[%c0_48, %c0_49, %c0_50] : memref<4x4x128xbf16, #tpu.memory_space<vmem>>, vector<2x2x128xbf16>
    %50 = vector.shape_cast %49 : vector<2x2x128xbf16> to vector<4x128xbf16>
    %c0_51 = arith.constant 0 : index
    %c0_52 = arith.constant 0 : index
    %c0_53 = arith.constant 0 : index
    %51 = vector.load %arg4[%c0_51, %c0_52, %c0_53] : memref<9x128x128xbf16, #tpu.memory_space<vmem>>, vector<1x128x128xbf16>
    %52 = vector.shape_cast %51 : vector<1x128x128xbf16> to vector<128x128xbf16>
    %cst_54 = arith.constant dense<0.000000e+00> : vector<4x128xf32>
    %53 = tpu.matmul %50, %52, %cst_54 {dimension_numbers = #tpu.dot_dimension_numbers<[1], [0], [0], [1], [0, 0, 1, 1], [], []>} : vector<4x128xbf16>, vector<128x128xbf16>, vector<4x128xf32> -> vector<4x128xf32>
    %54 = arith.addf %48, %53 : vector<4x128xf32>
    %c0_55 = arith.constant 0 : index
    %c1_56 = arith.constant 1 : index
    %c0_57 = arith.constant 0 : index
    %55 = vector.load %arg9[%c0_55, %c1_56, %c0_57] : memref<4x4x128xbf16, #tpu.memory_space<vmem>>, vector<2x2x128xbf16>
    %56 = vector.shape_cast %55 : vector<2x2x128xbf16> to vector<4x128xbf16>
    %c1_58 = arith.constant 1 : index
    %c0_59 = arith.constant 0 : index
    %c0_60 = arith.constant 0 : index
    %57 = vector.load %arg4[%c1_58, %c0_59, %c0_60] : memref<9x128x128xbf16, #tpu.memory_space<vmem>>, vector<1x128x128xbf16>
    %58 = vector.shape_cast %57 : vector<1x128x128xbf16> to vector<128x128xbf16>
    %cst_61 = arith.constant dense<0.000000e+00> : vector<4x128xf32>
    %59 = tpu.matmul %56, %58, %cst_61 {dimension_numbers = #tpu.dot_dimension_numbers<[1], [0], [0], [1], [0, 0, 1, 1], [], []>} : vector<4x128xbf16>, vector<128x128xbf16>, vector<4x128xf32> -> vector<4x128xf32>
    %60 = arith.addf %54, %59 : vector<4x128xf32>
    %c0_62 = arith.constant 0 : index
    %c2_63 = arith.constant 2 : index
    %c0_64 = arith.constant 0 : index
    %61 = vector.load %arg9[%c0_62, %c2_63, %c0_64] : memref<4x4x128xbf16, #tpu.memory_space<vmem>>, vector<2x2x128xbf16>
    %62 = vector.shape_cast %61 : vector<2x2x128xbf16> to vector<4x128xbf16>
    %c2_65 = arith.constant 2 : index
    %c0_66 = arith.constant 0 : index
    %c0_67 = arith.constant 0 : index
    %63 = vector.load %arg4[%c2_65, %c0_66, %c0_67] : memref<9x128x128xbf16, #tpu.memory_space<vmem>>, vector<1x128x128xbf16>
    %64 = vector.shape_cast %63 : vector<1x128x128xbf16> to vector<128x128xbf16>
    %cst_68 = arith.constant dense<0.000000e+00> : vector<4x128xf32>
    %65 = tpu.matmul %62, %64, %cst_68 {dimension_numbers = #tpu.dot_dimension_numbers<[1], [0], [0], [1], [0, 0, 1, 1], [], []>} : vector<4x128xbf16>, vector<128x128xbf16>, vector<4x128xf32> -> vector<4x128xf32>
    %66 = arith.addf %60, %65 : vector<4x128xf32>
    %c1_69 = arith.constant 1 : index
    %c0_70 = arith.constant 0 : index
    %c0_71 = arith.constant 0 : index
    %67 = vector.load %arg9[%c1_69, %c0_70, %c0_71] : memref<4x4x128xbf16, #tpu.memory_space<vmem>>, vector<2x2x128xbf16>
    %68 = vector.shape_cast %67 : vector<2x2x128xbf16> to vector<4x128xbf16>
    %c3_72 = arith.constant 3 : index
    %c0_73 = arith.constant 0 : index
    %c0_74 = arith.constant 0 : index
    %69 = vector.load %arg4[%c3_72, %c0_73, %c0_74] : memref<9x128x128xbf16, #tpu.memory_space<vmem>>, vector<1x128x128xbf16>
    %70 = vector.shape_cast %69 : vector<1x128x128xbf16> to vector<128x128xbf16>
    %cst_75 = arith.constant dense<0.000000e+00> : vector<4x128xf32>
    %71 = tpu.matmul %68, %70, %cst_75 {dimension_numbers = #tpu.dot_dimension_numbers<[1], [0], [0], [1], [0, 0, 1, 1], [], []>} : vector<4x128xbf16>, vector<128x128xbf16>, vector<4x128xf32> -> vector<4x128xf32>
    %72 = arith.addf %66, %71 : vector<4x128xf32>
    %c1_76 = arith.constant 1 : index
    %c1_77 = arith.constant 1 : index
    %c0_78 = arith.constant 0 : index
    %73 = vector.load %arg9[%c1_76, %c1_77, %c0_78] : memref<4x4x128xbf16, #tpu.memory_space<vmem>>, vector<2x2x128xbf16>
    %74 = vector.shape_cast %73 : vector<2x2x128xbf16> to vector<4x128xbf16>
    %c4 = arith.constant 4 : index
    %c0_79 = arith.constant 0 : index
    %c0_80 = arith.constant 0 : index
    %75 = vector.load %arg4[%c4, %c0_79, %c0_80] : memref<9x128x128xbf16, #tpu.memory_space<vmem>>, vector<1x128x128xbf16>
    %76 = vector.shape_cast %75 : vector<1x128x128xbf16> to vector<128x128xbf16>
    %cst_81 = arith.constant dense<0.000000e+00> : vector<4x128xf32>
    %77 = tpu.matmul %74, %76, %cst_81 {dimension_numbers = #tpu.dot_dimension_numbers<[1], [0], [0], [1], [0, 0, 1, 1], [], []>} : vector<4x128xbf16>, vector<128x128xbf16>, vector<4x128xf32> -> vector<4x128xf32>
    %78 = arith.addf %72, %77 : vector<4x128xf32>
    %c1_82 = arith.constant 1 : index
    %c2_83 = arith.constant 2 : index
    %c0_84 = arith.constant 0 : index
    %79 = vector.load %arg9[%c1_82, %c2_83, %c0_84] : memref<4x4x128xbf16, #tpu.memory_space<vmem>>, vector<2x2x128xbf16>
    %80 = vector.shape_cast %79 : vector<2x2x128xbf16> to vector<4x128xbf16>
    %c5 = arith.constant 5 : index
    %c0_85 = arith.constant 0 : index
    %c0_86 = arith.constant 0 : index
    %81 = vector.load %arg4[%c5, %c0_85, %c0_86] : memref<9x128x128xbf16, #tpu.memory_space<vmem>>, vector<1x128x128xbf16>
    %82 = vector.shape_cast %81 : vector<1x128x128xbf16> to vector<128x128xbf16>
    %cst_87 = arith.constant dense<0.000000e+00> : vector<4x128xf32>
    %83 = tpu.matmul %80, %82, %cst_87 {dimension_numbers = #tpu.dot_dimension_numbers<[1], [0], [0], [1], [0, 0, 1, 1], [], []>} : vector<4x128xbf16>, vector<128x128xbf16>, vector<4x128xf32> -> vector<4x128xf32>
    %84 = arith.addf %78, %83 : vector<4x128xf32>
    %c2_88 = arith.constant 2 : index
    %c0_89 = arith.constant 0 : index
    %c0_90 = arith.constant 0 : index
    %85 = vector.load %arg9[%c2_88, %c0_89, %c0_90] : memref<4x4x128xbf16, #tpu.memory_space<vmem>>, vector<2x2x128xbf16>
    %86 = vector.shape_cast %85 : vector<2x2x128xbf16> to vector<4x128xbf16>
    %c6 = arith.constant 6 : index
    %c0_91 = arith.constant 0 : index
    %c0_92 = arith.constant 0 : index
    %87 = vector.load %arg4[%c6, %c0_91, %c0_92] : memref<9x128x128xbf16, #tpu.memory_space<vmem>>, vector<1x128x128xbf16>
    %88 = vector.shape_cast %87 : vector<1x128x128xbf16> to vector<128x128xbf16>
    %cst_93 = arith.constant dense<0.000000e+00> : vector<4x128xf32>
    %89 = tpu.matmul %86, %88, %cst_93 {dimension_numbers = #tpu.dot_dimension_numbers<[1], [0], [0], [1], [0, 0, 1, 1], [], []>} : vector<4x128xbf16>, vector<128x128xbf16>, vector<4x128xf32> -> vector<4x128xf32>
    %90 = arith.addf %84, %89 : vector<4x128xf32>
    %c2_94 = arith.constant 2 : index
    %c1_95 = arith.constant 1 : index
    %c0_96 = arith.constant 0 : index
    %91 = vector.load %arg9[%c2_94, %c1_95, %c0_96] : memref<4x4x128xbf16, #tpu.memory_space<vmem>>, vector<2x2x128xbf16>
    %92 = vector.shape_cast %91 : vector<2x2x128xbf16> to vector<4x128xbf16>
    %c7 = arith.constant 7 : index
    %c0_97 = arith.constant 0 : index
    %c0_98 = arith.constant 0 : index
    %93 = vector.load %arg4[%c7, %c0_97, %c0_98] : memref<9x128x128xbf16, #tpu.memory_space<vmem>>, vector<1x128x128xbf16>
    %94 = vector.shape_cast %93 : vector<1x128x128xbf16> to vector<128x128xbf16>
    %cst_99 = arith.constant dense<0.000000e+00> : vector<4x128xf32>
    %95 = tpu.matmul %92, %94, %cst_99 {dimension_numbers = #tpu.dot_dimension_numbers<[1], [0], [0], [1], [0, 0, 1, 1], [], []>} : vector<4x128xbf16>, vector<128x128xbf16>, vector<4x128xf32> -> vector<4x128xf32>
    %96 = arith.addf %90, %95 : vector<4x128xf32>
    %c2_100 = arith.constant 2 : index
    %c2_101 = arith.constant 2 : index
    %c0_102 = arith.constant 0 : index
    %97 = vector.load %arg9[%c2_100, %c2_101, %c0_102] : memref<4x4x128xbf16, #tpu.memory_space<vmem>>, vector<2x2x128xbf16>
    %98 = vector.shape_cast %97 : vector<2x2x128xbf16> to vector<4x128xbf16>
    %c8 = arith.constant 8 : index
    %c0_103 = arith.constant 0 : index
    %c0_104 = arith.constant 0 : index
    %99 = vector.load %arg4[%c8, %c0_103, %c0_104] : memref<9x128x128xbf16, #tpu.memory_space<vmem>>, vector<1x128x128xbf16>
    %100 = vector.shape_cast %99 : vector<1x128x128xbf16> to vector<128x128xbf16>
    %cst_105 = arith.constant dense<0.000000e+00> : vector<4x128xf32>
    %101 = tpu.matmul %98, %100, %cst_105 {dimension_numbers = #tpu.dot_dimension_numbers<[1], [0], [0], [1], [0, 0, 1, 1], [], []>} : vector<4x128xbf16>, vector<128x128xbf16>, vector<4x128xf32> -> vector<4x128xf32>
    %102 = arith.addf %96, %101 : vector<4x128xf32>
    %c0_106 = arith.constant 0 : index
    %c0_107 = arith.constant 0 : index
    %103 = vector.load %arg5[%c0_106, %c0_107] : memref<1x128xf32, #tpu.memory_space<vmem>>, vector<1x128xf32>
    %104 = vector.broadcast %103 : vector<1x128xf32> to vector<4x128xf32>
    %105 = arith.addf %102, %104 : vector<4x128xf32>
    %106 = arith.addf %105, %47 : vector<4x128xf32>
    %cst_108 = arith.constant 0.000000e+00 : f32
    %107 = vector.broadcast %cst_108 : f32 to vector<4x128xf32>
    %108 = arith.maximumf %106, %107 : vector<4x128xf32>
    %109 = arith.truncf %108 : vector<4x128xf32> to vector<4x128xbf16>
    %c0_109 = arith.constant 0 : index
    %c0_110 = arith.constant 0 : index
    %c0_111 = arith.constant 0 : index
    %110 = vector.load %arg8[%c0_109, %c0_110, %c0_111] : memref<1x4x128xbf16, #tpu.memory_space<vmem>>, vector<1x4x128xbf16>
    %111 = vector.shape_cast %110 : vector<1x4x128xbf16> to vector<4x128xbf16>
    %112 = vector.shape_cast %109 : vector<4x128xbf16> to vector<1x4x128xbf16>
    tpu.vector_store %arg8[%c0_109, %c0_110, %c0_111], %112 {strides = array<i32>} : memref<1x4x128xbf16, #tpu.memory_space<vmem>>, vector<1x4x128xbf16>,
    return
  }
  func.func @transform_0(%arg0: i32) -> (i32, i32, i32, i32) {
    %c0_i32 = arith.constant 0 : i32
    %c0_i32_0 = arith.constant 0 : i32
    %c0_i32_1 = arith.constant 0 : i32
    %c0_i32_2 = arith.constant 0 : i32
    return %arg0, %c0_i32, %c0_i32_0, %c0_i32_1 : i32, i32, i32, i32
  }
  func.func @transform_1(%arg0: i32) -> (i32, i32, i32) {
    %c0_i32 = arith.constant 0 : i32
    %c0_i32_0 = arith.constant 0 : i32
    %c0_i32_1 = arith.constant 0 : i32
    %c0_i32_2 = arith.constant 0 : i32
    return %c0_i32, %c0_i32_0, %c0_i32_1 : i32, i32, i32
  }
  func.func @transform_2(%arg0: i32) -> (i32, i32) {
    %c0_i32 = arith.constant 0 : i32
    %c0_i32_0 = arith.constant 0 : i32
    %c0_i32_1 = arith.constant 0 : i32
    return %c0_i32, %c0_i32_0 : i32, i32
  }
  func.func @transform_3(%arg0: i32) -> (i32, i32, i32) {
    %c0_i32 = arith.constant 0 : i32
    %c0_i32_0 = arith.constant 0 : i32
    %c0_i32_1 = arith.constant 0 : i32
    %c0_i32_2 = arith.constant 0 : i32
    return %c0_i32, %c0_i32_0, %c0_i32_1 : i32, i32, i32
  }
  func.func @transform_4(%arg0: i32) -> (i32, i32) {
    %c0_i32 = arith.constant 0 : i32
    %c0_i32_0 = arith.constant 0 : i32
    %c0_i32_1 = arith.constant 0 : i32
    return %c0_i32, %c0_i32_0 : i32, i32
  }
  func.func @transform_5(%arg0: i32) -> (i32, i32, i32) {
    %c0_i32 = arith.constant 0 : i32
    %c0_i32_0 = arith.constant 0 : i32
    %c0_i32_1 = arith.constant 0 : i32
    %c0_i32_2 = arith.constant 0 : i32
    return %c0_i32, %c0_i32_0, %c0_i32_1 : i32, i32, i32
  }
  func.func @transform_6(%arg0: i32) -> (i32, i32) {
    %c0_i32 = arith.constant 0 : i32
    %c0_i32_0 = arith.constant 0 : i32
    %c0_i32_1 = arith.constant 0 : i32
    return %c0_i32, %c0_i32_0 : i32, i32
  }
  func.func @transform_7(%arg0: i32) -> (i32, i32, i32) {
    %c0_i32 = arith.constant 0 : i32
    %c0_i32_0 = arith.constant 0 : i32
    %c0_i32_1 = arith.constant 0 : i32
    return %arg0, %c0_i32, %c0_i32_0 : i32, i32, i32
  }
}

module attributes {stable_mosaic.version = 11 : i64} {
  func.func @_block_kernel(%arg0: i32, %arg1: memref<1x4x4x128xbf16, #tpu.memory_space<vmem>>, %arg2: memref<9x128x128xbf16, #tpu.memory_space<vmem>>, %arg3: memref<1x128xf32, #tpu.memory_space<vmem>>, %arg4: memref<9x128x128xbf16, #tpu.memory_space<vmem>>, %arg5: memref<1x128xf32, #tpu.memory_space<vmem>>, %arg6: memref<1x4x128xbf16, #tpu.memory_space<vmem>>, %arg7: memref<4x4x128xbf16, #tpu.memory_space<vmem>>) attributes {dimension_semantics = [#tpu.dimension_semantics<parallel>], iteration_bounds = array<i64: 2>, scalar_prefetch = 0 : i64, scratch_operands = 1 : i64, tpu.core_type = #tpu.core_type<tc>, window_params = [{transform_indices = @transform_0, window_bounds = array<i64: 1, 4, 4, 128>}, {pipeline_mode = #tpu.pipeline_mode<synchronous>, transform_indices = @transform_1, window_bounds = array<i64: 9, 128, 128>}, {pipeline_mode = #tpu.pipeline_mode<synchronous>, transform_indices = @transform_2, window_bounds = array<i64: 1, 128>}, {pipeline_mode = #tpu.pipeline_mode<synchronous>, transform_indices = @transform_3, window_bounds = array<i64: 9, 128, 128>}, {pipeline_mode = #tpu.pipeline_mode<synchronous>, transform_indices = @transform_4, window_bounds = array<i64: 1, 128>}, {transform_indices = @transform_5, window_bounds = array<i64: 1, 4, 128>}]} {
    %cst = arith.constant 0.000000e+00 : f32
    %0 = vector.broadcast %cst : f32 to vector<4x128xf32>
    %c0 = arith.constant 0 : index
    %c0_0 = arith.constant 0 : index
    %c0_1 = arith.constant 0 : index
    %c0_2 = arith.constant 0 : index
    %1 = vector.load %arg1[%c0, %c0_0, %c0_1, %c0_2] : memref<1x4x4x128xbf16, #tpu.memory_space<vmem>>, vector<1x2x2x128xbf16>
    %2 = vector.shape_cast %1 : vector<1x2x2x128xbf16> to vector<2x2x128xbf16>
    %3 = vector.shape_cast %2 : vector<2x2x128xbf16> to vector<4x128xbf16>
    %c0_3 = arith.constant 0 : index
    %c0_4 = arith.constant 0 : index
    %c0_5 = arith.constant 0 : index
    %4 = vector.load %arg2[%c0_3, %c0_4, %c0_5] : memref<9x128x128xbf16, #tpu.memory_space<vmem>>, vector<1x128x128xbf16>
    %5 = vector.shape_cast %4 : vector<1x128x128xbf16> to vector<128x128xbf16>
    %cst_6 = arith.constant dense<0.000000e+00> : vector<4x128xf32>
    %6 = tpu.matmul %3, %5, %cst_6 {dimension_numbers = #tpu.dot_dimension_numbers<[1], [0], [0], [1], [0, 0, 1, 1], [], []>} : vector<4x128xbf16>, vector<128x128xbf16>, vector<4x128xf32> -> vector<4x128xf32>
    %7 = arith.addf %0, %6 : vector<4x128xf32>
    %c0_7 = arith.constant 0 : index
    %c0_8 = arith.constant 0 : index
    %c1 = arith.constant 1 : index
    %c0_9 = arith.constant 0 : index
    %8 = vector.load %arg1[%c0_7, %c0_8, %c1, %c0_9] : memref<1x4x4x128xbf16, #tpu.memory_space<vmem>>, vector<1x2x2x128xbf16>
    %9 = vector.shape_cast %8 : vector<1x2x2x128xbf16> to vector<2x2x128xbf16>
    %10 = vector.shape_cast %9 : vector<2x2x128xbf16> to vector<4x128xbf16>
    %c1_10 = arith.constant 1 : index
    %c0_11 = arith.constant 0 : index
    %c0_12 = arith.constant 0 : index
    %11 = vector.load %arg2[%c1_10, %c0_11, %c0_12] : memref<9x128x128xbf16, #tpu.memory_space<vmem>>, vector<1x128x128xbf16>
    %12 = vector.shape_cast %11 : vector<1x128x128xbf16> to vector<128x128xbf16>
    %cst_13 = arith.constant dense<0.000000e+00> : vector<4x128xf32>
    %13 = tpu.matmul %10, %12, %cst_13 {dimension_numbers = #tpu.dot_dimension_numbers<[1], [0], [0], [1], [0, 0, 1, 1], [], []>} : vector<4x128xbf16>, vector<128x128xbf16>, vector<4x128xf32> -> vector<4x128xf32>
    %14 = arith.addf %7, %13 : vector<4x128xf32>
    %c0_14 = arith.constant 0 : index
    %c0_15 = arith.constant 0 : index
    %c2 = arith.constant 2 : index
    %c0_16 = arith.constant 0 : index
    %15 = vector.load %arg1[%c0_14, %c0_15, %c2, %c0_16] : memref<1x4x4x128xbf16, #tpu.memory_space<vmem>>, vector<1x2x2x128xbf16>
    %16 = vector.shape_cast %15 : vector<1x2x2x128xbf16> to vector<2x2x128xbf16>
    %17 = vector.shape_cast %16 : vector<2x2x128xbf16> to vector<4x128xbf16>
    %c2_17 = arith.constant 2 : index
    %c0_18 = arith.constant 0 : index
    %c0_19 = arith.constant 0 : index
    %18 = vector.load %arg2[%c2_17, %c0_18, %c0_19] : memref<9x128x128xbf16, #tpu.memory_space<vmem>>, vector<1x128x128xbf16>
    %19 = vector.shape_cast %18 : vector<1x128x128xbf16> to vector<128x128xbf16>
    %cst_20 = arith.constant dense<0.000000e+00> : vector<4x128xf32>
    %20 = tpu.matmul %17, %19, %cst_20 {dimension_numbers = #tpu.dot_dimension_numbers<[1], [0], [0], [1], [0, 0, 1, 1], [], []>} : vector<4x128xbf16>, vector<128x128xbf16>, vector<4x128xf32> -> vector<4x128xf32>
    %21 = arith.addf %14, %20 : vector<4x128xf32>
    %c0_21 = arith.constant 0 : index
    %c1_22 = arith.constant 1 : index
    %c0_23 = arith.constant 0 : index
    %c0_24 = arith.constant 0 : index
    %22 = vector.load %arg1[%c0_21, %c1_22, %c0_23, %c0_24] : memref<1x4x4x128xbf16, #tpu.memory_space<vmem>>, vector<1x2x2x128xbf16>
    %23 = vector.shape_cast %22 : vector<1x2x2x128xbf16> to vector<2x2x128xbf16>
    %24 = vector.shape_cast %23 : vector<2x2x128xbf16> to vector<4x128xbf16>
    %c3 = arith.constant 3 : index
    %c0_25 = arith.constant 0 : index
    %c0_26 = arith.constant 0 : index
    %25 = vector.load %arg2[%c3, %c0_25, %c0_26] : memref<9x128x128xbf16, #tpu.memory_space<vmem>>, vector<1x128x128xbf16>
    %26 = vector.shape_cast %25 : vector<1x128x128xbf16> to vector<128x128xbf16>
    %cst_27 = arith.constant dense<0.000000e+00> : vector<4x128xf32>
    %27 = tpu.matmul %24, %26, %cst_27 {dimension_numbers = #tpu.dot_dimension_numbers<[1], [0], [0], [1], [0, 0, 1, 1], [], []>} : vector<4x128xbf16>, vector<128x128xbf16>, vector<4x128xf32> -> vector<4x128xf32>
    %28 = arith.addf %21, %27 : vector<4x128xf32>
    %c0_28 = arith.constant 0 : index
    %c1_29 = arith.constant 1 : index
    %c1_30 = arith.constant 1 : index
    %c0_31 = arith.constant 0 : index
    %29 = vector.load %arg1[%c0_28, %c1_29, %c1_30, %c0_31] : memref<1x4x4x128xbf16, #tpu.memory_space<vmem>>, vector<1x2x2x128xbf16>
    %30 = vector.shape_cast %29 : vector<1x2x2x128xbf16> to vector<2x2x128xbf16>
    %31 = vector.shape_cast %30 : vector<2x2x128xbf16> to vector<4x128xbf16>
    %c4 = arith.constant 4 : index
    %c0_32 = arith.constant 0 : index
    %c0_33 = arith.constant 0 : index
    %32 = vector.load %arg2[%c4, %c0_32, %c0_33] : memref<9x128x128xbf16, #tpu.memory_space<vmem>>, vector<1x128x128xbf16>
    %33 = vector.shape_cast %32 : vector<1x128x128xbf16> to vector<128x128xbf16>
    %cst_34 = arith.constant dense<0.000000e+00> : vector<4x128xf32>
    %34 = tpu.matmul %31, %33, %cst_34 {dimension_numbers = #tpu.dot_dimension_numbers<[1], [0], [0], [1], [0, 0, 1, 1], [], []>} : vector<4x128xbf16>, vector<128x128xbf16>, vector<4x128xf32> -> vector<4x128xf32>
    %35 = arith.addf %28, %34 : vector<4x128xf32>
    %c0_35 = arith.constant 0 : index
    %c1_36 = arith.constant 1 : index
    %c2_37 = arith.constant 2 : index
    %c0_38 = arith.constant 0 : index
    %36 = vector.load %arg1[%c0_35, %c1_36, %c2_37, %c0_38] : memref<1x4x4x128xbf16, #tpu.memory_space<vmem>>, vector<1x2x2x128xbf16>
    %37 = vector.shape_cast %36 : vector<1x2x2x128xbf16> to vector<2x2x128xbf16>
    %38 = vector.shape_cast %37 : vector<2x2x128xbf16> to vector<4x128xbf16>
    %c5 = arith.constant 5 : index
    %c0_39 = arith.constant 0 : index
    %c0_40 = arith.constant 0 : index
    %39 = vector.load %arg2[%c5, %c0_39, %c0_40] : memref<9x128x128xbf16, #tpu.memory_space<vmem>>, vector<1x128x128xbf16>
    %40 = vector.shape_cast %39 : vector<1x128x128xbf16> to vector<128x128xbf16>
    %cst_41 = arith.constant dense<0.000000e+00> : vector<4x128xf32>
    %41 = tpu.matmul %38, %40, %cst_41 {dimension_numbers = #tpu.dot_dimension_numbers<[1], [0], [0], [1], [0, 0, 1, 1], [], []>} : vector<4x128xbf16>, vector<128x128xbf16>, vector<4x128xf32> -> vector<4x128xf32>
    %42 = arith.addf %35, %41 : vector<4x128xf32>
    %c0_42 = arith.constant 0 : index
    %c2_43 = arith.constant 2 : index
    %c0_44 = arith.constant 0 : index
    %c0_45 = arith.constant 0 : index
    %43 = vector.load %arg1[%c0_42, %c2_43, %c0_44, %c0_45] : memref<1x4x4x128xbf16, #tpu.memory_space<vmem>>, vector<1x2x2x128xbf16>
    %44 = vector.shape_cast %43 : vector<1x2x2x128xbf16> to vector<2x2x128xbf16>
    %45 = vector.shape_cast %44 : vector<2x2x128xbf16> to vector<4x128xbf16>
    %c6 = arith.constant 6 : index
    %c0_46 = arith.constant 0 : index
    %c0_47 = arith.constant 0 : index
    %46 = vector.load %arg2[%c6, %c0_46, %c0_47] : memref<9x128x128xbf16, #tpu.memory_space<vmem>>, vector<1x128x128xbf16>
    %47 = vector.shape_cast %46 : vector<1x128x128xbf16> to vector<128x128xbf16>
    %cst_48 = arith.constant dense<0.000000e+00> : vector<4x128xf32>
    %48 = tpu.matmul %45, %47, %cst_48 {dimension_numbers = #tpu.dot_dimension_numbers<[1], [0], [0], [1], [0, 0, 1, 1], [], []>} : vector<4x128xbf16>, vector<128x128xbf16>, vector<4x128xf32> -> vector<4x128xf32>
    %49 = arith.addf %42, %48 : vector<4x128xf32>
    %c0_49 = arith.constant 0 : index
    %c2_50 = arith.constant 2 : index
    %c1_51 = arith.constant 1 : index
    %c0_52 = arith.constant 0 : index
    %50 = vector.load %arg1[%c0_49, %c2_50, %c1_51, %c0_52] : memref<1x4x4x128xbf16, #tpu.memory_space<vmem>>, vector<1x2x2x128xbf16>
    %51 = vector.shape_cast %50 : vector<1x2x2x128xbf16> to vector<2x2x128xbf16>
    %52 = vector.shape_cast %51 : vector<2x2x128xbf16> to vector<4x128xbf16>
    %c7 = arith.constant 7 : index
    %c0_53 = arith.constant 0 : index
    %c0_54 = arith.constant 0 : index
    %53 = vector.load %arg2[%c7, %c0_53, %c0_54] : memref<9x128x128xbf16, #tpu.memory_space<vmem>>, vector<1x128x128xbf16>
    %54 = vector.shape_cast %53 : vector<1x128x128xbf16> to vector<128x128xbf16>
    %cst_55 = arith.constant dense<0.000000e+00> : vector<4x128xf32>
    %55 = tpu.matmul %52, %54, %cst_55 {dimension_numbers = #tpu.dot_dimension_numbers<[1], [0], [0], [1], [0, 0, 1, 1], [], []>} : vector<4x128xbf16>, vector<128x128xbf16>, vector<4x128xf32> -> vector<4x128xf32>
    %56 = arith.addf %49, %55 : vector<4x128xf32>
    %c0_56 = arith.constant 0 : index
    %c2_57 = arith.constant 2 : index
    %c2_58 = arith.constant 2 : index
    %c0_59 = arith.constant 0 : index
    %57 = vector.load %arg1[%c0_56, %c2_57, %c2_58, %c0_59] : memref<1x4x4x128xbf16, #tpu.memory_space<vmem>>, vector<1x2x2x128xbf16>
    %58 = vector.shape_cast %57 : vector<1x2x2x128xbf16> to vector<2x2x128xbf16>
    %59 = vector.shape_cast %58 : vector<2x2x128xbf16> to vector<4x128xbf16>
    %c8 = arith.constant 8 : index
    %c0_60 = arith.constant 0 : index
    %c0_61 = arith.constant 0 : index
    %60 = vector.load %arg2[%c8, %c0_60, %c0_61] : memref<9x128x128xbf16, #tpu.memory_space<vmem>>, vector<1x128x128xbf16>
    %61 = vector.shape_cast %60 : vector<1x128x128xbf16> to vector<128x128xbf16>
    %cst_62 = arith.constant dense<0.000000e+00> : vector<4x128xf32>
    %62 = tpu.matmul %59, %61, %cst_62 {dimension_numbers = #tpu.dot_dimension_numbers<[1], [0], [0], [1], [0, 0, 1, 1], [], []>} : vector<4x128xbf16>, vector<128x128xbf16>, vector<4x128xf32> -> vector<4x128xf32>
    %63 = arith.addf %56, %62 : vector<4x128xf32>
    %c0_63 = arith.constant 0 : index
    %c0_64 = arith.constant 0 : index
    %64 = vector.load %arg3[%c0_63, %c0_64] : memref<1x128xf32, #tpu.memory_space<vmem>>, vector<1x128xf32>
    %65 = vector.broadcast %64 : vector<1x128xf32> to vector<4x128xf32>
    %66 = arith.addf %63, %65 : vector<4x128xf32>
    %cst_65 = arith.constant 0.000000e+00 : f32
    %67 = vector.broadcast %cst_65 : f32 to vector<4x128xf32>
    %68 = arith.maximumf %66, %67 : vector<4x128xf32>
    %cst_66 = arith.constant 0.000000e+00 : bf16
    %69 = vector.broadcast %cst_66 : bf16 to vector<4x4x128xbf16>
    %c0_67 = arith.constant 0 : index
    %c0_68 = arith.constant 0 : index
    %c0_69 = arith.constant 0 : index
    %70 = vector.load %arg7[%c0_67, %c0_68, %c0_69] : memref<4x4x128xbf16, #tpu.memory_space<vmem>>, vector<4x4x128xbf16>
    tpu.vector_store %arg7[%c0_67, %c0_68, %c0_69], %69 {strides = array<i32>} : memref<4x4x128xbf16, #tpu.memory_space<vmem>>, vector<4x4x128xbf16>,
    %71 = vector.shape_cast %68 : vector<4x128xf32> to vector<2x2x128xf32>
    %72 = arith.truncf %71 : vector<2x2x128xf32> to vector<2x2x128xbf16>
    %c1_70 = arith.constant 1 : index
    %c1_71 = arith.constant 1 : index
    %c0_72 = arith.constant 0 : index
    %73 = vector.load %arg7[%c1_70, %c1_71, %c0_72] : memref<4x4x128xbf16, #tpu.memory_space<vmem>>, vector<2x2x128xbf16>
    tpu.vector_store %arg7[%c1_70, %c1_71, %c0_72], %72 {strides = array<i32>} : memref<4x4x128xbf16, #tpu.memory_space<vmem>>, vector<2x2x128xbf16>,
    %c0_73 = arith.constant 0 : index
    %c1_74 = arith.constant 1 : index
    %c1_75 = arith.constant 1 : index
    %c0_76 = arith.constant 0 : index
    %74 = vector.load %arg1[%c0_73, %c1_74, %c1_75, %c0_76] : memref<1x4x4x128xbf16, #tpu.memory_space<vmem>>, vector<1x2x2x128xbf16>
    %75 = vector.shape_cast %74 : vector<1x2x2x128xbf16> to vector<2x2x128xbf16>
    %76 = vector.shape_cast %75 : vector<2x2x128xbf16> to vector<4x128xbf16>
    %77 = arith.extf %76 : vector<4x128xbf16> to vector<4x128xf32>
    %cst_77 = arith.constant 0.000000e+00 : f32
    %78 = vector.broadcast %cst_77 : f32 to vector<4x128xf32>
    %c0_78 = arith.constant 0 : index
    %c0_79 = arith.constant 0 : index
    %c0_80 = arith.constant 0 : index
    %79 = vector.load %arg7[%c0_78, %c0_79, %c0_80] : memref<4x4x128xbf16, #tpu.memory_space<vmem>>, vector<2x2x128xbf16>
    %80 = vector.shape_cast %79 : vector<2x2x128xbf16> to vector<4x128xbf16>
    %c0_81 = arith.constant 0 : index
    %c0_82 = arith.constant 0 : index
    %c0_83 = arith.constant 0 : index
    %81 = vector.load %arg4[%c0_81, %c0_82, %c0_83] : memref<9x128x128xbf16, #tpu.memory_space<vmem>>, vector<1x128x128xbf16>
    %82 = vector.shape_cast %81 : vector<1x128x128xbf16> to vector<128x128xbf16>
    %cst_84 = arith.constant dense<0.000000e+00> : vector<4x128xf32>
    %83 = tpu.matmul %80, %82, %cst_84 {dimension_numbers = #tpu.dot_dimension_numbers<[1], [0], [0], [1], [0, 0, 1, 1], [], []>} : vector<4x128xbf16>, vector<128x128xbf16>, vector<4x128xf32> -> vector<4x128xf32>
    %84 = arith.addf %78, %83 : vector<4x128xf32>
    %c0_85 = arith.constant 0 : index
    %c1_86 = arith.constant 1 : index
    %c0_87 = arith.constant 0 : index
    %85 = vector.load %arg7[%c0_85, %c1_86, %c0_87] : memref<4x4x128xbf16, #tpu.memory_space<vmem>>, vector<2x2x128xbf16>
    %86 = vector.shape_cast %85 : vector<2x2x128xbf16> to vector<4x128xbf16>
    %c1_88 = arith.constant 1 : index
    %c0_89 = arith.constant 0 : index
    %c0_90 = arith.constant 0 : index
    %87 = vector.load %arg4[%c1_88, %c0_89, %c0_90] : memref<9x128x128xbf16, #tpu.memory_space<vmem>>, vector<1x128x128xbf16>
    %88 = vector.shape_cast %87 : vector<1x128x128xbf16> to vector<128x128xbf16>
    %cst_91 = arith.constant dense<0.000000e+00> : vector<4x128xf32>
    %89 = tpu.matmul %86, %88, %cst_91 {dimension_numbers = #tpu.dot_dimension_numbers<[1], [0], [0], [1], [0, 0, 1, 1], [], []>} : vector<4x128xbf16>, vector<128x128xbf16>, vector<4x128xf32> -> vector<4x128xf32>
    %90 = arith.addf %84, %89 : vector<4x128xf32>
    %c0_92 = arith.constant 0 : index
    %c2_93 = arith.constant 2 : index
    %c0_94 = arith.constant 0 : index
    %91 = vector.load %arg7[%c0_92, %c2_93, %c0_94] : memref<4x4x128xbf16, #tpu.memory_space<vmem>>, vector<2x2x128xbf16>
    %92 = vector.shape_cast %91 : vector<2x2x128xbf16> to vector<4x128xbf16>
    %c2_95 = arith.constant 2 : index
    %c0_96 = arith.constant 0 : index
    %c0_97 = arith.constant 0 : index
    %93 = vector.load %arg4[%c2_95, %c0_96, %c0_97] : memref<9x128x128xbf16, #tpu.memory_space<vmem>>, vector<1x128x128xbf16>
    %94 = vector.shape_cast %93 : vector<1x128x128xbf16> to vector<128x128xbf16>
    %cst_98 = arith.constant dense<0.000000e+00> : vector<4x128xf32>
    %95 = tpu.matmul %92, %94, %cst_98 {dimension_numbers = #tpu.dot_dimension_numbers<[1], [0], [0], [1], [0, 0, 1, 1], [], []>} : vector<4x128xbf16>, vector<128x128xbf16>, vector<4x128xf32> -> vector<4x128xf32>
    %96 = arith.addf %90, %95 : vector<4x128xf32>
    %c1_99 = arith.constant 1 : index
    %c0_100 = arith.constant 0 : index
    %c0_101 = arith.constant 0 : index
    %97 = vector.load %arg7[%c1_99, %c0_100, %c0_101] : memref<4x4x128xbf16, #tpu.memory_space<vmem>>, vector<2x2x128xbf16>
    %98 = vector.shape_cast %97 : vector<2x2x128xbf16> to vector<4x128xbf16>
    %c3_102 = arith.constant 3 : index
    %c0_103 = arith.constant 0 : index
    %c0_104 = arith.constant 0 : index
    %99 = vector.load %arg4[%c3_102, %c0_103, %c0_104] : memref<9x128x128xbf16, #tpu.memory_space<vmem>>, vector<1x128x128xbf16>
    %100 = vector.shape_cast %99 : vector<1x128x128xbf16> to vector<128x128xbf16>
    %cst_105 = arith.constant dense<0.000000e+00> : vector<4x128xf32>
    %101 = tpu.matmul %98, %100, %cst_105 {dimension_numbers = #tpu.dot_dimension_numbers<[1], [0], [0], [1], [0, 0, 1, 1], [], []>} : vector<4x128xbf16>, vector<128x128xbf16>, vector<4x128xf32> -> vector<4x128xf32>
    %102 = arith.addf %96, %101 : vector<4x128xf32>
    %c1_106 = arith.constant 1 : index
    %c1_107 = arith.constant 1 : index
    %c0_108 = arith.constant 0 : index
    %103 = vector.load %arg7[%c1_106, %c1_107, %c0_108] : memref<4x4x128xbf16, #tpu.memory_space<vmem>>, vector<2x2x128xbf16>
    %104 = vector.shape_cast %103 : vector<2x2x128xbf16> to vector<4x128xbf16>
    %c4_109 = arith.constant 4 : index
    %c0_110 = arith.constant 0 : index
    %c0_111 = arith.constant 0 : index
    %105 = vector.load %arg4[%c4_109, %c0_110, %c0_111] : memref<9x128x128xbf16, #tpu.memory_space<vmem>>, vector<1x128x128xbf16>
    %106 = vector.shape_cast %105 : vector<1x128x128xbf16> to vector<128x128xbf16>
    %cst_112 = arith.constant dense<0.000000e+00> : vector<4x128xf32>
    %107 = tpu.matmul %104, %106, %cst_112 {dimension_numbers = #tpu.dot_dimension_numbers<[1], [0], [0], [1], [0, 0, 1, 1], [], []>} : vector<4x128xbf16>, vector<128x128xbf16>, vector<4x128xf32> -> vector<4x128xf32>
    %108 = arith.addf %102, %107 : vector<4x128xf32>
    %c1_113 = arith.constant 1 : index
    %c2_114 = arith.constant 2 : index
    %c0_115 = arith.constant 0 : index
    %109 = vector.load %arg7[%c1_113, %c2_114, %c0_115] : memref<4x4x128xbf16, #tpu.memory_space<vmem>>, vector<2x2x128xbf16>
    %110 = vector.shape_cast %109 : vector<2x2x128xbf16> to vector<4x128xbf16>
    %c5_116 = arith.constant 5 : index
    %c0_117 = arith.constant 0 : index
    %c0_118 = arith.constant 0 : index
    %111 = vector.load %arg4[%c5_116, %c0_117, %c0_118] : memref<9x128x128xbf16, #tpu.memory_space<vmem>>, vector<1x128x128xbf16>
    %112 = vector.shape_cast %111 : vector<1x128x128xbf16> to vector<128x128xbf16>
    %cst_119 = arith.constant dense<0.000000e+00> : vector<4x128xf32>
    %113 = tpu.matmul %110, %112, %cst_119 {dimension_numbers = #tpu.dot_dimension_numbers<[1], [0], [0], [1], [0, 0, 1, 1], [], []>} : vector<4x128xbf16>, vector<128x128xbf16>, vector<4x128xf32> -> vector<4x128xf32>
    %114 = arith.addf %108, %113 : vector<4x128xf32>
    %c2_120 = arith.constant 2 : index
    %c0_121 = arith.constant 0 : index
    %c0_122 = arith.constant 0 : index
    %115 = vector.load %arg7[%c2_120, %c0_121, %c0_122] : memref<4x4x128xbf16, #tpu.memory_space<vmem>>, vector<2x2x128xbf16>
    %116 = vector.shape_cast %115 : vector<2x2x128xbf16> to vector<4x128xbf16>
    %c6_123 = arith.constant 6 : index
    %c0_124 = arith.constant 0 : index
    %c0_125 = arith.constant 0 : index
    %117 = vector.load %arg4[%c6_123, %c0_124, %c0_125] : memref<9x128x128xbf16, #tpu.memory_space<vmem>>, vector<1x128x128xbf16>
    %118 = vector.shape_cast %117 : vector<1x128x128xbf16> to vector<128x128xbf16>
    %cst_126 = arith.constant dense<0.000000e+00> : vector<4x128xf32>
    %119 = tpu.matmul %116, %118, %cst_126 {dimension_numbers = #tpu.dot_dimension_numbers<[1], [0], [0], [1], [0, 0, 1, 1], [], []>} : vector<4x128xbf16>, vector<128x128xbf16>, vector<4x128xf32> -> vector<4x128xf32>
    %120 = arith.addf %114, %119 : vector<4x128xf32>
    %c2_127 = arith.constant 2 : index
    %c1_128 = arith.constant 1 : index
    %c0_129 = arith.constant 0 : index
    %121 = vector.load %arg7[%c2_127, %c1_128, %c0_129] : memref<4x4x128xbf16, #tpu.memory_space<vmem>>, vector<2x2x128xbf16>
    %122 = vector.shape_cast %121 : vector<2x2x128xbf16> to vector<4x128xbf16>
    %c7_130 = arith.constant 7 : index
    %c0_131 = arith.constant 0 : index
    %c0_132 = arith.constant 0 : index
    %123 = vector.load %arg4[%c7_130, %c0_131, %c0_132] : memref<9x128x128xbf16, #tpu.memory_space<vmem>>, vector<1x128x128xbf16>
    %124 = vector.shape_cast %123 : vector<1x128x128xbf16> to vector<128x128xbf16>
    %cst_133 = arith.constant dense<0.000000e+00> : vector<4x128xf32>
    %125 = tpu.matmul %122, %124, %cst_133 {dimension_numbers = #tpu.dot_dimension_numbers<[1], [0], [0], [1], [0, 0, 1, 1], [], []>} : vector<4x128xbf16>, vector<128x128xbf16>, vector<4x128xf32> -> vector<4x128xf32>
    %126 = arith.addf %120, %125 : vector<4x128xf32>
    %c2_134 = arith.constant 2 : index
    %c2_135 = arith.constant 2 : index
    %c0_136 = arith.constant 0 : index
    %127 = vector.load %arg7[%c2_134, %c2_135, %c0_136] : memref<4x4x128xbf16, #tpu.memory_space<vmem>>, vector<2x2x128xbf16>
    %128 = vector.shape_cast %127 : vector<2x2x128xbf16> to vector<4x128xbf16>
    %c8_137 = arith.constant 8 : index
    %c0_138 = arith.constant 0 : index
    %c0_139 = arith.constant 0 : index
    %129 = vector.load %arg4[%c8_137, %c0_138, %c0_139] : memref<9x128x128xbf16, #tpu.memory_space<vmem>>, vector<1x128x128xbf16>
    %130 = vector.shape_cast %129 : vector<1x128x128xbf16> to vector<128x128xbf16>
    %cst_140 = arith.constant dense<0.000000e+00> : vector<4x128xf32>
    %131 = tpu.matmul %128, %130, %cst_140 {dimension_numbers = #tpu.dot_dimension_numbers<[1], [0], [0], [1], [0, 0, 1, 1], [], []>} : vector<4x128xbf16>, vector<128x128xbf16>, vector<4x128xf32> -> vector<4x128xf32>
    %132 = arith.addf %126, %131 : vector<4x128xf32>
    %c0_141 = arith.constant 0 : index
    %c0_142 = arith.constant 0 : index
    %133 = vector.load %arg5[%c0_141, %c0_142] : memref<1x128xf32, #tpu.memory_space<vmem>>, vector<1x128xf32>
    %134 = vector.broadcast %133 : vector<1x128xf32> to vector<4x128xf32>
    %135 = arith.addf %132, %134 : vector<4x128xf32>
    %136 = arith.addf %135, %77 : vector<4x128xf32>
    %cst_143 = arith.constant 0.000000e+00 : f32
    %137 = vector.broadcast %cst_143 : f32 to vector<4x128xf32>
    %138 = arith.maximumf %136, %137 : vector<4x128xf32>
    %139 = arith.truncf %138 : vector<4x128xf32> to vector<4x128xbf16>
    %c0_144 = arith.constant 0 : index
    %c0_145 = arith.constant 0 : index
    %c0_146 = arith.constant 0 : index
    %140 = vector.load %arg6[%c0_144, %c0_145, %c0_146] : memref<1x4x128xbf16, #tpu.memory_space<vmem>>, vector<1x4x128xbf16>
    %141 = vector.shape_cast %140 : vector<1x4x128xbf16> to vector<4x128xbf16>
    %142 = vector.shape_cast %139 : vector<4x128xbf16> to vector<1x4x128xbf16>
    tpu.vector_store %arg6[%c0_144, %c0_145, %c0_146], %142 {strides = array<i32>} : memref<1x4x128xbf16, #tpu.memory_space<vmem>>, vector<1x4x128xbf16>,
    return
  }
  func.func @transform_0(%arg0: i32) -> (i32, i32, i32, i32) {
    %c0_i32 = arith.constant 0 : i32
    %c0_i32_0 = arith.constant 0 : i32
    %c0_i32_1 = arith.constant 0 : i32
    %c0_i32_2 = arith.constant 0 : i32
    return %arg0, %c0_i32, %c0_i32_0, %c0_i32_1 : i32, i32, i32, i32
  }
  func.func @transform_1(%arg0: i32) -> (i32, i32, i32) {
    %c0_i32 = arith.constant 0 : i32
    %c0_i32_0 = arith.constant 0 : i32
    %c0_i32_1 = arith.constant 0 : i32
    %c0_i32_2 = arith.constant 0 : i32
    return %c0_i32, %c0_i32_0, %c0_i32_1 : i32, i32, i32
  }
  func.func @transform_2(%arg0: i32) -> (i32, i32) {
    %c0_i32 = arith.constant 0 : i32
    %c0_i32_0 = arith.constant 0 : i32
    %c0_i32_1 = arith.constant 0 : i32
    return %c0_i32, %c0_i32_0 : i32, i32
  }
  func.func @transform_3(%arg0: i32) -> (i32, i32, i32) {
    %c0_i32 = arith.constant 0 : i32
    %c0_i32_0 = arith.constant 0 : i32
    %c0_i32_1 = arith.constant 0 : i32
    %c0_i32_2 = arith.constant 0 : i32
    return %c0_i32, %c0_i32_0, %c0_i32_1 : i32, i32, i32
  }
  func.func @transform_4(%arg0: i32) -> (i32, i32) {
    %c0_i32 = arith.constant 0 : i32
    %c0_i32_0 = arith.constant 0 : i32
    %c0_i32_1 = arith.constant 0 : i32
    return %c0_i32, %c0_i32_0 : i32, i32
  }
  func.func @transform_5(%arg0: i32) -> (i32, i32, i32) {
    %c0_i32 = arith.constant 0 : i32
    %c0_i32_0 = arith.constant 0 : i32
    %c0_i32_1 = arith.constant 0 : i32
    return %arg0, %c0_i32, %c0_i32_0 : i32, i32, i32
  }
}

</mosaic_0001>

<llo_original>
// kernel: backbone_base_forward.7
$region0: #{backbone_base_forward.7}
  #allocation0 [shape = 'u32[]', space=smem, size = 0x4, offset = 0x4, fixed_abs, tag = 'smem constant byte address 0x4 - core index']
  #allocation1 [shape = 'u32[72,128]{1,0:T(1,128)}', space=vmem, size = 0x9000, scoped, tag = 'internal scratch']
  %s0 = inlined_call_operand.vmem [shape: bf16[2,4,5,5,64], index: 0, kind: input, shape index: {}]
  %s1 = inlined_call_operand.vmem [shape: bf16[2,4,4,64], index: 1, kind: output, shape index: {}]
  %s2 = sld [smem:[#allocation0]]
  $region37: #{backbone_base_forward.7} parent=0
    _
  %s4 = ssub.s32 1, %s2
  %s5 = scalar_select 0, %s4, %s2
  loop: start=0, step=1, limit=4
  $region2: #{backbone_base_forward.7} parent=0 // loop_pre_header
    _
  $region3: #{backbone_base_forward.7} parent=0 // loop_header
    %s7 = sphi 0, %s11
    %p8 = scmp.ge.s32.totalorder %s7, 4
    %s17 = sphi 0, %s19
    %s20 = sphi 0, %s17
    %s21 = sphi 0, %s20
    %s37 = sphi 0, %s21
    %s43 = sphi 0, %s45
    %s46 = sphi 0, %s43
    %s47 = sphi 0, %s46
    %s63 = sphi 0, %s47
  $region4: #{backbone_base_forward.7} parent=0 // loop_header_branch
    %10 = sbr.rel (%p8) target = $region8
  $region5: #{backbone_base_forward.7} parent=0 // loop_body
    %s12 = ssub.s32 %s7, 1
    %s13 = ssub.s32 %s7, 2
    %s14 = sadd.s32 %s7, 1
    %s15 = ssub.s32 %s7, %s14
    %p16 = scmp.eq.s32.totalorder %s15, 0
    %s18 = sadd.s32 %s17, 1
    %s19 = scalar_select %p16, %s17, %s18
    %p22 = pneg %p16
    %p23 = scmp.eq.s32.totalorder %s7, 1
    %p24 = por %p22, %p23
    %p25 = scmp.ne.s32.totalorder %s17, %s20
    %p26 = scmp.eq.s32.totalorder %s7, 0
    %p27 = por %p25, %p26
    %p28 = scmp.ne.s32.totalorder %s17, %s20
    %p29 = scmp.eq.s32.totalorder %s12, 1
    %p30 = por %p28, %p29
    %p31 = scmp.ne.s32.totalorder %s20, %s21
    %p32 = scmp.eq.s32.totalorder %s12, 0
    %p33 = por %p31, %p32
    %p34 = scmp.ne.s32.totalorder %s20, %s21
    %p35 = scmp.eq.s32.totalorder %s13, 1
    %p36 = por %p34, %p35
    %p38 = scmp.ne.s32.totalorder %s21, %s37
    %p39 = scmp.eq.s32.totalorder %s13, 0
    %p40 = por %p38, %p39
    %s41 = ssub.s32 %s7, %s14
    %p42 = scmp.eq.s32.totalorder %s41, 0
    %s44 = sadd.s32 %s43, 1
    %s45 = scalar_select %p42, %s43, %s44
    %p48 = pneg %p42
    %p49 = scmp.eq.s32.totalorder %s7, 1
    %p50 = por %p48, %p49
    %p51 = scmp.ne.s32.totalorder %s43, %s46
    %p52 = scmp.eq.s32.totalorder %s7, 0
    %p53 = por %p51, %p52
    %p54 = scmp.ne.s32.totalorder %s43, %s46
    %p55 = scmp.eq.s32.totalorder %s12, 1
    %p56 = por %p54, %p55
    %p57 = scmp.ne.s32.totalorder %s46, %s47
    %p58 = scmp.eq.s32.totalorder %s12, 0
    %p59 = por %p57, %p58
    %p60 = scmp.ne.s32.totalorder %s46, %s47
    %p61 = scmp.eq.s32.totalorder %s13, 1
    %p62 = por %p60, %p61
    %p64 = scmp.ne.s32.totalorder %s47, %s63
    %p65 = scmp.eq.s32.totalorder %s13, 0
    %p66 = por %p64, %p65
    %p67 = scmp.le.s32.totalorder 1, %s7
    %p68 = scmp.lt.s32.totalorder %s7, 3
    %p69 = pnand %p67, %p68
    %p70 = pneg %p69
    // Predicated region
    $region9: #{backbone_base_forward.7} parent=5 // pred_check
      _
    $region10: #{backbone_base_forward.7} parent=5 // pred_check_branch
      %72 = sbr.rel (%p69) target = $region12
    $region11: #{backbone_base_forward.7} parent=5 // pred_region
      %s73 = ssub.s32 %s7, 1
    $region12: #{backbone_base_forward.7} parent=5 // pred_fallthru
      _
    %p74 = scmp.lt.s32.totalorder %s7, 2
    // Predicated region
    $region13: #{backbone_base_forward.7} parent=5 // pred_check
      %p75 = pneg %p74
    $region14: #{backbone_base_forward.7} parent=5 // pred_check_branch
      %77 = sbr.rel (%p75) target = $region16
    $region15: #{backbone_base_forward.7} parent=5 // pred_region
      // Predicated region
      $region17: #{backbone_base_forward.7} parent=15 // pred_check
        %p78 = pneg %p27
      $region18: #{backbone_base_forward.7} parent=15 // pred_check_branch
        %80 = sbr.rel (%p78) target = $region20
      $region19: #{backbone_base_forward.7} parent=15 // pred_region
        %p81 = scmp.lt.s32.totalorder %s7, 1
        %s82 = scalar_select %p81, %s7, 1
        %s83 = smul.addr %s82, 20
        %s84 = smul.addr %s83, 4
        %s85 = scalar_lea.vmem %s0, %s84
      $region20: #{backbone_base_forward.7} parent=15 // pred_fallthru
        _
    $region16: #{backbone_base_forward.7} parent=5 // pred_fallthru
      _
    %p86 = scmp.le.s32.totalorder 1, %s7
    %p87 = scmp.lt.s32.totalorder %s7, 3
    %p88 = pnand %p86, %p87
    %p89 = pneg %p88
    // Predicated region
    $region21: #{backbone_base_forward.7} parent=5 // pred_check
      _
    $region22: #{backbone_base_forward.7} parent=5 // pred_check_branch
      %91 = sbr.rel (%p88) target = $region24
    $region23: #{backbone_base_forward.7} parent=5 // pred_region
      %s92 = ssub.s32 %s7, 1
      %p93 = scmp.lt.s32.totalorder %s12, 1
      %s94 = scalar_select %p93, %s12, 1
      %s95 = smul.addr %s94, 20
      %s96 = smul.addr %s95, 4
      %s97 = scalar_lea.vmem %s0, %s96
      %p98 = pneg %p33
      %p99 = pneg %p30
      %p100 = pneg %p59
      %p101 = pneg %p56
      %p102 = scmp.lt.s32.totalorder %s12, 1
      %s103 = scalar_select %p102, %s12, 1
      %s104 = smul.addr %s103, 4
      %s105 = smul.addr %s104, 2
      %s106 = scalar_lea.vmem %s1, %s105
      %p107 = scmp.lt.s32.totalorder %s12, 1
      %s108 = scalar_select %p107, %s12, 1
      %s109 = smul.addr %s108, 20
      %s110 = smul.addr %s109, 4
      %s111 = scalar_lea.vmem %s0, %s110
      %p112 = scmp.lt.s32.totalorder %s12, 1
      %s113 = scalar_select %p112, %s12, 1
      %s114 = smul.addr %s113, 4
      %s115 = smul.addr %s114, 2
      %s116 = scalar_lea.vmem %s1, %s115
      %v117 = vld [vmem:[%s111] sm:$0x3]
      %v118 = vld [vmem:[%s111 + $0x4] sm:$0x3]
      %v119 = vld [vmem:[%s111 + $0x8] sm:$0x3]
      %v120 = vld [vmem:[%s111 + $0xc] sm:$0x3]
      %s121 = scalar_lea.vmem %s111, 20
      %v122 = vld [vmem:[%s121] sm:$0x3]
      %v123 = vld [vmem:[%s121 + $0x4] sm:$0x3]
      %v124 = vld [vmem:[%s121 + $0x8] sm:$0x3]
      %v125 = vld [vmem:[%s121 + $0xc] sm:$0x3]
      %v126 = vunpack.c.l.bf16 %v117
      %v127 = vunpack.c.l.bf16 %v118
      %v128 = vunpack.c.l.bf16 %v119
      %v129 = vunpack.c.l.bf16 %v120
      %v130 = vunpack.c.l.bf16 %v122
      %v131 = vunpack.c.l.bf16 %v123
      %v132 = vunpack.c.l.bf16 %v124
      %v133 = vunpack.c.l.bf16 %v125
      %v134 = vmax.f32 %v126, %v130
      %v135 = vmax.f32 %v127, %v131
      %v136 = vmax.f32 %v128, %v132
      %v137 = vmax.f32 %v129, %v133
      %v138 = vpack.c.bf16 %v134, %v134
      %v139 = vpack.c.bf16 %v135, %v135
      %v140 = vpack.c.bf16 %v136, %v136
      %v141 = vpack.c.bf16 %v137, %v137
      %v142 = vld [vmem:[%s111] sm:$0x7]
      %v143 = vld [vmem:[%s111 + $0x4] sm:$0x7]
      %v144 = vld [vmem:[%s111 + $0x8] sm:$0x7]
      %v145 = vld [vmem:[%s111 + $0xc] sm:$0x7]
      %v146 = vunpack.c.l.bf16 %v138
      %v147 = vunpack.c.l.bf16 %v139
      %v148 = vunpack.c.l.bf16 %v140
      %v149 = vunpack.c.l.bf16 %v141
      %v150 = vunpack.c.l.bf16 %v142
      %v151 = vunpack.c.l.bf16 %v143
      %v152 = vunpack.c.l.bf16 %v144
      %v153 = vunpack.c.l.bf16 %v145
      %v158 = vrot.slane %v150, 1
      %v159 = vrot.slane %v151, 1
      %v160 = vrot.slane %v152, 1
      %v161 = vrot.slane %v153, 1
      %v166 = vmax.f32 %v146, %v158
      %v167 = vmax.f32 %v147, %v159
      %v168 = vmax.f32 %v148, %v160
      %v169 = vmax.f32 %v149, %v161
      %v170 = vpack.c.bf16 %v166, %v166
      %v171 = vpack.c.bf16 %v167, %v167
      %v172 = vpack.c.bf16 %v168, %v168
      %v173 = vpack.c.bf16 %v169, %v169
      %s174 = scalar_lea.vmem %s111, 40
      %v175 = vld [vmem:[%s174] sm:$0x3]
      %v176 = vld [vmem:[%s174 + $0x4] sm:$0x3]
      %v177 = vld [vmem:[%s174 + $0x8] sm:$0x3]
      %v178 = vld [vmem:[%s174 + $0xc] sm:$0x3]
      %v179 = vunpack.c.l.bf16 %v170
      %v180 = vunpack.c.l.bf16 %v171
      %v181 = vunpack.c.l.bf16 %v172
      %v182 = vunpack.c.l.bf16 %v173
      %v183 = vunpack.c.l.bf16 %v175
      %v184 = vunpack.c.l.bf16 %v176
      %v185 = vunpack.c.l.bf16 %v177
      %v186 = vunpack.c.l.bf16 %v178
      %v187 = vmax.f32 %v179, %v183
      %v188 = vmax.f32 %v180, %v184
      %v189 = vmax.f32 %v181, %v185
      %v190 = vmax.f32 %v182, %v186
      %v191 = vpack.c.bf16 %v187, %v187
      %v192 = vpack.c.bf16 %v188, %v188
      %v193 = vpack.c.bf16 %v189, %v189
      %v194 = vpack.c.bf16 %v190, %v190
      %s195 = scalar_lea.vmem %s111, 60
      %v196 = vld [vmem:[%s195] sm:$0x3]
      %v197 = vld [vmem:[%s195 + $0x4] sm:$0x3]
      %v198 = vld [vmem:[%s195 + $0x8] sm:$0x3]
      %v199 = vld [vmem:[%s195 + $0xc] sm:$0x3]
      %v200 = vunpack.c.l.bf16 %v191
      %v201 = vunpack.c.l.bf16 %v192
      %v202 = vunpack.c.l.bf16 %v193
      %v203 = vunpack.c.l.bf16 %v194
      %v204 = vunpack.c.l.bf16 %v196
      %v205 = vunpack.c.l.bf16 %v197
      %v206 = vunpack.c.l.bf16 %v198
      %v207 = vunpack.c.l.bf16 %v199
      %v208 = vmax.f32 %v200, %v204
      %v209 = vmax.f32 %v201, %v205
      %v210 = vmax.f32 %v202, %v206
      %v211 = vmax.f32 %v203, %v207
      %v212 = vpack.c.bf16 %v208, %v208
      %v213 = vpack.c.bf16 %v209, %v209
      %v214 = vpack.c.bf16 %v210, %v210
      %v215 = vpack.c.bf16 %v211, %v211
      %v216 = vld [vmem:[%s174] sm:$0x7]
      %v217 = vld [vmem:[%s174 + $0x4] sm:$0x7]
      %v218 = vld [vmem:[%s174 + $0x8] sm:$0x7]
      %v219 = vld [vmem:[%s174 + $0xc] sm:$0x7]
      %v220 = vunpack.c.l.bf16 %v212
      %v221 = vunpack.c.l.bf16 %v213
      %v222 = vunpack.c.l.bf16 %v214
      %v223 = vunpack.c.l.bf16 %v215
      %v224 = vunpack.c.l.bf16 %v216
      %v225 = vunpack.c.l.bf16 %v217
      %v226 = vunpack.c.l.bf16 %v218
      %v227 = vunpack.c.l.bf16 %v219
      %v232 = vrot.slane %v224, 1
      %v233 = vrot.slane %v225, 1
      %v234 = vrot.slane %v226, 1
      %v235 = vrot.slane %v227, 1
      %v240 = vmax.f32 %v220, %v232
      %v241 = vmax.f32 %v221, %v233
      %v242 = vmax.f32 %v222, %v234
      %v243 = vmax.f32 %v223, %v235
      %v244 = vpack.c.bf16 %v240, %v240
      %v245 = vpack.c.bf16 %v241, %v241
      %v246 = vpack.c.bf16 %v242, %v242
      %v247 = vpack.c.bf16 %v243, %v243
      %s248 = scalar_lea.vmem %s111, 4
      %v249 = vld [vmem:[%s248] sm:$0x3]
      %v250 = vld [vmem:[%s248 + $0x4] sm:$0x3]
      %v251 = vld [vmem:[%s248 + $0x8] sm:$0x3]
      %v252 = vld [vmem:[%s248 + $0xc] sm:$0x3]
      %v253 = vunpack.c.l.bf16 %v244
      %v254 = vunpack.c.l.bf16 %v245
      %v255 = vunpack.c.l.bf16 %v246
      %v256 = vunpack.c.l.bf16 %v247
      %v257 = vunpack.c.l.bf16 %v249
      %v258 = vunpack.c.l.bf16 %v250
      %v259 = vunpack.c.l.bf16 %v251
      %v260 = vunpack.c.l.bf16 %v252
      %v261 = vmax.f32 %v253, %v257
      %v262 = vmax.f32 %v254, %v258
      %v263 = vmax.f32 %v255, %v259
      %v264 = vmax.f32 %v256, %v260
      %v265 = vpack.c.bf16 %v261, %v261
      %v266 = vpack.c.bf16 %v262, %v262
      %v267 = vpack.c.bf16 %v263, %v263
      %v268 = vpack.c.bf16 %v264, %v264
      %s269 = scalar_lea.vmem %s111, 24
      %v270 = vld [vmem:[%s269] sm:$0x3]
      %v271 = vld [vmem:[%s269 + $0x4] sm:$0x3]
      %v272 = vld [vmem:[%s269 + $0x8] sm:$0x3]
      %v273 = vld [vmem:[%s269 + $0xc] sm:$0x3]
      %v274 = vunpack.c.l.bf16 %v265
      %v275 = vunpack.c.l.bf16 %v266
      %v276 = vunpack.c.l.bf16 %v267
      %v277 = vunpack.c.l.bf16 %v268
      %v278 = vunpack.c.l.bf16 %v270
      %v279 = vunpack.c.l.bf16 %v271
      %v280 = vunpack.c.l.bf16 %v272
      %v281 = vunpack.c.l.bf16 %v273
      %v282 = vmax.f32 %v274, %v278
      %v283 = vmax.f32 %v275, %v279
      %v284 = vmax.f32 %v276, %v280
      %v285 = vmax.f32 %v277, %v281
      %v286 = vpack.c.bf16 %v282, %v282
      %v287 = vpack.c.bf16 %v283, %v283
      %v288 = vpack.c.bf16 %v284, %v284
      %v289 = vpack.c.bf16 %v285, %v285
      %v290 = vld [vmem:[%s248] sm:$0x7]
      %v291 = vld [vmem:[%s248 + $0x4] sm:$0x7]
      %v292 = vld [vmem:[%s248 + $0x8] sm:$0x7]
      %v293 = vld [vmem:[%s248 + $0xc] sm:$0x7]
      %v294 = vunpack.c.l.bf16 %v286
      %v295 = vunpack.c.l.bf16 %v287
      %v296 = vunpack.c.l.bf16 %v288
      %v297 = vunpack.c.l.bf16 %v289
      %v298 = vunpack.c.l.bf16 %v290
      %v299 = vunpack.c.l.bf16 %v291
      %v300 = vunpack.c.l.bf16 %v292
      %v301 = vunpack.c.l.bf16 %v293
      %v306 = vrot.slane %v298, 1
      %v307 = vrot.slane %v299, 1
      %v308 = vrot.slane %v300, 1
      %v309 = vrot.slane %v301, 1
      %v314 = vmax.f32 %v294, %v306
      %v315 = vmax.f32 %v295, %v307
      %v316 = vmax.f32 %v296, %v308
      %v317 = vmax.f32 %v297, %v309
      %v318 = vpack.c.bf16 %v314, %v314
      %v319 = vpack.c.bf16 %v315, %v315
      %v320 = vpack.c.bf16 %v316, %v316
      %v321 = vpack.c.bf16 %v317, %v317
      %vm322 = vcmask 517120
      %323 = vst.msk [vmem:[%s116] sm:$0x3] %vm322, %v318
      %324 = vst.msk [vmem:[%s116 + $0x2] sm:$0x3] %vm322, %v319
      %325 = vst.msk [vmem:[%s116 + $0x4] sm:$0x3] %vm322, %v320
      %326 = vst.msk [vmem:[%s116 + $0x6] sm:$0x3] %vm322, %v321
      %p327 = scmp.lt.s32.totalorder %s12, 1
      %s328 = scalar_select %p327, %s12, 1
      %s329 = smul.addr %s328, 4
      %s330 = smul.addr %s329, 2
      %s331 = scalar_lea.vmem %s1, %s330
      // Predicated region
      $region25: #{backbone_base_forward.7} parent=23 // pred_check
        %p332 = pneg %p56
      $region26: #{backbone_base_forward.7} parent=23 // pred_check_branch
        %334 = sbr.rel (%p332) target = $region28
      $region27: #{backbone_base_forward.7} parent=23 // pred_region
        _
      $region28: #{backbone_base_forward.7} parent=23 // pred_fallthru
        _
    $region24: #{backbone_base_forward.7} parent=5 // pred_fallthru
      _
    %p335 = scmp.le.s32.totalorder 2, %s7
    // Predicated region
    $region29: #{backbone_base_forward.7} parent=5 // pred_check
      %p336 = pneg %p335
    $region30: #{backbone_base_forward.7} parent=5 // pred_check_branch
      %338 = sbr.rel (%p336) target = $region32
    $region31: #{backbone_base_forward.7} parent=5 // pred_region
      %s339 = ssub.s32 %s7, 2
      // Predicated region
      $region33: #{backbone_base_forward.7} parent=31 // pred_check
        %p340 = pneg %p62
      $region34: #{backbone_base_forward.7} parent=31 // pred_check_branch
        %342 = sbr.rel (%p340) target = $region36
      $region35: #{backbone_base_forward.7} parent=31 // pred_region
        %p343 = scmp.lt.s32.totalorder %s13, 1
        %s344 = scalar_select %p343, %s13, 1
        %s345 = smul.addr %s344, 4
        %s346 = smul.addr %s345, 2
        %s347 = scalar_lea.vmem %s1, %s346
      $region36: #{backbone_base_forward.7} parent=31 // pred_fallthru
        _
    $region32: #{backbone_base_forward.7} parent=5 // pred_fallthru
      _
  $region6: #{backbone_base_forward.7} parent=0 // loop_footer
    %s11 = sadd.s32 1, %s7
  $region7: #{backbone_base_forward.7} parent=0 // loop_footer_branch
    %6 = sbr.rel target = $region3
  $region8: #{backbone_base_forward.7} parent=0 // loop_exit
    _

// kernel: backbone_base_forward.6
$region0: #{backbone_base_forward.6}
  #allocation0 [shape = 'u32[]', space=smem, size = 0x4, offset = 0x4, fixed_abs, tag = 'smem constant byte address 0x4 - core index']
  #allocation1 [shape = 'u32[72,128]{1,0:T(1,128)}', space=vmem, size = 0x9000, scoped, tag = 'internal scratch']
  %s0 = inlined_call_operand.vmem [shape: bf16[2,11,11,16], index: 0, kind: input, shape index: {}]
  %s1 = inlined_call_operand.vmem [shape: bf16[16,16,64], index: 1, kind: input, shape index: {}]
  %s2 = inlined_call_operand.vmem [shape: f32[1,64], index: 2, kind: input, shape index: {}]
  %s3 = inlined_call_operand.vmem [shape: bf16[2,64,64], index: 3, kind: output, shape index: {}]
  %s4 = sld [smem:[#allocation0]]
  $region45: #{backbone_base_forward.6} parent=0
    _
  %s6 = ssub.s32 1, %s4
  %s7 = scalar_select 0, %s6, %s4
  loop: start=0, step=1, limit=4
  $region2: #{backbone_base_forward.6} parent=0 // loop_pre_header
    _
  $region3: #{backbone_base_forward.6} parent=0 // loop_header
    %s9 = sphi 0, %s13
    %p10 = scmp.ge.s32.totalorder %s9, 4
    %s19 = sphi 0, %s21
    %s22 = sphi 0, %s19
    %s23 = sphi 0, %s22
    %s39 = sphi 0, %s23
    %s43 = sphi 0, %s43
    %s45 = sphi 0, %s43
    %s46 = sphi 0, %s45
    %s60 = sphi 0, %s46
    %s64 = sphi 0, %s64
    %s66 = sphi 0, %s64
    %s67 = sphi 0, %s66
    %s81 = sphi 0, %s67
    %s87 = sphi 0, %s89
    %s90 = sphi 0, %s87
    %s91 = sphi 0, %s90
    %s107 = sphi 0, %s91
  $region4: #{backbone_base_forward.6} parent=0 // loop_header_branch
    %12 = sbr.rel (%p10) target = $region8
  $region5: #{backbone_base_forward.6} parent=0 // loop_body
    %s14 = ssub.s32 %s9, 1
    %s15 = ssub.s32 %s9, 2
    %s16 = sadd.s32 %s9, 1
    %s17 = ssub.s32 %s9, %s16
    %p18 = scmp.eq.s32.totalorder %s17, 0
    %s20 = sadd.s32 %s19, 1
    %s21 = scalar_select %p18, %s19, %s20
    %p24 = pneg %p18
    %p25 = scmp.eq.s32.totalorder %s9, 1
    %p26 = por %p24, %p25
    %p27 = scmp.ne.s32.totalorder %s19, %s22
    %p28 = scmp.eq.s32.totalorder %s9, 0
    %p29 = por %p27, %p28
    %p30 = scmp.ne.s32.totalorder %s19, %s22
    %p31 = scmp.eq.s32.totalorder %s14, 1
    %p32 = por %p30, %p31
    %p33 = scmp.ne.s32.totalorder %s22, %s23
    %p34 = scmp.eq.s32.totalorder %s14, 0
    %p35 = por %p33, %p34
    %p36 = scmp.ne.s32.totalorder %s22, %s23
    %p37 = scmp.eq.s32.totalorder %s15, 1
    %p38 = por %p36, %p37
    %p40 = scmp.ne.s32.totalorder %s23, %s39
    %p41 = scmp.eq.s32.totalorder %s15, 0
    %p42 = por %p40, %p41
    %s44 = sadd.s32 %s43, 1
    %p47 = scmp.eq.s32.totalorder %s9, 1
    %p48 = scmp.ne.s32.totalorder %s43, %s45
    %p49 = scmp.eq.s32.totalorder %s9, 0
    %p50 = por %p48, %p49
    %p51 = scmp.ne.s32.totalorder %s43, %s45
    %p52 = scmp.eq.s32.totalorder %s14, 1
    %p53 = por %p51, %p52
    %p54 = scmp.ne.s32.totalorder %s45, %s46
    %p55 = scmp.eq.s32.totalorder %s14, 0
    %p56 = por %p54, %p55
    %p57 = scmp.ne.s32.totalorder %s45, %s46
    %p58 = scmp.eq.s32.totalorder %s15, 1
    %p59 = por %p57, %p58
    %p61 = scmp.ne.s32.totalorder %s46, %s60
    %p62 = scmp.eq.s32.totalorder %s15, 0
    %p63 = por %p61, %p62
    %s65 = sadd.s32 %s64, 1
    %p68 = scmp.eq.s32.totalorder %s9, 1
    %p69 = scmp.ne.s32.totalorder %s64, %s66
    %p70 = scmp.eq.s32.totalorder %s9, 0
    %p71 = por %p69, %p70
    %p72 = scmp.ne.s32.totalorder %s64, %s66
    %p73 = scmp.eq.s32.totalorder %s14, 1
    %p74 = por %p72, %p73
    %p75 = scmp.ne.s32.totalorder %s66, %s67
    %p76 = scmp.eq.s32.totalorder %s14, 0
    %p77 = por %p75, %p76
    %p78 = scmp.ne.s32.totalorder %s66, %s67
    %p79 = scmp.eq.s32.totalorder %s15, 1
    %p80 = por %p78, %p79
    %p82 = scmp.ne.s32.totalorder %s67, %s81
    %p83 = scmp.eq.s32.totalorder %s15, 0
    %p84 = por %p82, %p83
    %s85 = ssub.s32 %s9, %s16
    %p86 = scmp.eq.s32.totalorder %s85, 0
    %s88 = sadd.s32 %s87, 1
    %s89 = scalar_select %p86, %s87, %s88
    %p92 = pneg %p86
    %p93 = scmp.eq.s32.totalorder %s9, 1
    %p94 = por %p92, %p93
    %p95 = scmp.ne.s32.totalorder %s87, %s90
    %p96 = scmp.eq.s32.totalorder %s9, 0
    %p97 = por %p95, %p96
    %p98 = scmp.ne.s32.totalorder %s87, %s90
    %p99 = scmp.eq.s32.totalorder %s14, 1
    %p100 = por %p98, %p99
    %p101 = scmp.ne.s32.totalorder %s90, %s91
    %p102 = scmp.eq.s32.totalorder %s14, 0
    %p103 = por %p101, %p102
    %p104 = scmp.ne.s32.totalorder %s90, %s91
    %p105 = scmp.eq.s32.totalorder %s15, 1
    %p106 = por %p104, %p105
    %p108 = scmp.ne.s32.totalorder %s91, %s107
    %p109 = scmp.eq.s32.totalorder %s15, 0
    %p110 = por %p108, %p109
    %p111 = scmp.le.s32.totalorder 1, %s9
    %p112 = scmp.lt.s32.totalorder %s9, 3
    %p113 = pnand %p111, %p112
    %p114 = pneg %p113
    // Predicated region
    $region9: #{backbone_base_forward.6} parent=5 // pred_check
      _
    $region10: #{backbone_base_forward.6} parent=5 // pred_check_branch
      %116 = sbr.rel (%p113) target = $region12
    $region11: #{backbone_base_forward.6} parent=5 // pred_region
      %s117 = ssub.s32 %s9, 1
      // Predicated region
      $region13: #{backbone_base_forward.6} parent=11 // pred_check
        %p118 = pneg %p56
      $region14: #{backbone_base_forward.6} parent=11 // pred_check_branch
        %120 = sbr.rel (%p118) target = $region16
      $region15: #{backbone_base_forward.6} parent=11 // pred_region
        _
      $region16: #{backbone_base_forward.6} parent=11 // pred_fallthru
        _
      // Predicated region
      $region17: #{backbone_base_forward.6} parent=11 // pred_check
        %p121 = pneg %p77
      $region18: #{backbone_base_forward.6} parent=11 // pred_check_branch
        %123 = sbr.rel (%p121) target = $region20
      $region19: #{backbone_base_forward.6} parent=11 // pred_region
        _
      $region20: #{backbone_base_forward.6} parent=11 // pred_fallthru
        _
    $region12: #{backbone_base_forward.6} parent=5 // pred_fallthru
      _
    %p124 = scmp.lt.s32.totalorder %s9, 2
    // Predicated region
    $region21: #{backbone_base_forward.6} parent=5 // pred_check
      %p125 = pneg %p124
    $region22: #{backbone_base_forward.6} parent=5 // pred_check_branch
      %127 = sbr.rel (%p125) target = $region24
    $region23: #{backbone_base_forward.6} parent=5 // pred_region
      // Predicated region
      $region25: #{backbone_base_forward.6} parent=23 // pred_check
        %p128 = pneg %p29
      $region26: #{backbone_base_forward.6} parent=23 // pred_check_branch
        %130 = sbr.rel (%p128) target = $region28
      $region27: #{backbone_base_forward.6} parent=23 // pred_region
        %p131 = scmp.lt.s32.totalorder %s9, 1
        %s132 = scalar_select %p131, %s9, 1
        %s133 = smul.addr %s132, 22
        %s134 = smul.addr %s133, 4
        %s135 = scalar_lea.vmem %s0, %s134
      $region28: #{backbone_base_forward.6} parent=23 // pred_fallthru
        _
    $region24: #{backbone_base_forward.6} parent=5 // pred_fallthru
      _
    %p136 = scmp.le.s32.totalorder 1, %s9
    %p137 = scmp.lt.s32.totalorder %s9, 3
    %p138 = pnand %p136, %p137
    %p139 = pneg %p138
    // Predicated region
    $region29: #{backbone_base_forward.6} parent=5 // pred_check
      _
    $region30: #{backbone_base_forward.6} parent=5 // pred_check_branch
      %141 = sbr.rel (%p138) target = $region32
    $region31: #{backbone_base_forward.6} parent=5 // pred_region
      %s142 = ssub.s32 %s9, 1
      %p143 = scmp.lt.s32.totalorder %s14, 1
      %s144 = scalar_select %p143, %s14, 1
      %s145 = smul.addr %s144, 22
      %s146 = smul.addr %s145, 4
      %s147 = scalar_lea.vmem %s0, %s146
      %p148 = pneg %p35
      %p149 = pneg %p32
      %p150 = pneg %p56
      %p151 = pneg %p53
      %p152 = pneg %p77
      %p153 = pneg %p74
      %p154 = pneg %p103
      %p155 = pneg %p100
      %p156 = scmp.lt.s32.totalorder %s14, 1
      %s157 = scalar_select %p156, %s14, 1
      %s158 = smul.addr %s157, 8
      %s159 = smul.addr %s158, 4
      %s160 = scalar_lea.vmem %s3, %s159
      %p161 = scmp.lt.s32.totalorder %s14, 1
      %s162 = scalar_select %p161, %s14, 1
      %s163 = smul.addr %s162, 22
      %s164 = smul.addr %s163, 4
      %s165 = scalar_lea.vmem %s0, %s164
      %p166 = scmp.lt.s32.totalorder %s14, 1
      %s167 = scalar_select %p166, %s14, 1
      %s168 = smul.addr %s167, 8
      %s169 = smul.addr %s168, 4
      %s170 = scalar_lea.vmem %s3, %s169
      %v172 = vld [vmem:[%s165] sm:$0xf]
      %v173 = vld [vmem:[%s165 + $0x8] sm:$0xf]
      %v174 = vld [vmem:[%s165 + $0x10] sm:$0xf]
      %v175 = vld [vmem:[%s165 + $0x18] sm:$0xf]
      %v176 = vld [vmem:[%s165 + $0x20] sm:$0xf]
      %v177 = vld [vmem:[%s165 + $0x28] sm:$0xf]
      %v178 = vld [vmem:[%s165 + $0x30] sm:$0xf]
      %v179 = vld [vmem:[%s165 + $0x38] sm:$0xf]
      %v180 = vld [vmem:[%s1] sm:$0xf]
      %v181 = vld [vmem:[%s1 + $0x4] sm:$0xf]
      %v182 = vld [vmem:[%s165 + $0x4] sm:$0x1]
      %v183 = vld [vmem:[%s165 + $0xc] sm:$0x1]
      %v184 = vld [vmem:[%s165 + $0x14] sm:$0x1]
      %v185 = vld [vmem:[%s165 + $0x1c] sm:$0x1]
      %v186 = vld [vmem:[%s165 + $0x24] sm:$0x1]
      %v187 = vld [vmem:[%s165 + $0x2c] sm:$0x1]
      %v188 = vld [vmem:[%s165 + $0x34] sm:$0x1]
      %v189 = vld [vmem:[%s165 + $0x3c] sm:$0x1]
      %vm190 = vsmask.f32 3328
      %vm191 = vsmask.f32 7440
      %vm192 = vmor %vm190, %vm191
      %v194 = vshrl.u32 %v172, 16
      %v196 = vrot.slane %v194, 4
      %v197 = vshll.u32 %v172, 16
      %v199 = vrot.slane %v197, 5
      %v200 = vor.u32 %v196, %v199
      %v201 = vrot.slane %v200, 4
      %v203 = vshll.u32 %v182, 16
      %v205 = vrot.slane %v203, 5
      %v206 = vsel %vm192, %v201, %v205
      %v208 = vshrl.u32 %v173, 16
      %v210 = vrot.slane %v208, 4
      %v211 = vshll.u32 %v173, 16
      %v213 = vrot.slane %v211, 5
      %v214 = vor.u32 %v210, %v213
      %v215 = vrot.slane %v214, 4
      %v217 = vshll.u32 %v183, 16
      %v219 = vrot.slane %v217, 5
      %v220 = vsel %vm192, %v215, %v219
      %v222 = vshrl.u32 %v174, 16
      %v224 = vrot.slane %v222, 4
      %v225 = vshll.u32 %v174, 16
      %v227 = vrot.slane %v225, 5
      %v228 = vor.u32 %v224, %v227
      %v229 = vrot.slane %v228, 4
      %v231 = vshll.u32 %v184, 16
      %v233 = vrot.slane %v231, 5
      %v234 = vsel %vm192, %v229, %v233
      %v236 = vshrl.u32 %v175, 16
      %v238 = vrot.slane %v236, 4
      %v239 = vshll.u32 %v175, 16
      %v241 = vrot.slane %v239, 5
      %v242 = vor.u32 %v238, %v241
      %v243 = vrot.slane %v242, 4
      %v245 = vshll.u32 %v185, 16
      %v247 = vrot.slane %v245, 5
      %v248 = vsel %vm192, %v243, %v247
      %v250 = vshrl.u32 %v176, 16
      %v252 = vrot.slane %v250, 4
      %v253 = vshll.u32 %v176, 16
      %v255 = vrot.slane %v253, 5
      %v256 = vor.u32 %v252, %v255
      %v257 = vrot.slane %v256, 4
      %v259 = vshll.u32 %v186, 16
      %v261 = vrot.slane %v259, 5
      %v262 = vsel %vm192, %v257, %v261
      %v264 = vshrl.u32 %v177, 16
      %v266 = vrot.slane %v264, 4
      %v267 = vshll.u32 %v177, 16
      %v269 = vrot.slane %v267, 5
      %v270 = vor.u32 %v266, %v269
      %v271 = vrot.slane %v270, 4
      %v273 = vshll.u32 %v187, 16
      %v275 = vrot.slane %v273, 5
      %v276 = vsel %vm192, %v271, %v275
      %v278 = vshrl.u32 %v178, 16
      %v280 = vrot.slane %v278, 4
      %v281 = vshll.u32 %v178, 16
      %v283 = vrot.slane %v281, 5
      %v284 = vor.u32 %v280, %v283
      %v285 = vrot.slane %v284, 4
      %v287 = vshll.u32 %v188, 16
      %v289 = vrot.slane %v287, 5
      %v290 = vsel %vm192, %v285, %v289
      %v292 = vshrl.u32 %v179, 16
      %v294 = vrot.slane %v292, 4
      %v295 = vshll.u32 %v179, 16
      %v297 = vrot.slane %v295, 5
      %v298 = vor.u32 %v294, %v297
      %v299 = vrot.slane %v298, 4
      %v301 = vshll.u32 %v189, 16
      %v303 = vrot.slane %v301, 5
      %v304 = vsel %vm192, %v299, %v303
      %s305 = scalar_lea.vmem %s1, 8
      %v306 = vld [vmem:[%s305] sm:$0xf]
      %v307 = vld [vmem:[%s305 + $0x4] sm:$0xf]
      %v308 = vunpack.c.l.b16 %v206
      %v309 = vunpack.c.l.b16 %v220
      %v310 = vunpack.c.l.b16 %v234
      %v311 = vunpack.c.l.b16 %v248
      %v312 = vunpack.c.l.b16 %v262
      %v313 = vunpack.c.l.b16 %v276
      %v314 = vunpack.c.l.b16 %v290
      %v315 = vunpack.c.l.b16 %v304
      %v316 = vpack.c.b16 %v309, %v308
      %v317 = vpack.c.b16 %v311, %v310
      %v318 = vpack.c.b16 %v313, %v312
      %v319 = vpack.c.b16 %v315, %v314
      %v322 = vunpack.c.l.b16 %v306
      %v323 = vunpack.c.l.b16 %v307
      %v324 = vpack.c.b16 %v323, %v322
      %vm326 = vcmask 130048
      %v328 = vsel %vm326, %v316, 0
      %v331 = vsel %vm326, %v317, 0
      %v334 = vsel %vm326, %v318, 0
      %v337 = vsel %vm326, %v319, 0
      %339 = vmatpush.bf16.msra.mxu0 0
      %340 = vmatpush.bf16.msra.mxu0 0
      %341 = vmatpush.bf16.msra.mxu0 0
      %342 = vmatpush.bf16.msra.mxu0 0
      %343 = vmatpush.bf16.msra.mxu0 0
      %344 = vmatpush.bf16.msra.mxu0 0
      %345 = vmatpush.bf16.msra.mxu0 0
      %346 = vmatpush.bf16.msra.mxu0 %v324
      %347 = vmatmul.bf16.gmra.mxu0 %v328
      %v348 = vpop.f32.mrf.mxu0
      %v349 = vadd.f32 0.0, %v348
      %v350 = vpop.f32.mrf.mxu0
      %v351 = vadd.f32 0.0, %v350
      %352 = vmatmul.bf16.gmra.mxu0 %v331
      %v353 = vpop.f32.mrf.mxu0
      %v354 = vadd.f32 0.0, %v353
      %v355 = vpop.f32.mrf.mxu0
      %v356 = vadd.f32 0.0, %v355
      %357 = vmatmul.bf16.gmra.mxu0 %v334
      %v358 = vpop.f32.mrf.mxu0
      %v359 = vadd.f32 0.0, %v358
      %v360 = vpop.f32.mrf.mxu0
      %v361 = vadd.f32 0.0, %v360
      %362 = vmatmul.bf16.gmra.mxu0 %v337
      %v363 = vpop.f32.mrf.mxu0
      %v364 = vadd.f32 0.0, %v363
      %v365 = vpop.f32.mrf.mxu0
      %v366 = vadd.f32 0.0, %v365
      %367 = vdwg.mxu0
      %v376 = vunpack.c.l.b16 %v172
      %v377 = vunpack.c.l.b16 %v173
      %v378 = vunpack.c.l.b16 %v174
      %v379 = vunpack.c.l.b16 %v175
      %v380 = vunpack.c.l.b16 %v176
      %v381 = vunpack.c.l.b16 %v177
      %v382 = vunpack.c.l.b16 %v178
      %v383 = vunpack.c.l.b16 %v179
      %v384 = vpack.c.b16 %v377, %v376
      %v385 = vpack.c.b16 %v379, %v378
      %v386 = vpack.c.b16 %v381, %v380
      %v387 = vpack.c.b16 %v383, %v382
      %v390 = vunpack.c.l.b16 %v180
      %v391 = vunpack.c.l.b16 %v181
      %v392 = vpack.c.b16 %v391, %v390
      %v395 = vsel %vm326, %v384, 0
      %v398 = vsel %vm326, %v385, 0
      %v401 = vsel %vm326, %v386, 0
      %v404 = vsel %vm326, %v387, 0
      %406 = vmatpush.bf16.msra.mxu0 0
      %407 = vmatpush.bf16.msra.mxu0 0
      %408 = vmatpush.bf16.msra.mxu0 0
      %409 = vmatpush.bf16.msra.mxu0 0
      %410 = vmatpush.bf16.msra.mxu0 0
      %411 = vmatpush.bf16.msra.mxu0 0
      %412 = vmatpush.bf16.msra.mxu0 0
      %413 = vmatpush.bf16.msra.mxu0 %v392
      %414 = vmatmul.bf16.gmra.mxu0 %v395
      %v415 = vpop.f32.mrf.mxu0
      %v416 = vadd.f32 %v349, %v415
      %v417 = vpop.f32.mrf.mxu0
      %v418 = vadd.f32 %v351, %v417
      %419 = vmatmul.bf16.gmra.mxu0 %v398
      %v420 = vpop.f32.mrf.mxu0
      %v421 = vadd.f32 %v354, %v420
      %v422 = vpop.f32.mrf.mxu0
      %v423 = vadd.f32 %v356, %v422
      %424 = vmatmul.bf16.gmra.mxu0 %v401
      %v425 = vpop.f32.mrf.mxu0
      %v426 = vadd.f32 %v359, %v425
      %v427 = vpop.f32.mrf.mxu0
      %v428 = vadd.f32 %v361, %v427
      %429 = vmatmul.bf16.gmra.mxu0 %v404
      %v430 = vpop.f32.mrf.mxu0
      %v431 = vadd.f32 %v364, %v430
      %v432 = vpop.f32.mrf.mxu0
      %v433 = vadd.f32 %v366, %v432
      %434 = vdwg.mxu0
      %v435 = vld [vmem:[%s165] sm:$0xe]
      %v436 = vld [vmem:[%s165 + $0x8] sm:$0xe]
      %v437 = vld [vmem:[%s165 + $0x10] sm:$0xe]
      %v438 = vld [vmem:[%s165 + $0x18] sm:$0xe]
      %v439 = vld [vmem:[%s165 + $0x20] sm:$0xe]
      %v440 = vld [vmem:[%s165 + $0x28] sm:$0xe]
      %v441 = vld [vmem:[%s165 + $0x30] sm:$0xe]
      %v442 = vld [vmem:[%s165 + $0x38] sm:$0xe]
      %vm459 = vcmask 1042432
      %vm460 = vcmask 1046532
      %vm461 = vmor %vm459, %vm460
      %v462 = vrot.slane %v435, 5
      %v463 = vrot.slane %v462, 4
      %v464 = vrot.slane %v182, 5
      %v465 = vsel %vm461, %v463, %v464
      %v466 = vrot.slane %v436, 5
      %v467 = vrot.slane %v466, 4
      %v468 = vrot.slane %v183, 5
      %v469 = vsel %vm461, %v467, %v468
      %v470 = vrot.slane %v437, 5
      %v471 = vrot.slane %v470, 4
      %v472 = vrot.slane %v184, 5
      %v473 = vsel %vm461, %v471, %v472
      %v474 = vrot.slane %v438, 5
      %v475 = vrot.slane %v474, 4
      %v476 = vrot.slane %v185, 5
      %v477 = vsel %vm461, %v475, %v476
      %v478 = vrot.slane %v439, 5
      %v479 = vrot.slane %v478, 4
      %v480 = vrot.slane %v186, 5
      %v481 = vsel %vm461, %v479, %v480
      %v482 = vrot.slane %v440, 5
      %v483 = vrot.slane %v482, 4
      %v484 = vrot.slane %v187, 5
      %v485 = vsel %vm461, %v483, %v484
      %v486 = vrot.slane %v441, 5
      %v487 = vrot.slane %v486, 4
      %v488 = vrot.slane %v188, 5
      %v489 = vsel %vm461, %v487, %v488
      %v490 = vrot.slane %v442, 5
      %v491 = vrot.slane %v490, 4
      %v492 = vrot.slane %v189, 5
      %v493 = vsel %vm461, %v491, %v492
      %s494 = scalar_lea.vmem %s1, 16
      %v495 = vld [vmem:[%s494] sm:$0xf]
      %v496 = vld [vmem:[%s494 + $0x4] sm:$0xf]
      %v497 = vunpack.c.l.b16 %v465
      %v498 = vunpack.c.l.b16 %v469
      %v499 = vunpack.c.l.b16 %v473
      %v500 = vunpack.c.l.b16 %v477
      %v501 = vunpack.c.l.b16 %v481
      %v502 = vunpack.c.l.b16 %v485
      %v503 = vunpack.c.l.b16 %v489
      %v504 = vunpack.c.l.b16 %v493
      %v505 = vpack.c.b16 %v498, %v497
      %v506 = vpack.c.b16 %v500, %v499
      %v507 = vpack.c.b16 %v502, %v501
      %v508 = vpack.c.b16 %v504, %v503
      %v511 = vunpack.c.l.b16 %v495
      %v512 = vunpack.c.l.b16 %v496
      %v513 = vpack.c.b16 %v512, %v511
      %v516 = vsel %vm326, %v505, 0
      %v519 = vsel %vm326, %v506, 0
      %v522 = vsel %vm326, %v507, 0
      %v525 = vsel %vm326, %v508, 0
      %527 = vmatpush.bf16.msra.mxu0 0
      %528 = vmatpush.bf16.msra.mxu0 0
      %529 = vmatpush.bf16.msra.mxu0 0
      %530 = vmatpush.bf16.msra.mxu0 0
      %531 = vmatpush.bf16.msra.mxu0 0
      %532 = vmatpush.bf16.msra.mxu0 0
      %533 = vmatpush.bf16.msra.mxu0 0
      %534 = vmatpush.bf16.msra.mxu0 %v513
      %535 = vmatmul.bf16.gmra.mxu0 %v516
      %v536 = vpop.f32.mrf.mxu0
      %v537 = vadd.f32 0.0, %v536
      %v538 = vpop.f32.mrf.mxu0
      %v539 = vadd.f32 0.0, %v538
      %540 = vmatmul.bf16.gmra.mxu0 %v519
      %v541 = vpop.f32.mrf.mxu0
      %v542 = vadd.f32 0.0, %v541
      %v543 = vpop.f32.mrf.mxu0
      %v544 = vadd.f32 0.0, %v543
      %545 = vmatmul.bf16.gmra.mxu0 %v522
      %v546 = vpop.f32.mrf.mxu0
      %v547 = vadd.f32 0.0, %v546
      %v548 = vpop.f32.mrf.mxu0
      %v549 = vadd.f32 0.0, %v548
      %550 = vmatmul.bf16.gmra.mxu0 %v525
      %v551 = vpop.f32.mrf.mxu0
      %v552 = vadd.f32 0.0, %v551
      %v553 = vpop.f32.mrf.mxu0
      %v554 = vadd.f32 0.0, %v553
      %555 = vdwg.mxu0
      %v556 = vadd.f32 %v416, %v537
      %v557 = vadd.f32 %v418, %v539
      %v558 = vadd.f32 %v421, %v542
      %v559 = vadd.f32 %v423, %v544
      %v560 = vadd.f32 %v426, %v547
      %v561 = vadd.f32 %v428, %v549
      %v562 = vadd.f32 %v431, %v552
      %v563 = vadd.f32 %v433, %v554
      %v564 = vld [vmem:[%s165 + $0x4] sm:$0x3]
      %v565 = vld [vmem:[%s165 + $0xc] sm:$0x3]
      %v566 = vld [vmem:[%s165 + $0x14] sm:$0x3]
      %v567 = vld [vmem:[%s165 + $0x1c] sm:$0x3]
      %v568 = vld [vmem:[%s165 + $0x24] sm:$0x3]
      %v569 = vld [vmem:[%s165 + $0x2c] sm:$0x3]
      %v570 = vld [vmem:[%s165 + $0x34] sm:$0x3]
      %v571 = vld [vmem:[%s165 + $0x3c] sm:$0x3]
      %vm572 = vsmask.f32 2304
      %vm573 = vsmask.f32 6416
      %vm574 = vmor %vm572, %vm573
      %v576 = vshrl.u32 %v435, 16
      %v578 = vrot.slane %v576, 5
      %v579 = vshll.u32 %v435, 16
      %v581 = vrot.slane %v579, 6
      %v582 = vor.u32 %v578, %v581
      %v583 = vrot.slane %v582, 4
      %v585 = vshrl.u32 %v564, 16
      %v587 = vrot.slane %v585, 5
      %v588 = vshll.u32 %v564, 16
      %v590 = vrot.slane %v588, 6
      %v591 = vor.u32 %v587, %v590
      %v592 = vsel %vm574, %v583, %v591
      %v594 = vshrl.u32 %v436, 16
      %v596 = vrot.slane %v594, 5
      %v597 = vshll.u32 %v436, 16
      %v599 = vrot.slane %v597, 6
      %v600 = vor.u32 %v596, %v599
      %v601 = vrot.slane %v600, 4
      %v603 = vshrl.u32 %v565, 16
      %v605 = vrot.slane %v603, 5
      %v606 = vshll.u32 %v565, 16
      %v608 = vrot.slane %v606, 6
      %v609 = vor.u32 %v605, %v608
      %v610 = vsel %vm574, %v601, %v609
      %v612 = vshrl.u32 %v437, 16
      %v614 = vrot.slane %v612, 5
      %v615 = vshll.u32 %v437, 16
      %v617 = vrot.slane %v615, 6
      %v618 = vor.u32 %v614, %v617
      %v619 = vrot.slane %v618, 4
      %v621 = vshrl.u32 %v566, 16
      %v623 = vrot.slane %v621, 5
      %v624 = vshll.u32 %v566, 16
      %v626 = vrot.slane %v624, 6
      %v627 = vor.u32 %v623, %v626
      %v628 = vsel %vm574, %v619, %v627
      %v630 = vshrl.u32 %v438, 16
      %v632 = vrot.slane %v630, 5
      %v633 = vshll.u32 %v438, 16
      %v635 = vrot.slane %v633, 6
      %v636 = vor.u32 %v632, %v635
      %v637 = vrot.slane %v636, 4
      %v639 = vshrl.u32 %v567, 16
      %v641 = vrot.slane %v639, 5
      %v642 = vshll.u32 %v567, 16
      %v644 = vrot.slane %v642, 6
      %v645 = vor.u32 %v641, %v644
      %v646 = vsel %vm574, %v637, %v645
      %v648 = vshrl.u32 %v439, 16
      %v650 = vrot.slane %v648, 5
      %v651 = vshll.u32 %v439, 16
      %v653 = vrot.slane %v651, 6
      %v654 = vor.u32 %v650, %v653
      %v655 = vrot.slane %v654, 4
      %v657 = vshrl.u32 %v568, 16
      %v659 = vrot.slane %v657, 5
      %v660 = vshll.u32 %v568, 16
      %v662 = vrot.slane %v660, 6
      %v663 = vor.u32 %v659, %v662
      %v664 = vsel %vm574, %v655, %v663
      %v666 = vshrl.u32 %v440, 16
      %v668 = vrot.slane %v666, 5
      %v669 = vshll.u32 %v440, 16
      %v671 = vrot.slane %v669, 6
      %v672 = vor.u32 %v668, %v671
      %v673 = vrot.slane %v672, 4
      %v675 = vshrl.u32 %v569, 16
      %v677 = vrot.slane %v675, 5
      %v678 = vshll.u32 %v569, 16
      %v680 = vrot.slane %v678, 6
      %v681 = vor.u32 %v677, %v680
      %v682 = vsel %vm574, %v673, %v681
      %v684 = vshrl.u32 %v441, 16
      %v686 = vrot.slane %v684, 5
      %v687 = vshll.u32 %v441, 16
      %v689 = vrot.slane %v687, 6
      %v690 = vor.u32 %v686, %v689
      %v691 = vrot.slane %v690, 4
      %v693 = vshrl.u32 %v570, 16
      %v695 = vrot.slane %v693, 5
      %v696 = vshll.u32 %v570, 16
      %v698 = vrot.slane %v696, 6
      %v699 = vor.u32 %v695, %v698
      %v700 = vsel %vm574, %v691, %v699
      %v702 = vshrl.u32 %v442, 16
      %v704 = vrot.slane %v702, 5
      %v705 = vshll.u32 %v442, 16
      %v707 = vrot.slane %v705, 6
      %v708 = vor.u32 %v704, %v707
      %v709 = vrot.slane %v708, 4
      %v711 = vshrl.u32 %v571, 16
      %v713 = vrot.slane %v711, 5
      %v714 = vshll.u32 %v571, 16
      %v716 = vrot.slane %v714, 6
      %v717 = vor.u32 %v713, %v716
      %v718 = vsel %vm574, %v709, %v717
      %s719 = scalar_lea.vmem %s1, 24
      %v720 = vld [vmem:[%s719] sm:$0xf]
      %v721 = vld [vmem:[%s719 + $0x4] sm:$0xf]
      %v722 = vunpack.c.l.b16 %v592
      %v723 = vunpack.c.l.b16 %v610
      %v724 = vunpack.c.l.b16 %v628
      %v725 = vunpack.c.l.b16 %v646
      %v726 = vunpack.c.l.b16 %v664
      %v727 = vunpack.c.l.b16 %v682
      %v728 = vunpack.c.l.b16 %v700
      %v729 = vunpack.c.l.b16 %v718
      %v730 = vpack.c.b16 %v723, %v722
      %v731 = vpack.c.b16 %v725, %v724
      %v732 = vpack.c.b16 %v727, %v726
      %v733 = vpack.c.b16 %v729, %v728
      %v736 = vunpack.c.l.b16 %v720
      %v737 = vunpack.c.l.b16 %v721
      %v738 = vpack.c.b16 %v737, %v736
      %v741 = vsel %vm326, %v730, 0
      %v744 = vsel %vm326, %v731, 0
      %v747 = vsel %vm326, %v732, 0
      %v750 = vsel %vm326, %v733, 0
      %752 = vmatpush.bf16.msra.mxu0 0
      %753 = vmatpush.bf16.msra.mxu0 0
      %754 = vmatpush.bf16.msra.mxu0 0
      %755 = vmatpush.bf16.msra.mxu0 0
      %756 = vmatpush.bf16.msra.mxu0 0
      %757 = vmatpush.bf16.msra.mxu0 0
      %758 = vmatpush.bf16.msra.mxu0 0
      %759 = vmatpush.bf16.msra.mxu0 %v738
      %760 = vmatmul.bf16.gmra.mxu0 %v741
      %v761 = vpop.f32.mrf.mxu0
      %v762 = vadd.f32 0.0, %v761
      %v763 = vpop.f32.mrf.mxu0
      %v764 = vadd.f32 0.0, %v763
      %765 = vmatmul.bf16.gmra.mxu0 %v744
      %v766 = vpop.f32.mrf.mxu0
      %v767 = vadd.f32 0.0, %v766
      %v768 = vpop.f32.mrf.mxu0
      %v769 = vadd.f32 0.0, %v768
      %770 = vmatmul.bf16.gmra.mxu0 %v747
      %v771 = vpop.f32.mrf.mxu0
      %v772 = vadd.f32 0.0, %v771
      %v773 = vpop.f32.mrf.mxu0
      %v774 = vadd.f32 0.0, %v773
      %775 = vmatmul.bf16.gmra.mxu0 %v750
      %v776 = vpop.f32.mrf.mxu0
      %v777 = vadd.f32 0.0, %v776
      %v778 = vpop.f32.mrf.mxu0
      %v779 = vadd.f32 0.0, %v778
      %780 = vdwg.mxu0
      %v781 = vadd.f32 %v556, %v762
      %v782 = vadd.f32 %v557, %v764
      %v783 = vadd.f32 %v558, %v767
      %v784 = vadd.f32 %v559, %v769
      %v785 = vadd.f32 %v560, %v772
      %v786 = vadd.f32 %v561, %v774
      %v787 = vadd.f32 %v562, %v777
      %v788 = vadd.f32 %v563, %v779
      %s789 = scalar_lea.vmem %s165, 8
      %v790 = vld [vmem:[%s789] sm:$0xf]
      %v791 = vld [vmem:[%s789 + $0x8] sm:$0xf]
      %v792 = vld [vmem:[%s789 + $0x10] sm:$0xf]
      %v793 = vld [vmem:[%s789 + $0x18] sm:$0xf]
      %v794 = vld [vmem:[%s789 + $0x20] sm:$0xf]
      %v795 = vld [vmem:[%s789 + $0x28] sm:$0xf]
      %v796 = vld [vmem:[%s789 + $0x30] sm:$0xf]
      %v797 = vld [vmem:[%s789 + $0x38] sm:$0xf]
      %s798 = scalar_lea.vmem %s1, 32
      %v799 = vld [vmem:[%s798] sm:$0xf]
      %v800 = vld [vmem:[%s798 + $0x4] sm:$0xf]
      %v809 = vunpack.c.l.b16 %v790
      %v810 = vunpack.c.l.b16 %v791
      %v811 = vunpack.c.l.b16 %v792
      %v812 = vunpack.c.l.b16 %v793
      %v813 = vunpack.c.l.b16 %v794
      %v814 = vunpack.c.l.b16 %v795
      %v815 = vunpack.c.l.b16 %v796
      %v816 = vunpack.c.l.b16 %v797
      %v817 = vpack.c.b16 %v810, %v809
      %v818 = vpack.c.b16 %v812, %v811
      %v819 = vpack.c.b16 %v814, %v813
      %v820 = vpack.c.b16 %v816, %v815
      %v823 = vunpack.c.l.b16 %v799
      %v824 = vunpack.c.l.b16 %v800
      %v825 = vpack.c.b16 %v824, %v823
      %v828 = vsel %vm326, %v817, 0
      %v831 = vsel %vm326, %v818, 0
      %v834 = vsel %vm326, %v819, 0
      %v837 = vsel %vm326, %v820, 0
      %839 = vmatpush.bf16.msra.mxu0 0
      %840 = vmatpush.bf16.msra.mxu0 0
      %841 = vmatpush.bf16.msra.mxu0 0
      %842 = vmatpush.bf16.msra.mxu0 0
      %843 = vmatpush.bf16.msra.mxu0 0
      %844 = vmatpush.bf16.msra.mxu0 0
      %845 = vmatpush.bf16.msra.mxu0 0
      %846 = vmatpush.bf16.msra.mxu0 %v825
      %847 = vmatmul.bf16.gmra.mxu0 %v828
      %v848 = vpop.f32.mrf.mxu0
      %v849 = vadd.f32 0.0, %v848
      %v850 = vpop.f32.mrf.mxu0
      %v851 = vadd.f32 0.0, %v850
      %852 = vmatmul.bf16.gmra.mxu0 %v831
      %v853 = vpop.f32.mrf.mxu0
      %v854 = vadd.f32 0.0, %v853
      %v855 = vpop.f32.mrf.mxu0
      %v856 = vadd.f32 0.0, %v855
      %857 = vmatmul.bf16.gmra.mxu0 %v834
      %v858 = vpop.f32.mrf.mxu0
      %v859 = vadd.f32 0.0, %v858
      %v860 = vpop.f32.mrf.mxu0
      %v861 = vadd.f32 0.0, %v860
      %862 = vmatmul.bf16.gmra.mxu0 %v837
      %v863 = vpop.f32.mrf.mxu0
      %v864 = vadd.f32 0.0, %v863
      %v865 = vpop.f32.mrf.mxu0
      %v866 = vadd.f32 0.0, %v865
      %867 = vdwg.mxu0
      %v868 = vadd.f32 %v781, %v849
      %v869 = vadd.f32 %v782, %v851
      %v870 = vadd.f32 %v783, %v854
      %v871 = vadd.f32 %v784, %v856
      %v872 = vadd.f32 %v785, %v859
      %v873 = vadd.f32 %v786, %v861
      %v874 = vadd.f32 %v787, %v864
      %v875 = vadd.f32 %v788, %v866
      %v876 = vld [vmem:[%s789] sm:$0xf]
      %v877 = vld [vmem:[%s789 + $0x4] sm:$0x1]
      %v878 = vld [vmem:[%s789 + $0x8] sm:$0xf]
      %v879 = vld [vmem:[%s789 + $0xc] sm:$0x1]
      %v880 = vld [vmem:[%s789 + $0x10] sm:$0xf]
      %v881 = vld [vmem:[%s789 + $0x14] sm:$0x1]
      %v882 = vld [vmem:[%s789 + $0x18] sm:$0xf]
      %v883 = vld [vmem:[%s789 + $0x1c] sm:$0x1]
      %v884 = vld [vmem:[%s789 + $0x20] sm:$0xf]
      %v885 = vld [vmem:[%s789 + $0x24] sm:$0x1]
      %v886 = vld [vmem:[%s789 + $0x28] sm:$0xf]
      %v887 = vld [vmem:[%s789 + $0x2c] sm:$0x1]
      %v888 = vld [vmem:[%s789 + $0x30] sm:$0xf]
      %v889 = vld [vmem:[%s789 + $0x34] sm:$0x1]
      %v890 = vld [vmem:[%s789 + $0x38] sm:$0xf]
      %v891 = vld [vmem:[%s789 + $0x3c] sm:$0x1]
      %v893 = vshrl.u32 %v876, 16
      %v895 = vrot.slane %v893, 4
      %v896 = vshll.u32 %v876, 16
      %v898 = vrot.slane %v896, 5
      %v899 = vor.u32 %v895, %v898
      %v900 = vrot.slane %v899, 4
      %v902 = vshll.u32 %v877, 16
      %v904 = vrot.slane %v902, 5
      %v905 = vsel %vm192, %v900, %v904
      %v907 = vshrl.u32 %v878, 16
      %v909 = vrot.slane %v907, 4
      %v910 = vshll.u32 %v878, 16
      %v912 = vrot.slane %v910, 5
      %v913 = vor.u32 %v909, %v912
      %v914 = vrot.slane %v913, 4
      %v916 = vshll.u32 %v879, 16
      %v918 = vrot.slane %v916, 5
      %v919 = vsel %vm192, %v914, %v918
      %v921 = vshrl.u32 %v880, 16
      %v923 = vrot.slane %v921, 4
      %v924 = vshll.u32 %v880, 16
      %v926 = vrot.slane %v924, 5
      %v927 = vor.u32 %v923, %v926
      %v928 = vrot.slane %v927, 4
      %v930 = vshll.u32 %v881, 16
      %v932 = vrot.slane %v930, 5
      %v933 = vsel %vm192, %v928, %v932
      %v935 = vshrl.u32 %v882, 16
      %v937 = vrot.slane %v935, 4
      %v938 = vshll.u32 %v882, 16
      %v940 = vrot.slane %v938, 5
      %v941 = vor.u32 %v937, %v940
      %v942 = vrot.slane %v941, 4
      %v944 = vshll.u32 %v883, 16
      %v946 = vrot.slane %v944, 5
      %v947 = vsel %vm192, %v942, %v946
      %v949 = vshrl.u32 %v884, 16
      %v951 = vrot.slane %v949, 4
      %v952 = vshll.u32 %v884, 16
      %v954 = vrot.slane %v952, 5
      %v955 = vor.u32 %v951, %v954
      %v956 = vrot.slane %v955, 4
      %v958 = vshll.u32 %v885, 16
      %v960 = vrot.slane %v958, 5
      %v961 = vsel %vm192, %v956, %v960
      %v963 = vshrl.u32 %v886, 16
      %v965 = vrot.slane %v963, 4
      %v966 = vshll.u32 %v886, 16
      %v968 = vrot.slane %v966, 5
      %v969 = vor.u32 %v965, %v968
      %v970 = vrot.slane %v969, 4
      %v972 = vshll.u32 %v887, 16
      %v974 = vrot.slane %v972, 5
      %v975 = vsel %vm192, %v970, %v974
      %v977 = vshrl.u32 %v888, 16
      %v979 = vrot.slane %v977, 4
      %v980 = vshll.u32 %v888, 16
      %v982 = vrot.slane %v980, 5
      %v983 = vor.u32 %v979, %v982
      %v984 = vrot.slane %v983, 4
      %v986 = vshll.u32 %v889, 16
      %v988 = vrot.slane %v986, 5
      %v989 = vsel %vm192, %v984, %v988
      %v991 = vshrl.u32 %v890, 16
      %v993 = vrot.slane %v991, 4
      %v994 = vshll.u32 %v890, 16
      %v996 = vrot.slane %v994, 5
      %v997 = vor.u32 %v993, %v996
      %v998 = vrot.slane %v997, 4
      %v1000 = vshll.u32 %v891, 16
      %v1002 = vrot.slane %v1000, 5
      %v1003 = vsel %vm192, %v998, %v1002
      %s1004 = scalar_lea.vmem %s1, 40
      %v1005 = vld [vmem:[%s1004] sm:$0xf]
      %v1006 = vld [vmem:[%s1004 + $0x4] sm:$0xf]
      %v1007 = vunpack.c.l.b16 %v905
      %v1008 = vunpack.c.l.b16 %v919
      %v1009 = vunpack.c.l.b16 %v933
      %v1010 = vunpack.c.l.b16 %v947
      %v1011 = vunpack.c.l.b16 %v961
      %v1012 = vunpack.c.l.b16 %v975
      %v1013 = vunpack.c.l.b16 %v989
      %v1014 = vunpack.c.l.b16 %v1003
      %v1015 = vpack.c.b16 %v1008, %v1007
      %v1016 = vpack.c.b16 %v1010, %v1009
      %v1017 = vpack.c.b16 %v1012, %v1011
      %v1018 = vpack.c.b16 %v1014, %v1013
      %v1021 = vunpack.c.l.b16 %v1005
      %v1022 = vunpack.c.l.b16 %v1006
      %v1023 = vpack.c.b16 %v1022, %v1021
      %v1026 = vsel %vm326, %v1015, 0
      %v1029 = vsel %vm326, %v1016, 0
      %v1032 = vsel %vm326, %v1017, 0
      %v1035 = vsel %vm326, %v1018, 0
      %1037 = vmatpush.bf16.msra.mxu0 0
      %1038 = vmatpush.bf16.msra.mxu0 0
      %1039 = vmatpush.bf16.msra.mxu0 0
      %1040 = vmatpush.bf16.msra.mxu0 0
      %1041 = vmatpush.bf16.msra.mxu0 0
      %1042 = vmatpush.bf16.msra.mxu0 0
      %1043 = vmatpush.bf16.msra.mxu0 0
      %1044 = vmatpush.bf16.msra.mxu0 %v1023
      %1045 = vmatmul.bf16.gmra.mxu0 %v1026
      %v1046 = vpop.f32.mrf.mxu0
      %v1047 = vadd.f32 0.0, %v1046
      %v1048 = vpop.f32.mrf.mxu0
      %v1049 = vadd.f32 0.0, %v1048
      %1050 = vmatmul.bf16.gmra.mxu0 %v1029
      %v1051 = vpop.f32.mrf.mxu0
      %v1052 = vadd.f32 0.0, %v1051
      %v1053 = vpop.f32.mrf.mxu0
      %v1054 = vadd.f32 0.0, %v1053
      %1055 = vmatmul.bf16.gmra.mxu0 %v1032
      %v1056 = vpop.f32.mrf.mxu0
      %v1057 = vadd.f32 0.0, %v1056
      %v1058 = vpop.f32.mrf.mxu0
      %v1059 = vadd.f32 0.0, %v1058
      %1060 = vmatmul.bf16.gmra.mxu0 %v1035
      %v1061 = vpop.f32.mrf.mxu0
      %v1062 = vadd.f32 0.0, %v1061
      %v1063 = vpop.f32.mrf.mxu0
      %v1064 = vadd.f32 0.0, %v1063
      %1065 = vdwg.mxu0
      %v1066 = vadd.f32 %v868, %v1047
      %v1067 = vadd.f32 %v869, %v1049
      %v1068 = vadd.f32 %v870, %v1052
      %v1069 = vadd.f32 %v871, %v1054
      %v1070 = vadd.f32 %v872, %v1057
      %v1071 = vadd.f32 %v873, %v1059
      %v1072 = vadd.f32 %v874, %v1062
      %v1073 = vadd.f32 %v875, %v1064
      %v1074 = vld [vmem:[%s789] sm:$0xe]
      %v1075 = vld [vmem:[%s789 + $0x8] sm:$0xe]
      %v1076 = vld [vmem:[%s789 + $0x10] sm:$0xe]
      %v1077 = vld [vmem:[%s789 + $0x18] sm:$0xe]
      %v1078 = vld [vmem:[%s789 + $0x20] sm:$0xe]
      %v1079 = vld [vmem:[%s789 + $0x28] sm:$0xe]
      %v1080 = vld [vmem:[%s789 + $0x30] sm:$0xe]
      %v1081 = vld [vmem:[%s789 + $0x38] sm:$0xe]
      %v1098 = vrot.slane %v1074, 5
      %v1099 = vrot.slane %v1098, 4
      %v1100 = vrot.slane %v877, 5
      %v1101 = vsel %vm461, %v1099, %v1100
      %v1102 = vrot.slane %v1075, 5
      %v1103 = vrot.slane %v1102, 4
      %v1104 = vrot.slane %v879, 5
      %v1105 = vsel %vm461, %v1103, %v1104
      %v1106 = vrot.slane %v1076, 5
      %v1107 = vrot.slane %v1106, 4
      %v1108 = vrot.slane %v881, 5
      %v1109 = vsel %vm461, %v1107, %v1108
      %v1110 = vrot.slane %v1077, 5
      %v1111 = vrot.slane %v1110, 4
      %v1112 = vrot.slane %v883, 5
      %v1113 = vsel %vm461, %v1111, %v1112
      %v1114 = vrot.slane %v1078, 5
      %v1115 = vrot.slane %v1114, 4
      %v1116 = vrot.slane %v885, 5
      %v1117 = vsel %vm461, %v1115, %v1116
      %v1118 = vrot.slane %v1079, 5
      %v1119 = vrot.slane %v1118, 4
      %v1120 = vrot.slane %v887, 5
      %v1121 = vsel %vm461, %v1119, %v1120
      %v1122 = vrot.slane %v1080, 5
      %v1123 = vrot.slane %v1122, 4
      %v1124 = vrot.slane %v889, 5
      %v1125 = vsel %vm461, %v1123, %v1124
      %v1126 = vrot.slane %v1081, 5
      %v1127 = vrot.slane %v1126, 4
      %v1128 = vrot.slane %v891, 5
      %v1129 = vsel %vm461, %v1127, %v1128
      %s1130 = scalar_lea.vmem %s1, 48
      %v1131 = vld [vmem:[%s1130] sm:$0xf]
      %v1132 = vld [vmem:[%s1130 + $0x4] sm:$0xf]
      %v1133 = vunpack.c.l.b16 %v1101
      %v1134 = vunpack.c.l.b16 %v1105
      %v1135 = vunpack.c.l.b16 %v1109
      %v1136 = vunpack.c.l.b16 %v1113
      %v1137 = vunpack.c.l.b16 %v1117
      %v1138 = vunpack.c.l.b16 %v1121
      %v1139 = vunpack.c.l.b16 %v1125
      %v1140 = vunpack.c.l.b16 %v1129
      %v1141 = vpack.c.b16 %v1134, %v1133
      %v1142 = vpack.c.b16 %v1136, %v1135
      %v1143 = vpack.c.b16 %v1138, %v1137
      %v1144 = vpack.c.b16 %v1140, %v1139
      %v1147 = vunpack.c.l.b16 %v1131
      %v1148 = vunpack.c.l.b16 %v1132
      %v1149 = vpack.c.b16 %v1148, %v1147
      %v1152 = vsel %vm326, %v1141, 0
      %v1155 = vsel %vm326, %v1142, 0
      %v1158 = vsel %vm326, %v1143, 0
      %v1161 = vsel %vm326, %v1144, 0
      %1163 = vmatpush.bf16.msra.mxu0 0
      %1164 = vmatpush.bf16.msra.mxu0 0
      %1165 = vmatpush.bf16.msra.mxu0 0
      %1166 = vmatpush.bf16.msra.mxu0 0
      %1167 = vmatpush.bf16.msra.mxu0 0
      %1168 = vmatpush.bf16.msra.mxu0 0
      %1169 = vmatpush.bf16.msra.mxu0 0
      %1170 = vmatpush.bf16.msra.mxu0 %v1149
      %1171 = vmatmul.bf16.gmra.mxu0 %v1152
      %v1172 = vpop.f32.mrf.mxu0
      %v1173 = vadd.f32 0.0, %v1172
      %v1174 = vpop.f32.mrf.mxu0
      %v1175 = vadd.f32 0.0, %v1174
      %1176 = vmatmul.bf16.gmra.mxu0 %v1155
      %v1177 = vpop.f32.mrf.mxu0
      %v1178 = vadd.f32 0.0, %v1177
      %v1179 = vpop.f32.mrf.mxu0
      %v1180 = vadd.f32 0.0, %v1179
      %1181 = vmatmul.bf16.gmra.mxu0 %v1158
      %v1182 = vpop.f32.mrf.mxu0
      %v1183 = vadd.f32 0.0, %v1182
      %v1184 = vpop.f32.mrf.mxu0
      %v1185 = vadd.f32 0.0, %v1184
      %1186 = vmatmul.bf16.gmra.mxu0 %v1161
      %v1187 = vpop.f32.mrf.mxu0
      %v1188 = vadd.f32 0.0, %v1187
      %v1189 = vpop.f32.mrf.mxu0
      %v1190 = vadd.f32 0.0, %v1189
      %1191 = vdwg.mxu0
      %v1192 = vadd.f32 %v1066, %v1173
      %v1193 = vadd.f32 %v1067, %v1175
      %v1194 = vadd.f32 %v1068, %v1178
      %v1195 = vadd.f32 %v1069, %v1180
      %v1196 = vadd.f32 %v1070, %v1183
      %v1197 = vadd.f32 %v1071, %v1185
      %v1198 = vadd.f32 %v1072, %v1188
      %v1199 = vadd.f32 %v1073, %v1190
      %v1200 = vld [vmem:[%s789 + $0x4] sm:$0x3]
      %v1201 = vld [vmem:[%s789 + $0xc] sm:$0x3]
      %v1202 = vld [vmem:[%s789 + $0x14] sm:$0x3]
      %v1203 = vld [vmem:[%s789 + $0x1c] sm:$0x3]
      %v1204 = vld [vmem:[%s789 + $0x24] sm:$0x3]
      %v1205 = vld [vmem:[%s789 + $0x2c] sm:$0x3]
      %v1206 = vld [vmem:[%s789 + $0x34] sm:$0x3]
      %v1207 = vld [vmem:[%s789 + $0x3c] sm:$0x3]
      %v1209 = vshrl.u32 %v1074, 16
      %v1211 = vrot.slane %v1209, 5
      %v1212 = vshll.u32 %v1074, 16
      %v1214 = vrot.slane %v1212, 6
      %v1215 = vor.u32 %v1211, %v1214
      %v1216 = vrot.slane %v1215, 4
      %v1218 = vshrl.u32 %v1200, 16
      %v1220 = vrot.slane %v1218, 5
      %v1221 = vshll.u32 %v1200, 16
      %v1223 = vrot.slane %v1221, 6
      %v1224 = vor.u32 %v1220, %v1223
      %v1225 = vsel %vm574, %v1216, %v1224
      %v1227 = vshrl.u32 %v1075, 16
      %v1229 = vrot.slane %v1227, 5
      %v1230 = vshll.u32 %v1075, 16
      %v1232 = vrot.slane %v1230, 6
      %v1233 = vor.u32 %v1229, %v1232
      %v1234 = vrot.slane %v1233, 4
      %v1236 = vshrl.u32 %v1201, 16
      %v1238 = vrot.slane %v1236, 5
      %v1239 = vshll.u32 %v1201, 16
      %v1241 = vrot.slane %v1239, 6
      %v1242 = vor.u32 %v1238, %v1241
      %v1243 = vsel %vm574, %v1234, %v1242
      %v1245 = vshrl.u32 %v1076, 16
      %v1247 = vrot.slane %v1245, 5
      %v1248 = vshll.u32 %v1076, 16
      %v1250 = vrot.slane %v1248, 6
      %v1251 = vor.u32 %v1247, %v1250
      %v1252 = vrot.slane %v1251, 4
      %v1254 = vshrl.u32 %v1202, 16
      %v1256 = vrot.slane %v1254, 5
      %v1257 = vshll.u32 %v1202, 16
      %v1259 = vrot.slane %v1257, 6
      %v1260 = vor.u32 %v1256, %v1259
      %v1261 = vsel %vm574, %v1252, %v1260
      %v1263 = vshrl.u32 %v1077, 16
      %v1265 = vrot.slane %v1263, 5
      %v1266 = vshll.u32 %v1077, 16
      %v1268 = vrot.slane %v1266, 6
      %v1269 = vor.u32 %v1265, %v1268
      %v1270 = vrot.slane %v1269, 4
      %v1272 = vshrl.u32 %v1203, 16
      %v1274 = vrot.slane %v1272, 5
      %v1275 = vshll.u32 %v1203, 16
      %v1277 = vrot.slane %v1275, 6
      %v1278 = vor.u32 %v1274, %v1277
      %v1279 = vsel %vm574, %v1270, %v1278
      %v1281 = vshrl.u32 %v1078, 16
      %v1283 = vrot.slane %v1281, 5
      %v1284 = vshll.u32 %v1078, 16
      %v1286 = vrot.slane %v1284, 6
      %v1287 = vor.u32 %v1283, %v1286
      %v1288 = vrot.slane %v1287, 4
      %v1290 = vshrl.u32 %v1204, 16
      %v1292 = vrot.slane %v1290, 5
      %v1293 = vshll.u32 %v1204, 16
      %v1295 = vrot.slane %v1293, 6
      %v1296 = vor.u32 %v1292, %v1295
      %v1297 = vsel %vm574, %v1288, %v1296
      %v1299 = vshrl.u32 %v1079, 16
      %v1301 = vrot.slane %v1299, 5
      %v1302 = vshll.u32 %v1079, 16
      %v1304 = vrot.slane %v1302, 6
      %v1305 = vor.u32 %v1301, %v1304
      %v1306 = vrot.slane %v1305, 4
      %v1308 = vshrl.u32 %v1205, 16
      %v1310 = vrot.slane %v1308, 5
      %v1311 = vshll.u32 %v1205, 16
      %v1313 = vrot.slane %v1311, 6
      %v1314 = vor.u32 %v1310, %v1313
      %v1315 = vsel %vm574, %v1306, %v1314
      %v1317 = vshrl.u32 %v1080, 16
      %v1319 = vrot.slane %v1317, 5
      %v1320 = vshll.u32 %v1080, 16
      %v1322 = vrot.slane %v1320, 6
      %v1323 = vor.u32 %v1319, %v1322
      %v1324 = vrot.slane %v1323, 4
      %v1326 = vshrl.u32 %v1206, 16
      %v1328 = vrot.slane %v1326, 5
      %v1329 = vshll.u32 %v1206, 16
      %v1331 = vrot.slane %v1329, 6
      %v1332 = vor.u32 %v1328, %v1331
      %v1333 = vsel %vm574, %v1324, %v1332
      %v1335 = vshrl.u32 %v1081, 16
      %v1337 = vrot.slane %v1335, 5
      %v1338 = vshll.u32 %v1081, 16
      %v1340 = vrot.slane %v1338, 6
      %v1341 = vor.u32 %v1337, %v1340
      %v1342 = vrot.slane %v1341, 4
      %v1344 = vshrl.u32 %v1207, 16
      %v1346 = vrot.slane %v1344, 5
      %v1347 = vshll.u32 %v1207, 16
      %v1349 = vrot.slane %v1347, 6
      %v1350 = vor.u32 %v1346, %v1349
      %v1351 = vsel %vm574, %v1342, %v1350
      %s1352 = scalar_lea.vmem %s1, 56
      %v1353 = vld [vmem:[%s1352] sm:$0xf]
      %v1354 = vld [vmem:[%s1352 + $0x4] sm:$0xf]
      %v1355 = vunpack.c.l.b16 %v1225
      %v1356 = vunpack.c.l.b16 %v1243
      %v1357 = vunpack.c.l.b16 %v1261
      %v1358 = vunpack.c.l.b16 %v1279
      %v1359 = vunpack.c.l.b16 %v1297
      %v1360 = vunpack.c.l.b16 %v1315
      %v1361 = vunpack.c.l.b16 %v1333
      %v1362 = vunpack.c.l.b16 %v1351
      %v1363 = vpack.c.b16 %v1356, %v1355
      %v1364 = vpack.c.b16 %v1358, %v1357
      %v1365 = vpack.c.b16 %v1360, %v1359
      %v1366 = vpack.c.b16 %v1362, %v1361
      %v1369 = vunpack.c.l.b16 %v1353
      %v1370 = vunpack.c.l.b16 %v1354
      %v1371 = vpack.c.b16 %v1370, %v1369
      %v1374 = vsel %vm326, %v1363, 0
      %v1377 = vsel %vm326, %v1364, 0
      %v1380 = vsel %vm326, %v1365, 0
      %v1383 = vsel %vm326, %v1366, 0
      %1385 = vmatpush.bf16.msra.mxu0 0
      %1386 = vmatpush.bf16.msra.mxu0 0
      %1387 = vmatpush.bf16.msra.mxu0 0
      %1388 = vmatpush.bf16.msra.mxu0 0
      %1389 = vmatpush.bf16.msra.mxu0 0
      %1390 = vmatpush.bf16.msra.mxu0 0
      %1391 = vmatpush.bf16.msra.mxu0 0
      %1392 = vmatpush.bf16.msra.mxu0 %v1371
      %1393 = vmatmul.bf16.gmra.mxu0 %v1374
      %v1394 = vpop.f32.mrf.mxu0
      %v1395 = vadd.f32 0.0, %v1394
      %v1396 = vpop.f32.mrf.mxu0
      %v1397 = vadd.f32 0.0, %v1396
      %1398 = vmatmul.bf16.gmra.mxu0 %v1377
      %v1399 = vpop.f32.mrf.mxu0
      %v1400 = vadd.f32 0.0, %v1399
      %v1401 = vpop.f32.mrf.mxu0
      %v1402 = vadd.f32 0.0, %v1401
      %1403 = vmatmul.bf16.gmra.mxu0 %v1380
      %v1404 = vpop.f32.mrf.mxu0
      %v1405 = vadd.f32 0.0, %v1404
      %v1406 = vpop.f32.mrf.mxu0
      %v1407 = vadd.f32 0.0, %v1406
      %1408 = vmatmul.bf16.gmra.mxu0 %v1383
      %v1409 = vpop.f32.mrf.mxu0
      %v1410 = vadd.f32 0.0, %v1409
      %v1411 = vpop.f32.mrf.mxu0
      %v1412 = vadd.f32 0.0, %v1411
      %1413 = vdwg.mxu0
      %v1414 = vadd.f32 %v1192, %v1395
      %v1415 = vadd.f32 %v1193, %v1397
      %v1416 = vadd.f32 %v1194, %v1400
      %v1417 = vadd.f32 %v1195, %v1402
      %v1418 = vadd.f32 %v1196, %v1405
      %v1419 = vadd.f32 %v1197, %v1407
      %v1420 = vadd.f32 %v1198, %v1410
      %v1421 = vadd.f32 %v1199, %v1412
      %s1422 = scalar_lea.vmem %s165, 16
      %v1423 = vld [vmem:[%s1422] sm:$0xf]
      %v1424 = vld [vmem:[%s1422 + $0x8] sm:$0xf]
      %v1425 = vld [vmem:[%s1422 + $0x10] sm:$0xf]
      %v1426 = vld [vmem:[%s1422 + $0x18] sm:$0xf]
      %v1427 = vld [vmem:[%s1422 + $0x20] sm:$0xf]
      %v1428 = vld [vmem:[%s1422 + $0x28] sm:$0xf]
      %v1429 = vld [vmem:[%s1422 + $0x30] sm:$0xf]
      %v1430 = vld [vmem:[%s1422 + $0x38] sm:$0xf]
      %s1431 = scalar_lea.vmem %s1, 64
      %v1432 = vld [vmem:[%s1431] sm:$0xf]
      %v1433 = vld [vmem:[%s1431 + $0x4] sm:$0xf]
      %v1442 = vunpack.c.l.b16 %v1423
      %v1443 = vunpack.c.l.b16 %v1424
      %v1444 = vunpack.c.l.b16 %v1425
      %v1445 = vunpack.c.l.b16 %v1426
      %v1446 = vunpack.c.l.b16 %v1427
      %v1447 = vunpack.c.l.b16 %v1428
      %v1448 = vunpack.c.l.b16 %v1429
      %v1449 = vunpack.c.l.b16 %v1430
      %v1450 = vpack.c.b16 %v1443, %v1442
      %v1451 = vpack.c.b16 %v1445, %v1444
      %v1452 = vpack.c.b16 %v1447, %v1446
      %v1453 = vpack.c.b16 %v1449, %v1448
      %v1456 = vunpack.c.l.b16 %v1432
      %v1457 = vunpack.c.l.b16 %v1433
      %v1458 = vpack.c.b16 %v1457, %v1456
      %v1461 = vsel %vm326, %v1450, 0
      %v1464 = vsel %vm326, %v1451, 0
      %v1467 = vsel %vm326, %v1452, 0
      %v1470 = vsel %vm326, %v1453, 0
      %1472 = vmatpush.bf16.msra.mxu0 0
      %1473 = vmatpush.bf16.msra.mxu0 0
      %1474 = vmatpush.bf16.msra.mxu0 0
      %1475 = vmatpush.bf16.msra.mxu0 0
      %1476 = vmatpush.bf16.msra.mxu0 0
      %1477 = vmatpush.bf16.msra.mxu0 0
      %1478 = vmatpush.bf16.msra.mxu0 0
      %1479 = vmatpush.bf16.msra.mxu0 %v1458
      %1480 = vmatmul.bf16.gmra.mxu0 %v1461
      %v1481 = vpop.f32.mrf.mxu0
      %v1482 = vadd.f32 0.0, %v1481
      %v1483 = vpop.f32.mrf.mxu0
      %v1484 = vadd.f32 0.0, %v1483
      %1485 = vmatmul.bf16.gmra.mxu0 %v1464
      %v1486 = vpop.f32.mrf.mxu0
      %v1487 = vadd.f32 0.0, %v1486
      %v1488 = vpop.f32.mrf.mxu0
      %v1489 = vadd.f32 0.0, %v1488
      %1490 = vmatmul.bf16.gmra.mxu0 %v1467
      %v1491 = vpop.f32.mrf.mxu0
      %v1492 = vadd.f32 0.0, %v1491
      %v1493 = vpop.f32.mrf.mxu0
      %v1494 = vadd.f32 0.0, %v1493
      %1495 = vmatmul.bf16.gmra.mxu0 %v1470
      %v1496 = vpop.f32.mrf.mxu0
      %v1497 = vadd.f32 0.0, %v1496
      %v1498 = vpop.f32.mrf.mxu0
      %v1499 = vadd.f32 0.0, %v1498
      %1500 = vdwg.mxu0
      %v1501 = vadd.f32 %v1414, %v1482
      %v1502 = vadd.f32 %v1415, %v1484
      %v1503 = vadd.f32 %v1416, %v1487
      %v1504 = vadd.f32 %v1417, %v1489
      %v1505 = vadd.f32 %v1418, %v1492
      %v1506 = vadd.f32 %v1419, %v1494
      %v1507 = vadd.f32 %v1420, %v1497
      %v1508 = vadd.f32 %v1421, %v1499
      %v1509 = vld [vmem:[%s1422] sm:$0xf]
      %v1510 = vld [vmem:[%s1422 + $0x4] sm:$0x1]
      %v1511 = vld [vmem:[%s1422 + $0x8] sm:$0xf]
      %v1512 = vld [vmem:[%s1422 + $0xc] sm:$0x1]
      %v1513 = vld [vmem:[%s1422 + $0x10] sm:$0xf]
      %v1514 = vld [vmem:[%s1422 + $0x14] sm:$0x1]
      %v1515 = vld [vmem:[%s1422 + $0x18] sm:$0xf]
      %v1516 = vld [vmem:[%s1422 + $0x1c] sm:$0x1]
      %v1517 = vld [vmem:[%s1422 + $0x20] sm:$0xf]
      %v1518 = vld [vmem:[%s1422 + $0x24] sm:$0x1]
      %v1519 = vld [vmem:[%s1422 + $0x28] sm:$0xf]
      %v1520 = vld [vmem:[%s1422 + $0x2c] sm:$0x1]
      %v1521 = vld [vmem:[%s1422 + $0x30] sm:$0xf]
      %v1522 = vld [vmem:[%s1422 + $0x34] sm:$0x1]
      %v1523 = vld [vmem:[%s1422 + $0x38] sm:$0xf]
      %v1524 = vld [vmem:[%s1422 + $0x3c] sm:$0x1]
      %v1526 = vshrl.u32 %v1509, 16
      %v1528 = vrot.slane %v1526, 4
      %v1529 = vshll.u32 %v1509, 16
      %v1531 = vrot.slane %v1529, 5
      %v1532 = vor.u32 %v1528, %v1531
      %v1533 = vrot.slane %v1532, 4
      %v1535 = vshll.u32 %v1510, 16
      %v1537 = vrot.slane %v1535, 5
      %v1538 = vsel %vm192, %v1533, %v1537
      %v1540 = vshrl.u32 %v1511, 16
      %v1542 = vrot.slane %v1540, 4
      %v1543 = vshll.u32 %v1511, 16
      %v1545 = vrot.slane %v1543, 5
      %v1546 = vor.u32 %v1542, %v1545
      %v1547 = vrot.slane %v1546, 4
      %v1549 = vshll.u32 %v1512, 16
      %v1551 = vrot.slane %v1549, 5
      %v1552 = vsel %vm192, %v1547, %v1551
      %v1554 = vshrl.u32 %v1513, 16
      %v1556 = vrot.slane %v1554, 4
      %v1557 = vshll.u32 %v1513, 16
      %v1559 = vrot.slane %v1557, 5
      %v1560 = vor.u32 %v1556, %v1559
      %v1561 = vrot.slane %v1560, 4
      %v1563 = vshll.u32 %v1514, 16
      %v1565 = vrot.slane %v1563, 5
      %v1566 = vsel %vm192, %v1561, %v1565
      %v1568 = vshrl.u32 %v1515, 16
      %v1570 = vrot.slane %v1568, 4
      %v1571 = vshll.u32 %v1515, 16
      %v1573 = vrot.slane %v1571, 5
      %v1574 = vor.u32 %v1570, %v1573
      %v1575 = vrot.slane %v1574, 4
      %v1577 = vshll.u32 %v1516, 16
      %v1579 = vrot.slane %v1577, 5
      %v1580 = vsel %vm192, %v1575, %v1579
      %v1582 = vshrl.u32 %v1517, 16
      %v1584 = vrot.slane %v1582, 4
      %v1585 = vshll.u32 %v1517, 16
      %v1587 = vrot.slane %v1585, 5
      %v1588 = vor.u32 %v1584, %v1587
      %v1589 = vrot.slane %v1588, 4
      %v1591 = vshll.u32 %v1518, 16
      %v1593 = vrot.slane %v1591, 5
      %v1594 = vsel %vm192, %v1589, %v1593
      %v1596 = vshrl.u32 %v1519, 16
      %v1598 = vrot.slane %v1596, 4
      %v1599 = vshll.u32 %v1519, 16
      %v1601 = vrot.slane %v1599, 5
      %v1602 = vor.u32 %v1598, %v1601
      %v1603 = vrot.slane %v1602, 4
      %v1605 = vshll.u32 %v1520, 16
      %v1607 = vrot.slane %v1605, 5
      %v1608 = vsel %vm192, %v1603, %v1607
      %v1610 = vshrl.u32 %v1521, 16
      %v1612 = vrot.slane %v1610, 4
      %v1613 = vshll.u32 %v1521, 16
      %v1615 = vrot.slane %v1613, 5
      %v1616 = vor.u32 %v1612, %v1615
      %v1617 = vrot.slane %v1616, 4
      %v1619 = vshll.u32 %v1522, 16
      %v1621 = vrot.slane %v1619, 5
      %v1622 = vsel %vm192, %v1617, %v1621
      %v1624 = vshrl.u32 %v1523, 16
      %v1626 = vrot.slane %v1624, 4
      %v1627 = vshll.u32 %v1523, 16
      %v1629 = vrot.slane %v1627, 5
      %v1630 = vor.u32 %v1626, %v1629
      %v1631 = vrot.slane %v1630, 4
      %v1633 = vshll.u32 %v1524, 16
      %v1635 = vrot.slane %v1633, 5
      %v1636 = vsel %vm192, %v1631, %v1635
      %s1637 = scalar_lea.vmem %s1, 72
      %v1638 = vld [vmem:[%s1637] sm:$0xf]
      %v1639 = vld [vmem:[%s1637 + $0x4] sm:$0xf]
      %v1640 = vunpack.c.l.b16 %v1538
      %v1641 = vunpack.c.l.b16 %v1552
      %v1642 = vunpack.c.l.b16 %v1566
      %v1643 = vunpack.c.l.b16 %v1580
      %v1644 = vunpack.c.l.b16 %v1594
      %v1645 = vunpack.c.l.b16 %v1608
      %v1646 = vunpack.c.l.b16 %v1622
      %v1647 = vunpack.c.l.b16 %v1636
      %v1648 = vpack.c.b16 %v1641, %v1640
      %v1649 = vpack.c.b16 %v1643, %v1642
      %v1650 = vpack.c.b16 %v1645, %v1644
      %v1651 = vpack.c.b16 %v1647, %v1646
      %v1654 = vunpack.c.l.b16 %v1638
      %v1655 = vunpack.c.l.b16 %v1639
      %v1656 = vpack.c.b16 %v1655, %v1654
      %v1659 = vsel %vm326, %v1648, 0
      %v1662 = vsel %vm326, %v1649, 0
      %v1665 = vsel %vm326, %v1650, 0
      %v1668 = vsel %vm326, %v1651, 0
      %1670 = vmatpush.bf16.msra.mxu0 0
      %1671 = vmatpush.bf16.msra.mxu0 0
      %1672 = vmatpush.bf16.msra.mxu0 0
      %1673 = vmatpush.bf16.msra.mxu0 0
      %1674 = vmatpush.bf16.msra.mxu0 0
      %1675 = vmatpush.bf16.msra.mxu0 0
      %1676 = vmatpush.bf16.msra.mxu0 0
      %1677 = vmatpush.bf16.msra.mxu0 %v1656
      %1678 = vmatmul.bf16.gmra.mxu0 %v1659
      %v1679 = vpop.f32.mrf.mxu0
      %v1680 = vadd.f32 0.0, %v1679
      %v1681 = vpop.f32.mrf.mxu0
      %v1682 = vadd.f32 0.0, %v1681
      %1683 = vmatmul.bf16.gmra.mxu0 %v1662
      %v1684 = vpop.f32.mrf.mxu0
      %v1685 = vadd.f32 0.0, %v1684
      %v1686 = vpop.f32.mrf.mxu0
      %v1687 = vadd.f32 0.0, %v1686
      %1688 = vmatmul.bf16.gmra.mxu0 %v1665
      %v1689 = vpop.f32.mrf.mxu0
      %v1690 = vadd.f32 0.0, %v1689
      %v1691 = vpop.f32.mrf.mxu0
      %v1692 = vadd.f32 0.0, %v1691
      %1693 = vmatmul.bf16.gmra.mxu0 %v1668
      %v1694 = vpop.f32.mrf.mxu0
      %v1695 = vadd.f32 0.0, %v1694
      %v1696 = vpop.f32.mrf.mxu0
      %v1697 = vadd.f32 0.0, %v1696
      %1698 = vdwg.mxu0
      %v1699 = vadd.f32 %v1501, %v1680
      %v1700 = vadd.f32 %v1502, %v1682
      %v1701 = vadd.f32 %v1503, %v1685
      %v1702 = vadd.f32 %v1504, %v1687
      %v1703 = vadd.f32 %v1505, %v1690
      %v1704 = vadd.f32 %v1506, %v1692
      %v1705 = vadd.f32 %v1507, %v1695
      %v1706 = vadd.f32 %v1508, %v1697
      %v1707 = vld [vmem:[%s1422] sm:$0xe]
      %v1708 = vld [vmem:[%s1422 + $0x8] sm:$0xe]
      %v1709 = vld [vmem:[%s1422 + $0x10] sm:$0xe]
      %v1710 = vld [vmem:[%s1422 + $0x18] sm:$0xe]
      %v1711 = vld [vmem:[%s1422 + $0x20] sm:$0xe]
      %v1712 = vld [vmem:[%s1422 + $0x28] sm:$0xe]
      %v1713 = vld [vmem:[%s1422 + $0x30] sm:$0xe]
      %v1714 = vld [vmem:[%s1422 + $0x38] sm:$0xe]
      %v1731 = vrot.slane %v1707, 5
      %v1732 = vrot.slane %v1731, 4
      %v1733 = vrot.slane %v1510, 5
      %v1734 = vsel %vm461, %v1732, %v1733
      %v1735 = vrot.slane %v1708, 5
      %v1736 = vrot.slane %v1735, 4
      %v1737 = vrot.slane %v1512, 5
      %v1738 = vsel %vm461, %v1736, %v1737
      %v1739 = vrot.slane %v1709, 5
      %v1740 = vrot.slane %v1739, 4
      %v1741 = vrot.slane %v1514, 5
      %v1742 = vsel %vm461, %v1740, %v1741
      %v1743 = vrot.slane %v1710, 5
      %v1744 = vrot.slane %v1743, 4
      %v1745 = vrot.slane %v1516, 5
      %v1746 = vsel %vm461, %v1744, %v1745
      %v1747 = vrot.slane %v1711, 5
      %v1748 = vrot.slane %v1747, 4
      %v1749 = vrot.slane %v1518, 5
      %v1750 = vsel %vm461, %v1748, %v1749
      %v1751 = vrot.slane %v1712, 5
      %v1752 = vrot.slane %v1751, 4
      %v1753 = vrot.slane %v1520, 5
      %v1754 = vsel %vm461, %v1752, %v1753
      %v1755 = vrot.slane %v1713, 5
      %v1756 = vrot.slane %v1755, 4
      %v1757 = vrot.slane %v1522, 5
      %v1758 = vsel %vm461, %v1756, %v1757
      %v1759 = vrot.slane %v1714, 5
      %v1760 = vrot.slane %v1759, 4
      %v1761 = vrot.slane %v1524, 5
      %v1762 = vsel %vm461, %v1760, %v1761
      %s1763 = scalar_lea.vmem %s1, 80
      %v1764 = vld [vmem:[%s1763] sm:$0xf]
      %v1765 = vld [vmem:[%s1763 + $0x4] sm:$0xf]
      %v1766 = vunpack.c.l.b16 %v1734
      %v1767 = vunpack.c.l.b16 %v1738
      %v1768 = vunpack.c.l.b16 %v1742
      %v1769 = vunpack.c.l.b16 %v1746
      %v1770 = vunpack.c.l.b16 %v1750
      %v1771 = vunpack.c.l.b16 %v1754
      %v1772 = vunpack.c.l.b16 %v1758
      %v1773 = vunpack.c.l.b16 %v1762
      %v1774 = vpack.c.b16 %v1767, %v1766
      %v1775 = vpack.c.b16 %v1769, %v1768
      %v1776 = vpack.c.b16 %v1771, %v1770
      %v1777 = vpack.c.b16 %v1773, %v1772
      %v1780 = vunpack.c.l.b16 %v1764
      %v1781 = vunpack.c.l.b16 %v1765
      %v1782 = vpack.c.b16 %v1781, %v1780
      %v1785 = vsel %vm326, %v1774, 0
      %v1788 = vsel %vm326, %v1775, 0
      %v1791 = vsel %vm326, %v1776, 0
      %v1794 = vsel %vm326, %v1777, 0
      %1796 = vmatpush.bf16.msra.mxu0 0
      %1797 = vmatpush.bf16.msra.mxu0 0
      %1798 = vmatpush.bf16.msra.mxu0 0
      %1799 = vmatpush.bf16.msra.mxu0 0
      %1800 = vmatpush.bf16.msra.mxu0 0
      %1801 = vmatpush.bf16.msra.mxu0 0
      %1802 = vmatpush.bf16.msra.mxu0 0
      %1803 = vmatpush.bf16.msra.mxu0 %v1782
      %1804 = vmatmul.bf16.gmra.mxu0 %v1785
      %v1805 = vpop.f32.mrf.mxu0
      %v1806 = vadd.f32 0.0, %v1805
      %v1807 = vpop.f32.mrf.mxu0
      %v1808 = vadd.f32 0.0, %v1807
      %1809 = vmatmul.bf16.gmra.mxu0 %v1788
      %v1810 = vpop.f32.mrf.mxu0
      %v1811 = vadd.f32 0.0, %v1810
      %v1812 = vpop.f32.mrf.mxu0
      %v1813 = vadd.f32 0.0, %v1812
      %1814 = vmatmul.bf16.gmra.mxu0 %v1791
      %v1815 = vpop.f32.mrf.mxu0
      %v1816 = vadd.f32 0.0, %v1815
      %v1817 = vpop.f32.mrf.mxu0
      %v1818 = vadd.f32 0.0, %v1817
      %1819 = vmatmul.bf16.gmra.mxu0 %v1794
      %v1820 = vpop.f32.mrf.mxu0
      %v1821 = vadd.f32 0.0, %v1820
      %v1822 = vpop.f32.mrf.mxu0
      %v1823 = vadd.f32 0.0, %v1822
      %1824 = vdwg.mxu0
      %v1825 = vadd.f32 %v1699, %v1806
      %v1826 = vadd.f32 %v1700, %v1808
      %v1827 = vadd.f32 %v1701, %v1811
      %v1828 = vadd.f32 %v1702, %v1813
      %v1829 = vadd.f32 %v1703, %v1816
      %v1830 = vadd.f32 %v1704, %v1818
      %v1831 = vadd.f32 %v1705, %v1821
      %v1832 = vadd.f32 %v1706, %v1823
      %v1833 = vld [vmem:[%s1422 + $0x4] sm:$0x3]
      %v1834 = vld [vmem:[%s1422 + $0xc] sm:$0x3]
      %v1835 = vld [vmem:[%s1422 + $0x14] sm:$0x3]
      %v1836 = vld [vmem:[%s1422 + $0x1c] sm:$0x3]
      %v1837 = vld [vmem:[%s1422 + $0x24] sm:$0x3]
      %v1838 = vld [vmem:[%s1422 + $0x2c] sm:$0x3]
      %v1839 = vld [vmem:[%s1422 + $0x34] sm:$0x3]
      %v1840 = vld [vmem:[%s1422 + $0x3c] sm:$0x3]
      %v1842 = vshrl.u32 %v1707, 16
      %v1844 = vrot.slane %v1842, 5
      %v1845 = vshll.u32 %v1707, 16
      %v1847 = vrot.slane %v1845, 6
      %v1848 = vor.u32 %v1844, %v1847
      %v1849 = vrot.slane %v1848, 4
      %v1851 = vshrl.u32 %v1833, 16
      %v1853 = vrot.slane %v1851, 5
      %v1854 = vshll.u32 %v1833, 16
      %v1856 = vrot.slane %v1854, 6
      %v1857 = vor.u32 %v1853, %v1856
      %v1858 = vsel %vm574, %v1849, %v1857
      %v1860 = vshrl.u32 %v1708, 16
      %v1862 = vrot.slane %v1860, 5
      %v1863 = vshll.u32 %v1708, 16
      %v1865 = vrot.slane %v1863, 6
      %v1866 = vor.u32 %v1862, %v1865
      %v1867 = vrot.slane %v1866, 4
      %v1869 = vshrl.u32 %v1834, 16
      %v1871 = vrot.slane %v1869, 5
      %v1872 = vshll.u32 %v1834, 16
      %v1874 = vrot.slane %v1872, 6
      %v1875 = vor.u32 %v1871, %v1874
      %v1876 = vsel %vm574, %v1867, %v1875
      %v1878 = vshrl.u32 %v1709, 16
      %v1880 = vrot.slane %v1878, 5
      %v1881 = vshll.u32 %v1709, 16
      %v1883 = vrot.slane %v1881, 6
      %v1884 = vor.u32 %v1880, %v1883
      %v1885 = vrot.slane %v1884, 4
      %v1887 = vshrl.u32 %v1835, 16
      %v1889 = vrot.slane %v1887, 5
      %v1890 = vshll.u32 %v1835, 16
      %v1892 = vrot.slane %v1890, 6
      %v1893 = vor.u32 %v1889, %v1892
      %v1894 = vsel %vm574, %v1885, %v1893
      %v1896 = vshrl.u32 %v1710, 16
      %v1898 = vrot.slane %v1896, 5
      %v1899 = vshll.u32 %v1710, 16
      %v1901 = vrot.slane %v1899, 6
      %v1902 = vor.u32 %v1898, %v1901
      %v1903 = vrot.slane %v1902, 4
      %v1905 = vshrl.u32 %v1836, 16
      %v1907 = vrot.slane %v1905, 5
      %v1908 = vshll.u32 %v1836, 16
      %v1910 = vrot.slane %v1908, 6
      %v1911 = vor.u32 %v1907, %v1910
      %v1912 = vsel %vm574, %v1903, %v1911
      %v1914 = vshrl.u32 %v1711, 16
      %v1916 = vrot.slane %v1914, 5
      %v1917 = vshll.u32 %v1711, 16
      %v1919 = vrot.slane %v1917, 6
      %v1920 = vor.u32 %v1916, %v1919
      %v1921 = vrot.slane %v1920, 4
      %v1923 = vshrl.u32 %v1837, 16
      %v1925 = vrot.slane %v1923, 5
      %v1926 = vshll.u32 %v1837, 16
      %v1928 = vrot.slane %v1926, 6
      %v1929 = vor.u32 %v1925, %v1928
      %v1930 = vsel %vm574, %v1921, %v1929
      %v1932 = vshrl.u32 %v1712, 16
      %v1934 = vrot.slane %v1932, 5
      %v1935 = vshll.u32 %v1712, 16
      %v1937 = vrot.slane %v1935, 6
      %v1938 = vor.u32 %v1934, %v1937
      %v1939 = vrot.slane %v1938, 4
      %v1941 = vshrl.u32 %v1838, 16
      %v1943 = vrot.slane %v1941, 5
      %v1944 = vshll.u32 %v1838, 16
      %v1946 = vrot.slane %v1944, 6
      %v1947 = vor.u32 %v1943, %v1946
      %v1948 = vsel %vm574, %v1939, %v1947
      %v1950 = vshrl.u32 %v1713, 16
      %v1952 = vrot.slane %v1950, 5
      %v1953 = vshll.u32 %v1713, 16
      %v1955 = vrot.slane %v1953, 6
      %v1956 = vor.u32 %v1952, %v1955
      %v1957 = vrot.slane %v1956, 4
      %v1959 = vshrl.u32 %v1839, 16
      %v1961 = vrot.slane %v1959, 5
      %v1962 = vshll.u32 %v1839, 16
      %v1964 = vrot.slane %v1962, 6
      %v1965 = vor.u32 %v1961, %v1964
      %v1966 = vsel %vm574, %v1957, %v1965
      %v1968 = vshrl.u32 %v1714, 16
      %v1970 = vrot.slane %v1968, 5
      %v1971 = vshll.u32 %v1714, 16
      %v1973 = vrot.slane %v1971, 6
      %v1974 = vor.u32 %v1970, %v1973
      %v1975 = vrot.slane %v1974, 4
      %v1977 = vshrl.u32 %v1840, 16
      %v1979 = vrot.slane %v1977, 5
      %v1980 = vshll.u32 %v1840, 16
      %v1982 = vrot.slane %v1980, 6
      %v1983 = vor.u32 %v1979, %v1982
      %v1984 = vsel %vm574, %v1975, %v1983
      %s1985 = scalar_lea.vmem %s1, 88
      %v1986 = vld [vmem:[%s1985] sm:$0xf]
      %v1987 = vld [vmem:[%s1985 + $0x4] sm:$0xf]
      %v1988 = vunpack.c.l.b16 %v1858
      %v1989 = vunpack.c.l.b16 %v1876
      %v1990 = vunpack.c.l.b16 %v1894
      %v1991 = vunpack.c.l.b16 %v1912
      %v1992 = vunpack.c.l.b16 %v1930
      %v1993 = vunpack.c.l.b16 %v1948
      %v1994 = vunpack.c.l.b16 %v1966
      %v1995 = vunpack.c.l.b16 %v1984
      %v1996 = vpack.c.b16 %v1989, %v1988
      %v1997 = vpack.c.b16 %v1991, %v1990
      %v1998 = vpack.c.b16 %v1993, %v1992
      %v1999 = vpack.c.b16 %v1995, %v1994
      %v2002 = vunpack.c.l.b16 %v1986
      %v2003 = vunpack.c.l.b16 %v1987
      %v2004 = vpack.c.b16 %v2003, %v2002
      %v2007 = vsel %vm326, %v1996, 0
      %v2010 = vsel %vm326, %v1997, 0
      %v2013 = vsel %vm326, %v1998, 0
      %v2016 = vsel %vm326, %v1999, 0
      %2018 = vmatpush.bf16.msra.mxu0 0
      %2019 = vmatpush.bf16.msra.mxu0 0
      %2020 = vmatpush.bf16.msra.mxu0 0
      %2021 = vmatpush.bf16.msra.mxu0 0
      %2022 = vmatpush.bf16.msra.mxu0 0
      %2023 = vmatpush.bf16.msra.mxu0 0
      %2024 = vmatpush.bf16.msra.mxu0 0
      %2025 = vmatpush.bf16.msra.mxu0 %v2004
      %2026 = vmatmul.bf16.gmra.mxu0 %v2007
      %v2027 = vpop.f32.mrf.mxu0
      %v2028 = vadd.f32 0.0, %v2027
      %v2029 = vpop.f32.mrf.mxu0
      %v2030 = vadd.f32 0.0, %v2029
      %2031 = vmatmul.bf16.gmra.mxu0 %v2010
      %v2032 = vpop.f32.mrf.mxu0
      %v2033 = vadd.f32 0.0, %v2032
      %v2034 = vpop.f32.mrf.mxu0
      %v2035 = vadd.f32 0.0, %v2034
      %2036 = vmatmul.bf16.gmra.mxu0 %v2013
      %v2037 = vpop.f32.mrf.mxu0
      %v2038 = vadd.f32 0.0, %v2037
      %v2039 = vpop.f32.mrf.mxu0
      %v2040 = vadd.f32 0.0, %v2039
      %2041 = vmatmul.bf16.gmra.mxu0 %v2016
      %v2042 = vpop.f32.mrf.mxu0
      %v2043 = vadd.f32 0.0, %v2042
      %v2044 = vpop.f32.mrf.mxu0
      %v2045 = vadd.f32 0.0, %v2044
      %2046 = vdwg.mxu0
      %v2047 = vadd.f32 %v1825, %v2028
      %v2048 = vadd.f32 %v1826, %v2030
      %v2049 = vadd.f32 %v1827, %v2033
      %v2050 = vadd.f32 %v1828, %v2035
      %v2051 = vadd.f32 %v1829, %v2038
      %v2052 = vadd.f32 %v1830, %v2040
      %v2053 = vadd.f32 %v1831, %v2043
      %v2054 = vadd.f32 %v1832, %v2045
      %s2055 = scalar_lea.vmem %s165, 24
      %v2056 = vld [vmem:[%s2055] sm:$0xf]
      %v2057 = vld [vmem:[%s2055 + $0x8] sm:$0xf]
      %v2058 = vld [vmem:[%s2055 + $0x10] sm:$0xf]
      %v2059 = vld [vmem:[%s2055 + $0x18] sm:$0xf]
      %v2060 = vld [vmem:[%s2055 + $0x20] sm:$0xf]
      %v2061 = vld [vmem:[%s2055 + $0x28] sm:$0xf]
      %v2062 = vld [vmem:[%s2055 + $0x30] sm:$0xf]
      %v2063 = vld [vmem:[%s2055 + $0x38] sm:$0xf]
      %s2064 = scalar_lea.vmem %s1, 96
      %v2065 = vld [vmem:[%s2064] sm:$0xf]
      %v2066 = vld [vmem:[%s2064 + $0x4] sm:$0xf]
      %v2075 = vunpack.c.l.b16 %v2056
      %v2076 = vunpack.c.l.b16 %v2057
      %v2077 = vunpack.c.l.b16 %v2058
      %v2078 = vunpack.c.l.b16 %v2059
      %v2079 = vunpack.c.l.b16 %v2060
      %v2080 = vunpack.c.l.b16 %v2061
      %v2081 = vunpack.c.l.b16 %v2062
      %v2082 = vunpack.c.l.b16 %v2063
      %v2083 = vpack.c.b16 %v2076, %v2075
      %v2084 = vpack.c.b16 %v2078, %v2077
      %v2085 = vpack.c.b16 %v2080, %v2079
      %v2086 = vpack.c.b16 %v2082, %v2081
      %v2089 = vunpack.c.l.b16 %v2065
      %v2090 = vunpack.c.l.b16 %v2066
      %v2091 = vpack.c.b16 %v2090, %v2089
      %v2094 = vsel %vm326, %v2083, 0
      %v2097 = vsel %vm326, %v2084, 0
      %v2100 = vsel %vm326, %v2085, 0
      %v2103 = vsel %vm326, %v2086, 0
      %2105 = vmatpush.bf16.msra.mxu0 0
      %2106 = vmatpush.bf16.msra.mxu0 0
      %2107 = vmatpush.bf16.msra.mxu0 0
      %2108 = vmatpush.bf16.msra.mxu0 0
      %2109 = vmatpush.bf16.msra.mxu0 0
      %2110 = vmatpush.bf16.msra.mxu0 0
      %2111 = vmatpush.bf16.msra.mxu0 0
      %2112 = vmatpush.bf16.msra.mxu0 %v2091
      %2113 = vmatmul.bf16.gmra.mxu0 %v2094
      %v2114 = vpop.f32.mrf.mxu0
      %v2115 = vadd.f32 0.0, %v2114
      %v2116 = vpop.f32.mrf.mxu0
      %v2117 = vadd.f32 0.0, %v2116
      %2118 = vmatmul.bf16.gmra.mxu0 %v2097
      %v2119 = vpop.f32.mrf.mxu0
      %v2120 = vadd.f32 0.0, %v2119
      %v2121 = vpop.f32.mrf.mxu0
      %v2122 = vadd.f32 0.0, %v2121
      %2123 = vmatmul.bf16.gmra.mxu0 %v2100
      %v2124 = vpop.f32.mrf.mxu0
      %v2125 = vadd.f32 0.0, %v2124
      %v2126 = vpop.f32.mrf.mxu0
      %v2127 = vadd.f32 0.0, %v2126
      %2128 = vmatmul.bf16.gmra.mxu0 %v2103
      %v2129 = vpop.f32.mrf.mxu0
      %v2130 = vadd.f32 0.0, %v2129
      %v2131 = vpop.f32.mrf.mxu0
      %v2132 = vadd.f32 0.0, %v2131
      %2133 = vdwg.mxu0
      %v2134 = vadd.f32 %v2047, %v2115
      %v2135 = vadd.f32 %v2048, %v2117
      %v2136 = vadd.f32 %v2049, %v2120
      %v2137 = vadd.f32 %v2050, %v2122
      %v2138 = vadd.f32 %v2051, %v2125
      %v2139 = vadd.f32 %v2052, %v2127
      %v2140 = vadd.f32 %v2053, %v2130
      %v2141 = vadd.f32 %v2054, %v2132
      %v2142 = vld [vmem:[%s2055] sm:$0xf]
      %v2143 = vld [vmem:[%s2055 + $0x4] sm:$0x1]
      %v2144 = vld [vmem:[%s2055 + $0x8] sm:$0xf]
      %v2145 = vld [vmem:[%s2055 + $0xc] sm:$0x1]
      %v2146 = vld [vmem:[%s2055 + $0x10] sm:$0xf]
      %v2147 = vld [vmem:[%s2055 + $0x14] sm:$0x1]
      %v2148 = vld [vmem:[%s2055 + $0x18] sm:$0xf]
      %v2149 = vld [vmem:[%s2055 + $0x1c] sm:$0x1]
      %v2150 = vld [vmem:[%s2055 + $0x20] sm:$0xf]
      %v2151 = vld [vmem:[%s2055 + $0x24] sm:$0x1]
      %v2152 = vld [vmem:[%s2055 + $0x28] sm:$0xf]
      %v2153 = vld [vmem:[%s2055 + $0x2c] sm:$0x1]
      %v2154 = vld [vmem:[%s2055 + $0x30] sm:$0xf]
      %v2155 = vld [vmem:[%s2055 + $0x34] sm:$0x1]
      %v2156 = vld [vmem:[%s2055 + $0x38] sm:$0xf]
      %v2157 = vld [vmem:[%s2055 + $0x3c] sm:$0x1]
      %v2159 = vshrl.u32 %v2142, 16
      %v2161 = vrot.slane %v2159, 4
      %v2162 = vshll.u32 %v2142, 16
      %v2164 = vrot.slane %v2162, 5
      %v2165 = vor.u32 %v2161, %v2164
      %v2166 = vrot.slane %v2165, 4
      %v2168 = vshll.u32 %v2143, 16
      %v2170 = vrot.slane %v2168, 5
      %v2171 = vsel %vm192, %v2166, %v2170
      %v2173 = vshrl.u32 %v2144, 16
      %v2175 = vrot.slane %v2173, 4
      %v2176 = vshll.u32 %v2144, 16
      %v2178 = vrot.slane %v2176, 5
      %v2179 = vor.u32 %v2175, %v2178
      %v2180 = vrot.slane %v2179, 4
      %v2182 = vshll.u32 %v2145, 16
      %v2184 = vrot.slane %v2182, 5
      %v2185 = vsel %vm192, %v2180, %v2184
      %v2187 = vshrl.u32 %v2146, 16
      %v2189 = vrot.slane %v2187, 4
      %v2190 = vshll.u32 %v2146, 16
      %v2192 = vrot.slane %v2190, 5
      %v2193 = vor.u32 %v2189, %v2192
      %v2194 = vrot.slane %v2193, 4
      %v2196 = vshll.u32 %v2147, 16
      %v2198 = vrot.slane %v2196, 5
      %v2199 = vsel %vm192, %v2194, %v2198
      %v2201 = vshrl.u32 %v2148, 16
      %v2203 = vrot.slane %v2201, 4
      %v2204 = vshll.u32 %v2148, 16
      %v2206 = vrot.slane %v2204, 5
      %v2207 = vor.u32 %v2203, %v2206
      %v2208 = vrot.slane %v2207, 4
      %v2210 = vshll.u32 %v2149, 16
      %v2212 = vrot.slane %v2210, 5
      %v2213 = vsel %vm192, %v2208, %v2212
      %v2215 = vshrl.u32 %v2150, 16
      %v2217 = vrot.slane %v2215, 4
      %v2218 = vshll.u32 %v2150, 16
      %v2220 = vrot.slane %v2218, 5
      %v2221 = vor.u32 %v2217, %v2220
      %v2222 = vrot.slane %v2221, 4
      %v2224 = vshll.u32 %v2151, 16
      %v2226 = vrot.slane %v2224, 5
      %v2227 = vsel %vm192, %v2222, %v2226
      %v2229 = vshrl.u32 %v2152, 16
      %v2231 = vrot.slane %v2229, 4
      %v2232 = vshll.u32 %v2152, 16
      %v2234 = vrot.slane %v2232, 5
      %v2235 = vor.u32 %v2231, %v2234
      %v2236 = vrot.slane %v2235, 4
      %v2238 = vshll.u32 %v2153, 16
      %v2240 = vrot.slane %v2238, 5
      %v2241 = vsel %vm192, %v2236, %v2240
      %v2243 = vshrl.u32 %v2154, 16
      %v2245 = vrot.slane %v2243, 4
      %v2246 = vshll.u32 %v2154, 16
      %v2248 = vrot.slane %v2246, 5
      %v2249 = vor.u32 %v2245, %v2248
      %v2250 = vrot.slane %v2249, 4
      %v2252 = vshll.u32 %v2155, 16
      %v2254 = vrot.slane %v2252, 5
      %v2255 = vsel %vm192, %v2250, %v2254
      %v2257 = vshrl.u32 %v2156, 16
      %v2259 = vrot.slane %v2257, 4
      %v2260 = vshll.u32 %v2156, 16
      %v2262 = vrot.slane %v2260, 5
      %v2263 = vor.u32 %v2259, %v2262
      %v2264 = vrot.slane %v2263, 4
      %v2266 = vshll.u32 %v2157, 16
      %v2268 = vrot.slane %v2266, 5
      %v2269 = vsel %vm192, %v2264, %v2268
      %s2270 = scalar_lea.vmem %s1, 104
      %v2271 = vld [vmem:[%s2270] sm:$0xf]
      %v2272 = vld [vmem:[%s2270 + $0x4] sm:$0xf]
      %v2273 = vunpack.c.l.b16 %v2171
      %v2274 = vunpack.c.l.b16 %v2185
      %v2275 = vunpack.c.l.b16 %v2199
      %v2276 = vunpack.c.l.b16 %v2213
      %v2277 = vunpack.c.l.b16 %v2227
      %v2278 = vunpack.c.l.b16 %v2241
      %v2279 = vunpack.c.l.b16 %v2255
      %v2280 = vunpack.c.l.b16 %v2269
      %v2281 = vpack.c.b16 %v2274, %v2273
      %v2282 = vpack.c.b16 %v2276, %v2275
      %v2283 = vpack.c.b16 %v2278, %v2277
      %v2284 = vpack.c.b16 %v2280, %v2279
      %v2287 = vunpack.c.l.b16 %v2271
      %v2288 = vunpack.c.l.b16 %v2272
      %v2289 = vpack.c.b16 %v2288, %v2287
      %v2292 = vsel %vm326, %v2281, 0
      %v2295 = vsel %vm326, %v2282, 0
      %v2298 = vsel %vm326, %v2283, 0
      %v2301 = vsel %vm326, %v2284, 0
      %2303 = vmatpush.bf16.msra.mxu0 0
      %2304 = vmatpush.bf16.msra.mxu0 0
      %2305 = vmatpush.bf16.msra.mxu0 0
      %2306 = vmatpush.bf16.msra.mxu0 0
      %2307 = vmatpush.bf16.msra.mxu0 0
      %2308 = vmatpush.bf16.msra.mxu0 0
      %2309 = vmatpush.bf16.msra.mxu0 0
      %2310 = vmatpush.bf16.msra.mxu0 %v2289
      %2311 = vmatmul.bf16.gmra.mxu0 %v2292
      %v2312 = vpop.f32.mrf.mxu0
      %v2313 = vadd.f32 0.0, %v2312
      %v2314 = vpop.f32.mrf.mxu0
      %v2315 = vadd.f32 0.0, %v2314
      %2316 = vmatmul.bf16.gmra.mxu0 %v2295
      %v2317 = vpop.f32.mrf.mxu0
      %v2318 = vadd.f32 0.0, %v2317
      %v2319 = vpop.f32.mrf.mxu0
      %v2320 = vadd.f32 0.0, %v2319
      %2321 = vmatmul.bf16.gmra.mxu0 %v2298
      %v2322 = vpop.f32.mrf.mxu0
      %v2323 = vadd.f32 0.0, %v2322
      %v2324 = vpop.f32.mrf.mxu0
      %v2325 = vadd.f32 0.0, %v2324
      %2326 = vmatmul.bf16.gmra.mxu0 %v2301
      %v2327 = vpop.f32.mrf.mxu0
      %v2328 = vadd.f32 0.0, %v2327
      %v2329 = vpop.f32.mrf.mxu0
      %v2330 = vadd.f32 0.0, %v2329
      %2331 = vdwg.mxu0
      %v2332 = vadd.f32 %v2134, %v2313
      %v2333 = vadd.f32 %v2135, %v2315
      %v2334 = vadd.f32 %v2136, %v2318
      %v2335 = vadd.f32 %v2137, %v2320
      %v2336 = vadd.f32 %v2138, %v2323
      %v2337 = vadd.f32 %v2139, %v2325
      %v2338 = vadd.f32 %v2140, %v2328
      %v2339 = vadd.f32 %v2141, %v2330
      %v2340 = vld [vmem:[%s2055] sm:$0xe]
      %v2341 = vld [vmem:[%s2055 + $0x8] sm:$0xe]
      %v2342 = vld [vmem:[%s2055 + $0x10] sm:$0xe]
      %v2343 = vld [vmem:[%s2055 + $0x18] sm:$0xe]
      %v2344 = vld [vmem:[%s2055 + $0x20] sm:$0xe]
      %v2345 = vld [vmem:[%s2055 + $0x28] sm:$0xe]
      %v2346 = vld [vmem:[%s2055 + $0x30] sm:$0xe]
      %v2347 = vld [vmem:[%s2055 + $0x38] sm:$0xe]
      %v2364 = vrot.slane %v2340, 5
      %v2365 = vrot.slane %v2364, 4
      %v2366 = vrot.slane %v2143, 5
      %v2367 = vsel %vm461, %v2365, %v2366
      %v2368 = vrot.slane %v2341, 5
      %v2369 = vrot.slane %v2368, 4
      %v2370 = vrot.slane %v2145, 5
      %v2371 = vsel %vm461, %v2369, %v2370
      %v2372 = vrot.slane %v2342, 5
      %v2373 = vrot.slane %v2372, 4
      %v2374 = vrot.slane %v2147, 5
      %v2375 = vsel %vm461, %v2373, %v2374
      %v2376 = vrot.slane %v2343, 5
      %v2377 = vrot.slane %v2376, 4
      %v2378 = vrot.slane %v2149, 5
      %v2379 = vsel %vm461, %v2377, %v2378
      %v2380 = vrot.slane %v2344, 5
      %v2381 = vrot.slane %v2380, 4
      %v2382 = vrot.slane %v2151, 5
      %v2383 = vsel %vm461, %v2381, %v2382
      %v2384 = vrot.slane %v2345, 5
      %v2385 = vrot.slane %v2384, 4
      %v2386 = vrot.slane %v2153, 5
      %v2387 = vsel %vm461, %v2385, %v2386
      %v2388 = vrot.slane %v2346, 5
      %v2389 = vrot.slane %v2388, 4
      %v2390 = vrot.slane %v2155, 5
      %v2391 = vsel %vm461, %v2389, %v2390
      %v2392 = vrot.slane %v2347, 5
      %v2393 = vrot.slane %v2392, 4
      %v2394 = vrot.slane %v2157, 5
      %v2395 = vsel %vm461, %v2393, %v2394
      %s2396 = scalar_lea.vmem %s1, 112
      %v2397 = vld [vmem:[%s2396] sm:$0xf]
      %v2398 = vld [vmem:[%s2396 + $0x4] sm:$0xf]
      %v2399 = vunpack.c.l.b16 %v2367
      %v2400 = vunpack.c.l.b16 %v2371
      %v2401 = vunpack.c.l.b16 %v2375
      %v2402 = vunpack.c.l.b16 %v2379
      %v2403 = vunpack.c.l.b16 %v2383
      %v2404 = vunpack.c.l.b16 %v2387
      %v2405 = vunpack.c.l.b16 %v2391
      %v2406 = vunpack.c.l.b16 %v2395
      %v2407 = vpack.c.b16 %v2400, %v2399
      %v2408 = vpack.c.b16 %v2402, %v2401
      %v2409 = vpack.c.b16 %v2404, %v2403
      %v2410 = vpack.c.b16 %v2406, %v2405
      %v2413 = vunpack.c.l.b16 %v2397
      %v2414 = vunpack.c.l.b16 %v2398
      %v2415 = vpack.c.b16 %v2414, %v2413
      %v2418 = vsel %vm326, %v2407, 0
      %v2421 = vsel %vm326, %v2408, 0
      %v2424 = vsel %vm326, %v2409, 0
      %v2427 = vsel %vm326, %v2410, 0
      %2429 = vmatpush.bf16.msra.mxu0 0
      %2430 = vmatpush.bf16.msra.mxu0 0
      %2431 = vmatpush.bf16.msra.mxu0 0
      %2432 = vmatpush.bf16.msra.mxu0 0
      %2433 = vmatpush.bf16.msra.mxu0 0
      %2434 = vmatpush.bf16.msra.mxu0 0
      %2435 = vmatpush.bf16.msra.mxu0 0
      %2436 = vmatpush.bf16.msra.mxu0 %v2415
      %2437 = vmatmul.bf16.gmra.mxu0 %v2418
      %v2438 = vpop.f32.mrf.mxu0
      %v2439 = vadd.f32 0.0, %v2438
      %v2440 = vpop.f32.mrf.mxu0
      %v2441 = vadd.f32 0.0, %v2440
      %2442 = vmatmul.bf16.gmra.mxu0 %v2421
      %v2443 = vpop.f32.mrf.mxu0
      %v2444 = vadd.f32 0.0, %v2443
      %v2445 = vpop.f32.mrf.mxu0
      %v2446 = vadd.f32 0.0, %v2445
      %2447 = vmatmul.bf16.gmra.mxu0 %v2424
      %v2448 = vpop.f32.mrf.mxu0
      %v2449 = vadd.f32 0.0, %v2448
      %v2450 = vpop.f32.mrf.mxu0
      %v2451 = vadd.f32 0.0, %v2450
      %2452 = vmatmul.bf16.gmra.mxu0 %v2427
      %v2453 = vpop.f32.mrf.mxu0
      %v2454 = vadd.f32 0.0, %v2453
      %v2455 = vpop.f32.mrf.mxu0
      %v2456 = vadd.f32 0.0, %v2455
      %2457 = vdwg.mxu0
      %v2458 = vadd.f32 %v2332, %v2439
      %v2459 = vadd.f32 %v2333, %v2441
      %v2460 = vadd.f32 %v2334, %v2444
      %v2461 = vadd.f32 %v2335, %v2446
      %v2462 = vadd.f32 %v2336, %v2449
      %v2463 = vadd.f32 %v2337, %v2451
      %v2464 = vadd.f32 %v2338, %v2454
      %v2465 = vadd.f32 %v2339, %v2456
      %v2466 = vld [vmem:[%s2055 + $0x4] sm:$0x3]
      %v2467 = vld [vmem:[%s2055 + $0xc] sm:$0x3]
      %v2468 = vld [vmem:[%s2055 + $0x14] sm:$0x3]
      %v2469 = vld [vmem:[%s2055 + $0x1c] sm:$0x3]
      %v2470 = vld [vmem:[%s2055 + $0x24] sm:$0x3]
      %v2471 = vld [vmem:[%s2055 + $0x2c] sm:$0x3]
      %v2472 = vld [vmem:[%s2055 + $0x34] sm:$0x3]
      %v2473 = vld [vmem:[%s2055 + $0x3c] sm:$0x3]
      %v2475 = vshrl.u32 %v2340, 16
      %v2477 = vrot.slane %v2475, 5
      %v2478 = vshll.u32 %v2340, 16
      %v2480 = vrot.slane %v2478, 6
      %v2481 = vor.u32 %v2477, %v2480
      %v2482 = vrot.slane %v2481, 4
      %v2484 = vshrl.u32 %v2466, 16
      %v2486 = vrot.slane %v2484, 5
      %v2487 = vshll.u32 %v2466, 16
      %v2489 = vrot.slane %v2487, 6
      %v2490 = vor.u32 %v2486, %v2489
      %v2491 = vsel %vm574, %v2482, %v2490
      %v2493 = vshrl.u32 %v2341, 16
      %v2495 = vrot.slane %v2493, 5
      %v2496 = vshll.u32 %v2341, 16
      %v2498 = vrot.slane %v2496, 6
      %v2499 = vor.u32 %v2495, %v2498
      %v2500 = vrot.slane %v2499, 4
      %v2502 = vshrl.u32 %v2467, 16
      %v2504 = vrot.slane %v2502, 5
      %v2505 = vshll.u32 %v2467, 16
      %v2507 = vrot.slane %v2505, 6
      %v2508 = vor.u32 %v2504, %v2507
      %v2509 = vsel %vm574, %v2500, %v2508
      %v2511 = vshrl.u32 %v2342, 16
      %v2513 = vrot.slane %v2511, 5
      %v2514 = vshll.u32 %v2342, 16
      %v2516 = vrot.slane %v2514, 6
      %v2517 = vor.u32 %v2513, %v2516
      %v2518 = vrot.slane %v2517, 4
      %v2520 = vshrl.u32 %v2468, 16
      %v2522 = vrot.slane %v2520, 5
      %v2523 = vshll.u32 %v2468, 16
      %v2525 = vrot.slane %v2523, 6
      %v2526 = vor.u32 %v2522, %v2525
      %v2527 = vsel %vm574, %v2518, %v2526
      %v2529 = vshrl.u32 %v2343, 16
      %v2531 = vrot.slane %v2529, 5
      %v2532 = vshll.u32 %v2343, 16
      %v2534 = vrot.slane %v2532, 6
      %v2535 = vor.u32 %v2531, %v2534
      %v2536 = vrot.slane %v2535, 4
      %v2538 = vshrl.u32 %v2469, 16
      %v2540 = vrot.slane %v2538, 5
      %v2541 = vshll.u32 %v2469, 16
      %v2543 = vrot.slane %v2541, 6
      %v2544 = vor.u32 %v2540, %v2543
      %v2545 = vsel %vm574, %v2536, %v2544
      %v2547 = vshrl.u32 %v2344, 16
      %v2549 = vrot.slane %v2547, 5
      %v2550 = vshll.u32 %v2344, 16
      %v2552 = vrot.slane %v2550, 6
      %v2553 = vor.u32 %v2549, %v2552
      %v2554 = vrot.slane %v2553, 4
      %v2556 = vshrl.u32 %v2470, 16
      %v2558 = vrot.slane %v2556, 5
      %v2559 = vshll.u32 %v2470, 16
      %v2561 = vrot.slane %v2559, 6
      %v2562 = vor.u32 %v2558, %v2561
      %v2563 = vsel %vm574, %v2554, %v2562
      %v2565 = vshrl.u32 %v2345, 16
      %v2567 = vrot.slane %v2565, 5
      %v2568 = vshll.u32 %v2345, 16
      %v2570 = vrot.slane %v2568, 6
      %v2571 = vor.u32 %v2567, %v2570
      %v2572 = vrot.slane %v2571, 4
      %v2574 = vshrl.u32 %v2471, 16
      %v2576 = vrot.slane %v2574, 5
      %v2577 = vshll.u32 %v2471, 16
      %v2579 = vrot.slane %v2577, 6
      %v2580 = vor.u32 %v2576, %v2579
      %v2581 = vsel %vm574, %v2572, %v2580
      %v2583 = vshrl.u32 %v2346, 16
      %v2585 = vrot.slane %v2583, 5
      %v2586 = vshll.u32 %v2346, 16
      %v2588 = vrot.slane %v2586, 6
      %v2589 = vor.u32 %v2585, %v2588
      %v2590 = vrot.slane %v2589, 4
      %v2592 = vshrl.u32 %v2472, 16
      %v2594 = vrot.slane %v2592, 5
      %v2595 = vshll.u32 %v2472, 16
      %v2597 = vrot.slane %v2595, 6
      %v2598 = vor.u32 %v2594, %v2597
      %v2599 = vsel %vm574, %v2590, %v2598
      %v2601 = vshrl.u32 %v2347, 16
      %v2603 = vrot.slane %v2601, 5
      %v2604 = vshll.u32 %v2347, 16
      %v2606 = vrot.slane %v2604, 6
      %v2607 = vor.u32 %v2603, %v2606
      %v2608 = vrot.slane %v2607, 4
      %v2610 = vshrl.u32 %v2473, 16
      %v2612 = vrot.slane %v2610, 5
      %v2613 = vshll.u32 %v2473, 16
      %v2615 = vrot.slane %v2613, 6
      %v2616 = vor.u32 %v2612, %v2615
      %v2617 = vsel %vm574, %v2608, %v2616
      %s2618 = scalar_lea.vmem %s1, 120
      %v2619 = vld [vmem:[%s2618] sm:$0xf]
      %v2620 = vld [vmem:[%s2618 + $0x4] sm:$0xf]
      %v2621 = vunpack.c.l.b16 %v2491
      %v2622 = vunpack.c.l.b16 %v2509
      %v2623 = vunpack.c.l.b16 %v2527
      %v2624 = vunpack.c.l.b16 %v2545
      %v2625 = vunpack.c.l.b16 %v2563
      %v2626 = vunpack.c.l.b16 %v2581
      %v2627 = vunpack.c.l.b16 %v2599
      %v2628 = vunpack.c.l.b16 %v2617
      %v2629 = vpack.c.b16 %v2622, %v2621
      %v2630 = vpack.c.b16 %v2624, %v2623
      %v2631 = vpack.c.b16 %v2626, %v2625
      %v2632 = vpack.c.b16 %v2628, %v2627
      %v2635 = vunpack.c.l.b16 %v2619
      %v2636 = vunpack.c.l.b16 %v2620
      %v2637 = vpack.c.b16 %v2636, %v2635
      %v2640 = vsel %vm326, %v2629, 0
      %v2643 = vsel %vm326, %v2630, 0
      %v2646 = vsel %vm326, %v2631, 0
      %v2649 = vsel %vm326, %v2632, 0
      %2651 = vmatpush.bf16.msra.mxu0 0
      %2652 = vmatpush.bf16.msra.mxu0 0
      %2653 = vmatpush.bf16.msra.mxu0 0
      %2654 = vmatpush.bf16.msra.mxu0 0
      %2655 = vmatpush.bf16.msra.mxu0 0
      %2656 = vmatpush.bf16.msra.mxu0 0
      %2657 = vmatpush.bf16.msra.mxu0 0
      %2658 = vmatpush.bf16.msra.mxu0 %v2637
      %2659 = vmatmul.bf16.gmra.mxu0 %v2640
      %v2660 = vpop.f32.mrf.mxu0
      %v2661 = vadd.f32 0.0, %v2660
      %v2662 = vpop.f32.mrf.mxu0
      %v2663 = vadd.f32 0.0, %v2662
      %2664 = vmatmul.bf16.gmra.mxu0 %v2643
      %v2665 = vpop.f32.mrf.mxu0
      %v2666 = vadd.f32 0.0, %v2665
      %v2667 = vpop.f32.mrf.mxu0
      %v2668 = vadd.f32 0.0, %v2667
      %2669 = vmatmul.bf16.gmra.mxu0 %v2646
      %v2670 = vpop.f32.mrf.mxu0
      %v2671 = vadd.f32 0.0, %v2670
      %v2672 = vpop.f32.mrf.mxu0
      %v2673 = vadd.f32 0.0, %v2672
      %2674 = vmatmul.bf16.gmra.mxu0 %v2649
      %v2675 = vpop.f32.mrf.mxu0
      %v2676 = vadd.f32 0.0, %v2675
      %v2677 = vpop.f32.mrf.mxu0
      %v2678 = vadd.f32 0.0, %v2677
      %2679 = vdwg.mxu0
      %v2680 = vadd.f32 %v2458, %v2661
      %v2681 = vadd.f32 %v2459, %v2663
      %v2682 = vadd.f32 %v2460, %v2666
      %v2683 = vadd.f32 %v2461, %v2668
      %v2684 = vadd.f32 %v2462, %v2671
      %v2685 = vadd.f32 %v2463, %v2673
      %v2686 = vadd.f32 %v2464, %v2676
      %v2687 = vadd.f32 %v2465, %v2678
      %v2688 = vld [vmem:[%s2] sm:$0x1]
      %v2690 = vperm.slane %v2688, 0
      %v2692 = vadd.f32 %v2680, %v2690
      %v2693 = vadd.f32 %v2681, %v2690
      %v2694 = vadd.f32 %v2682, %v2690
      %v2695 = vadd.f32 %v2683, %v2690
      %v2696 = vadd.f32 %v2684, %v2690
      %v2697 = vadd.f32 %v2685, %v2690
      %v2698 = vadd.f32 %v2686, %v2690
      %v2699 = vadd.f32 %v2687, %v2690
      %v2700 = vmax.f32 %v2692, 0.0
      %v2701 = vmax.f32 %v2693, 0.0
      %v2702 = vmax.f32 %v2694, 0.0
      %v2703 = vmax.f32 %v2695, 0.0
      %v2704 = vmax.f32 %v2696, 0.0
      %v2705 = vmax.f32 %v2697, 0.0
      %v2706 = vmax.f32 %v2698, 0.0
      %v2707 = vmax.f32 %v2699, 0.0
      %v2708 = vpack.c.bf16 %v2700, %v2700
      %v2709 = vpack.c.bf16 %v2701, %v2701
      %v2710 = vpack.c.bf16 %v2702, %v2702
      %v2711 = vpack.c.bf16 %v2703, %v2703
      %v2712 = vpack.c.bf16 %v2704, %v2704
      %v2713 = vpack.c.bf16 %v2705, %v2705
      %v2714 = vpack.c.bf16 %v2706, %v2706
      %v2715 = vpack.c.bf16 %v2707, %v2707
      %vm2716 = vcmask 519168
      %2717 = vst.msk [vmem:[%s170] sm:$0xf] %vm2716, %v2708
      %2718 = vst.msk [vmem:[%s170 + $0x4] sm:$0xf] %vm2716, %v2709
      %2719 = vst.msk [vmem:[%s170 + $0x8] sm:$0xf] %vm2716, %v2710
      %2720 = vst.msk [vmem:[%s170 + $0xc] sm:$0xf] %vm2716, %v2711
      %2721 = vst.msk [vmem:[%s170 + $0x10] sm:$0xf] %vm2716, %v2712
      %2722 = vst.msk [vmem:[%s170 + $0x14] sm:$0xf] %vm2716, %v2713
      %2723 = vst.msk [vmem:[%s170 + $0x18] sm:$0xf] %vm2716, %v2714
      %2724 = vst.msk [vmem:[%s170 + $0x1c] sm:$0xf] %vm2716, %v2715
      %p2725 = scmp.lt.s32.totalorder %s14, 1
      %s2726 = scalar_select %p2725, %s14, 1
      %s2727 = smul.addr %s2726, 8
      %s2728 = smul.addr %s2727, 4
      %s2729 = scalar_lea.vmem %s3, %s2728
      // Predicated region
      $region33: #{backbone_base_forward.6} parent=31 // pred_check
        %p2730 = pneg %p100
      $region34: #{backbone_base_forward.6} parent=31 // pred_check_branch
        %2732 = sbr.rel (%p2730) target = $region36
      $region35: #{backbone_base_forward.6} parent=31 // pred_region
        _
      $region36: #{backbone_base_forward.6} parent=31 // pred_fallthru
        _
    $region32: #{backbone_base_forward.6} parent=5 // pred_fallthru
      _
    %p2733 = scmp.le.s32.totalorder 2, %s9
    // Predicated region
    $region37: #{backbone_base_forward.6} parent=5 // pred_check
      %p2734 = pneg %p2733
    $region38: #{backbone_base_forward.6} parent=5 // pred_check_branch
      %2736 = sbr.rel (%p2734) target = $region40
    $region39: #{backbone_base_forward.6} parent=5 // pred_region
      %s2737 = ssub.s32 %s9, 2
      // Predicated region
      $region41: #{backbone_base_forward.6} parent=39 // pred_check
        %p2738 = pneg %p106
      $region42: #{backbone_base_forward.6} parent=39 // pred_check_branch
        %2740 = sbr.rel (%p2738) target = $region44
      $region43: #{backbone_base_forward.6} parent=39 // pred_region
        %p2741 = scmp.lt.s32.totalorder %s15, 1
        %s2742 = scalar_select %p2741, %s15, 1
        %s2743 = smul.addr %s2742, 8
        %s2744 = smul.addr %s2743, 4
        %s2745 = scalar_lea.vmem %s3, %s2744
      $region44: #{backbone_base_forward.6} parent=39 // pred_fallthru
        _
    $region40: #{backbone_base_forward.6} parent=5 // pred_fallthru
      _
  $region6: #{backbone_base_forward.6} parent=0 // loop_footer
    %s13 = sadd.s32 1, %s9
  $region7: #{backbone_base_forward.6} parent=0 // loop_footer_branch
    %8 = sbr.rel target = $region3
  $region8: #{backbone_base_forward.6} parent=0 // loop_exit
    _

// kernel: backbone_base_forward.10
$region0: #{backbone_base_forward.10}
  #allocation0 [shape = 'u32[]', space=smem, size = 0x4, offset = 0x4, fixed_abs, tag = 'smem constant byte address 0x4 - core index']
  #allocation1 [shape = 'u32[72,128]{1,0:T(1,128)}', space=vmem, size = 0x9000, scoped, tag = 'internal scratch']
  #allocation2 [shape = 'bf16[4,4,128]{2,1,0:T(4,128)(2,1)}', space=vmem, size = 0x1000, scoped, tag = 'scratch operand']
  %s0 = inlined_call_operand.vmem [shape: bf16[2,3,3,256], index: 0, kind: input, shape index: {}]
  %s1 = inlined_call_operand.vmem [shape: bf16[4,256,128], index: 1, kind: input, shape index: {}]
  %s2 = inlined_call_operand.vmem [shape: f32[1,128], index: 2, kind: input, shape index: {}]
  %s3 = inlined_call_operand.vmem [shape: bf16[9,128,128], index: 3, kind: input, shape index: {}]
  %s4 = inlined_call_operand.vmem [shape: f32[1,128], index: 4, kind: input, shape index: {}]
  %s5 = inlined_call_operand.vmem [shape: bf16[1,64,128], index: 5, kind: input, shape index: {}]
  %s6 = inlined_call_operand.vmem [shape: f32[1,128], index: 6, kind: input, shape index: {}]
  %s7 = inlined_call_operand.vmem [shape: bf16[2,4,128], index: 7, kind: output, shape index: {}]
  %s8 = sld [smem:[#allocation0]]
  $region61: #{backbone_base_forward.10} parent=0
    _
  %s10 = ssub.s32 1, %s8
  %s11 = scalar_select 0, %s10, %s8
  loop: start=0, step=1, limit=4
  $region2: #{backbone_base_forward.10} parent=0 // loop_pre_header
    _
  $region3: #{backbone_base_forward.10} parent=0 // loop_header
    %s13 = sphi 0, %s17
    %p14 = scmp.ge.s32.totalorder %s13, 4
    %s23 = sphi 0, %s25
    %s26 = sphi 0, %s23
    %s27 = sphi 0, %s26
    %s43 = sphi 0, %s27
    %s47 = sphi 0, %s47
    %s49 = sphi 0, %s47
    %s50 = sphi 0, %s49
    %s64 = sphi 0, %s50
    %s68 = sphi 0, %s68
    %s70 = sphi 0, %s68
    %s71 = sphi 0, %s70
    %s85 = sphi 0, %s71
    %s89 = sphi 0, %s89
    %s91 = sphi 0, %s89
    %s92 = sphi 0, %s91
    %s106 = sphi 0, %s92
    %s110 = sphi 0, %s110
    %s112 = sphi 0, %s110
    %s113 = sphi 0, %s112
    %s127 = sphi 0, %s113
    %s131 = sphi 0, %s131
    %s133 = sphi 0, %s131
    %s134 = sphi 0, %s133
    %s148 = sphi 0, %s134
    %s152 = sphi 0, %s152
    %s154 = sphi 0, %s152
    %s155 = sphi 0, %s154
    %s169 = sphi 0, %s155
    %s175 = sphi 0, %s177
    %s178 = sphi 0, %s175
    %s179 = sphi 0, %s178
    %s195 = sphi 0, %s179
  $region4: #{backbone_base_forward.10} parent=0 // loop_header_branch
    %16 = sbr.rel (%p14) target = $region8
  $region5: #{backbone_base_forward.10} parent=0 // loop_body
    %s18 = ssub.s32 %s13, 1
    %s19 = ssub.s32 %s13, 2
    %s20 = sadd.s32 %s13, 1
    %s21 = ssub.s32 %s13, %s20
    %p22 = scmp.eq.s32.totalorder %s21, 0
    %s24 = sadd.s32 %s23, 1
    %s25 = scalar_select %p22, %s23, %s24
    %p28 = pneg %p22
    %p29 = scmp.eq.s32.totalorder %s13, 1
    %p30 = por %p28, %p29
    %p31 = scmp.ne.s32.totalorder %s23, %s26
    %p32 = scmp.eq.s32.totalorder %s13, 0
    %p33 = por %p31, %p32
    %p34 = scmp.ne.s32.totalorder %s23, %s26
    %p35 = scmp.eq.s32.totalorder %s18, 1
    %p36 = por %p34, %p35
    %p37 = scmp.ne.s32.totalorder %s26, %s27
    %p38 = scmp.eq.s32.totalorder %s18, 0
    %p39 = por %p37, %p38
    %p40 = scmp.ne.s32.totalorder %s26, %s27
    %p41 = scmp.eq.s32.totalorder %s19, 1
    %p42 = por %p40, %p41
    %p44 = scmp.ne.s32.totalorder %s27, %s43
    %p45 = scmp.eq.s32.totalorder %s19, 0
    %p46 = por %p44, %p45
    %s48 = sadd.s32 %s47, 1
    %p51 = scmp.eq.s32.totalorder %s13, 1
    %p52 = scmp.ne.s32.totalorder %s47, %s49
    %p53 = scmp.eq.s32.totalorder %s13, 0
    %p54 = por %p52, %p53
    %p55 = scmp.ne.s32.totalorder %s47, %s49
    %p56 = scmp.eq.s32.totalorder %s18, 1
    %p57 = por %p55, %p56
    %p58 = scmp.ne.s32.totalorder %s49, %s50
    %p59 = scmp.eq.s32.totalorder %s18, 0
    %p60 = por %p58, %p59
    %p61 = scmp.ne.s32.totalorder %s49, %s50
    %p62 = scmp.eq.s32.totalorder %s19, 1
    %p63 = por %p61, %p62
    %p65 = scmp.ne.s32.totalorder %s50, %s64
    %p66 = scmp.eq.s32.totalorder %s19, 0
    %p67 = por %p65, %p66
    %s69 = sadd.s32 %s68, 1
    %p72 = scmp.eq.s32.totalorder %s13, 1
    %p73 = scmp.ne.s32.totalorder %s68, %s70
    %p74 = scmp.eq.s32.totalorder %s13, 0
    %p75 = por %p73, %p74
    %p76 = scmp.ne.s32.totalorder %s68, %s70
    %p77 = scmp.eq.s32.totalorder %s18, 1
    %p78 = por %p76, %p77
    %p79 = scmp.ne.s32.totalorder %s70, %s71
    %p80 = scmp.eq.s32.totalorder %s18, 0
    %p81 = por %p79, %p80
    %p82 = scmp.ne.s32.totalorder %s70, %s71
    %p83 = scmp.eq.s32.totalorder %s19, 1
    %p84 = por %p82, %p83
    %p86 = scmp.ne.s32.totalorder %s71, %s85
    %p87 = scmp.eq.s32.totalorder %s19, 0
    %p88 = por %p86, %p87
    %s90 = sadd.s32 %s89, 1
    %p93 = scmp.eq.s32.totalorder %s13, 1
    %p94 = scmp.ne.s32.totalorder %s89, %s91
    %p95 = scmp.eq.s32.totalorder %s13, 0
    %p96 = por %p94, %p95
    %p97 = scmp.ne.s32.totalorder %s89, %s91
    %p98 = scmp.eq.s32.totalorder %s18, 1
    %p99 = por %p97, %p98
    %p100 = scmp.ne.s32.totalorder %s91, %s92
    %p101 = scmp.eq.s32.totalorder %s18, 0
    %p102 = por %p100, %p101
    %p103 = scmp.ne.s32.totalorder %s91, %s92
    %p104 = scmp.eq.s32.totalorder %s19, 1
    %p105 = por %p103, %p104
    %p107 = scmp.ne.s32.totalorder %s92, %s106
    %p108 = scmp.eq.s32.totalorder %s19, 0
    %p109 = por %p107, %p108
    %s111 = sadd.s32 %s110, 1
    %p114 = scmp.eq.s32.totalorder %s13, 1
    %p115 = scmp.ne.s32.totalorder %s110, %s112
    %p116 = scmp.eq.s32.totalorder %s13, 0
    %p117 = por %p115, %p116
    %p118 = scmp.ne.s32.totalorder %s110, %s112
    %p119 = scmp.eq.s32.totalorder %s18, 1
    %p120 = por %p118, %p119
    %p121 = scmp.ne.s32.totalorder %s112, %s113
    %p122 = scmp.eq.s32.totalorder %s18, 0
    %p123 = por %p121, %p122
    %p124 = scmp.ne.s32.totalorder %s112, %s113
    %p125 = scmp.eq.s32.totalorder %s19, 1
    %p126 = por %p124, %p125
    %p128 = scmp.ne.s32.totalorder %s113, %s127
    %p129 = scmp.eq.s32.totalorder %s19, 0
    %p130 = por %p128, %p129
    %s132 = sadd.s32 %s131, 1
    %p135 = scmp.eq.s32.totalorder %s13, 1
    %p136 = scmp.ne.s32.totalorder %s131, %s133
    %p137 = scmp.eq.s32.totalorder %s13, 0
    %p138 = por %p136, %p137
    %p139 = scmp.ne.s32.totalorder %s131, %s133
    %p140 = scmp.eq.s32.totalorder %s18, 1
    %p141 = por %p139, %p140
    %p142 = scmp.ne.s32.totalorder %s133, %s134
    %p143 = scmp.eq.s32.totalorder %s18, 0
    %p144 = por %p142, %p143
    %p145 = scmp.ne.s32.totalorder %s133, %s134
    %p146 = scmp.eq.s32.totalorder %s19, 1
    %p147 = por %p145, %p146
    %p149 = scmp.ne.s32.totalorder %s134, %s148
    %p150 = scmp.eq.s32.totalorder %s19, 0
    %p151 = por %p149, %p150
    %s153 = sadd.s32 %s152, 1
    %p156 = scmp.eq.s32.totalorder %s13, 1
    %p157 = scmp.ne.s32.totalorder %s152, %s154
    %p158 = scmp.eq.s32.totalorder %s13, 0
    %p159 = por %p157, %p158
    %p160 = scmp.ne.s32.totalorder %s152, %s154
    %p161 = scmp.eq.s32.totalorder %s18, 1
    %p162 = por %p160, %p161
    %p163 = scmp.ne.s32.totalorder %s154, %s155
    %p164 = scmp.eq.s32.totalorder %s18, 0
    %p165 = por %p163, %p164
    %p166 = scmp.ne.s32.totalorder %s154, %s155
    %p167 = scmp.eq.s32.totalorder %s19, 1
    %p168 = por %p166, %p167
    %p170 = scmp.ne.s32.totalorder %s155, %s169
    %p171 = scmp.eq.s32.totalorder %s19, 0
    %p172 = por %p170, %p171
    %s173 = ssub.s32 %s13, %s20
    %p174 = scmp.eq.s32.totalorder %s173, 0
    %s176 = sadd.s32 %s175, 1
    %s177 = scalar_select %p174, %s175, %s176
    %p180 = pneg %p174
    %p181 = scmp.eq.s32.totalorder %s13, 1
    %p182 = por %p180, %p181
    %p183 = scmp.ne.s32.totalorder %s175, %s178
    %p184 = scmp.eq.s32.totalorder %s13, 0
    %p185 = por %p183, %p184
    %p186 = scmp.ne.s32.totalorder %s175, %s178
    %p187 = scmp.eq.s32.totalorder %s18, 1
    %p188 = por %p186, %p187
    %p189 = scmp.ne.s32.totalorder %s178, %s179
    %p190 = scmp.eq.s32.totalorder %s18, 0
    %p191 = por %p189, %p190
    %p192 = scmp.ne.s32.totalorder %s178, %s179
    %p193 = scmp.eq.s32.totalorder %s19, 1
    %p194 = por %p192, %p193
    %p196 = scmp.ne.s32.totalorder %s179, %s195
    %p197 = scmp.eq.s32.totalorder %s19, 0
    %p198 = por %p196, %p197
    %p199 = scmp.le.s32.totalorder 1, %s13
    %p200 = scmp.lt.s32.totalorder %s13, 3
    %p201 = pnand %p199, %p200
    %p202 = pneg %p201
    // Predicated region
    $region9: #{backbone_base_forward.10} parent=5 // pred_check
      _
    $region10: #{backbone_base_forward.10} parent=5 // pred_check_branch
      %204 = sbr.rel (%p201) target = $region12
    $region11: #{backbone_base_forward.10} parent=5 // pred_region
      %s205 = ssub.s32 %s13, 1
      // Predicated region
      $region13: #{backbone_base_forward.10} parent=11 // pred_check
        %p206 = pneg %p60
      $region14: #{backbone_base_forward.10} parent=11 // pred_check_branch
        %208 = sbr.rel (%p206) target = $region16
      $region15: #{backbone_base_forward.10} parent=11 // pred_region
        _
      $region16: #{backbone_base_forward.10} parent=11 // pred_fallthru
        _
      // Predicated region
      $region17: #{backbone_base_forward.10} parent=11 // pred_check
        %p209 = pneg %p81
      $region18: #{backbone_base_forward.10} parent=11 // pred_check_branch
        %211 = sbr.rel (%p209) target = $region20
      $region19: #{backbone_base_forward.10} parent=11 // pred_region
        _
      $region20: #{backbone_base_forward.10} parent=11 // pred_fallthru
        _
      // Predicated region
      $region21: #{backbone_base_forward.10} parent=11 // pred_check
        %p212 = pneg %p102
      $region22: #{backbone_base_forward.10} parent=11 // pred_check_branch
        %214 = sbr.rel (%p212) target = $region24
      $region23: #{backbone_base_forward.10} parent=11 // pred_region
        _
      $region24: #{backbone_base_forward.10} parent=11 // pred_fallthru
        _
      // Predicated region
      $region25: #{backbone_base_forward.10} parent=11 // pred_check
        %p215 = pneg %p123
      $region26: #{backbone_base_forward.10} parent=11 // pred_check_branch
        %217 = sbr.rel (%p215) target = $region28
      $region27: #{backbone_base_forward.10} parent=11 // pred_region
        _
      $region28: #{backbone_base_forward.10} parent=11 // pred_fallthru
        _
      // Predicated region
      $region29: #{backbone_base_forward.10} parent=11 // pred_check
        %p218 = pneg %p144
      $region30: #{backbone_base_forward.10} parent=11 // pred_check_branch
        %220 = sbr.rel (%p218) target = $region32
      $region31: #{backbone_base_forward.10} parent=11 // pred_region
        _
      $region32: #{backbone_base_forward.10} parent=11 // pred_fallthru
        _
      // Predicated region
      $region33: #{backbone_base_forward.10} parent=11 // pred_check
        %p221 = pneg %p165
      $region34: #{backbone_base_forward.10} parent=11 // pred_check_branch
        %223 = sbr.rel (%p221) target = $region36
      $region35: #{backbone_base_forward.10} parent=11 // pred_region
        _
      $region36: #{backbone_base_forward.10} parent=11 // pred_fallthru
        _
    $region12: #{backbone_base_forward.10} parent=5 // pred_fallthru
      _
    %p224 = scmp.lt.s32.totalorder %s13, 2
    // Predicated region
    $region37: #{backbone_base_forward.10} parent=5 // pred_check
      %p225 = pneg %p224
    $region38: #{backbone_base_forward.10} parent=5 // pred_check_branch
      %227 = sbr.rel (%p225) target = $region40
    $region39: #{backbone_base_forward.10} parent=5 // pred_region
      // Predicated region
      $region41: #{backbone_base_forward.10} parent=39 // pred_check
        %p228 = pneg %p33
      $region42: #{backbone_base_forward.10} parent=39 // pred_check_branch
        %230 = sbr.rel (%p228) target = $region44
      $region43: #{backbone_base_forward.10} parent=39 // pred_region
        %p231 = scmp.lt.s32.totalorder %s13, 1
        %s232 = scalar_select %p231, %s13, 1
        %s233 = smul.addr %s232, 6
        %s234 = smul.addr %s233, 2
        %s235 = scalar_lea.vmem %s0, %s234
      $region44: #{backbone_base_forward.10} parent=39 // pred_fallthru
        _
    $region40: #{backbone_base_forward.10} parent=5 // pred_fallthru
      _
    %p236 = scmp.le.s32.totalorder 1, %s13
    %p237 = scmp.lt.s32.totalorder %s13, 3
    %p238 = pnand %p236, %p237
    %p239 = pneg %p238
    // Predicated region
    $region45: #{backbone_base_forward.10} parent=5 // pred_check
      _
    $region46: #{backbone_base_forward.10} parent=5 // pred_check_branch
      %241 = sbr.rel (%p238) target = $region48
    $region47: #{backbone_base_forward.10} parent=5 // pred_region
      %s242 = ssub.s32 %s13, 1
      %p243 = scmp.lt.s32.totalorder %s18, 1
      %s244 = scalar_select %p243, %s18, 1
      %s245 = smul.addr %s244, 6
      %s246 = smul.addr %s245, 2
      %s247 = scalar_lea.vmem %s0, %s246
      %p248 = pneg %p39
      %p249 = pneg %p36
      %p250 = pneg %p60
      %p251 = pneg %p57
      %p252 = pneg %p81
      %p253 = pneg %p78
      %p254 = pneg %p102
      %p255 = pneg %p99
      %p256 = pneg %p123
      %p257 = pneg %p120
      %p258 = pneg %p144
      %p259 = pneg %p141
      %p260 = pneg %p165
      %p261 = pneg %p162
      %p262 = pneg %p191
      %p263 = pneg %p188
      %p264 = scmp.lt.s32.totalorder %s18, 1
      %s265 = scalar_select %p264, %s18, 1
      %s266 = smul.addr %s265, 2
      %s267 = scalar_lea.vmem %s7, %s266
      %p268 = scmp.lt.s32.totalorder %s18, 1
      %s269 = scalar_select %p268, %s18, 1
      %s270 = smul.addr %s269, 6
      %s271 = smul.addr %s270, 2
      %s272 = scalar_lea.vmem %s0, %s271
      %p273 = scmp.lt.s32.totalorder %s18, 1
      %s274 = scalar_select %p273, %s18, 1
      %s275 = smul.addr %s274, 2
      %s276 = scalar_lea.vmem %s7, %s275
      %v278 = vld [vmem:[%s272] sm:$0x5]
      %v279 = vld [vmem:[%s272 + $0x4] sm:$0x5]
      %v282 = vrot.slane %v278, 1
      %v283 = vrot.slane %v278, 2
      %v284 = vrot.slane %v278, 3
      %v285 = vrot.slane %v279, 1
      %v286 = vrot.slane %v279, 2
      %v287 = vrot.slane %v279, 3
      %vm288 = vcmask 1040384
      %v291 = vsel %vm288, %v278, %v282
      %vm292 = vcmask 1042434
      %v295 = vsel %vm292, %v283, %v284
      %vm296 = vcmask 1041408
      %v297 = vsel %vm296, %v291, %v295
      %v300 = vsel %vm288, %v279, %v285
      %v303 = vsel %vm292, %v286, %v287
      %v304 = vsel %vm296, %v300, %v303
      %v305 = vld [vmem:[%s1] sm:$0xf]
      %v306 = vld [vmem:[%s1 + $0x4] sm:$0xf]
      %v307 = vld [vmem:[%s1 + $0x8] sm:$0xf]
      %v308 = vld [vmem:[%s1 + $0xc] sm:$0xf]
      %v309 = vld [vmem:[%s1 + $0x10] sm:$0xf]
      %v310 = vld [vmem:[%s1 + $0x14] sm:$0xf]
      %v311 = vld [vmem:[%s1 + $0x18] sm:$0xf]
      %v312 = vld [vmem:[%s1 + $0x1c] sm:$0xf]
      %v313 = vld [vmem:[%s1 + $0x20] sm:$0xf]
      %v314 = vld [vmem:[%s1 + $0x24] sm:$0xf]
      %v315 = vld [vmem:[%s1 + $0x28] sm:$0xf]
      %v316 = vld [vmem:[%s1 + $0x2c] sm:$0xf]
      %v317 = vld [vmem:[%s1 + $0x30] sm:$0xf]
      %v318 = vld [vmem:[%s1 + $0x34] sm:$0xf]
      %v319 = vld [vmem:[%s1 + $0x38] sm:$0xf]
      %v320 = vld [vmem:[%s1 + $0x3c] sm:$0xf]
      %v321 = vld [vmem:[%s1 + $0x40] sm:$0xf]
      %v322 = vld [vmem:[%s1 + $0x44] sm:$0xf]
      %v323 = vld [vmem:[%s1 + $0x48] sm:$0xf]
      %v324 = vld [vmem:[%s1 + $0x4c] sm:$0xf]
      %v325 = vld [vmem:[%s1 + $0x50] sm:$0xf]
      %v326 = vld [vmem:[%s1 + $0x54] sm:$0xf]
      %v327 = vld [vmem:[%s1 + $0x58] sm:$0xf]
      %v328 = vld [vmem:[%s1 + $0x5c] sm:$0xf]
      %v329 = vld [vmem:[%s1 + $0x60] sm:$0xf]
      %v330 = vld [vmem:[%s1 + $0x64] sm:$0xf]
      %v331 = vld [vmem:[%s1 + $0x68] sm:$0xf]
      %v332 = vld [vmem:[%s1 + $0x6c] sm:$0xf]
      %v333 = vld [vmem:[%s1 + $0x70] sm:$0xf]
      %v334 = vld [vmem:[%s1 + $0x74] sm:$0xf]
      %v335 = vld [vmem:[%s1 + $0x78] sm:$0xf]
      %v336 = vld [vmem:[%s1 + $0x7c] sm:$0xf]
      %v337 = vld [vmem:[%s272] sm:$0xf]
      %v338 = vld [vmem:[%s272 + $0x4] sm:$0xf]
      %v341 = vrot.slane %v337, 1
      %v342 = vrot.slane %v337, 2
      %v343 = vrot.slane %v337, 3
      %v344 = vrot.slane %v338, 1
      %v345 = vrot.slane %v338, 2
      %v346 = vrot.slane %v338, 3
      %v349 = vsel %vm288, %v337, %v341
      %v352 = vsel %vm292, %v342, %v343
      %v353 = vsel %vm296, %v349, %v352
      %vm354 = vcmask 1041409
      %v355 = vsel %vm354, %v337, %v341
      %vm356 = vcmask 1043459
      %v357 = vsel %vm356, %v342, %v343
      %vm358 = vcmask 1042433
      %v359 = vsel %vm358, %v355, %v357
      %v361 = vrot.slane %v359, 1
      %v364 = vsel %vm288, %v338, %v344
      %v367 = vsel %vm292, %v345, %v346
      %v368 = vsel %vm296, %v364, %v367
      %v369 = vsel %vm354, %v338, %v344
      %v370 = vsel %vm356, %v345, %v346
      %v371 = vsel %vm358, %v369, %v370
      %v373 = vrot.slane %v371, 1
      %vm374 = vsmask.f32 256
      %vm375 = vsmask.f32 1284
      %vm376 = vmor %vm374, %vm375
      %vm377 = vsmask.f32 2312
      %vm378 = vmor %vm376, %vm377
      %vm379 = vsmask.f32 3340
      %vm380 = vmor %vm378, %vm379
      %vm381 = vsmask.f32 4368
      %vm382 = vmor %vm380, %vm381
      %vm383 = vsmask.f32 5396
      %vm384 = vmor %vm382, %vm383
      %vm385 = vsmask.f32 6424
      %vm386 = vmor %vm384, %vm385
      %vm387 = vsmask.f32 7452
      %vm388 = vmor %vm386, %vm387
      %v389 = vshrl.u32 %v353, 16
      %v391 = vrot.slane %v389, 7
      %v392 = vrot.slane %v391, 1
      %v394 = vshll.u32 %v361, 16
      %v396 = vsel %vm388, %v392, %v394
      %v397 = vshrl.u32 %v368, 16
      %v399 = vrot.slane %v397, 7
      %v400 = vrot.slane %v399, 1
      %v402 = vshll.u32 %v373, 16
      %v404 = vsel %vm388, %v400, %v402
      %s405 = scalar_lea.vmem %s1, 128
      %v406 = vld [vmem:[%s405] sm:$0xf]
      %v407 = vld [vmem:[%s405 + $0x4] sm:$0xf]
      %v408 = vld [vmem:[%s405 + $0x8] sm:$0xf]
      %v409 = vld [vmem:[%s405 + $0xc] sm:$0xf]
      %v410 = vld [vmem:[%s405 + $0x10] sm:$0xf]
      %v411 = vld [vmem:[%s405 + $0x14] sm:$0xf]
      %v412 = vld [vmem:[%s405 + $0x18] sm:$0xf]
      %v413 = vld [vmem:[%s405 + $0x1c] sm:$0xf]
      %v414 = vld [vmem:[%s405 + $0x20] sm:$0xf]
      %v415 = vld [vmem:[%s405 + $0x24] sm:$0xf]
      %v416 = vld [vmem:[%s405 + $0x28] sm:$0xf]
      %v417 = vld [vmem:[%s405 + $0x2c] sm:$0xf]
      %v418 = vld [vmem:[%s405 + $0x30] sm:$0xf]
      %v419 = vld [vmem:[%s405 + $0x34] sm:$0xf]
      %v420 = vld [vmem:[%s405 + $0x38] sm:$0xf]
      %v421 = vld [vmem:[%s405 + $0x3c] sm:$0xf]
      %v422 = vld [vmem:[%s405 + $0x40] sm:$0xf]
      %v423 = vld [vmem:[%s405 + $0x44] sm:$0xf]
      %v424 = vld [vmem:[%s405 + $0x48] sm:$0xf]
      %v425 = vld [vmem:[%s405 + $0x4c] sm:$0xf]
      %v426 = vld [vmem:[%s405 + $0x50] sm:$0xf]
      %v427 = vld [vmem:[%s405 + $0x54] sm:$0xf]
      %v428 = vld [vmem:[%s405 + $0x58] sm:$0xf]
      %v429 = vld [vmem:[%s405 + $0x5c] sm:$0xf]
      %v430 = vld [vmem:[%s405 + $0x60] sm:$0xf]
      %v431 = vld [vmem:[%s405 + $0x64] sm:$0xf]
      %v432 = vld [vmem:[%s405 + $0x68] sm:$0xf]
      %v433 = vld [vmem:[%s405 + $0x6c] sm:$0xf]
      %v434 = vld [vmem:[%s405 + $0x70] sm:$0xf]
      %v435 = vld [vmem:[%s405 + $0x74] sm:$0xf]
      %v436 = vld [vmem:[%s405 + $0x78] sm:$0xf]
      %v437 = vld [vmem:[%s405 + $0x7c] sm:$0xf]
      %439 = vst [vmem:[#allocation1] ss:$9 sm:$0xff] %v396
      %s441 = scalar_lea.vmem [#allocation1], 1
      %442 = vst [vmem:[%s441] ss:$9 sm:$0xff] %v404
      %v443 = vld [vmem:[#allocation1] sm:$0xff]
      %v444 = vld [vmem:[#allocation1 + $0x9] sm:$0xff]
      %v479 = vunpack.c.l.b16 %v406
      %v480 = vunpack.c.l.b16 %v407
      %v481 = vunpack.c.l.b16 %v408
      %v482 = vunpack.c.l.b16 %v409
      %v483 = vunpack.c.l.b16 %v410
      %v484 = vunpack.c.l.b16 %v411
      %v485 = vunpack.c.l.b16 %v412
      %v486 = vunpack.c.l.b16 %v413
      %v487 = vunpack.c.l.b16 %v414
      %v488 = vunpack.c.l.b16 %v415
      %v489 = vunpack.c.l.b16 %v416
      %v490 = vunpack.c.l.b16 %v417
      %v491 = vunpack.c.l.b16 %v418
      %v492 = vunpack.c.l.b16 %v419
      %v493 = vunpack.c.l.b16 %v420
      %v494 = vunpack.c.l.b16 %v421
      %v495 = vunpack.c.l.b16 %v422
      %v496 = vunpack.c.l.b16 %v423
      %v497 = vunpack.c.l.b16 %v424
      %v498 = vunpack.c.l.b16 %v425
      %v499 = vunpack.c.l.b16 %v426
      %v500 = vunpack.c.l.b16 %v427
      %v501 = vunpack.c.l.b16 %v428
      %v502 = vunpack.c.l.b16 %v429
      %v503 = vunpack.c.l.b16 %v430
      %v504 = vunpack.c.l.b16 %v431
      %v505 = vunpack.c.l.b16 %v432
      %v506 = vunpack.c.l.b16 %v433
      %v507 = vunpack.c.l.b16 %v434
      %v508 = vunpack.c.l.b16 %v435
      %v509 = vunpack.c.l.b16 %v436
      %v510 = vunpack.c.l.b16 %v437
      %v511 = vpack.c.b16 %v480, %v479
      %v512 = vpack.c.b16 %v482, %v481
      %v513 = vpack.c.b16 %v484, %v483
      %v514 = vpack.c.b16 %v486, %v485
      %v515 = vpack.c.b16 %v488, %v487
      %v516 = vpack.c.b16 %v490, %v489
      %v517 = vpack.c.b16 %v492, %v491
      %v518 = vpack.c.b16 %v494, %v493
      %v519 = vpack.c.b16 %v496, %v495
      %v520 = vpack.c.b16 %v498, %v497
      %v521 = vpack.c.b16 %v500, %v499
      %v522 = vpack.c.b16 %v502, %v501
      %v523 = vpack.c.b16 %v504, %v503
      %v524 = vpack.c.b16 %v506, %v505
      %v525 = vpack.c.b16 %v508, %v507
      %v526 = vpack.c.b16 %v510, %v509
      %543 = vmatpush.bf16.msra.mxu0 %v518
      %544 = vmatpush.bf16.msra.mxu0 %v517
      %545 = vmatpush.bf16.msra.mxu0 %v516
      %546 = vmatpush.bf16.msra.mxu0 %v515
      %547 = vmatpush.bf16.msra.mxu0 %v514
      %548 = vmatpush.bf16.msra.mxu0 %v513
      %549 = vmatpush.bf16.msra.mxu0 %v512
      %550 = vmatpush.bf16.msra.mxu0 %v511
      %551 = vmatmul.bf16.gmra.mxu0 %v443
      %v552 = vpop.f32.mrf.mxu0
      %v553 = vadd.f32 0.0, %v552
      %v554 = vpop.f32.mrf.mxu0
      %555 = vdwg.mxu0
      %556 = vmatpush.bf16.msra.mxu0 %v526
      %557 = vmatpush.bf16.msra.mxu0 %v525
      %558 = vmatpush.bf16.msra.mxu0 %v524
      %559 = vmatpush.bf16.msra.mxu0 %v523
      %560 = vmatpush.bf16.msra.mxu0 %v522
      %561 = vmatpush.bf16.msra.mxu0 %v521
      %562 = vmatpush.bf16.msra.mxu0 %v520
      %563 = vmatpush.bf16.msra.mxu0 %v519
      %564 = vmatmul.bf16.gmra.mxu0 %v444
      %v565 = vpop.f32.mrf.mxu0
      %v566 = vadd.f32 %v553, %v565
      %v567 = vpop.f32.mrf.mxu0
      %568 = vdwg.mxu0
      %569 = vst [vmem:[#allocation1] ss:$9 sm:$0xff] %v297
      %s570 = scalar_lea.vmem [#allocation1], 1
      %571 = vst [vmem:[%s570] ss:$9 sm:$0xff] %v304
      %v572 = vld [vmem:[#allocation1] sm:$0xff]
      %v573 = vld [vmem:[#allocation1 + $0x9] sm:$0xff]
      %v608 = vunpack.c.l.b16 %v305
      %v609 = vunpack.c.l.b16 %v306
      %v610 = vunpack.c.l.b16 %v307
      %v611 = vunpack.c.l.b16 %v308
      %v612 = vunpack.c.l.b16 %v309
      %v613 = vunpack.c.l.b16 %v310
      %v614 = vunpack.c.l.b16 %v311
      %v615 = vunpack.c.l.b16 %v312
      %v616 = vunpack.c.l.b16 %v313
      %v617 = vunpack.c.l.b16 %v314
      %v618 = vunpack.c.l.b16 %v315
      %v619 = vunpack.c.l.b16 %v316
      %v620 = vunpack.c.l.b16 %v317
      %v621 = vunpack.c.l.b16 %v318
      %v622 = vunpack.c.l.b16 %v319
      %v623 = vunpack.c.l.b16 %v320
      %v624 = vunpack.c.l.b16 %v321
      %v625 = vunpack.c.l.b16 %v322
      %v626 = vunpack.c.l.b16 %v323
      %v627 = vunpack.c.l.b16 %v324
      %v628 = vunpack.c.l.b16 %v325
      %v629 = vunpack.c.l.b16 %v326
      %v630 = vunpack.c.l.b16 %v327
      %v631 = vunpack.c.l.b16 %v328
      %v632 = vunpack.c.l.b16 %v329
      %v633 = vunpack.c.l.b16 %v330
      %v634 = vunpack.c.l.b16 %v331
      %v635 = vunpack.c.l.b16 %v332
      %v636 = vunpack.c.l.b16 %v333
      %v637 = vunpack.c.l.b16 %v334
      %v638 = vunpack.c.l.b16 %v335
      %v639 = vunpack.c.l.b16 %v336
      %v640 = vpack.c.b16 %v609, %v608
      %v641 = vpack.c.b16 %v611, %v610
      %v642 = vpack.c.b16 %v613, %v612
      %v643 = vpack.c.b16 %v615, %v614
      %v644 = vpack.c.b16 %v617, %v616
      %v645 = vpack.c.b16 %v619, %v618
      %v646 = vpack.c.b16 %v621, %v620
      %v647 = vpack.c.b16 %v623, %v622
      %v648 = vpack.c.b16 %v625, %v624
      %v649 = vpack.c.b16 %v627, %v626
      %v650 = vpack.c.b16 %v629, %v628
      %v651 = vpack.c.b16 %v631, %v630
      %v652 = vpack.c.b16 %v633, %v632
      %v653 = vpack.c.b16 %v635, %v634
      %v654 = vpack.c.b16 %v637, %v636
      %v655 = vpack.c.b16 %v639, %v638
      %672 = vmatpush.bf16.msra.mxu0 %v647
      %673 = vmatpush.bf16.msra.mxu0 %v646
      %674 = vmatpush.bf16.msra.mxu0 %v645
      %675 = vmatpush.bf16.msra.mxu0 %v644
      %676 = vmatpush.bf16.msra.mxu0 %v643
      %677 = vmatpush.bf16.msra.mxu0 %v642
      %678 = vmatpush.bf16.msra.mxu0 %v641
      %679 = vmatpush.bf16.msra.mxu0 %v640
      %680 = vmatmul.bf16.gmra.mxu0 %v572
      %v681 = vpop.f32.mrf.mxu0
      %v682 = vadd.f32 %v566, %v681
      %v683 = vpop.f32.mrf.mxu0
      %684 = vdwg.mxu0
      %685 = vmatpush.bf16.msra.mxu0 %v655
      %686 = vmatpush.bf16.msra.mxu0 %v654
      %687 = vmatpush.bf16.msra.mxu0 %v653
      %688 = vmatpush.bf16.msra.mxu0 %v652
      %689 = vmatpush.bf16.msra.mxu0 %v651
      %690 = vmatpush.bf16.msra.mxu0 %v650
      %691 = vmatpush.bf16.msra.mxu0 %v649
      %692 = vmatpush.bf16.msra.mxu0 %v648
      %693 = vmatmul.bf16.gmra.mxu0 %v573
      %v694 = vpop.f32.mrf.mxu0
      %v695 = vadd.f32 %v682, %v694
      %v696 = vpop.f32.mrf.mxu0
      %697 = vdwg.mxu0
      %s698 = scalar_lea.vmem %s272, 4
      %v699 = vld [vmem:[%s698] sm:$0x5]
      %v700 = vld [vmem:[%s698 + $0x4] sm:$0x5]
      %v703 = vrot.slane %v699, 1
      %v704 = vrot.slane %v699, 2
      %v705 = vrot.slane %v699, 3
      %v706 = vrot.slane %v700, 1
      %v707 = vrot.slane %v700, 2
      %v708 = vrot.slane %v700, 3
      %v711 = vsel %vm288, %v699, %v703
      %v714 = vsel %vm292, %v704, %v705
      %v715 = vsel %vm296, %v711, %v714
      %v718 = vsel %vm288, %v700, %v706
      %v721 = vsel %vm292, %v707, %v708
      %v722 = vsel %vm296, %v718, %v721
      %s723 = scalar_lea.vmem %s1, 256
      %v724 = vld [vmem:[%s723] sm:$0xf]
      %v725 = vld [vmem:[%s723 + $0x4] sm:$0xf]
      %v726 = vld [vmem:[%s723 + $0x8] sm:$0xf]
      %v727 = vld [vmem:[%s723 + $0xc] sm:$0xf]
      %v728 = vld [vmem:[%s723 + $0x10] sm:$0xf]
      %v729 = vld [vmem:[%s723 + $0x14] sm:$0xf]
      %v730 = vld [vmem:[%s723 + $0x18] sm:$0xf]
      %v731 = vld [vmem:[%s723 + $0x1c] sm:$0xf]
      %v732 = vld [vmem:[%s723 + $0x20] sm:$0xf]
      %v733 = vld [vmem:[%s723 + $0x24] sm:$0xf]
      %v734 = vld [vmem:[%s723 + $0x28] sm:$0xf]
      %v735 = vld [vmem:[%s723 + $0x2c] sm:$0xf]
      %v736 = vld [vmem:[%s723 + $0x30] sm:$0xf]
      %v737 = vld [vmem:[%s723 + $0x34] sm:$0xf]
      %v738 = vld [vmem:[%s723 + $0x38] sm:$0xf]
      %v739 = vld [vmem:[%s723 + $0x3c] sm:$0xf]
      %v740 = vld [vmem:[%s723 + $0x40] sm:$0xf]
      %v741 = vld [vmem:[%s723 + $0x44] sm:$0xf]
      %v742 = vld [vmem:[%s723 + $0x48] sm:$0xf]
      %v743 = vld [vmem:[%s723 + $0x4c] sm:$0xf]
      %v744 = vld [vmem:[%s723 + $0x50] sm:$0xf]
      %v745 = vld [vmem:[%s723 + $0x54] sm:$0xf]
      %v746 = vld [vmem:[%s723 + $0x58] sm:$0xf]
      %v747 = vld [vmem:[%s723 + $0x5c] sm:$0xf]
      %v748 = vld [vmem:[%s723 + $0x60] sm:$0xf]
      %v749 = vld [vmem:[%s723 + $0x64] sm:$0xf]
      %v750 = vld [vmem:[%s723 + $0x68] sm:$0xf]
      %v751 = vld [vmem:[%s723 + $0x6c] sm:$0xf]
      %v752 = vld [vmem:[%s723 + $0x70] sm:$0xf]
      %v753 = vld [vmem:[%s723 + $0x74] sm:$0xf]
      %v754 = vld [vmem:[%s723 + $0x78] sm:$0xf]
      %v755 = vld [vmem:[%s723 + $0x7c] sm:$0xf]
      %756 = vst [vmem:[#allocation1] ss:$9 sm:$0xff] %v715
      %s757 = scalar_lea.vmem [#allocation1], 1
      %758 = vst [vmem:[%s757] ss:$9 sm:$0xff] %v722
      %v759 = vld [vmem:[#allocation1] sm:$0xff]
      %v760 = vld [vmem:[#allocation1 + $0x9] sm:$0xff]
      %v795 = vunpack.c.l.b16 %v724
      %v796 = vunpack.c.l.b16 %v725
      %v797 = vunpack.c.l.b16 %v726
      %v798 = vunpack.c.l.b16 %v727
      %v799 = vunpack.c.l.b16 %v728
      %v800 = vunpack.c.l.b16 %v729
      %v801 = vunpack.c.l.b16 %v730
      %v802 = vunpack.c.l.b16 %v731
      %v803 = vunpack.c.l.b16 %v732
      %v804 = vunpack.c.l.b16 %v733
      %v805 = vunpack.c.l.b16 %v734
      %v806 = vunpack.c.l.b16 %v735
      %v807 = vunpack.c.l.b16 %v736
      %v808 = vunpack.c.l.b16 %v737
      %v809 = vunpack.c.l.b16 %v738
      %v810 = vunpack.c.l.b16 %v739
      %v811 = vunpack.c.l.b16 %v740
      %v812 = vunpack.c.l.b16 %v741
      %v813 = vunpack.c.l.b16 %v742
      %v814 = vunpack.c.l.b16 %v743
      %v815 = vunpack.c.l.b16 %v744
      %v816 = vunpack.c.l.b16 %v745
      %v817 = vunpack.c.l.b16 %v746
      %v818 = vunpack.c.l.b16 %v747
      %v819 = vunpack.c.l.b16 %v748
      %v820 = vunpack.c.l.b16 %v749
      %v821 = vunpack.c.l.b16 %v750
      %v822 = vunpack.c.l.b16 %v751
      %v823 = vunpack.c.l.b16 %v752
      %v824 = vunpack.c.l.b16 %v753
      %v825 = vunpack.c.l.b16 %v754
      %v826 = vunpack.c.l.b16 %v755
      %v827 = vpack.c.b16 %v796, %v795
      %v828 = vpack.c.b16 %v798, %v797
      %v829 = vpack.c.b16 %v800, %v799
      %v830 = vpack.c.b16 %v802, %v801
      %v831 = vpack.c.b16 %v804, %v803
      %v832 = vpack.c.b16 %v806, %v805
      %v833 = vpack.c.b16 %v808, %v807
      %v834 = vpack.c.b16 %v810, %v809
      %v835 = vpack.c.b16 %v812, %v811
      %v836 = vpack.c.b16 %v814, %v813
      %v837 = vpack.c.b16 %v816, %v815
      %v838 = vpack.c.b16 %v818, %v817
      %v839 = vpack.c.b16 %v820, %v819
      %v840 = vpack.c.b16 %v822, %v821
      %v841 = vpack.c.b16 %v824, %v823
      %v842 = vpack.c.b16 %v826, %v825
      %859 = vmatpush.bf16.msra.mxu0 %v834
      %860 = vmatpush.bf16.msra.mxu0 %v833
      %861 = vmatpush.bf16.msra.mxu0 %v832
      %862 = vmatpush.bf16.msra.mxu0 %v831
      %863 = vmatpush.bf16.msra.mxu0 %v830
      %864 = vmatpush.bf16.msra.mxu0 %v829
      %865 = vmatpush.bf16.msra.mxu0 %v828
      %866 = vmatpush.bf16.msra.mxu0 %v827
      %867 = vmatmul.bf16.gmra.mxu0 %v759
      %v868 = vpop.f32.mrf.mxu0
      %v869 = vadd.f32 0.0, %v868
      %v870 = vpop.f32.mrf.mxu0
      %871 = vdwg.mxu0
      %872 = vmatpush.bf16.msra.mxu0 %v842
      %873 = vmatpush.bf16.msra.mxu0 %v841
      %874 = vmatpush.bf16.msra.mxu0 %v840
      %875 = vmatpush.bf16.msra.mxu0 %v839
      %876 = vmatpush.bf16.msra.mxu0 %v838
      %877 = vmatpush.bf16.msra.mxu0 %v837
      %878 = vmatpush.bf16.msra.mxu0 %v836
      %879 = vmatpush.bf16.msra.mxu0 %v835
      %880 = vmatmul.bf16.gmra.mxu0 %v760
      %v881 = vpop.f32.mrf.mxu0
      %v882 = vadd.f32 %v869, %v881
      %v883 = vpop.f32.mrf.mxu0
      %884 = vdwg.mxu0
      %v885 = vadd.f32 %v695, %v882
      %v886 = vld [vmem:[%s698] sm:$0xf]
      %v887 = vld [vmem:[%s698 + $0x4] sm:$0xf]
      %v890 = vrot.slane %v886, 1
      %v891 = vrot.slane %v886, 2
      %v892 = vrot.slane %v886, 3
      %v893 = vrot.slane %v887, 1
      %v894 = vrot.slane %v887, 2
      %v895 = vrot.slane %v887, 3
      %v898 = vsel %vm288, %v886, %v890
      %v901 = vsel %vm292, %v891, %v892
      %v902 = vsel %vm296, %v898, %v901
      %v903 = vsel %vm354, %v886, %v890
      %v904 = vsel %vm356, %v891, %v892
      %v905 = vsel %vm358, %v903, %v904
      %v907 = vrot.slane %v905, 1
      %v910 = vsel %vm288, %v887, %v893
      %v913 = vsel %vm292, %v894, %v895
      %v914 = vsel %vm296, %v910, %v913
      %v915 = vsel %vm354, %v887, %v893
      %v916 = vsel %vm356, %v894, %v895
      %v917 = vsel %vm358, %v915, %v916
      %v919 = vrot.slane %v917, 1
      %v920 = vshrl.u32 %v902, 16
      %v922 = vrot.slane %v920, 7
      %v923 = vrot.slane %v922, 1
      %v925 = vshll.u32 %v907, 16
      %v927 = vsel %vm388, %v923, %v925
      %v928 = vshrl.u32 %v914, 16
      %v930 = vrot.slane %v928, 7
      %v931 = vrot.slane %v930, 1
      %v933 = vshll.u32 %v919, 16
      %v935 = vsel %vm388, %v931, %v933
      %s936 = scalar_lea.vmem %s1, 384
      %v937 = vld [vmem:[%s936] sm:$0xf]
      %v938 = vld [vmem:[%s936 + $0x4] sm:$0xf]
      %v939 = vld [vmem:[%s936 + $0x8] sm:$0xf]
      %v940 = vld [vmem:[%s936 + $0xc] sm:$0xf]
      %v941 = vld [vmem:[%s936 + $0x10] sm:$0xf]
      %v942 = vld [vmem:[%s936 + $0x14] sm:$0xf]
      %v943 = vld [vmem:[%s936 + $0x18] sm:$0xf]
      %v944 = vld [vmem:[%s936 + $0x1c] sm:$0xf]
      %v945 = vld [vmem:[%s936 + $0x20] sm:$0xf]
      %v946 = vld [vmem:[%s936 + $0x24] sm:$0xf]
      %v947 = vld [vmem:[%s936 + $0x28] sm:$0xf]
      %v948 = vld [vmem:[%s936 + $0x2c] sm:$0xf]
      %v949 = vld [vmem:[%s936 + $0x30] sm:$0xf]
      %v950 = vld [vmem:[%s936 + $0x34] sm:$0xf]
      %v951 = vld [vmem:[%s936 + $0x38] sm:$0xf]
      %v952 = vld [vmem:[%s936 + $0x3c] sm:$0xf]
      %v953 = vld [vmem:[%s936 + $0x40] sm:$0xf]
      %v954 = vld [vmem:[%s936 + $0x44] sm:$0xf]
      %v955 = vld [vmem:[%s936 + $0x48] sm:$0xf]
      %v956 = vld [vmem:[%s936 + $0x4c] sm:$0xf]
      %v957 = vld [vmem:[%s936 + $0x50] sm:$0xf]
      %v958 = vld [vmem:[%s936 + $0x54] sm:$0xf]
      %v959 = vld [vmem:[%s936 + $0x58] sm:$0xf]
      %v960 = vld [vmem:[%s936 + $0x5c] sm:$0xf]
      %v961 = vld [vmem:[%s936 + $0x60] sm:$0xf]
      %v962 = vld [vmem:[%s936 + $0x64] sm:$0xf]
      %v963 = vld [vmem:[%s936 + $0x68] sm:$0xf]
      %v964 = vld [vmem:[%s936 + $0x6c] sm:$0xf]
      %v965 = vld [vmem:[%s936 + $0x70] sm:$0xf]
      %v966 = vld [vmem:[%s936 + $0x74] sm:$0xf]
      %v967 = vld [vmem:[%s936 + $0x78] sm:$0xf]
      %v968 = vld [vmem:[%s936 + $0x7c] sm:$0xf]
      %970 = vst [vmem:[#allocation1] ss:$9 sm:$0xff] %v927
      %s972 = scalar_lea.vmem [#allocation1], 1
      %973 = vst [vmem:[%s972] ss:$9 sm:$0xff] %v935
      %v974 = vld [vmem:[#allocation1] sm:$0xff]
      %v975 = vld [vmem:[#allocation1 + $0x9] sm:$0xff]
      %v1010 = vunpack.c.l.b16 %v937
      %v1011 = vunpack.c.l.b16 %v938
      %v1012 = vunpack.c.l.b16 %v939
      %v1013 = vunpack.c.l.b16 %v940
      %v1014 = vunpack.c.l.b16 %v941
      %v1015 = vunpack.c.l.b16 %v942
      %v1016 = vunpack.c.l.b16 %v943
      %v1017 = vunpack.c.l.b16 %v944
      %v1018 = vunpack.c.l.b16 %v945
      %v1019 = vunpack.c.l.b16 %v946
      %v1020 = vunpack.c.l.b16 %v947
      %v1021 = vunpack.c.l.b16 %v948
      %v1022 = vunpack.c.l.b16 %v949
      %v1023 = vunpack.c.l.b16 %v950
      %v1024 = vunpack.c.l.b16 %v951
      %v1025 = vunpack.c.l.b16 %v952
      %v1026 = vunpack.c.l.b16 %v953
      %v1027 = vunpack.c.l.b16 %v954
      %v1028 = vunpack.c.l.b16 %v955
      %v1029 = vunpack.c.l.b16 %v956
      %v1030 = vunpack.c.l.b16 %v957
      %v1031 = vunpack.c.l.b16 %v958
      %v1032 = vunpack.c.l.b16 %v959
      %v1033 = vunpack.c.l.b16 %v960
      %v1034 = vunpack.c.l.b16 %v961
      %v1035 = vunpack.c.l.b16 %v962
      %v1036 = vunpack.c.l.b16 %v963
      %v1037 = vunpack.c.l.b16 %v964
      %v1038 = vunpack.c.l.b16 %v965
      %v1039 = vunpack.c.l.b16 %v966
      %v1040 = vunpack.c.l.b16 %v967
      %v1041 = vunpack.c.l.b16 %v968
      %v1042 = vpack.c.b16 %v1011, %v1010
      %v1043 = vpack.c.b16 %v1013, %v1012
      %v1044 = vpack.c.b16 %v1015, %v1014
      %v1045 = vpack.c.b16 %v1017, %v1016
      %v1046 = vpack.c.b16 %v1019, %v1018
      %v1047 = vpack.c.b16 %v1021, %v1020
      %v1048 = vpack.c.b16 %v1023, %v1022
      %v1049 = vpack.c.b16 %v1025, %v1024
      %v1050 = vpack.c.b16 %v1027, %v1026
      %v1051 = vpack.c.b16 %v1029, %v1028
      %v1052 = vpack.c.b16 %v1031, %v1030
      %v1053 = vpack.c.b16 %v1033, %v1032
      %v1054 = vpack.c.b16 %v1035, %v1034
      %v1055 = vpack.c.b16 %v1037, %v1036
      %v1056 = vpack.c.b16 %v1039, %v1038
      %v1057 = vpack.c.b16 %v1041, %v1040
      %1074 = vmatpush.bf16.msra.mxu0 %v1049
      %1075 = vmatpush.bf16.msra.mxu0 %v1048
      %1076 = vmatpush.bf16.msra.mxu0 %v1047
      %1077 = vmatpush.bf16.msra.mxu0 %v1046
      %1078 = vmatpush.bf16.msra.mxu0 %v1045
      %1079 = vmatpush.bf16.msra.mxu0 %v1044
      %1080 = vmatpush.bf16.msra.mxu0 %v1043
      %1081 = vmatpush.bf16.msra.mxu0 %v1042
      %1082 = vmatmul.bf16.gmra.mxu0 %v974
      %v1083 = vpop.f32.mrf.mxu0
      %v1084 = vadd.f32 0.0, %v1083
      %v1085 = vpop.f32.mrf.mxu0
      %1086 = vdwg.mxu0
      %1087 = vmatpush.bf16.msra.mxu0 %v1057
      %1088 = vmatpush.bf16.msra.mxu0 %v1056
      %1089 = vmatpush.bf16.msra.mxu0 %v1055
      %1090 = vmatpush.bf16.msra.mxu0 %v1054
      %1091 = vmatpush.bf16.msra.mxu0 %v1053
      %1092 = vmatpush.bf16.msra.mxu0 %v1052
      %1093 = vmatpush.bf16.msra.mxu0 %v1051
      %1094 = vmatpush.bf16.msra.mxu0 %v1050
      %1095 = vmatmul.bf16.gmra.mxu0 %v975
      %v1096 = vpop.f32.mrf.mxu0
      %v1097 = vadd.f32 %v1084, %v1096
      %v1098 = vpop.f32.mrf.mxu0
      %1099 = vdwg.mxu0
      %v1100 = vadd.f32 %v885, %v1097
      %v1101 = vld [vmem:[%s2] sm:$0x1]
      %v1103 = vperm.slane %v1101, 0
      %v1105 = vadd.f32 %v1100, %v1103
      %v1106 = vmax.f32 %v1105, 0.0
      %1107 = vst [vmem:[#allocation2] sm:$0x3] 0
      %1108 = vst [vmem:[#allocation2 + $0x2] sm:$0x3] 0
      %1109 = vst [vmem:[#allocation2 + $0x4] sm:$0x3] 0
      %1110 = vst [vmem:[#allocation2 + $0x6] sm:$0x3] 0
      %v1112 = vrot.slane %v1106, 2
      %v1114 = vpack.c.bf16 %v1106, %v1106
      %v1115 = vpack.c.bf16 %v1112, %v1112
      %v1118 = vrot.slane %v1114, 2
      %v1119 = vrot.slane %v1115, 2
      %v1122 = vsel %vm296, %v1114, %v1118
      %v1125 = vsel %vm296, %v1115, %v1119
      %v1126 = vshrl.u32 %v1122, 16
      %v1128 = vrot.slane %v1126, 7
      %v1129 = vshll.u32 %v1122, 16
      %v1131 = vor.u32 %v1128, %v1129
      %v1132 = vshrl.u32 %v1125, 16
      %v1134 = vrot.slane %v1132, 7
      %v1135 = vshll.u32 %v1125, 16
      %v1137 = vor.u32 %v1134, %v1135
      %s1140 = scalar_lea.vmem [#allocation2], 2
      %vm1141 = vcmask 1041408
      %vm1142 = vsmask.f32 1282
      %vm1143 = vmand %vm1141, %vm1142
      %v1144 = vld [vmem:[%s1140] sm:$0x3]
      %v1145 = vsel %vm1143, %v1131, %v1144
      %1146 = vst [vmem:[%s1140] sm:$0x3] %v1145
      %v1147 = vld [vmem:[%s1140 + $0x2] sm:$0x3]
      %v1148 = vsel %vm1143, %v1137, %v1147
      %1149 = vst [vmem:[%s1140 + $0x2] sm:$0x3] %v1148
      %v1150 = vld [vmem:[%s272 + $0x2] sm:$0x1]
      %v1151 = vld [vmem:[%s272 + $0x6] sm:$0x1]
      %v1152 = vld [vmem:[%s5] sm:$0xf]
      %v1153 = vld [vmem:[%s5 + $0x4] sm:$0xf]
      %v1154 = vld [vmem:[%s5 + $0x8] sm:$0xf]
      %v1155 = vld [vmem:[%s5 + $0xc] sm:$0xf]
      %v1156 = vld [vmem:[%s5 + $0x10] sm:$0xf]
      %v1157 = vld [vmem:[%s5 + $0x14] sm:$0xf]
      %v1158 = vld [vmem:[%s5 + $0x18] sm:$0xf]
      %v1159 = vld [vmem:[%s5 + $0x1c] sm:$0xf]
      %v1160 = vld [vmem:[%s6] sm:$0x1]
      %v1162 = vperm.slane %v1160, 0
      %1165 = vst [vmem:[#allocation1] ss:$9 sm:$0xff] %v1150
      %s1167 = scalar_lea.vmem [#allocation1], 1
      %1168 = vst [vmem:[%s1167] ss:$9 sm:$0xff] %v1151
      %v1169 = vld [vmem:[#allocation1] sm:$0xff]
      %1171 = vrot.lane.b32.xlu0 %v1169, 64
      %v1172 = vpop.permute.xlu0 %1171
      %v1181 = vunpack.c.l.b16 %v1152
      %v1182 = vunpack.c.l.b16 %v1153
      %v1183 = vunpack.c.l.b16 %v1154
      %v1184 = vunpack.c.l.b16 %v1155
      %v1185 = vunpack.c.l.b16 %v1156
      %v1186 = vunpack.c.l.b16 %v1157
      %v1187 = vunpack.c.l.b16 %v1158
      %v1188 = vunpack.c.l.b16 %v1159
      %v1189 = vpack.c.b16 %v1182, %v1181
      %v1190 = vpack.c.b16 %v1184, %v1183
      %v1191 = vpack.c.b16 %v1186, %v1185
      %v1192 = vpack.c.b16 %v1188, %v1187
      %vm1197 = vcmask 523264
      %v1199 = vsel %vm1197, %v1172, 0
      %1201 = vmatpush.bf16.msra.mxu0 0
      %1202 = vmatpush.bf16.msra.mxu0 0
      %1203 = vmatpush.bf16.msra.mxu0 0
      %1204 = vmatpush.bf16.msra.mxu0 0
      %1205 = vmatpush.bf16.msra.mxu0 %v1192
      %1206 = vmatpush.bf16.msra.mxu0 %v1191
      %1207 = vmatpush.bf16.msra.mxu0 %v1190
      %1208 = vmatpush.bf16.msra.mxu0 %v1189
      %1209 = vmatmul.bf16.gmra.mxu0 %v1199
      %v1210 = vpop.f32.mrf.mxu0
      %v1211 = vadd.f32 %v1162, %v1210
      %v1212 = vpop.f32.mrf.mxu0
      %1213 = vdwg.mxu0
      %v1214 = vld [vmem:[#allocation2] sm:$0x1]
      %v1215 = vld [vmem:[#allocation2 + $0x2] sm:$0x1]
      %v1216 = vld [vmem:[%s3] sm:$0xf]
      %v1217 = vld [vmem:[%s3 + $0x4] sm:$0xf]
      %v1218 = vld [vmem:[%s3 + $0x8] sm:$0xf]
      %v1219 = vld [vmem:[%s3 + $0xc] sm:$0xf]
      %v1220 = vld [vmem:[%s3 + $0x10] sm:$0xf]
      %v1221 = vld [vmem:[%s3 + $0x14] sm:$0xf]
      %v1222 = vld [vmem:[%s3 + $0x18] sm:$0xf]
      %v1223 = vld [vmem:[%s3 + $0x1c] sm:$0xf]
      %v1224 = vld [vmem:[%s3 + $0x20] sm:$0xf]
      %v1225 = vld [vmem:[%s3 + $0x24] sm:$0xf]
      %v1226 = vld [vmem:[%s3 + $0x28] sm:$0xf]
      %v1227 = vld [vmem:[%s3 + $0x2c] sm:$0xf]
      %v1228 = vld [vmem:[%s3 + $0x30] sm:$0xf]
      %v1229 = vld [vmem:[%s3 + $0x34] sm:$0xf]
      %v1230 = vld [vmem:[%s3 + $0x38] sm:$0xf]
      %v1231 = vld [vmem:[%s3 + $0x3c] sm:$0xf]
      %v1232 = vld [vmem:[#allocation2] sm:$0x3]
      %v1233 = vld [vmem:[#allocation2 + $0x2] sm:$0x3]
      %v1236 = vrot.slane %v1232, 1
      %v1237 = vrot.slane %v1232, 2
      %v1238 = vrot.slane %v1232, 3
      %v1239 = vrot.slane %v1233, 1
      %v1240 = vrot.slane %v1233, 2
      %v1241 = vrot.slane %v1233, 3
      %v1244 = vsel %vm288, %v1232, %v1236
      %v1247 = vsel %vm292, %v1237, %v1238
      %v1248 = vsel %vm296, %v1244, %v1247
      %v1249 = vsel %vm354, %v1232, %v1236
      %v1250 = vsel %vm356, %v1237, %v1238
      %v1251 = vsel %vm358, %v1249, %v1250
      %v1253 = vrot.slane %v1251, 1
      %v1256 = vsel %vm288, %v1233, %v1239
      %v1259 = vsel %vm292, %v1240, %v1241
      %v1260 = vsel %vm296, %v1256, %v1259
      %v1261 = vsel %vm354, %v1233, %v1239
      %v1262 = vsel %vm356, %v1240, %v1241
      %v1263 = vsel %vm358, %v1261, %v1262
      %v1265 = vrot.slane %v1263, 1
      %v1266 = vshrl.u32 %v1248, 16
      %v1268 = vrot.slane %v1266, 7
      %v1269 = vrot.slane %v1268, 1
      %v1271 = vshll.u32 %v1253, 16
      %v1273 = vsel %vm388, %v1269, %v1271
      %v1274 = vshrl.u32 %v1260, 16
      %v1276 = vrot.slane %v1274, 7
      %v1277 = vrot.slane %v1276, 1
      %v1279 = vshll.u32 %v1265, 16
      %v1281 = vsel %vm388, %v1277, %v1279
      %s1282 = scalar_lea.vmem %s3, 64
      %v1283 = vld [vmem:[%s1282] sm:$0xf]
      %v1284 = vld [vmem:[%s1282 + $0x4] sm:$0xf]
      %v1285 = vld [vmem:[%s1282 + $0x8] sm:$0xf]
      %v1286 = vld [vmem:[%s1282 + $0xc] sm:$0xf]
      %v1287 = vld [vmem:[%s1282 + $0x10] sm:$0xf]
      %v1288 = vld [vmem:[%s1282 + $0x14] sm:$0xf]
      %v1289 = vld [vmem:[%s1282 + $0x18] sm:$0xf]
      %v1290 = vld [vmem:[%s1282 + $0x1c] sm:$0xf]
      %v1291 = vld [vmem:[%s1282 + $0x20] sm:$0xf]
      %v1292 = vld [vmem:[%s1282 + $0x24] sm:$0xf]
      %v1293 = vld [vmem:[%s1282 + $0x28] sm:$0xf]
      %v1294 = vld [vmem:[%s1282 + $0x2c] sm:$0xf]
      %v1295 = vld [vmem:[%s1282 + $0x30] sm:$0xf]
      %v1296 = vld [vmem:[%s1282 + $0x34] sm:$0xf]
      %v1297 = vld [vmem:[%s1282 + $0x38] sm:$0xf]
      %v1298 = vld [vmem:[%s1282 + $0x3c] sm:$0xf]
      %1300 = vst [vmem:[#allocation1] ss:$9 sm:$0xff] %v1273
      %s1302 = scalar_lea.vmem [#allocation1], 1
      %1303 = vst [vmem:[%s1302] ss:$9 sm:$0xff] %v1281
      %v1304 = vld [vmem:[#allocation1] sm:$0xff]
      %v1322 = vunpack.c.l.b16 %v1283
      %v1323 = vunpack.c.l.b16 %v1284
      %v1324 = vunpack.c.l.b16 %v1285
      %v1325 = vunpack.c.l.b16 %v1286
      %v1326 = vunpack.c.l.b16 %v1287
      %v1327 = vunpack.c.l.b16 %v1288
      %v1328 = vunpack.c.l.b16 %v1289
      %v1329 = vunpack.c.l.b16 %v1290
      %v1330 = vunpack.c.l.b16 %v1291
      %v1331 = vunpack.c.l.b16 %v1292
      %v1332 = vunpack.c.l.b16 %v1293
      %v1333 = vunpack.c.l.b16 %v1294
      %v1334 = vunpack.c.l.b16 %v1295
      %v1335 = vunpack.c.l.b16 %v1296
      %v1336 = vunpack.c.l.b16 %v1297
      %v1337 = vunpack.c.l.b16 %v1298
      %v1338 = vpack.c.b16 %v1323, %v1322
      %v1339 = vpack.c.b16 %v1325, %v1324
      %v1340 = vpack.c.b16 %v1327, %v1326
      %v1341 = vpack.c.b16 %v1329, %v1328
      %v1342 = vpack.c.b16 %v1331, %v1330
      %v1343 = vpack.c.b16 %v1333, %v1332
      %v1344 = vpack.c.b16 %v1335, %v1334
      %v1345 = vpack.c.b16 %v1337, %v1336
      %1354 = vmatpush.bf16.msra.mxu0 %v1345
      %1355 = vmatpush.bf16.msra.mxu0 %v1344
      %1356 = vmatpush.bf16.msra.mxu0 %v1343
      %1357 = vmatpush.bf16.msra.mxu0 %v1342
      %1358 = vmatpush.bf16.msra.mxu0 %v1341
      %1359 = vmatpush.bf16.msra.mxu0 %v1340
      %1360 = vmatpush.bf16.msra.mxu0 %v1339
      %1361 = vmatpush.bf16.msra.mxu0 %v1338
      %1362 = vmatmul.bf16.gmra.mxu0 %v1304
      %v1363 = vpop.f32.mrf.mxu0
      %v1364 = vadd.f32 0.0, %v1363
      %v1365 = vpop.f32.mrf.mxu0
      %1366 = vdwg.mxu0
      %1368 = vst [vmem:[#allocation1] ss:$9 sm:$0xff] %v1214
      %s1370 = scalar_lea.vmem [#allocation1], 1
      %1371 = vst [vmem:[%s1370] ss:$9 sm:$0xff] %v1215
      %v1372 = vld [vmem:[#allocation1] sm:$0xff]
      %v1390 = vunpack.c.l.b16 %v1216
      %v1391 = vunpack.c.l.b16 %v1217
      %v1392 = vunpack.c.l.b16 %v1218
      %v1393 = vunpack.c.l.b16 %v1219
      %v1394 = vunpack.c.l.b16 %v1220
      %v1395 = vunpack.c.l.b16 %v1221
      %v1396 = vunpack.c.l.b16 %v1222
      %v1397 = vunpack.c.l.b16 %v1223
      %v1398 = vunpack.c.l.b16 %v1224
      %v1399 = vunpack.c.l.b16 %v1225
      %v1400 = vunpack.c.l.b16 %v1226
      %v1401 = vunpack.c.l.b16 %v1227
      %v1402 = vunpack.c.l.b16 %v1228
      %v1403 = vunpack.c.l.b16 %v1229
      %v1404 = vunpack.c.l.b16 %v1230
      %v1405 = vunpack.c.l.b16 %v1231
      %v1406 = vpack.c.b16 %v1391, %v1390
      %v1407 = vpack.c.b16 %v1393, %v1392
      %v1408 = vpack.c.b16 %v1395, %v1394
      %v1409 = vpack.c.b16 %v1397, %v1396
      %v1410 = vpack.c.b16 %v1399, %v1398
      %v1411 = vpack.c.b16 %v1401, %v1400
      %v1412 = vpack.c.b16 %v1403, %v1402
      %v1413 = vpack.c.b16 %v1405, %v1404
      %1422 = vmatpush.bf16.msra.mxu0 %v1413
      %1423 = vmatpush.bf16.msra.mxu0 %v1412
      %1424 = vmatpush.bf16.msra.mxu0 %v1411
      %1425 = vmatpush.bf16.msra.mxu0 %v1410
      %1426 = vmatpush.bf16.msra.mxu0 %v1409
      %1427 = vmatpush.bf16.msra.mxu0 %v1408
      %1428 = vmatpush.bf16.msra.mxu0 %v1407
      %1429 = vmatpush.bf16.msra.mxu0 %v1406
      %1430 = vmatmul.bf16.gmra.mxu0 %v1372
      %v1431 = vpop.f32.mrf.mxu0
      %v1432 = vadd.f32 %v1364, %v1431
      %v1433 = vpop.f32.mrf.mxu0
      %1434 = vdwg.mxu0
      %v1435 = vld [vmem:[#allocation2] sm:$0x2]
      %v1436 = vld [vmem:[#allocation2 + $0x2] sm:$0x2]
      %1438 = vst [vmem:[#allocation1] sm:$0xff] %v1435
      %s1439 = scalar_lea.vmem [#allocation1], 1
      %v1440 = vld [vmem:[%s1439] ss:$2 sm:$0xff]
      %1442 = vst [vmem:[#allocation1 + $0x10] sm:$0xff] %v1436
      %s1443 = scalar_lea.vmem [#allocation1], 17
      %v1444 = vld [vmem:[%s1443] ss:$2 sm:$0xff]
      %s1445 = scalar_lea.vmem %s3, 128
      %v1446 = vld [vmem:[%s1445] sm:$0xf]
      %v1447 = vld [vmem:[%s1445 + $0x4] sm:$0xf]
      %v1448 = vld [vmem:[%s1445 + $0x8] sm:$0xf]
      %v1449 = vld [vmem:[%s1445 + $0xc] sm:$0xf]
      %v1450 = vld [vmem:[%s1445 + $0x10] sm:$0xf]
      %v1451 = vld [vmem:[%s1445 + $0x14] sm:$0xf]
      %v1452 = vld [vmem:[%s1445 + $0x18] sm:$0xf]
      %v1453 = vld [vmem:[%s1445 + $0x1c] sm:$0xf]
      %v1454 = vld [vmem:[%s1445 + $0x20] sm:$0xf]
      %v1455 = vld [vmem:[%s1445 + $0x24] sm:$0xf]
      %v1456 = vld [vmem:[%s1445 + $0x28] sm:$0xf]
      %v1457 = vld [vmem:[%s1445 + $0x2c] sm:$0xf]
      %v1458 = vld [vmem:[%s1445 + $0x30] sm:$0xf]
      %v1459 = vld [vmem:[%s1445 + $0x34] sm:$0xf]
      %v1460 = vld [vmem:[%s1445 + $0x38] sm:$0xf]
      %v1461 = vld [vmem:[%s1445 + $0x3c] sm:$0xf]
      %1462 = vst [vmem:[#allocation1] ss:$9 sm:$0xff] %v1440
      %s1463 = scalar_lea.vmem [#allocation1], 1
      %1464 = vst [vmem:[%s1463] ss:$9 sm:$0xff] %v1444
      %v1465 = vld [vmem:[#allocation1] sm:$0xff]
      %v1483 = vunpack.c.l.b16 %v1446
      %v1484 = vunpack.c.l.b16 %v1447
      %v1485 = vunpack.c.l.b16 %v1448
      %v1486 = vunpack.c.l.b16 %v1449
      %v1487 = vunpack.c.l.b16 %v1450
      %v1488 = vunpack.c.l.b16 %v1451
      %v1489 = vunpack.c.l.b16 %v1452
      %v1490 = vunpack.c.l.b16 %v1453
      %v1491 = vunpack.c.l.b16 %v1454
      %v1492 = vunpack.c.l.b16 %v1455
      %v1493 = vunpack.c.l.b16 %v1456
      %v1494 = vunpack.c.l.b16 %v1457
      %v1495 = vunpack.c.l.b16 %v1458
      %v1496 = vunpack.c.l.b16 %v1459
      %v1497 = vunpack.c.l.b16 %v1460
      %v1498 = vunpack.c.l.b16 %v1461
      %v1499 = vpack.c.b16 %v1484, %v1483
      %v1500 = vpack.c.b16 %v1486, %v1485
      %v1501 = vpack.c.b16 %v1488, %v1487
      %v1502 = vpack.c.b16 %v1490, %v1489
      %v1503 = vpack.c.b16 %v1492, %v1491
      %v1504 = vpack.c.b16 %v1494, %v1493
      %v1505 = vpack.c.b16 %v1496, %v1495
      %v1506 = vpack.c.b16 %v1498, %v1497
      %1515 = vmatpush.bf16.msra.mxu0 %v1506
      %1516 = vmatpush.bf16.msra.mxu0 %v1505
      %1517 = vmatpush.bf16.msra.mxu0 %v1504
      %1518 = vmatpush.bf16.msra.mxu0 %v1503
      %1519 = vmatpush.bf16.msra.mxu0 %v1502
      %1520 = vmatpush.bf16.msra.mxu0 %v1501
      %1521 = vmatpush.bf16.msra.mxu0 %v1500
      %1522 = vmatpush.bf16.msra.mxu0 %v1499
      %1523 = vmatmul.bf16.gmra.mxu0 %v1465
      %v1524 = vpop.f32.mrf.mxu0
      %v1525 = vadd.f32 0.0, %v1524
      %v1526 = vpop.f32.mrf.mxu0
      %1527 = vdwg.mxu0
      %v1528 = vadd.f32 %v1432, %v1525
      %v1529 = vld [vmem:[%s1140] sm:$0x1]
      %v1530 = vld [vmem:[%s1140 + $0x2] sm:$0x1]
      %s1531 = scalar_lea.vmem %s3, 192
      %v1532 = vld [vmem:[%s1531] sm:$0xf]
      %v1533 = vld [vmem:[%s1531 + $0x4] sm:$0xf]
      %v1534 = vld [vmem:[%s1531 + $0x8] sm:$0xf]
      %v1535 = vld [vmem:[%s1531 + $0xc] sm:$0xf]
      %v1536 = vld [vmem:[%s1531 + $0x10] sm:$0xf]
      %v1537 = vld [vmem:[%s1531 + $0x14] sm:$0xf]
      %v1538 = vld [vmem:[%s1531 + $0x18] sm:$0xf]
      %v1539 = vld [vmem:[%s1531 + $0x1c] sm:$0xf]
      %v1540 = vld [vmem:[%s1531 + $0x20] sm:$0xf]
      %v1541 = vld [vmem:[%s1531 + $0x24] sm:$0xf]
      %v1542 = vld [vmem:[%s1531 + $0x28] sm:$0xf]
      %v1543 = vld [vmem:[%s1531 + $0x2c] sm:$0xf]
      %v1544 = vld [vmem:[%s1531 + $0x30] sm:$0xf]
      %v1545 = vld [vmem:[%s1531 + $0x34] sm:$0xf]
      %v1546 = vld [vmem:[%s1531 + $0x38] sm:$0xf]
      %v1547 = vld [vmem:[%s1531 + $0x3c] sm:$0xf]
      %1549 = vst [vmem:[#allocation1] ss:$9 sm:$0xff] %v1529
      %s1551 = scalar_lea.vmem [#allocation1], 1
      %1552 = vst [vmem:[%s1551] ss:$9 sm:$0xff] %v1530
      %v1553 = vld [vmem:[#allocation1] sm:$0xff]
      %v1571 = vunpack.c.l.b16 %v1532
      %v1572 = vunpack.c.l.b16 %v1533
      %v1573 = vunpack.c.l.b16 %v1534
      %v1574 = vunpack.c.l.b16 %v1535
      %v1575 = vunpack.c.l.b16 %v1536
      %v1576 = vunpack.c.l.b16 %v1537
      %v1577 = vunpack.c.l.b16 %v1538
      %v1578 = vunpack.c.l.b16 %v1539
      %v1579 = vunpack.c.l.b16 %v1540
      %v1580 = vunpack.c.l.b16 %v1541
      %v1581 = vunpack.c.l.b16 %v1542
      %v1582 = vunpack.c.l.b16 %v1543
      %v1583 = vunpack.c.l.b16 %v1544
      %v1584 = vunpack.c.l.b16 %v1545
      %v1585 = vunpack.c.l.b16 %v1546
      %v1586 = vunpack.c.l.b16 %v1547
      %v1587 = vpack.c.b16 %v1572, %v1571
      %v1588 = vpack.c.b16 %v1574, %v1573
      %v1589 = vpack.c.b16 %v1576, %v1575
      %v1590 = vpack.c.b16 %v1578, %v1577
      %v1591 = vpack.c.b16 %v1580, %v1579
      %v1592 = vpack.c.b16 %v1582, %v1581
      %v1593 = vpack.c.b16 %v1584, %v1583
      %v1594 = vpack.c.b16 %v1586, %v1585
      %1603 = vmatpush.bf16.msra.mxu0 %v1594
      %1604 = vmatpush.bf16.msra.mxu0 %v1593
      %1605 = vmatpush.bf16.msra.mxu0 %v1592
      %1606 = vmatpush.bf16.msra.mxu0 %v1591
      %1607 = vmatpush.bf16.msra.mxu0 %v1590
      %1608 = vmatpush.bf16.msra.mxu0 %v1589
      %1609 = vmatpush.bf16.msra.mxu0 %v1588
      %1610 = vmatpush.bf16.msra.mxu0 %v1587
      %1611 = vmatmul.bf16.gmra.mxu0 %v1553
      %v1612 = vpop.f32.mrf.mxu0
      %v1613 = vadd.f32 0.0, %v1612
      %v1614 = vpop.f32.mrf.mxu0
      %1615 = vdwg.mxu0
      %v1616 = vadd.f32 %v1528, %v1613
      %v1617 = vld [vmem:[%s1140] sm:$0x3]
      %v1618 = vld [vmem:[%s1140 + $0x2] sm:$0x3]
      %v1621 = vrot.slane %v1617, 1
      %v1622 = vrot.slane %v1617, 2
      %v1623 = vrot.slane %v1617, 3
      %v1624 = vrot.slane %v1618, 1
      %v1625 = vrot.slane %v1618, 2
      %v1626 = vrot.slane %v1618, 3
      %v1629 = vsel %vm288, %v1617, %v1621
      %v1632 = vsel %vm292, %v1622, %v1623
      %v1633 = vsel %vm296, %v1629, %v1632
      %v1634 = vsel %vm354, %v1617, %v1621
      %v1635 = vsel %vm356, %v1622, %v1623
      %v1636 = vsel %vm358, %v1634, %v1635
      %v1638 = vrot.slane %v1636, 1
      %v1641 = vsel %vm288, %v1618, %v1624
      %v1644 = vsel %vm292, %v1625, %v1626
      %v1645 = vsel %vm296, %v1641, %v1644
      %v1646 = vsel %vm354, %v1618, %v1624
      %v1647 = vsel %vm356, %v1625, %v1626
      %v1648 = vsel %vm358, %v1646, %v1647
      %v1650 = vrot.slane %v1648, 1
      %v1651 = vshrl.u32 %v1633, 16
      %v1653 = vrot.slane %v1651, 7
      %v1654 = vrot.slane %v1653, 1
      %v1656 = vshll.u32 %v1638, 16
      %v1658 = vsel %vm388, %v1654, %v1656
      %v1659 = vshrl.u32 %v1645, 16
      %v1661 = vrot.slane %v1659, 7
      %v1662 = vrot.slane %v1661, 1
      %v1664 = vshll.u32 %v1650, 16
      %v1666 = vsel %vm388, %v1662, %v1664
      %s1667 = scalar_lea.vmem %s3, 256
      %v1668 = vld [vmem:[%s1667] sm:$0xf]
      %v1669 = vld [vmem:[%s1667 + $0x4] sm:$0xf]
      %v1670 = vld [vmem:[%s1667 + $0x8] sm:$0xf]
      %v1671 = vld [vmem:[%s1667 + $0xc] sm:$0xf]
      %v1672 = vld [vmem:[%s1667 + $0x10] sm:$0xf]
      %v1673 = vld [vmem:[%s1667 + $0x14] sm:$0xf]
      %v1674 = vld [vmem:[%s1667 + $0x18] sm:$0xf]
      %v1675 = vld [vmem:[%s1667 + $0x1c] sm:$0xf]
      %v1676 = vld [vmem:[%s1667 + $0x20] sm:$0xf]
      %v1677 = vld [vmem:[%s1667 + $0x24] sm:$0xf]
      %v1678 = vld [vmem:[%s1667 + $0x28] sm:$0xf]
      %v1679 = vld [vmem:[%s1667 + $0x2c] sm:$0xf]
      %v1680 = vld [vmem:[%s1667 + $0x30] sm:$0xf]
      %v1681 = vld [vmem:[%s1667 + $0x34] sm:$0xf]
      %v1682 = vld [vmem:[%s1667 + $0x38] sm:$0xf]
      %v1683 = vld [vmem:[%s1667 + $0x3c] sm:$0xf]
      %1685 = vst [vmem:[#allocation1] ss:$9 sm:$0xff] %v1658
      %s1687 = scalar_lea.vmem [#allocation1], 1
      %1688 = vst [vmem:[%s1687] ss:$9 sm:$0xff] %v1666
      %v1689 = vld [vmem:[#allocation1] sm:$0xff]
      %v1707 = vunpack.c.l.b16 %v1668
      %v1708 = vunpack.c.l.b16 %v1669
      %v1709 = vunpack.c.l.b16 %v1670
      %v1710 = vunpack.c.l.b16 %v1671
      %v1711 = vunpack.c.l.b16 %v1672
      %v1712 = vunpack.c.l.b16 %v1673
      %v1713 = vunpack.c.l.b16 %v1674
      %v1714 = vunpack.c.l.b16 %v1675
      %v1715 = vunpack.c.l.b16 %v1676
      %v1716 = vunpack.c.l.b16 %v1677
      %v1717 = vunpack.c.l.b16 %v1678
      %v1718 = vunpack.c.l.b16 %v1679
      %v1719 = vunpack.c.l.b16 %v1680
      %v1720 = vunpack.c.l.b16 %v1681
      %v1721 = vunpack.c.l.b16 %v1682
      %v1722 = vunpack.c.l.b16 %v1683
      %v1723 = vpack.c.b16 %v1708, %v1707
      %v1724 = vpack.c.b16 %v1710, %v1709
      %v1725 = vpack.c.b16 %v1712, %v1711
      %v1726 = vpack.c.b16 %v1714, %v1713
      %v1727 = vpack.c.b16 %v1716, %v1715
      %v1728 = vpack.c.b16 %v1718, %v1717
      %v1729 = vpack.c.b16 %v1720, %v1719
      %v1730 = vpack.c.b16 %v1722, %v1721
      %1739 = vmatpush.bf16.msra.mxu0 %v1730
      %1740 = vmatpush.bf16.msra.mxu0 %v1729
      %1741 = vmatpush.bf16.msra.mxu0 %v1728
      %1742 = vmatpush.bf16.msra.mxu0 %v1727
      %1743 = vmatpush.bf16.msra.mxu0 %v1726
      %1744 = vmatpush.bf16.msra.mxu0 %v1725
      %1745 = vmatpush.bf16.msra.mxu0 %v1724
      %1746 = vmatpush.bf16.msra.mxu0 %v1723
      %1747 = vmatmul.bf16.gmra.mxu0 %v1689
      %v1748 = vpop.f32.mrf.mxu0
      %v1749 = vadd.f32 0.0, %v1748
      %v1750 = vpop.f32.mrf.mxu0
      %1751 = vdwg.mxu0
      %v1752 = vadd.f32 %v1616, %v1749
      %v1753 = vld [vmem:[%s1140] sm:$0x2]
      %v1754 = vld [vmem:[%s1140 + $0x2] sm:$0x2]
      %1756 = vst [vmem:[#allocation1] sm:$0xff] %v1753
      %s1757 = scalar_lea.vmem [#allocation1], 1
      %v1758 = vld [vmem:[%s1757] ss:$2 sm:$0xff]
      %1760 = vst [vmem:[#allocation1 + $0x10] sm:$0xff] %v1754
      %s1761 = scalar_lea.vmem [#allocation1], 17
      %v1762 = vld [vmem:[%s1761] ss:$2 sm:$0xff]
      %s1763 = scalar_lea.vmem %s3, 320
      %v1764 = vld [vmem:[%s1763] sm:$0xf]
      %v1765 = vld [vmem:[%s1763 + $0x4] sm:$0xf]
      %v1766 = vld [vmem:[%s1763 + $0x8] sm:$0xf]
      %v1767 = vld [vmem:[%s1763 + $0xc] sm:$0xf]
      %v1768 = vld [vmem:[%s1763 + $0x10] sm:$0xf]
      %v1769 = vld [vmem:[%s1763 + $0x14] sm:$0xf]
      %v1770 = vld [vmem:[%s1763 + $0x18] sm:$0xf]
      %v1771 = vld [vmem:[%s1763 + $0x1c] sm:$0xf]
      %v1772 = vld [vmem:[%s1763 + $0x20] sm:$0xf]
      %v1773 = vld [vmem:[%s1763 + $0x24] sm:$0xf]
      %v1774 = vld [vmem:[%s1763 + $0x28] sm:$0xf]
      %v1775 = vld [vmem:[%s1763 + $0x2c] sm:$0xf]
      %v1776 = vld [vmem:[%s1763 + $0x30] sm:$0xf]
      %v1777 = vld [vmem:[%s1763 + $0x34] sm:$0xf]
      %v1778 = vld [vmem:[%s1763 + $0x38] sm:$0xf]
      %v1779 = vld [vmem:[%s1763 + $0x3c] sm:$0xf]
      %1780 = vst [vmem:[#allocation1] ss:$9 sm:$0xff] %v1758
      %s1781 = scalar_lea.vmem [#allocation1], 1
      %1782 = vst [vmem:[%s1781] ss:$9 sm:$0xff] %v1762
      %v1783 = vld [vmem:[#allocation1] sm:$0xff]
      %v1801 = vunpack.c.l.b16 %v1764
      %v1802 = vunpack.c.l.b16 %v1765
      %v1803 = vunpack.c.l.b16 %v1766
      %v1804 = vunpack.c.l.b16 %v1767
      %v1805 = vunpack.c.l.b16 %v1768
      %v1806 = vunpack.c.l.b16 %v1769
      %v1807 = vunpack.c.l.b16 %v1770
      %v1808 = vunpack.c.l.b16 %v1771
      %v1809 = vunpack.c.l.b16 %v1772
      %v1810 = vunpack.c.l.b16 %v1773
      %v1811 = vunpack.c.l.b16 %v1774
      %v1812 = vunpack.c.l.b16 %v1775
      %v1813 = vunpack.c.l.b16 %v1776
      %v1814 = vunpack.c.l.b16 %v1777
      %v1815 = vunpack.c.l.b16 %v1778
      %v1816 = vunpack.c.l.b16 %v1779
      %v1817 = vpack.c.b16 %v1802, %v1801
      %v1818 = vpack.c.b16 %v1804, %v1803
      %v1819 = vpack.c.b16 %v1806, %v1805
      %v1820 = vpack.c.b16 %v1808, %v1807
      %v1821 = vpack.c.b16 %v1810, %v1809
      %v1822 = vpack.c.b16 %v1812, %v1811
      %v1823 = vpack.c.b16 %v1814, %v1813
      %v1824 = vpack.c.b16 %v1816, %v1815
      %1833 = vmatpush.bf16.msra.mxu0 %v1824
      %1834 = vmatpush.bf16.msra.mxu0 %v1823
      %1835 = vmatpush.bf16.msra.mxu0 %v1822
      %1836 = vmatpush.bf16.msra.mxu0 %v1821
      %1837 = vmatpush.bf16.msra.mxu0 %v1820
      %1838 = vmatpush.bf16.msra.mxu0 %v1819
      %1839 = vmatpush.bf16.msra.mxu0 %v1818
      %1840 = vmatpush.bf16.msra.mxu0 %v1817
      %1841 = vmatmul.bf16.gmra.mxu0 %v1783
      %v1842 = vpop.f32.mrf.mxu0
      %v1843 = vadd.f32 0.0, %v1842
      %v1844 = vpop.f32.mrf.mxu0
      %1845 = vdwg.mxu0
      %v1846 = vadd.f32 %v1752, %v1843
      %s1847 = scalar_lea.vmem [#allocation2], 4
      %v1848 = vld [vmem:[%s1847] sm:$0x1]
      %v1849 = vld [vmem:[%s1847 + $0x2] sm:$0x1]
      %s1850 = scalar_lea.vmem %s3, 384
      %v1851 = vld [vmem:[%s1850] sm:$0xf]
      %v1852 = vld [vmem:[%s1850 + $0x4] sm:$0xf]
      %v1853 = vld [vmem:[%s1850 + $0x8] sm:$0xf]
      %v1854 = vld [vmem:[%s1850 + $0xc] sm:$0xf]
      %v1855 = vld [vmem:[%s1850 + $0x10] sm:$0xf]
      %v1856 = vld [vmem:[%s1850 + $0x14] sm:$0xf]
      %v1857 = vld [vmem:[%s1850 + $0x18] sm:$0xf]
      %v1858 = vld [vmem:[%s1850 + $0x1c] sm:$0xf]
      %v1859 = vld [vmem:[%s1850 + $0x20] sm:$0xf]
      %v1860 = vld [vmem:[%s1850 + $0x24] sm:$0xf]
      %v1861 = vld [vmem:[%s1850 + $0x28] sm:$0xf]
      %v1862 = vld [vmem:[%s1850 + $0x2c] sm:$0xf]
      %v1863 = vld [vmem:[%s1850 + $0x30] sm:$0xf]
      %v1864 = vld [vmem:[%s1850 + $0x34] sm:$0xf]
      %v1865 = vld [vmem:[%s1850 + $0x38] sm:$0xf]
      %v1866 = vld [vmem:[%s1850 + $0x3c] sm:$0xf]
      %1868 = vst [vmem:[#allocation1] ss:$9 sm:$0xff] %v1848
      %s1870 = scalar_lea.vmem [#allocation1], 1
      %1871 = vst [vmem:[%s1870] ss:$9 sm:$0xff] %v1849
      %v1872 = vld [vmem:[#allocation1] sm:$0xff]
      %v1890 = vunpack.c.l.b16 %v1851
      %v1891 = vunpack.c.l.b16 %v1852
      %v1892 = vunpack.c.l.b16 %v1853
      %v1893 = vunpack.c.l.b16 %v1854
      %v1894 = vunpack.c.l.b16 %v1855
      %v1895 = vunpack.c.l.b16 %v1856
      %v1896 = vunpack.c.l.b16 %v1857
      %v1897 = vunpack.c.l.b16 %v1858
      %v1898 = vunpack.c.l.b16 %v1859
      %v1899 = vunpack.c.l.b16 %v1860
      %v1900 = vunpack.c.l.b16 %v1861
      %v1901 = vunpack.c.l.b16 %v1862
      %v1902 = vunpack.c.l.b16 %v1863
      %v1903 = vunpack.c.l.b16 %v1864
      %v1904 = vunpack.c.l.b16 %v1865
      %v1905 = vunpack.c.l.b16 %v1866
      %v1906 = vpack.c.b16 %v1891, %v1890
      %v1907 = vpack.c.b16 %v1893, %v1892
      %v1908 = vpack.c.b16 %v1895, %v1894
      %v1909 = vpack.c.b16 %v1897, %v1896
      %v1910 = vpack.c.b16 %v1899, %v1898
      %v1911 = vpack.c.b16 %v1901, %v1900
      %v1912 = vpack.c.b16 %v1903, %v1902
      %v1913 = vpack.c.b16 %v1905, %v1904
      %1922 = vmatpush.bf16.msra.mxu0 %v1913
      %1923 = vmatpush.bf16.msra.mxu0 %v1912
      %1924 = vmatpush.bf16.msra.mxu0 %v1911
      %1925 = vmatpush.bf16.msra.mxu0 %v1910
      %1926 = vmatpush.bf16.msra.mxu0 %v1909
      %1927 = vmatpush.bf16.msra.mxu0 %v1908
      %1928 = vmatpush.bf16.msra.mxu0 %v1907
      %1929 = vmatpush.bf16.msra.mxu0 %v1906
      %1930 = vmatmul.bf16.gmra.mxu0 %v1872
      %v1931 = vpop.f32.mrf.mxu0
      %v1932 = vadd.f32 0.0, %v1931
      %v1933 = vpop.f32.mrf.mxu0
      %1934 = vdwg.mxu0
      %v1935 = vadd.f32 %v1846, %v1932
      %v1936 = vld [vmem:[%s1847] sm:$0x3]
      %v1937 = vld [vmem:[%s1847 + $0x2] sm:$0x3]
      %v1940 = vrot.slane %v1936, 1
      %v1941 = vrot.slane %v1936, 2
      %v1942 = vrot.slane %v1936, 3
      %v1943 = vrot.slane %v1937, 1
      %v1944 = vrot.slane %v1937, 2
      %v1945 = vrot.slane %v1937, 3
      %v1948 = vsel %vm288, %v1936, %v1940
      %v1951 = vsel %vm292, %v1941, %v1942
      %v1952 = vsel %vm296, %v1948, %v1951
      %v1953 = vsel %vm354, %v1936, %v1940
      %v1954 = vsel %vm356, %v1941, %v1942
      %v1955 = vsel %vm358, %v1953, %v1954
      %v1957 = vrot.slane %v1955, 1
      %v1960 = vsel %vm288, %v1937, %v1943
      %v1963 = vsel %vm292, %v1944, %v1945
      %v1964 = vsel %vm296, %v1960, %v1963
      %v1965 = vsel %vm354, %v1937, %v1943
      %v1966 = vsel %vm356, %v1944, %v1945
      %v1967 = vsel %vm358, %v1965, %v1966
      %v1969 = vrot.slane %v1967, 1
      %v1970 = vshrl.u32 %v1952, 16
      %v1972 = vrot.slane %v1970, 7
      %v1973 = vrot.slane %v1972, 1
      %v1975 = vshll.u32 %v1957, 16
      %v1977 = vsel %vm388, %v1973, %v1975
      %v1978 = vshrl.u32 %v1964, 16
      %v1980 = vrot.slane %v1978, 7
      %v1981 = vrot.slane %v1980, 1
      %v1983 = vshll.u32 %v1969, 16
      %v1985 = vsel %vm388, %v1981, %v1983
      %s1986 = scalar_lea.vmem %s3, 448
      %v1987 = vld [vmem:[%s1986] sm:$0xf]
      %v1988 = vld [vmem:[%s1986 + $0x4] sm:$0xf]
      %v1989 = vld [vmem:[%s1986 + $0x8] sm:$0xf]
      %v1990 = vld [vmem:[%s1986 + $0xc] sm:$0xf]
      %v1991 = vld [vmem:[%s1986 + $0x10] sm:$0xf]
      %v1992 = vld [vmem:[%s1986 + $0x14] sm:$0xf]
      %v1993 = vld [vmem:[%s1986 + $0x18] sm:$0xf]
      %v1994 = vld [vmem:[%s1986 + $0x1c] sm:$0xf]
      %v1995 = vld [vmem:[%s1986 + $0x20] sm:$0xf]
      %v1996 = vld [vmem:[%s1986 + $0x24] sm:$0xf]
      %v1997 = vld [vmem:[%s1986 + $0x28] sm:$0xf]
      %v1998 = vld [vmem:[%s1986 + $0x2c] sm:$0xf]
      %v1999 = vld [vmem:[%s1986 + $0x30] sm:$0xf]
      %v2000 = vld [vmem:[%s1986 + $0x34] sm:$0xf]
      %v2001 = vld [vmem:[%s1986 + $0x38] sm:$0xf]
      %v2002 = vld [vmem:[%s1986 + $0x3c] sm:$0xf]
      %2004 = vst [vmem:[#allocation1] ss:$9 sm:$0xff] %v1977
      %s2006 = scalar_lea.vmem [#allocation1], 1
      %2007 = vst [vmem:[%s2006] ss:$9 sm:$0xff] %v1985
      %v2008 = vld [vmem:[#allocation1] sm:$0xff]
      %v2026 = vunpack.c.l.b16 %v1987
      %v2027 = vunpack.c.l.b16 %v1988
      %v2028 = vunpack.c.l.b16 %v1989
      %v2029 = vunpack.c.l.b16 %v1990
      %v2030 = vunpack.c.l.b16 %v1991
      %v2031 = vunpack.c.l.b16 %v1992
      %v2032 = vunpack.c.l.b16 %v1993
      %v2033 = vunpack.c.l.b16 %v1994
      %v2034 = vunpack.c.l.b16 %v1995
      %v2035 = vunpack.c.l.b16 %v1996
      %v2036 = vunpack.c.l.b16 %v1997
      %v2037 = vunpack.c.l.b16 %v1998
      %v2038 = vunpack.c.l.b16 %v1999
      %v2039 = vunpack.c.l.b16 %v2000
      %v2040 = vunpack.c.l.b16 %v2001
      %v2041 = vunpack.c.l.b16 %v2002
      %v2042 = vpack.c.b16 %v2027, %v2026
      %v2043 = vpack.c.b16 %v2029, %v2028
      %v2044 = vpack.c.b16 %v2031, %v2030
      %v2045 = vpack.c.b16 %v2033, %v2032
      %v2046 = vpack.c.b16 %v2035, %v2034
      %v2047 = vpack.c.b16 %v2037, %v2036
      %v2048 = vpack.c.b16 %v2039, %v2038
      %v2049 = vpack.c.b16 %v2041, %v2040
      %2058 = vmatpush.bf16.msra.mxu0 %v2049
      %2059 = vmatpush.bf16.msra.mxu0 %v2048
      %2060 = vmatpush.bf16.msra.mxu0 %v2047
      %2061 = vmatpush.bf16.msra.mxu0 %v2046
      %2062 = vmatpush.bf16.msra.mxu0 %v2045
      %2063 = vmatpush.bf16.msra.mxu0 %v2044
      %2064 = vmatpush.bf16.msra.mxu0 %v2043
      %2065 = vmatpush.bf16.msra.mxu0 %v2042
      %2066 = vmatmul.bf16.gmra.mxu0 %v2008
      %v2067 = vpop.f32.mrf.mxu0
      %v2068 = vadd.f32 0.0, %v2067
      %v2069 = vpop.f32.mrf.mxu0
      %2070 = vdwg.mxu0
      %v2071 = vadd.f32 %v1935, %v2068
      %v2072 = vld [vmem:[%s1847] sm:$0x2]
      %v2073 = vld [vmem:[%s1847 + $0x2] sm:$0x2]
      %2075 = vst [vmem:[#allocation1] sm:$0xff] %v2072
      %s2076 = scalar_lea.vmem [#allocation1], 1
      %v2077 = vld [vmem:[%s2076] ss:$2 sm:$0xff]
      %2079 = vst [vmem:[#allocation1 + $0x10] sm:$0xff] %v2073
      %s2080 = scalar_lea.vmem [#allocation1], 17
      %v2081 = vld [vmem:[%s2080] ss:$2 sm:$0xff]
      %s2082 = scalar_lea.vmem %s3, 512
      %v2083 = vld [vmem:[%s2082] sm:$0xf]
      %v2084 = vld [vmem:[%s2082 + $0x4] sm:$0xf]
      %v2085 = vld [vmem:[%s2082 + $0x8] sm:$0xf]
      %v2086 = vld [vmem:[%s2082 + $0xc] sm:$0xf]
      %v2087 = vld [vmem:[%s2082 + $0x10] sm:$0xf]
      %v2088 = vld [vmem:[%s2082 + $0x14] sm:$0xf]
      %v2089 = vld [vmem:[%s2082 + $0x18] sm:$0xf]
      %v2090 = vld [vmem:[%s2082 + $0x1c] sm:$0xf]
      %v2091 = vld [vmem:[%s2082 + $0x20] sm:$0xf]
      %v2092 = vld [vmem:[%s2082 + $0x24] sm:$0xf]
      %v2093 = vld [vmem:[%s2082 + $0x28] sm:$0xf]
      %v2094 = vld [vmem:[%s2082 + $0x2c] sm:$0xf]
      %v2095 = vld [vmem:[%s2082 + $0x30] sm:$0xf]
      %v2096 = vld [vmem:[%s2082 + $0x34] sm:$0xf]
      %v2097 = vld [vmem:[%s2082 + $0x38] sm:$0xf]
      %v2098 = vld [vmem:[%s2082 + $0x3c] sm:$0xf]
      %2099 = vst [vmem:[#allocation1] ss:$9 sm:$0xff] %v2077
      %s2100 = scalar_lea.vmem [#allocation1], 1
      %2101 = vst [vmem:[%s2100] ss:$9 sm:$0xff] %v2081
      %v2102 = vld [vmem:[#allocation1] sm:$0xff]
      %v2120 = vunpack.c.l.b16 %v2083
      %v2121 = vunpack.c.l.b16 %v2084
      %v2122 = vunpack.c.l.b16 %v2085
      %v2123 = vunpack.c.l.b16 %v2086
      %v2124 = vunpack.c.l.b16 %v2087
      %v2125 = vunpack.c.l.b16 %v2088
      %v2126 = vunpack.c.l.b16 %v2089
      %v2127 = vunpack.c.l.b16 %v2090
      %v2128 = vunpack.c.l.b16 %v2091
      %v2129 = vunpack.c.l.b16 %v2092
      %v2130 = vunpack.c.l.b16 %v2093
      %v2131 = vunpack.c.l.b16 %v2094
      %v2132 = vunpack.c.l.b16 %v2095
      %v2133 = vunpack.c.l.b16 %v2096
      %v2134 = vunpack.c.l.b16 %v2097
      %v2135 = vunpack.c.l.b16 %v2098
      %v2136 = vpack.c.b16 %v2121, %v2120
      %v2137 = vpack.c.b16 %v2123, %v2122
      %v2138 = vpack.c.b16 %v2125, %v2124
      %v2139 = vpack.c.b16 %v2127, %v2126
      %v2140 = vpack.c.b16 %v2129, %v2128
      %v2141 = vpack.c.b16 %v2131, %v2130
      %v2142 = vpack.c.b16 %v2133, %v2132
      %v2143 = vpack.c.b16 %v2135, %v2134
      %2152 = vmatpush.bf16.msra.mxu0 %v2143
      %2153 = vmatpush.bf16.msra.mxu0 %v2142
      %2154 = vmatpush.bf16.msra.mxu0 %v2141
      %2155 = vmatpush.bf16.msra.mxu0 %v2140
      %2156 = vmatpush.bf16.msra.mxu0 %v2139
      %2157 = vmatpush.bf16.msra.mxu0 %v2138
      %2158 = vmatpush.bf16.msra.mxu0 %v2137
      %2159 = vmatpush.bf16.msra.mxu0 %v2136
      %2160 = vmatmul.bf16.gmra.mxu0 %v2102
      %v2161 = vpop.f32.mrf.mxu0
      %v2162 = vadd.f32 0.0, %v2161
      %v2163 = vpop.f32.mrf.mxu0
      %2164 = vdwg.mxu0
      %v2165 = vadd.f32 %v2071, %v2162
      %v2166 = vld [vmem:[%s4] sm:$0x1]
      %v2168 = vperm.slane %v2166, 0
      %v2170 = vadd.f32 %v2165, %v2168
      %v2171 = vadd.f32 %v2170, %v1211
      %v2172 = vmax.f32 %v2171, 0.0
      %v2173 = vpack.c.bf16 %v2172, %v2172
      %2174 = vst [vmem:[%s276] sm:$0x3] %v2173
      %p2175 = scmp.lt.s32.totalorder %s18, 1
      %s2176 = scalar_select %p2175, %s18, 1
      %s2177 = smul.addr %s2176, 2
      %s2178 = scalar_lea.vmem %s7, %s2177
      // Predicated region
      $region49: #{backbone_base_forward.10} parent=47 // pred_check
        %p2179 = pneg %p188
      $region50: #{backbone_base_forward.10} parent=47 // pred_check_branch
        %2181 = sbr.rel (%p2179) target = $region52
      $region51: #{backbone_base_forward.10} parent=47 // pred_region
        _
      $region52: #{backbone_base_forward.10} parent=47 // pred_fallthru
        _
    $region48: #{backbone_base_forward.10} parent=5 // pred_fallthru
      _
    %p2182 = scmp.le.s32.totalorder 2, %s13
    // Predicated region
    $region53: #{backbone_base_forward.10} parent=5 // pred_check
      %p2183 = pneg %p2182
    $region54: #{backbone_base_forward.10} parent=5 // pred_check_branch
      %2185 = sbr.rel (%p2183) target = $region56
    $region55: #{backbone_base_forward.10} parent=5 // pred_region
      %s2186 = ssub.s32 %s13, 2
      // Predicated region
      $region57: #{backbone_base_forward.10} parent=55 // pred_check
        %p2187 = pneg %p194
      $region58: #{backbone_base_forward.10} parent=55 // pred_check_branch
        %2189 = sbr.rel (%p2187) target = $region60
      $region59: #{backbone_base_forward.10} parent=55 // pred_region
        %p2190 = scmp.lt.s32.totalorder %s19, 1
        %s2191 = scalar_select %p2190, %s19, 1
        %s2192 = smul.addr %s2191, 2
        %s2193 = scalar_lea.vmem %s7, %s2192
      $region60: #{backbone_base_forward.10} parent=55 // pred_fallthru
        _
    $region56: #{backbone_base_forward.10} parent=5 // pred_fallthru
      _
  $region6: #{backbone_base_forward.10} parent=0 // loop_footer
    %s17 = sadd.s32 1, %s13
  $region7: #{backbone_base_forward.10} parent=0 // loop_footer_branch
    %12 = sbr.rel target = $region3
  $region8: #{backbone_base_forward.10} parent=0 // loop_exit
    _

// kernel: backbone_base_forward.8
$region0: #{backbone_base_forward.8}
  #allocation0 [shape = 'u32[]', space=smem, size = 0x4, offset = 0x4, fixed_abs, tag = 'smem constant byte address 0x4 - core index']
  #allocation1 [shape = 'u32[72,128]{1,0:T(1,128)}', space=vmem, size = 0x9000, scoped, tag = 'internal scratch']
  #allocation2 [shape = 'bf16[6,6,64]{2,1,0:T(8,128)(2,1)}', space=vmem, size = 0x3000, scoped, tag = 'scratch operand']
  %s0 = inlined_call_operand.vmem [shape: bf16[2,6,6,64], index: 0, kind: input, shape index: {}]
  %s1 = inlined_call_operand.vmem [shape: bf16[9,64,64], index: 1, kind: input, shape index: {}]
  %s2 = inlined_call_operand.vmem [shape: f32[1,64], index: 2, kind: input, shape index: {}]
  %s3 = inlined_call_operand.vmem [shape: bf16[9,64,64], index: 3, kind: input, shape index: {}]
  %s4 = inlined_call_operand.vmem [shape: f32[1,64], index: 4, kind: input, shape index: {}]
  %s5 = inlined_call_operand.vmem [shape: bf16[2,16,64], index: 5, kind: output, shape index: {}]
  %s6 = sld [smem:[#allocation0]]
  $region53: #{backbone_base_forward.8} parent=0
    _
  %s8 = ssub.s32 1, %s6
  %s9 = scalar_select 0, %s8, %s6
  loop: start=0, step=1, limit=4
  $region2: #{backbone_base_forward.8} parent=0 // loop_pre_header
    _
  $region3: #{backbone_base_forward.8} parent=0 // loop_header
    %s11 = sphi 0, %s15
    %p12 = scmp.ge.s32.totalorder %s11, 4
    %s21 = sphi 0, %s23
    %s24 = sphi 0, %s21
    %s25 = sphi 0, %s24
    %s41 = sphi 0, %s25
    %s45 = sphi 0, %s45
    %s47 = sphi 0, %s45
    %s48 = sphi 0, %s47
    %s62 = sphi 0, %s48
    %s66 = sphi 0, %s66
    %s68 = sphi 0, %s66
    %s69 = sphi 0, %s68
    %s83 = sphi 0, %s69
    %s87 = sphi 0, %s87
    %s89 = sphi 0, %s87
    %s90 = sphi 0, %s89
    %s104 = sphi 0, %s90
    %s108 = sphi 0, %s108
    %s110 = sphi 0, %s108
    %s111 = sphi 0, %s110
    %s125 = sphi 0, %s111
    %s131 = sphi 0, %s133
    %s134 = sphi 0, %s131
    %s135 = sphi 0, %s134
    %s151 = sphi 0, %s135
  $region4: #{backbone_base_forward.8} parent=0 // loop_header_branch
    %14 = sbr.rel (%p12) target = $region8
  $region5: #{backbone_base_forward.8} parent=0 // loop_body
    %s16 = ssub.s32 %s11, 1
    %s17 = ssub.s32 %s11, 2
    %s18 = sadd.s32 %s11, 1
    %s19 = ssub.s32 %s11, %s18
    %p20 = scmp.eq.s32.totalorder %s19, 0
    %s22 = sadd.s32 %s21, 1
    %s23 = scalar_select %p20, %s21, %s22
    %p26 = pneg %p20
    %p27 = scmp.eq.s32.totalorder %s11, 1
    %p28 = por %p26, %p27
    %p29 = scmp.ne.s32.totalorder %s21, %s24
    %p30 = scmp.eq.s32.totalorder %s11, 0
    %p31 = por %p29, %p30
    %p32 = scmp.ne.s32.totalorder %s21, %s24
    %p33 = scmp.eq.s32.totalorder %s16, 1
    %p34 = por %p32, %p33
    %p35 = scmp.ne.s32.totalorder %s24, %s25
    %p36 = scmp.eq.s32.totalorder %s16, 0
    %p37 = por %p35, %p36
    %p38 = scmp.ne.s32.totalorder %s24, %s25
    %p39 = scmp.eq.s32.totalorder %s17, 1
    %p40 = por %p38, %p39
    %p42 = scmp.ne.s32.totalorder %s25, %s41
    %p43 = scmp.eq.s32.totalorder %s17, 0
    %p44 = por %p42, %p43
    %s46 = sadd.s32 %s45, 1
    %p49 = scmp.eq.s32.totalorder %s11, 1
    %p50 = scmp.ne.s32.totalorder %s45, %s47
    %p51 = scmp.eq.s32.totalorder %s11, 0
    %p52 = por %p50, %p51
    %p53 = scmp.ne.s32.totalorder %s45, %s47
    %p54 = scmp.eq.s32.totalorder %s16, 1
    %p55 = por %p53, %p54
    %p56 = scmp.ne.s32.totalorder %s47, %s48
    %p57 = scmp.eq.s32.totalorder %s16, 0
    %p58 = por %p56, %p57
    %p59 = scmp.ne.s32.totalorder %s47, %s48
    %p60 = scmp.eq.s32.totalorder %s17, 1
    %p61 = por %p59, %p60
    %p63 = scmp.ne.s32.totalorder %s48, %s62
    %p64 = scmp.eq.s32.totalorder %s17, 0
    %p65 = por %p63, %p64
    %s67 = sadd.s32 %s66, 1
    %p70 = scmp.eq.s32.totalorder %s11, 1
    %p71 = scmp.ne.s32.totalorder %s66, %s68
    %p72 = scmp.eq.s32.totalorder %s11, 0
    %p73 = por %p71, %p72
    %p74 = scmp.ne.s32.totalorder %s66, %s68
    %p75 = scmp.eq.s32.totalorder %s16, 1
    %p76 = por %p74, %p75
    %p77 = scmp.ne.s32.totalorder %s68, %s69
    %p78 = scmp.eq.s32.totalorder %s16, 0
    %p79 = por %p77, %p78
    %p80 = scmp.ne.s32.totalorder %s68, %s69
    %p81 = scmp.eq.s32.totalorder %s17, 1
    %p82 = por %p80, %p81
    %p84 = scmp.ne.s32.totalorder %s69, %s83
    %p85 = scmp.eq.s32.totalorder %s17, 0
    %p86 = por %p84, %p85
    %s88 = sadd.s32 %s87, 1
    %p91 = scmp.eq.s32.totalorder %s11, 1
    %p92 = scmp.ne.s32.totalorder %s87, %s89
    %p93 = scmp.eq.s32.totalorder %s11, 0
    %p94 = por %p92, %p93
    %p95 = scmp.ne.s32.totalorder %s87, %s89
    %p96 = scmp.eq.s32.totalorder %s16, 1
    %p97 = por %p95, %p96
    %p98 = scmp.ne.s32.totalorder %s89, %s90
    %p99 = scmp.eq.s32.totalorder %s16, 0
    %p100 = por %p98, %p99
    %p101 = scmp.ne.s32.totalorder %s89, %s90
    %p102 = scmp.eq.s32.totalorder %s17, 1
    %p103 = por %p101, %p102
    %p105 = scmp.ne.s32.totalorder %s90, %s104
    %p106 = scmp.eq.s32.totalorder %s17, 0
    %p107 = por %p105, %p106
    %s109 = sadd.s32 %s108, 1
    %p112 = scmp.eq.s32.totalorder %s11, 1
    %p113 = scmp.ne.s32.totalorder %s108, %s110
    %p114 = scmp.eq.s32.totalorder %s11, 0
    %p115 = por %p113, %p114
    %p116 = scmp.ne.s32.totalorder %s108, %s110
    %p117 = scmp.eq.s32.totalorder %s16, 1
    %p118 = por %p116, %p117
    %p119 = scmp.ne.s32.totalorder %s110, %s111
    %p120 = scmp.eq.s32.totalorder %s16, 0
    %p121 = por %p119, %p120
    %p122 = scmp.ne.s32.totalorder %s110, %s111
    %p123 = scmp.eq.s32.totalorder %s17, 1
    %p124 = por %p122, %p123
    %p126 = scmp.ne.s32.totalorder %s111, %s125
    %p127 = scmp.eq.s32.totalorder %s17, 0
    %p128 = por %p126, %p127
    %s129 = ssub.s32 %s11, %s18
    %p130 = scmp.eq.s32.totalorder %s129, 0
    %s132 = sadd.s32 %s131, 1
    %s133 = scalar_select %p130, %s131, %s132
    %p136 = pneg %p130
    %p137 = scmp.eq.s32.totalorder %s11, 1
    %p138 = por %p136, %p137
    %p139 = scmp.ne.s32.totalorder %s131, %s134
    %p140 = scmp.eq.s32.totalorder %s11, 0
    %p141 = por %p139, %p140
    %p142 = scmp.ne.s32.totalorder %s131, %s134
    %p143 = scmp.eq.s32.totalorder %s16, 1
    %p144 = por %p142, %p143
    %p145 = scmp.ne.s32.totalorder %s134, %s135
    %p146 = scmp.eq.s32.totalorder %s16, 0
    %p147 = por %p145, %p146
    %p148 = scmp.ne.s32.totalorder %s134, %s135
    %p149 = scmp.eq.s32.totalorder %s17, 1
    %p150 = por %p148, %p149
    %p152 = scmp.ne.s32.totalorder %s135, %s151
    %p153 = scmp.eq.s32.totalorder %s17, 0
    %p154 = por %p152, %p153
    %p155 = scmp.le.s32.totalorder 1, %s11
    %p156 = scmp.lt.s32.totalorder %s11, 3
    %p157 = pnand %p155, %p156
    %p158 = pneg %p157
    // Predicated region
    $region9: #{backbone_base_forward.8} parent=5 // pred_check
      _
    $region10: #{backbone_base_forward.8} parent=5 // pred_check_branch
      %160 = sbr.rel (%p157) target = $region12
    $region11: #{backbone_base_forward.8} parent=5 // pred_region
      %s161 = ssub.s32 %s11, 1
      // Predicated region
      $region13: #{backbone_base_forward.8} parent=11 // pred_check
        %p162 = pneg %p58
      $region14: #{backbone_base_forward.8} parent=11 // pred_check_branch
        %164 = sbr.rel (%p162) target = $region16
      $region15: #{backbone_base_forward.8} parent=11 // pred_region
        _
      $region16: #{backbone_base_forward.8} parent=11 // pred_fallthru
        _
      // Predicated region
      $region17: #{backbone_base_forward.8} parent=11 // pred_check
        %p165 = pneg %p79
      $region18: #{backbone_base_forward.8} parent=11 // pred_check_branch
        %167 = sbr.rel (%p165) target = $region20
      $region19: #{backbone_base_forward.8} parent=11 // pred_region
        _
      $region20: #{backbone_base_forward.8} parent=11 // pred_fallthru
        _
      // Predicated region
      $region21: #{backbone_base_forward.8} parent=11 // pred_check
        %p168 = pneg %p100
      $region22: #{backbone_base_forward.8} parent=11 // pred_check_branch
        %170 = sbr.rel (%p168) target = $region24
      $region23: #{backbone_base_forward.8} parent=11 // pred_region
        _
      $region24: #{backbone_base_forward.8} parent=11 // pred_fallthru
        _
      // Predicated region
      $region25: #{backbone_base_forward.8} parent=11 // pred_check
        %p171 = pneg %p121
      $region26: #{backbone_base_forward.8} parent=11 // pred_check_branch
        %173 = sbr.rel (%p171) target = $region28
      $region27: #{backbone_base_forward.8} parent=11 // pred_region
        _
      $region28: #{backbone_base_forward.8} parent=11 // pred_fallthru
        _
    $region12: #{backbone_base_forward.8} parent=5 // pred_fallthru
      _
    %p174 = scmp.lt.s32.totalorder %s11, 2
    // Predicated region
    $region29: #{backbone_base_forward.8} parent=5 // pred_check
      %p175 = pneg %p174
    $region30: #{backbone_base_forward.8} parent=5 // pred_check_branch
      %177 = sbr.rel (%p175) target = $region32
    $region31: #{backbone_base_forward.8} parent=5 // pred_region
      // Predicated region
      $region33: #{backbone_base_forward.8} parent=31 // pred_check
        %p178 = pneg %p31
      $region34: #{backbone_base_forward.8} parent=31 // pred_check_branch
        %180 = sbr.rel (%p178) target = $region36
      $region35: #{backbone_base_forward.8} parent=31 // pred_region
        %p181 = scmp.lt.s32.totalorder %s11, 1
        %s182 = scalar_select %p181, %s11, 1
        %s183 = smul.addr %s182, 6
        %s184 = smul.addr %s183, 4
        %s185 = scalar_lea.vmem %s0, %s184
      $region36: #{backbone_base_forward.8} parent=31 // pred_fallthru
        _
    $region32: #{backbone_base_forward.8} parent=5 // pred_fallthru
      _
    %p186 = scmp.le.s32.totalorder 1, %s11
    %p187 = scmp.lt.s32.totalorder %s11, 3
    %p188 = pnand %p186, %p187
    %p189 = pneg %p188
    // Predicated region
    $region37: #{backbone_base_forward.8} parent=5 // pred_check
      _
    $region38: #{backbone_base_forward.8} parent=5 // pred_check_branch
      %191 = sbr.rel (%p188) target = $region40
    $region39: #{backbone_base_forward.8} parent=5 // pred_region
      %s192 = ssub.s32 %s11, 1
      %p193 = scmp.lt.s32.totalorder %s16, 1
      %s194 = scalar_select %p193, %s16, 1
      %s195 = smul.addr %s194, 6
      %s196 = smul.addr %s195, 4
      %s197 = scalar_lea.vmem %s0, %s196
      %p198 = pneg %p37
      %p199 = pneg %p34
      %p200 = pneg %p58
      %p201 = pneg %p55
      %p202 = pneg %p79
      %p203 = pneg %p76
      %p204 = pneg %p100
      %p205 = pneg %p97
      %p206 = pneg %p121
      %p207 = pneg %p118
      %p208 = pneg %p147
      %p209 = pneg %p144
      %p210 = scmp.lt.s32.totalorder %s16, 1
      %s211 = scalar_select %p210, %s16, 1
      %s212 = smul.addr %s211, 2
      %s213 = smul.addr %s212, 4
      %s214 = scalar_lea.vmem %s5, %s213
      %p215 = scmp.lt.s32.totalorder %s16, 1
      %s216 = scalar_select %p215, %s16, 1
      %s217 = smul.addr %s216, 6
      %s218 = smul.addr %s217, 4
      %s219 = scalar_lea.vmem %s0, %s218
      %p220 = scmp.lt.s32.totalorder %s16, 1
      %s221 = scalar_select %p220, %s16, 1
      %s222 = smul.addr %s221, 2
      %s223 = smul.addr %s222, 4
      %s224 = scalar_lea.vmem %s5, %s223
      %v226 = vld [vmem:[%s219] sm:$0x3]
      %v227 = vld [vmem:[%s219 + $0x4] sm:$0x3]
      %v228 = vld [vmem:[%s219 + $0x8] sm:$0x3]
      %v229 = vld [vmem:[%s219 + $0xc] sm:$0x3]
      %v230 = vld [vmem:[%s1] sm:$0xf]
      %v231 = vld [vmem:[%s1 + $0x4] sm:$0xf]
      %v232 = vld [vmem:[%s1 + $0x8] sm:$0xf]
      %v233 = vld [vmem:[%s1 + $0xc] sm:$0xf]
      %v234 = vld [vmem:[%s1 + $0x10] sm:$0xf]
      %v235 = vld [vmem:[%s1 + $0x14] sm:$0xf]
      %v236 = vld [vmem:[%s1 + $0x18] sm:$0xf]
      %v237 = vld [vmem:[%s1 + $0x1c] sm:$0xf]
      %v238 = vld [vmem:[%s219] sm:$0x7]
      %v239 = vld [vmem:[%s219 + $0x4] sm:$0x7]
      %v240 = vld [vmem:[%s219 + $0x8] sm:$0x7]
      %v241 = vld [vmem:[%s219 + $0xc] sm:$0x7]
      %v246 = vrot.slane %v238, 2
      %v247 = vrot.slane %v239, 2
      %v248 = vrot.slane %v240, 2
      %v249 = vrot.slane %v241, 2
      %vm250 = vcmask 1041408
      %v253 = vsel %vm250, %v238, %v246
      %vm254 = vcmask 1043458
      %v255 = vsel %vm254, %v238, %v246
      %v257 = vrot.slane %v255, 2
      %v260 = vsel %vm250, %v239, %v247
      %v261 = vsel %vm254, %v239, %v247
      %v263 = vrot.slane %v261, 2
      %v266 = vsel %vm250, %v240, %v248
      %v267 = vsel %vm254, %v240, %v248
      %v269 = vrot.slane %v267, 2
      %v272 = vsel %vm250, %v241, %v249
      %v273 = vsel %vm254, %v241, %v249
      %v275 = vrot.slane %v273, 2
      %vm276 = vsmask.f32 1280
      %vm277 = vsmask.f32 3336
      %vm278 = vmor %vm276, %vm277
      %vm279 = vsmask.f32 5392
      %vm280 = vmor %vm278, %vm279
      %vm281 = vsmask.f32 7448
      %vm282 = vmor %vm280, %vm281
      %v283 = vshrl.u32 %v253, 16
      %v285 = vrot.slane %v283, 6
      %v286 = vshll.u32 %v253, 16
      %v288 = vrot.slane %v286, 7
      %v289 = vor.u32 %v285, %v288
      %v290 = vrot.slane %v289, 2
      %v292 = vshll.u32 %v257, 16
      %v294 = vrot.slane %v292, 7
      %v295 = vsel %vm282, %v290, %v294
      %v296 = vshrl.u32 %v260, 16
      %v298 = vrot.slane %v296, 6
      %v299 = vshll.u32 %v260, 16
      %v301 = vrot.slane %v299, 7
      %v302 = vor.u32 %v298, %v301
      %v303 = vrot.slane %v302, 2
      %v305 = vshll.u32 %v263, 16
      %v307 = vrot.slane %v305, 7
      %v308 = vsel %vm282, %v303, %v307
      %v309 = vshrl.u32 %v266, 16
      %v311 = vrot.slane %v309, 6
      %v312 = vshll.u32 %v266, 16
      %v314 = vrot.slane %v312, 7
      %v315 = vor.u32 %v311, %v314
      %v316 = vrot.slane %v315, 2
      %v318 = vshll.u32 %v269, 16
      %v320 = vrot.slane %v318, 7
      %v321 = vsel %vm282, %v316, %v320
      %v322 = vshrl.u32 %v272, 16
      %v324 = vrot.slane %v322, 6
      %v325 = vshll.u32 %v272, 16
      %v327 = vrot.slane %v325, 7
      %v328 = vor.u32 %v324, %v327
      %v329 = vrot.slane %v328, 2
      %v331 = vshll.u32 %v275, 16
      %v333 = vrot.slane %v331, 7
      %v334 = vsel %vm282, %v329, %v333
      %s335 = scalar_lea.vmem %s1, 32
      %v336 = vld [vmem:[%s335] sm:$0xf]
      %v337 = vld [vmem:[%s335 + $0x4] sm:$0xf]
      %v338 = vld [vmem:[%s335 + $0x8] sm:$0xf]
      %v339 = vld [vmem:[%s335 + $0xc] sm:$0xf]
      %v340 = vld [vmem:[%s335 + $0x10] sm:$0xf]
      %v341 = vld [vmem:[%s335 + $0x14] sm:$0xf]
      %v342 = vld [vmem:[%s335 + $0x18] sm:$0xf]
      %v343 = vld [vmem:[%s335 + $0x1c] sm:$0xf]
      %345 = vst [vmem:[#allocation1] ss:$4 sm:$0xff] %v295
      %s347 = scalar_lea.vmem [#allocation1], 1
      %348 = vst [vmem:[%s347] ss:$4 sm:$0xff] %v308
      %s350 = scalar_lea.vmem [#allocation1], 2
      %351 = vst [vmem:[%s350] ss:$4 sm:$0xff] %v321
      %s353 = scalar_lea.vmem [#allocation1], 3
      %354 = vst [vmem:[%s353] ss:$4 sm:$0xff] %v334
      %v355 = vld.sshfl [vmem:[#allocation1] sm:$0xff pattern:$0x73625140]
      %v364 = vunpack.c.l.b16 %v336
      %v365 = vunpack.c.l.b16 %v337
      %v366 = vunpack.c.l.b16 %v338
      %v367 = vunpack.c.l.b16 %v339
      %v368 = vunpack.c.l.b16 %v340
      %v369 = vunpack.c.l.b16 %v341
      %v370 = vunpack.c.l.b16 %v342
      %v371 = vunpack.c.l.b16 %v343
      %v372 = vpack.c.b16 %v365, %v364
      %v373 = vpack.c.b16 %v367, %v366
      %v374 = vpack.c.b16 %v369, %v368
      %v375 = vpack.c.b16 %v371, %v370
      %vm380 = vcmask 523264
      %v381 = vsel %vm380, %v355, 0
      %383 = vmatpush.bf16.msra.mxu0 0
      %384 = vmatpush.bf16.msra.mxu0 0
      %385 = vmatpush.bf16.msra.mxu0 0
      %386 = vmatpush.bf16.msra.mxu0 0
      %387 = vmatpush.bf16.msra.mxu0 %v375
      %388 = vmatpush.bf16.msra.mxu0 %v374
      %389 = vmatpush.bf16.msra.mxu0 %v373
      %390 = vmatpush.bf16.msra.mxu0 %v372
      %391 = vmatmul.bf16.gmra.mxu0 %v381
      %v392 = vpop.f32.mrf.mxu0
      %v393 = vadd.f32 0.0, %v392
      %v394 = vpop.f32.mrf.mxu0
      %v395 = vadd.f32 0.0, %v394
      %396 = vdwg.mxu0
      %398 = vst [vmem:[#allocation1] ss:$4 sm:$0xff] %v226
      %s400 = scalar_lea.vmem [#allocation1], 1
      %401 = vst [vmem:[%s400] ss:$4 sm:$0xff] %v227
      %s403 = scalar_lea.vmem [#allocation1], 2
      %404 = vst [vmem:[%s403] ss:$4 sm:$0xff] %v228
      %s406 = scalar_lea.vmem [#allocation1], 3
      %407 = vst [vmem:[%s406] ss:$4 sm:$0xff] %v229
      %v408 = vld.sshfl [vmem:[#allocation1] sm:$0xff pattern:$0x73625140]
      %v417 = vunpack.c.l.b16 %v230
      %v418 = vunpack.c.l.b16 %v231
      %v419 = vunpack.c.l.b16 %v232
      %v420 = vunpack.c.l.b16 %v233
      %v421 = vunpack.c.l.b16 %v234
      %v422 = vunpack.c.l.b16 %v235
      %v423 = vunpack.c.l.b16 %v236
      %v424 = vunpack.c.l.b16 %v237
      %v425 = vpack.c.b16 %v418, %v417
      %v426 = vpack.c.b16 %v420, %v419
      %v427 = vpack.c.b16 %v422, %v421
      %v428 = vpack.c.b16 %v424, %v423
      %v433 = vsel %vm380, %v408, 0
      %435 = vmatpush.bf16.msra.mxu0 0
      %436 = vmatpush.bf16.msra.mxu0 0
      %437 = vmatpush.bf16.msra.mxu0 0
      %438 = vmatpush.bf16.msra.mxu0 0
      %439 = vmatpush.bf16.msra.mxu0 %v428
      %440 = vmatpush.bf16.msra.mxu0 %v427
      %441 = vmatpush.bf16.msra.mxu0 %v426
      %442 = vmatpush.bf16.msra.mxu0 %v425
      %443 = vmatmul.bf16.gmra.mxu0 %v433
      %v444 = vpop.f32.mrf.mxu0
      %v445 = vadd.f32 %v393, %v444
      %v446 = vpop.f32.mrf.mxu0
      %v447 = vadd.f32 %v395, %v446
      %448 = vdwg.mxu0
      %v449 = vld [vmem:[%s219] sm:$0x6]
      %v450 = vld [vmem:[%s219 + $0x4] sm:$0x6]
      %v451 = vld [vmem:[%s219 + $0x8] sm:$0x6]
      %v452 = vld [vmem:[%s219 + $0xc] sm:$0x6]
      %v457 = vrot.slane %v449, 2
      %v458 = vrot.slane %v450, 2
      %v459 = vrot.slane %v451, 2
      %v460 = vrot.slane %v452, 2
      %v463 = vsel %vm250, %v449, %v457
      %v465 = vsel %vm254, %v449, %v457
      %v467 = vrot.slane %v465, 2
      %v470 = vsel %vm250, %v450, %v458
      %v472 = vsel %vm254, %v450, %v458
      %v474 = vrot.slane %v472, 2
      %v477 = vsel %vm250, %v451, %v459
      %v479 = vsel %vm254, %v451, %v459
      %v481 = vrot.slane %v479, 2
      %v484 = vsel %vm250, %v452, %v460
      %v486 = vsel %vm254, %v452, %v460
      %v488 = vrot.slane %v486, 2
      %vm489 = vcmask 1040384
      %vm490 = vcmask 1042434
      %vm491 = vmor %vm489, %vm490
      %vm492 = vcmask 1044484
      %vm493 = vmor %vm491, %vm492
      %vm494 = vcmask 1046534
      %vm495 = vmor %vm493, %vm494
      %v496 = vrot.slane %v463, 7
      %v497 = vrot.slane %v496, 2
      %v498 = vrot.slane %v467, 7
      %v499 = vsel %vm495, %v497, %v498
      %v500 = vrot.slane %v470, 7
      %v501 = vrot.slane %v500, 2
      %v502 = vrot.slane %v474, 7
      %v503 = vsel %vm495, %v501, %v502
      %v504 = vrot.slane %v477, 7
      %v505 = vrot.slane %v504, 2
      %v506 = vrot.slane %v481, 7
      %v507 = vsel %vm495, %v505, %v506
      %v508 = vrot.slane %v484, 7
      %v509 = vrot.slane %v508, 2
      %v510 = vrot.slane %v488, 7
      %v511 = vsel %vm495, %v509, %v510
      %s512 = scalar_lea.vmem %s1, 64
      %v513 = vld [vmem:[%s512] sm:$0xf]
      %v514 = vld [vmem:[%s512 + $0x4] sm:$0xf]
      %v515 = vld [vmem:[%s512 + $0x8] sm:$0xf]
      %v516 = vld [vmem:[%s512 + $0xc] sm:$0xf]
      %v517 = vld [vmem:[%s512 + $0x10] sm:$0xf]
      %v518 = vld [vmem:[%s512 + $0x14] sm:$0xf]
      %v519 = vld [vmem:[%s512 + $0x18] sm:$0xf]
      %v520 = vld [vmem:[%s512 + $0x1c] sm:$0xf]
      %522 = vst [vmem:[#allocation1] ss:$4 sm:$0xff] %v499
      %s524 = scalar_lea.vmem [#allocation1], 1
      %525 = vst [vmem:[%s524] ss:$4 sm:$0xff] %v503
      %s527 = scalar_lea.vmem [#allocation1], 2
      %528 = vst [vmem:[%s527] ss:$4 sm:$0xff] %v507
      %s530 = scalar_lea.vmem [#allocation1], 3
      %531 = vst [vmem:[%s530] ss:$4 sm:$0xff] %v511
      %v532 = vld.sshfl [vmem:[#allocation1] sm:$0xff pattern:$0x73625140]
      %v541 = vunpack.c.l.b16 %v513
      %v542 = vunpack.c.l.b16 %v514
      %v543 = vunpack.c.l.b16 %v515
      %v544 = vunpack.c.l.b16 %v516
      %v545 = vunpack.c.l.b16 %v517
      %v546 = vunpack.c.l.b16 %v518
      %v547 = vunpack.c.l.b16 %v519
      %v548 = vunpack.c.l.b16 %v520
      %v549 = vpack.c.b16 %v542, %v541
      %v550 = vpack.c.b16 %v544, %v543
      %v551 = vpack.c.b16 %v546, %v545
      %v552 = vpack.c.b16 %v548, %v547
      %v557 = vsel %vm380, %v532, 0
      %559 = vmatpush.bf16.msra.mxu0 0
      %560 = vmatpush.bf16.msra.mxu0 0
      %561 = vmatpush.bf16.msra.mxu0 0
      %562 = vmatpush.bf16.msra.mxu0 0
      %563 = vmatpush.bf16.msra.mxu0 %v552
      %564 = vmatpush.bf16.msra.mxu0 %v551
      %565 = vmatpush.bf16.msra.mxu0 %v550
      %566 = vmatpush.bf16.msra.mxu0 %v549
      %567 = vmatmul.bf16.gmra.mxu0 %v557
      %v568 = vpop.f32.mrf.mxu0
      %v569 = vadd.f32 0.0, %v568
      %v570 = vpop.f32.mrf.mxu0
      %v571 = vadd.f32 0.0, %v570
      %572 = vdwg.mxu0
      %v573 = vadd.f32 %v445, %v569
      %v574 = vadd.f32 %v447, %v571
      %s575 = scalar_lea.vmem %s219, 4
      %v576 = vld [vmem:[%s575] sm:$0x3]
      %v577 = vld [vmem:[%s575 + $0x4] sm:$0x3]
      %v578 = vld [vmem:[%s575 + $0x8] sm:$0x3]
      %v579 = vld [vmem:[%s575 + $0xc] sm:$0x3]
      %s580 = scalar_lea.vmem %s1, 96
      %v581 = vld [vmem:[%s580] sm:$0xf]
      %v582 = vld [vmem:[%s580 + $0x4] sm:$0xf]
      %v583 = vld [vmem:[%s580 + $0x8] sm:$0xf]
      %v584 = vld [vmem:[%s580 + $0xc] sm:$0xf]
      %v585 = vld [vmem:[%s580 + $0x10] sm:$0xf]
      %v586 = vld [vmem:[%s580 + $0x14] sm:$0xf]
      %v587 = vld [vmem:[%s580 + $0x18] sm:$0xf]
      %v588 = vld [vmem:[%s580 + $0x1c] sm:$0xf]
      %590 = vst [vmem:[#allocation1] ss:$4 sm:$0xff] %v576
      %s592 = scalar_lea.vmem [#allocation1], 1
      %593 = vst [vmem:[%s592] ss:$4 sm:$0xff] %v577
      %s595 = scalar_lea.vmem [#allocation1], 2
      %596 = vst [vmem:[%s595] ss:$4 sm:$0xff] %v578
      %s598 = scalar_lea.vmem [#allocation1], 3
      %599 = vst [vmem:[%s598] ss:$4 sm:$0xff] %v579
      %v600 = vld.sshfl [vmem:[#allocation1] sm:$0xff pattern:$0x73625140]
      %v609 = vunpack.c.l.b16 %v581
      %v610 = vunpack.c.l.b16 %v582
      %v611 = vunpack.c.l.b16 %v583
      %v612 = vunpack.c.l.b16 %v584
      %v613 = vunpack.c.l.b16 %v585
      %v614 = vunpack.c.l.b16 %v586
      %v615 = vunpack.c.l.b16 %v587
      %v616 = vunpack.c.l.b16 %v588
      %v617 = vpack.c.b16 %v610, %v609
      %v618 = vpack.c.b16 %v612, %v611
      %v619 = vpack.c.b16 %v614, %v613
      %v620 = vpack.c.b16 %v616, %v615
      %v625 = vsel %vm380, %v600, 0
      %627 = vmatpush.bf16.msra.mxu0 0
      %628 = vmatpush.bf16.msra.mxu0 0
      %629 = vmatpush.bf16.msra.mxu0 0
      %630 = vmatpush.bf16.msra.mxu0 0
      %631 = vmatpush.bf16.msra.mxu0 %v620
      %632 = vmatpush.bf16.msra.mxu0 %v619
      %633 = vmatpush.bf16.msra.mxu0 %v618
      %634 = vmatpush.bf16.msra.mxu0 %v617
      %635 = vmatmul.bf16.gmra.mxu0 %v625
      %v636 = vpop.f32.mrf.mxu0
      %v637 = vadd.f32 0.0, %v636
      %v638 = vpop.f32.mrf.mxu0
      %v639 = vadd.f32 0.0, %v638
      %640 = vdwg.mxu0
      %v641 = vadd.f32 %v573, %v637
      %v642 = vadd.f32 %v574, %v639
      %v643 = vld [vmem:[%s575] sm:$0x7]
      %v644 = vld [vmem:[%s575 + $0x4] sm:$0x7]
      %v645 = vld [vmem:[%s575 + $0x8] sm:$0x7]
      %v646 = vld [vmem:[%s575 + $0xc] sm:$0x7]
      %v651 = vrot.slane %v643, 2
      %v652 = vrot.slane %v644, 2
      %v653 = vrot.slane %v645, 2
      %v654 = vrot.slane %v646, 2
      %v657 = vsel %vm250, %v643, %v651
      %v658 = vsel %vm254, %v643, %v651
      %v660 = vrot.slane %v658, 2
      %v663 = vsel %vm250, %v644, %v652
      %v664 = vsel %vm254, %v644, %v652
      %v666 = vrot.slane %v664, 2
      %v669 = vsel %vm250, %v645, %v653
      %v670 = vsel %vm254, %v645, %v653
      %v672 = vrot.slane %v670, 2
      %v675 = vsel %vm250, %v646, %v654
      %v676 = vsel %vm254, %v646, %v654
      %v678 = vrot.slane %v676, 2
      %v679 = vshrl.u32 %v657, 16
      %v681 = vrot.slane %v679, 6
      %v682 = vshll.u32 %v657, 16
      %v684 = vrot.slane %v682, 7
      %v685 = vor.u32 %v681, %v684
      %v686 = vrot.slane %v685, 2
      %v688 = vshll.u32 %v660, 16
      %v690 = vrot.slane %v688, 7
      %v691 = vsel %vm282, %v686, %v690
      %v692 = vshrl.u32 %v663, 16
      %v694 = vrot.slane %v692, 6
      %v695 = vshll.u32 %v663, 16
      %v697 = vrot.slane %v695, 7
      %v698 = vor.u32 %v694, %v697
      %v699 = vrot.slane %v698, 2
      %v701 = vshll.u32 %v666, 16
      %v703 = vrot.slane %v701, 7
      %v704 = vsel %vm282, %v699, %v703
      %v705 = vshrl.u32 %v669, 16
      %v707 = vrot.slane %v705, 6
      %v708 = vshll.u32 %v669, 16
      %v710 = vrot.slane %v708, 7
      %v711 = vor.u32 %v707, %v710
      %v712 = vrot.slane %v711, 2
      %v714 = vshll.u32 %v672, 16
      %v716 = vrot.slane %v714, 7
      %v717 = vsel %vm282, %v712, %v716
      %v718 = vshrl.u32 %v675, 16
      %v720 = vrot.slane %v718, 6
      %v721 = vshll.u32 %v675, 16
      %v723 = vrot.slane %v721, 7
      %v724 = vor.u32 %v720, %v723
      %v725 = vrot.slane %v724, 2
      %v727 = vshll.u32 %v678, 16
      %v729 = vrot.slane %v727, 7
      %v730 = vsel %vm282, %v725, %v729
      %s731 = scalar_lea.vmem %s1, 128
      %v732 = vld [vmem:[%s731] sm:$0xf]
      %v733 = vld [vmem:[%s731 + $0x4] sm:$0xf]
      %v734 = vld [vmem:[%s731 + $0x8] sm:$0xf]
      %v735 = vld [vmem:[%s731 + $0xc] sm:$0xf]
      %v736 = vld [vmem:[%s731 + $0x10] sm:$0xf]
      %v737 = vld [vmem:[%s731 + $0x14] sm:$0xf]
      %v738 = vld [vmem:[%s731 + $0x18] sm:$0xf]
      %v739 = vld [vmem:[%s731 + $0x1c] sm:$0xf]
      %741 = vst [vmem:[#allocation1] ss:$4 sm:$0xff] %v691
      %s743 = scalar_lea.vmem [#allocation1], 1
      %744 = vst [vmem:[%s743] ss:$4 sm:$0xff] %v704
      %s746 = scalar_lea.vmem [#allocation1], 2
      %747 = vst [vmem:[%s746] ss:$4 sm:$0xff] %v717
      %s749 = scalar_lea.vmem [#allocation1], 3
      %750 = vst [vmem:[%s749] ss:$4 sm:$0xff] %v730
      %v751 = vld.sshfl [vmem:[#allocation1] sm:$0xff pattern:$0x73625140]
      %v760 = vunpack.c.l.b16 %v732
      %v761 = vunpack.c.l.b16 %v733
      %v762 = vunpack.c.l.b16 %v734
      %v763 = vunpack.c.l.b16 %v735
      %v764 = vunpack.c.l.b16 %v736
      %v765 = vunpack.c.l.b16 %v737
      %v766 = vunpack.c.l.b16 %v738
      %v767 = vunpack.c.l.b16 %v739
      %v768 = vpack.c.b16 %v761, %v760
      %v769 = vpack.c.b16 %v763, %v762
      %v770 = vpack.c.b16 %v765, %v764
      %v771 = vpack.c.b16 %v767, %v766
      %v776 = vsel %vm380, %v751, 0
      %778 = vmatpush.bf16.msra.mxu0 0
      %779 = vmatpush.bf16.msra.mxu0 0
      %780 = vmatpush.bf16.msra.mxu0 0
      %781 = vmatpush.bf16.msra.mxu0 0
      %782 = vmatpush.bf16.msra.mxu0 %v771
      %783 = vmatpush.bf16.msra.mxu0 %v770
      %784 = vmatpush.bf16.msra.mxu0 %v769
      %785 = vmatpush.bf16.msra.mxu0 %v768
      %786 = vmatmul.bf16.gmra.mxu0 %v776
      %v787 = vpop.f32.mrf.mxu0
      %v788 = vadd.f32 0.0, %v787
      %v789 = vpop.f32.mrf.mxu0
      %v790 = vadd.f32 0.0, %v789
      %791 = vdwg.mxu0
      %v792 = vadd.f32 %v641, %v788
      %v793 = vadd.f32 %v642, %v790
      %v794 = vld [vmem:[%s575] sm:$0x6]
      %v795 = vld [vmem:[%s575 + $0x4] sm:$0x6]
      %v796 = vld [vmem:[%s575 + $0x8] sm:$0x6]
      %v797 = vld [vmem:[%s575 + $0xc] sm:$0x6]
      %v802 = vrot.slane %v794, 2
      %v803 = vrot.slane %v795, 2
      %v804 = vrot.slane %v796, 2
      %v805 = vrot.slane %v797, 2
      %v808 = vsel %vm250, %v794, %v802
      %v810 = vsel %vm254, %v794, %v802
      %v812 = vrot.slane %v810, 2
      %v815 = vsel %vm250, %v795, %v803
      %v817 = vsel %vm254, %v795, %v803
      %v819 = vrot.slane %v817, 2
      %v822 = vsel %vm250, %v796, %v804
      %v824 = vsel %vm254, %v796, %v804
      %v826 = vrot.slane %v824, 2
      %v829 = vsel %vm250, %v797, %v805
      %v831 = vsel %vm254, %v797, %v805
      %v833 = vrot.slane %v831, 2
      %v834 = vrot.slane %v808, 7
      %v835 = vrot.slane %v834, 2
      %v836 = vrot.slane %v812, 7
      %v837 = vsel %vm495, %v835, %v836
      %v838 = vrot.slane %v815, 7
      %v839 = vrot.slane %v838, 2
      %v840 = vrot.slane %v819, 7
      %v841 = vsel %vm495, %v839, %v840
      %v842 = vrot.slane %v822, 7
      %v843 = vrot.slane %v842, 2
      %v844 = vrot.slane %v826, 7
      %v845 = vsel %vm495, %v843, %v844
      %v846 = vrot.slane %v829, 7
      %v847 = vrot.slane %v846, 2
      %v848 = vrot.slane %v833, 7
      %v849 = vsel %vm495, %v847, %v848
      %s850 = scalar_lea.vmem %s1, 160
      %v851 = vld [vmem:[%s850] sm:$0xf]
      %v852 = vld [vmem:[%s850 + $0x4] sm:$0xf]
      %v853 = vld [vmem:[%s850 + $0x8] sm:$0xf]
      %v854 = vld [vmem:[%s850 + $0xc] sm:$0xf]
      %v855 = vld [vmem:[%s850 + $0x10] sm:$0xf]
      %v856 = vld [vmem:[%s850 + $0x14] sm:$0xf]
      %v857 = vld [vmem:[%s850 + $0x18] sm:$0xf]
      %v858 = vld [vmem:[%s850 + $0x1c] sm:$0xf]
      %860 = vst [vmem:[#allocation1] ss:$4 sm:$0xff] %v837
      %s862 = scalar_lea.vmem [#allocation1], 1
      %863 = vst [vmem:[%s862] ss:$4 sm:$0xff] %v841
      %s865 = scalar_lea.vmem [#allocation1], 2
      %866 = vst [vmem:[%s865] ss:$4 sm:$0xff] %v845
      %s868 = scalar_lea.vmem [#allocation1], 3
      %869 = vst [vmem:[%s868] ss:$4 sm:$0xff] %v849
      %v870 = vld.sshfl [vmem:[#allocation1] sm:$0xff pattern:$0x73625140]
      %v879 = vunpack.c.l.b16 %v851
      %v880 = vunpack.c.l.b16 %v852
      %v881 = vunpack.c.l.b16 %v853
      %v882 = vunpack.c.l.b16 %v854
      %v883 = vunpack.c.l.b16 %v855
      %v884 = vunpack.c.l.b16 %v856
      %v885 = vunpack.c.l.b16 %v857
      %v886 = vunpack.c.l.b16 %v858
      %v887 = vpack.c.b16 %v880, %v879
      %v888 = vpack.c.b16 %v882, %v881
      %v889 = vpack.c.b16 %v884, %v883
      %v890 = vpack.c.b16 %v886, %v885
      %v895 = vsel %vm380, %v870, 0
      %897 = vmatpush.bf16.msra.mxu0 0
      %898 = vmatpush.bf16.msra.mxu0 0
      %899 = vmatpush.bf16.msra.mxu0 0
      %900 = vmatpush.bf16.msra.mxu0 0
      %901 = vmatpush.bf16.msra.mxu0 %v890
      %902 = vmatpush.bf16.msra.mxu0 %v889
      %903 = vmatpush.bf16.msra.mxu0 %v888
      %904 = vmatpush.bf16.msra.mxu0 %v887
      %905 = vmatmul.bf16.gmra.mxu0 %v895
      %v906 = vpop.f32.mrf.mxu0
      %v907 = vadd.f32 0.0, %v906
      %v908 = vpop.f32.mrf.mxu0
      %v909 = vadd.f32 0.0, %v908
      %910 = vdwg.mxu0
      %v911 = vadd.f32 %v792, %v907
      %v912 = vadd.f32 %v793, %v909
      %s913 = scalar_lea.vmem %s219, 8
      %v914 = vld [vmem:[%s913] sm:$0x3]
      %v915 = vld [vmem:[%s913 + $0x4] sm:$0x3]
      %v916 = vld [vmem:[%s913 + $0x8] sm:$0x3]
      %v917 = vld [vmem:[%s913 + $0xc] sm:$0x3]
      %s918 = scalar_lea.vmem %s1, 192
      %v919 = vld [vmem:[%s918] sm:$0xf]
      %v920 = vld [vmem:[%s918 + $0x4] sm:$0xf]
      %v921 = vld [vmem:[%s918 + $0x8] sm:$0xf]
      %v922 = vld [vmem:[%s918 + $0xc] sm:$0xf]
      %v923 = vld [vmem:[%s918 + $0x10] sm:$0xf]
      %v924 = vld [vmem:[%s918 + $0x14] sm:$0xf]
      %v925 = vld [vmem:[%s918 + $0x18] sm:$0xf]
      %v926 = vld [vmem:[%s918 + $0x1c] sm:$0xf]
      %928 = vst [vmem:[#allocation1] ss:$4 sm:$0xff] %v914
      %s930 = scalar_lea.vmem [#allocation1], 1
      %931 = vst [vmem:[%s930] ss:$4 sm:$0xff] %v915
      %s933 = scalar_lea.vmem [#allocation1], 2
      %934 = vst [vmem:[%s933] ss:$4 sm:$0xff] %v916
      %s936 = scalar_lea.vmem [#allocation1], 3
      %937 = vst [vmem:[%s936] ss:$4 sm:$0xff] %v917
      %v938 = vld.sshfl [vmem:[#allocation1] sm:$0xff pattern:$0x73625140]
      %v947 = vunpack.c.l.b16 %v919
      %v948 = vunpack.c.l.b16 %v920
      %v949 = vunpack.c.l.b16 %v921
      %v950 = vunpack.c.l.b16 %v922
      %v951 = vunpack.c.l.b16 %v923
      %v952 = vunpack.c.l.b16 %v924
      %v953 = vunpack.c.l.b16 %v925
      %v954 = vunpack.c.l.b16 %v926
      %v955 = vpack.c.b16 %v948, %v947
      %v956 = vpack.c.b16 %v950, %v949
      %v957 = vpack.c.b16 %v952, %v951
      %v958 = vpack.c.b16 %v954, %v953
      %v963 = vsel %vm380, %v938, 0
      %965 = vmatpush.bf16.msra.mxu0 0
      %966 = vmatpush.bf16.msra.mxu0 0
      %967 = vmatpush.bf16.msra.mxu0 0
      %968 = vmatpush.bf16.msra.mxu0 0
      %969 = vmatpush.bf16.msra.mxu0 %v958
      %970 = vmatpush.bf16.msra.mxu0 %v957
      %971 = vmatpush.bf16.msra.mxu0 %v956
      %972 = vmatpush.bf16.msra.mxu0 %v955
      %973 = vmatmul.bf16.gmra.mxu0 %v963
      %v974 = vpop.f32.mrf.mxu0
      %v975 = vadd.f32 0.0, %v974
      %v976 = vpop.f32.mrf.mxu0
      %v977 = vadd.f32 0.0, %v976
      %978 = vdwg.mxu0
      %v979 = vadd.f32 %v911, %v975
      %v980 = vadd.f32 %v912, %v977
      %v981 = vld [vmem:[%s913] sm:$0x7]
      %v982 = vld [vmem:[%s913 + $0x4] sm:$0x7]
      %v983 = vld [vmem:[%s913 + $0x8] sm:$0x7]
      %v984 = vld [vmem:[%s913 + $0xc] sm:$0x7]
      %v989 = vrot.slane %v981, 2
      %v990 = vrot.slane %v982, 2
      %v991 = vrot.slane %v983, 2
      %v992 = vrot.slane %v984, 2
      %v995 = vsel %vm250, %v981, %v989
      %v996 = vsel %vm254, %v981, %v989
      %v998 = vrot.slane %v996, 2
      %v1001 = vsel %vm250, %v982, %v990
      %v1002 = vsel %vm254, %v982, %v990
      %v1004 = vrot.slane %v1002, 2
      %v1007 = vsel %vm250, %v983, %v991
      %v1008 = vsel %vm254, %v983, %v991
      %v1010 = vrot.slane %v1008, 2
      %v1013 = vsel %vm250, %v984, %v992
      %v1014 = vsel %vm254, %v984, %v992
      %v1016 = vrot.slane %v1014, 2
      %v1017 = vshrl.u32 %v995, 16
      %v1019 = vrot.slane %v1017, 6
      %v1020 = vshll.u32 %v995, 16
      %v1022 = vrot.slane %v1020, 7
      %v1023 = vor.u32 %v1019, %v1022
      %v1024 = vrot.slane %v1023, 2
      %v1026 = vshll.u32 %v998, 16
      %v1028 = vrot.slane %v1026, 7
      %v1029 = vsel %vm282, %v1024, %v1028
      %v1030 = vshrl.u32 %v1001, 16
      %v1032 = vrot.slane %v1030, 6
      %v1033 = vshll.u32 %v1001, 16
      %v1035 = vrot.slane %v1033, 7
      %v1036 = vor.u32 %v1032, %v1035
      %v1037 = vrot.slane %v1036, 2
      %v1039 = vshll.u32 %v1004, 16
      %v1041 = vrot.slane %v1039, 7
      %v1042 = vsel %vm282, %v1037, %v1041
      %v1043 = vshrl.u32 %v1007, 16
      %v1045 = vrot.slane %v1043, 6
      %v1046 = vshll.u32 %v1007, 16
      %v1048 = vrot.slane %v1046, 7
      %v1049 = vor.u32 %v1045, %v1048
      %v1050 = vrot.slane %v1049, 2
      %v1052 = vshll.u32 %v1010, 16
      %v1054 = vrot.slane %v1052, 7
      %v1055 = vsel %vm282, %v1050, %v1054
      %v1056 = vshrl.u32 %v1013, 16
      %v1058 = vrot.slane %v1056, 6
      %v1059 = vshll.u32 %v1013, 16
      %v1061 = vrot.slane %v1059, 7
      %v1062 = vor.u32 %v1058, %v1061
      %v1063 = vrot.slane %v1062, 2
      %v1065 = vshll.u32 %v1016, 16
      %v1067 = vrot.slane %v1065, 7
      %v1068 = vsel %vm282, %v1063, %v1067
      %s1069 = scalar_lea.vmem %s1, 224
      %v1070 = vld [vmem:[%s1069] sm:$0xf]
      %v1071 = vld [vmem:[%s1069 + $0x4] sm:$0xf]
      %v1072 = vld [vmem:[%s1069 + $0x8] sm:$0xf]
      %v1073 = vld [vmem:[%s1069 + $0xc] sm:$0xf]
      %v1074 = vld [vmem:[%s1069 + $0x10] sm:$0xf]
      %v1075 = vld [vmem:[%s1069 + $0x14] sm:$0xf]
      %v1076 = vld [vmem:[%s1069 + $0x18] sm:$0xf]
      %v1077 = vld [vmem:[%s1069 + $0x1c] sm:$0xf]
      %1079 = vst [vmem:[#allocation1] ss:$4 sm:$0xff] %v1029
      %s1081 = scalar_lea.vmem [#allocation1], 1
      %1082 = vst [vmem:[%s1081] ss:$4 sm:$0xff] %v1042
      %s1084 = scalar_lea.vmem [#allocation1], 2
      %1085 = vst [vmem:[%s1084] ss:$4 sm:$0xff] %v1055
      %s1087 = scalar_lea.vmem [#allocation1], 3
      %1088 = vst [vmem:[%s1087] ss:$4 sm:$0xff] %v1068
      %v1089 = vld.sshfl [vmem:[#allocation1] sm:$0xff pattern:$0x73625140]
      %v1098 = vunpack.c.l.b16 %v1070
      %v1099 = vunpack.c.l.b16 %v1071
      %v1100 = vunpack.c.l.b16 %v1072
      %v1101 = vunpack.c.l.b16 %v1073
      %v1102 = vunpack.c.l.b16 %v1074
      %v1103 = vunpack.c.l.b16 %v1075
      %v1104 = vunpack.c.l.b16 %v1076
      %v1105 = vunpack.c.l.b16 %v1077
      %v1106 = vpack.c.b16 %v1099, %v1098
      %v1107 = vpack.c.b16 %v1101, %v1100
      %v1108 = vpack.c.b16 %v1103, %v1102
      %v1109 = vpack.c.b16 %v1105, %v1104
      %v1114 = vsel %vm380, %v1089, 0
      %1116 = vmatpush.bf16.msra.mxu0 0
      %1117 = vmatpush.bf16.msra.mxu0 0
      %1118 = vmatpush.bf16.msra.mxu0 0
      %1119 = vmatpush.bf16.msra.mxu0 0
      %1120 = vmatpush.bf16.msra.mxu0 %v1109
      %1121 = vmatpush.bf16.msra.mxu0 %v1108
      %1122 = vmatpush.bf16.msra.mxu0 %v1107
      %1123 = vmatpush.bf16.msra.mxu0 %v1106
      %1124 = vmatmul.bf16.gmra.mxu0 %v1114
      %v1125 = vpop.f32.mrf.mxu0
      %v1126 = vadd.f32 0.0, %v1125
      %v1127 = vpop.f32.mrf.mxu0
      %v1128 = vadd.f32 0.0, %v1127
      %1129 = vdwg.mxu0
      %v1130 = vadd.f32 %v979, %v1126
      %v1131 = vadd.f32 %v980, %v1128
      %v1132 = vld [vmem:[%s913] sm:$0x6]
      %v1133 = vld [vmem:[%s913 + $0x4] sm:$0x6]
      %v1134 = vld [vmem:[%s913 + $0x8] sm:$0x6]
      %v1135 = vld [vmem:[%s913 + $0xc] sm:$0x6]
      %v1140 = vrot.slane %v1132, 2
      %v1141 = vrot.slane %v1133, 2
      %v1142 = vrot.slane %v1134, 2
      %v1143 = vrot.slane %v1135, 2
      %v1146 = vsel %vm250, %v1132, %v1140
      %v1148 = vsel %vm254, %v1132, %v1140
      %v1150 = vrot.slane %v1148, 2
      %v1153 = vsel %vm250, %v1133, %v1141
      %v1155 = vsel %vm254, %v1133, %v1141
      %v1157 = vrot.slane %v1155, 2
      %v1160 = vsel %vm250, %v1134, %v1142
      %v1162 = vsel %vm254, %v1134, %v1142
      %v1164 = vrot.slane %v1162, 2
      %v1167 = vsel %vm250, %v1135, %v1143
      %v1169 = vsel %vm254, %v1135, %v1143
      %v1171 = vrot.slane %v1169, 2
      %v1172 = vrot.slane %v1146, 7
      %v1173 = vrot.slane %v1172, 2
      %v1174 = vrot.slane %v1150, 7
      %v1175 = vsel %vm495, %v1173, %v1174
      %v1176 = vrot.slane %v1153, 7
      %v1177 = vrot.slane %v1176, 2
      %v1178 = vrot.slane %v1157, 7
      %v1179 = vsel %vm495, %v1177, %v1178
      %v1180 = vrot.slane %v1160, 7
      %v1181 = vrot.slane %v1180, 2
      %v1182 = vrot.slane %v1164, 7
      %v1183 = vsel %vm495, %v1181, %v1182
      %v1184 = vrot.slane %v1167, 7
      %v1185 = vrot.slane %v1184, 2
      %v1186 = vrot.slane %v1171, 7
      %v1187 = vsel %vm495, %v1185, %v1186
      %s1188 = scalar_lea.vmem %s1, 256
      %v1189 = vld [vmem:[%s1188] sm:$0xf]
      %v1190 = vld [vmem:[%s1188 + $0x4] sm:$0xf]
      %v1191 = vld [vmem:[%s1188 + $0x8] sm:$0xf]
      %v1192 = vld [vmem:[%s1188 + $0xc] sm:$0xf]
      %v1193 = vld [vmem:[%s1188 + $0x10] sm:$0xf]
      %v1194 = vld [vmem:[%s1188 + $0x14] sm:$0xf]
      %v1195 = vld [vmem:[%s1188 + $0x18] sm:$0xf]
      %v1196 = vld [vmem:[%s1188 + $0x1c] sm:$0xf]
      %1198 = vst [vmem:[#allocation1] ss:$4 sm:$0xff] %v1175
      %s1200 = scalar_lea.vmem [#allocation1], 1
      %1201 = vst [vmem:[%s1200] ss:$4 sm:$0xff] %v1179
      %s1203 = scalar_lea.vmem [#allocation1], 2
      %1204 = vst [vmem:[%s1203] ss:$4 sm:$0xff] %v1183
      %s1206 = scalar_lea.vmem [#allocation1], 3
      %1207 = vst [vmem:[%s1206] ss:$4 sm:$0xff] %v1187
      %v1208 = vld.sshfl [vmem:[#allocation1] sm:$0xff pattern:$0x73625140]
      %v1217 = vunpack.c.l.b16 %v1189
      %v1218 = vunpack.c.l.b16 %v1190
      %v1219 = vunpack.c.l.b16 %v1191
      %v1220 = vunpack.c.l.b16 %v1192
      %v1221 = vunpack.c.l.b16 %v1193
      %v1222 = vunpack.c.l.b16 %v1194
      %v1223 = vunpack.c.l.b16 %v1195
      %v1224 = vunpack.c.l.b16 %v1196
      %v1225 = vpack.c.b16 %v1218, %v1217
      %v1226 = vpack.c.b16 %v1220, %v1219
      %v1227 = vpack.c.b16 %v1222, %v1221
      %v1228 = vpack.c.b16 %v1224, %v1223
      %v1233 = vsel %vm380, %v1208, 0
      %1235 = vmatpush.bf16.msra.mxu0 0
      %1236 = vmatpush.bf16.msra.mxu0 0
      %1237 = vmatpush.bf16.msra.mxu0 0
      %1238 = vmatpush.bf16.msra.mxu0 0
      %1239 = vmatpush.bf16.msra.mxu0 %v1228
      %1240 = vmatpush.bf16.msra.mxu0 %v1227
      %1241 = vmatpush.bf16.msra.mxu0 %v1226
      %1242 = vmatpush.bf16.msra.mxu0 %v1225
      %1243 = vmatmul.bf16.gmra.mxu0 %v1233
      %v1244 = vpop.f32.mrf.mxu0
      %v1245 = vadd.f32 0.0, %v1244
      %v1246 = vpop.f32.mrf.mxu0
      %v1247 = vadd.f32 0.0, %v1246
      %1248 = vdwg.mxu0
      %v1249 = vadd.f32 %v1130, %v1245
      %v1250 = vadd.f32 %v1131, %v1247
      %v1251 = vld [vmem:[%s2] sm:$0x1]
      %v1253 = vperm.slane %v1251, 0
      %v1255 = vadd.f32 %v1249, %v1253
      %v1256 = vadd.f32 %v1250, %v1253
      %v1257 = vmax.f32 %v1255, 0.0
      %v1258 = vmax.f32 %v1256, 0.0
      %vm1259 = vcmask 518144
      %1260 = vst.msk [vmem:[#allocation2] sm:$0x7] %vm1259, 0
      %1261 = vst.msk [vmem:[#allocation2 + $0x4] sm:$0x7] %vm1259, 0
      %1262 = vst.msk [vmem:[#allocation2 + $0x8] sm:$0x7] %vm1259, 0
      %1263 = vst.msk [vmem:[#allocation2 + $0xc] sm:$0x7] %vm1259, 0
      %1264 = vst.msk [vmem:[#allocation2 + $0x10] sm:$0x7] %vm1259, 0
      %1265 = vst.msk [vmem:[#allocation2 + $0x14] sm:$0x7] %vm1259, 0
      %v1268 = vrot.slane %v1257, 4
      %v1269 = vrot.slane %v1258, 4
      %v1272 = vpack.c.bf16 %v1257, %v1257
      %v1273 = vpack.c.bf16 %v1268, %v1268
      %v1274 = vpack.c.bf16 %v1258, %v1258
      %v1275 = vpack.c.bf16 %v1269, %v1269
      %v1277 = vshrl.u32 %v1272, 16
      %v1279 = vrot.slane %v1277, 7
      %v1280 = vshll.u32 %v1272, 16
      %v1282 = vor.u32 %v1279, %v1280
      %v1284 = vshrl.u32 %v1273, 16
      %v1286 = vrot.slane %v1284, 7
      %v1287 = vshll.u32 %v1273, 16
      %v1289 = vor.u32 %v1286, %v1287
      %v1291 = vshrl.u32 %v1274, 16
      %v1293 = vrot.slane %v1291, 7
      %v1294 = vshll.u32 %v1274, 16
      %v1296 = vor.u32 %v1293, %v1294
      %v1298 = vshrl.u32 %v1275, 16
      %v1300 = vrot.slane %v1298, 7
      %v1301 = vshll.u32 %v1275, 16
      %v1303 = vor.u32 %v1300, %v1301
      %s1308 = scalar_lea.vmem [#allocation2], 4
      %vm1309 = vcmask 518144
      %vm1310 = vsmask.f32 2306
      %vm1311 = vmand %vm1309, %vm1310
      %v1312 = vld [vmem:[%s1308] sm:$0x7]
      %v1313 = vsel %vm1311, %v1282, %v1312
      %1314 = vst [vmem:[%s1308] sm:$0x7] %v1313
      %v1315 = vld [vmem:[%s1308 + $0x4] sm:$0x7]
      %v1316 = vsel %vm1311, %v1289, %v1315
      %1317 = vst [vmem:[%s1308 + $0x4] sm:$0x7] %v1316
      %v1318 = vld [vmem:[%s1308 + $0x8] sm:$0x7]
      %v1319 = vsel %vm1311, %v1296, %v1318
      %1320 = vst [vmem:[%s1308 + $0x8] sm:$0x7] %v1319
      %v1321 = vld [vmem:[%s1308 + $0xc] sm:$0x7]
      %v1322 = vsel %vm1311, %v1303, %v1321
      %1323 = vst [vmem:[%s1308 + $0xc] sm:$0x7] %v1322
      %v1324 = vld [vmem:[%s575] sm:$0x7]
      %v1325 = vld [vmem:[%s575 + $0x4] sm:$0x7]
      %v1326 = vld [vmem:[%s575 + $0x8] sm:$0x7]
      %v1327 = vld [vmem:[%s575 + $0xc] sm:$0x7]
      %v1332 = vrot.slane %v1324, 2
      %v1333 = vrot.slane %v1325, 2
      %v1334 = vrot.slane %v1326, 2
      %v1335 = vrot.slane %v1327, 2
      %v1338 = vsel %vm250, %v1324, %v1332
      %v1339 = vsel %vm254, %v1324, %v1332
      %v1341 = vrot.slane %v1339, 2
      %v1344 = vsel %vm250, %v1325, %v1333
      %v1345 = vsel %vm254, %v1325, %v1333
      %v1347 = vrot.slane %v1345, 2
      %v1350 = vsel %vm250, %v1326, %v1334
      %v1351 = vsel %vm254, %v1326, %v1334
      %v1353 = vrot.slane %v1351, 2
      %v1356 = vsel %vm250, %v1327, %v1335
      %v1357 = vsel %vm254, %v1327, %v1335
      %v1359 = vrot.slane %v1357, 2
      %v1360 = vshrl.u32 %v1338, 16
      %v1362 = vrot.slane %v1360, 6
      %v1363 = vshll.u32 %v1338, 16
      %v1365 = vrot.slane %v1363, 7
      %v1366 = vor.u32 %v1362, %v1365
      %v1367 = vrot.slane %v1366, 2
      %v1369 = vshll.u32 %v1341, 16
      %v1371 = vrot.slane %v1369, 7
      %v1372 = vsel %vm282, %v1367, %v1371
      %v1373 = vshrl.u32 %v1344, 16
      %v1375 = vrot.slane %v1373, 6
      %v1376 = vshll.u32 %v1344, 16
      %v1378 = vrot.slane %v1376, 7
      %v1379 = vor.u32 %v1375, %v1378
      %v1380 = vrot.slane %v1379, 2
      %v1382 = vshll.u32 %v1347, 16
      %v1384 = vrot.slane %v1382, 7
      %v1385 = vsel %vm282, %v1380, %v1384
      %v1386 = vshrl.u32 %v1350, 16
      %v1388 = vrot.slane %v1386, 6
      %v1389 = vshll.u32 %v1350, 16
      %v1391 = vrot.slane %v1389, 7
      %v1392 = vor.u32 %v1388, %v1391
      %v1393 = vrot.slane %v1392, 2
      %v1395 = vshll.u32 %v1353, 16
      %v1397 = vrot.slane %v1395, 7
      %v1398 = vsel %vm282, %v1393, %v1397
      %v1399 = vshrl.u32 %v1356, 16
      %v1401 = vrot.slane %v1399, 6
      %v1402 = vshll.u32 %v1356, 16
      %v1404 = vrot.slane %v1402, 7
      %v1405 = vor.u32 %v1401, %v1404
      %v1406 = vrot.slane %v1405, 2
      %v1408 = vshll.u32 %v1359, 16
      %v1410 = vrot.slane %v1408, 7
      %v1411 = vsel %vm282, %v1406, %v1410
      %v1416 = vunpack.c.l.bf16 %v1372
      %v1417 = vunpack.c.l.bf16 %v1385
      %v1418 = vunpack.c.l.bf16 %v1398
      %v1419 = vunpack.c.l.bf16 %v1411
      %v1420 = vld [vmem:[#allocation2] sm:$0x3]
      %v1421 = vld [vmem:[#allocation2 + $0x4] sm:$0x3]
      %v1422 = vld [vmem:[#allocation2 + $0x8] sm:$0x3]
      %v1423 = vld [vmem:[#allocation2 + $0xc] sm:$0x3]
      %v1424 = vld [vmem:[%s3] sm:$0xf]
      %v1425 = vld [vmem:[%s3 + $0x4] sm:$0xf]
      %v1426 = vld [vmem:[%s3 + $0x8] sm:$0xf]
      %v1427 = vld [vmem:[%s3 + $0xc] sm:$0xf]
      %v1428 = vld [vmem:[%s3 + $0x10] sm:$0xf]
      %v1429 = vld [vmem:[%s3 + $0x14] sm:$0xf]
      %v1430 = vld [vmem:[%s3 + $0x18] sm:$0xf]
      %v1431 = vld [vmem:[%s3 + $0x1c] sm:$0xf]
      %v1432 = vld [vmem:[#allocation2] sm:$0x7]
      %v1433 = vld [vmem:[#allocation2 + $0x4] sm:$0x7]
      %v1434 = vld [vmem:[#allocation2 + $0x8] sm:$0x7]
      %v1435 = vld [vmem:[#allocation2 + $0xc] sm:$0x7]
      %v1440 = vrot.slane %v1432, 2
      %v1441 = vrot.slane %v1433, 2
      %v1442 = vrot.slane %v1434, 2
      %v1443 = vrot.slane %v1435, 2
      %v1446 = vsel %vm250, %v1432, %v1440
      %v1447 = vsel %vm254, %v1432, %v1440
      %v1449 = vrot.slane %v1447, 2
      %v1452 = vsel %vm250, %v1433, %v1441
      %v1453 = vsel %vm254, %v1433, %v1441
      %v1455 = vrot.slane %v1453, 2
      %v1458 = vsel %vm250, %v1434, %v1442
      %v1459 = vsel %vm254, %v1434, %v1442
      %v1461 = vrot.slane %v1459, 2
      %v1464 = vsel %vm250, %v1435, %v1443
      %v1465 = vsel %vm254, %v1435, %v1443
      %v1467 = vrot.slane %v1465, 2
      %v1468 = vshrl.u32 %v1446, 16
      %v1470 = vrot.slane %v1468, 6
      %v1471 = vshll.u32 %v1446, 16
      %v1473 = vrot.slane %v1471, 7
      %v1474 = vor.u32 %v1470, %v1473
      %v1475 = vrot.slane %v1474, 2
      %v1477 = vshll.u32 %v1449, 16
      %v1479 = vrot.slane %v1477, 7
      %v1480 = vsel %vm282, %v1475, %v1479
      %v1481 = vshrl.u32 %v1452, 16
      %v1483 = vrot.slane %v1481, 6
      %v1484 = vshll.u32 %v1452, 16
      %v1486 = vrot.slane %v1484, 7
      %v1487 = vor.u32 %v1483, %v1486
      %v1488 = vrot.slane %v1487, 2
      %v1490 = vshll.u32 %v1455, 16
      %v1492 = vrot.slane %v1490, 7
      %v1493 = vsel %vm282, %v1488, %v1492
      %v1494 = vshrl.u32 %v1458, 16
      %v1496 = vrot.slane %v1494, 6
      %v1497 = vshll.u32 %v1458, 16
      %v1499 = vrot.slane %v1497, 7
      %v1500 = vor.u32 %v1496, %v1499
      %v1501 = vrot.slane %v1500, 2
      %v1503 = vshll.u32 %v1461, 16
      %v1505 = vrot.slane %v1503, 7
      %v1506 = vsel %vm282, %v1501, %v1505
      %v1507 = vshrl.u32 %v1464, 16
      %v1509 = vrot.slane %v1507, 6
      %v1510 = vshll.u32 %v1464, 16
      %v1512 = vrot.slane %v1510, 7
      %v1513 = vor.u32 %v1509, %v1512
      %v1514 = vrot.slane %v1513, 2
      %v1516 = vshll.u32 %v1467, 16
      %v1518 = vrot.slane %v1516, 7
      %v1519 = vsel %vm282, %v1514, %v1518
      %s1520 = scalar_lea.vmem %s3, 32
      %v1521 = vld [vmem:[%s1520] sm:$0xf]
      %v1522 = vld [vmem:[%s1520 + $0x4] sm:$0xf]
      %v1523 = vld [vmem:[%s1520 + $0x8] sm:$0xf]
      %v1524 = vld [vmem:[%s1520 + $0xc] sm:$0xf]
      %v1525 = vld [vmem:[%s1520 + $0x10] sm:$0xf]
      %v1526 = vld [vmem:[%s1520 + $0x14] sm:$0xf]
      %v1527 = vld [vmem:[%s1520 + $0x18] sm:$0xf]
      %v1528 = vld [vmem:[%s1520 + $0x1c] sm:$0xf]
      %1530 = vst [vmem:[#allocation1] ss:$4 sm:$0xff] %v1480
      %s1532 = scalar_lea.vmem [#allocation1], 1
      %1533 = vst [vmem:[%s1532] ss:$4 sm:$0xff] %v1493
      %s1535 = scalar_lea.vmem [#allocation1], 2
      %1536 = vst [vmem:[%s1535] ss:$4 sm:$0xff] %v1506
      %s1538 = scalar_lea.vmem [#allocation1], 3
      %1539 = vst [vmem:[%s1538] ss:$4 sm:$0xff] %v1519
      %v1540 = vld.sshfl [vmem:[#allocation1] sm:$0xff pattern:$0x73625140]
      %v1549 = vunpack.c.l.b16 %v1521
      %v1550 = vunpack.c.l.b16 %v1522
      %v1551 = vunpack.c.l.b16 %v1523
      %v1552 = vunpack.c.l.b16 %v1524
      %v1553 = vunpack.c.l.b16 %v1525
      %v1554 = vunpack.c.l.b16 %v1526
      %v1555 = vunpack.c.l.b16 %v1527
      %v1556 = vunpack.c.l.b16 %v1528
      %v1557 = vpack.c.b16 %v1550, %v1549
      %v1558 = vpack.c.b16 %v1552, %v1551
      %v1559 = vpack.c.b16 %v1554, %v1553
      %v1560 = vpack.c.b16 %v1556, %v1555
      %v1565 = vsel %vm380, %v1540, 0
      %1567 = vmatpush.bf16.msra.mxu0 0
      %1568 = vmatpush.bf16.msra.mxu0 0
      %1569 = vmatpush.bf16.msra.mxu0 0
      %1570 = vmatpush.bf16.msra.mxu0 0
      %1571 = vmatpush.bf16.msra.mxu0 %v1560
      %1572 = vmatpush.bf16.msra.mxu0 %v1559
      %1573 = vmatpush.bf16.msra.mxu0 %v1558
      %1574 = vmatpush.bf16.msra.mxu0 %v1557
      %1575 = vmatmul.bf16.gmra.mxu0 %v1565
      %v1576 = vpop.f32.mrf.mxu0
      %v1577 = vadd.f32 0.0, %v1576
      %v1578 = vpop.f32.mrf.mxu0
      %v1579 = vadd.f32 0.0, %v1578
      %1580 = vdwg.mxu0
      %1582 = vst [vmem:[#allocation1] ss:$4 sm:$0xff] %v1420
      %s1584 = scalar_lea.vmem [#allocation1], 1
      %1585 = vst [vmem:[%s1584] ss:$4 sm:$0xff] %v1421
      %s1587 = scalar_lea.vmem [#allocation1], 2
      %1588 = vst [vmem:[%s1587] ss:$4 sm:$0xff] %v1422
      %s1590 = scalar_lea.vmem [#allocation1], 3
      %1591 = vst [vmem:[%s1590] ss:$4 sm:$0xff] %v1423
      %v1592 = vld.sshfl [vmem:[#allocation1] sm:$0xff pattern:$0x73625140]
      %v1601 = vunpack.c.l.b16 %v1424
      %v1602 = vunpack.c.l.b16 %v1425
      %v1603 = vunpack.c.l.b16 %v1426
      %v1604 = vunpack.c.l.b16 %v1427
      %v1605 = vunpack.c.l.b16 %v1428
      %v1606 = vunpack.c.l.b16 %v1429
      %v1607 = vunpack.c.l.b16 %v1430
      %v1608 = vunpack.c.l.b16 %v1431
      %v1609 = vpack.c.b16 %v1602, %v1601
      %v1610 = vpack.c.b16 %v1604, %v1603
      %v1611 = vpack.c.b16 %v1606, %v1605
      %v1612 = vpack.c.b16 %v1608, %v1607
      %v1617 = vsel %vm380, %v1592, 0
      %1619 = vmatpush.bf16.msra.mxu0 0
      %1620 = vmatpush.bf16.msra.mxu0 0
      %1621 = vmatpush.bf16.msra.mxu0 0
      %1622 = vmatpush.bf16.msra.mxu0 0
      %1623 = vmatpush.bf16.msra.mxu0 %v1612
      %1624 = vmatpush.bf16.msra.mxu0 %v1611
      %1625 = vmatpush.bf16.msra.mxu0 %v1610
      %1626 = vmatpush.bf16.msra.mxu0 %v1609
      %1627 = vmatmul.bf16.gmra.mxu0 %v1617
      %v1628 = vpop.f32.mrf.mxu0
      %v1629 = vadd.f32 %v1577, %v1628
      %v1630 = vpop.f32.mrf.mxu0
      %v1631 = vadd.f32 %v1579, %v1630
      %1632 = vdwg.mxu0
      %v1633 = vld [vmem:[#allocation2] sm:$0x6]
      %v1634 = vld [vmem:[#allocation2 + $0x4] sm:$0x6]
      %v1635 = vld [vmem:[#allocation2 + $0x8] sm:$0x6]
      %v1636 = vld [vmem:[#allocation2 + $0xc] sm:$0x6]
      %v1641 = vrot.slane %v1633, 2
      %v1642 = vrot.slane %v1634, 2
      %v1643 = vrot.slane %v1635, 2
      %v1644 = vrot.slane %v1636, 2
      %v1647 = vsel %vm250, %v1633, %v1641
      %v1649 = vsel %vm254, %v1633, %v1641
      %v1651 = vrot.slane %v1649, 2
      %v1654 = vsel %vm250, %v1634, %v1642
      %v1656 = vsel %vm254, %v1634, %v1642
      %v1658 = vrot.slane %v1656, 2
      %v1661 = vsel %vm250, %v1635, %v1643
      %v1663 = vsel %vm254, %v1635, %v1643
      %v1665 = vrot.slane %v1663, 2
      %v1668 = vsel %vm250, %v1636, %v1644
      %v1670 = vsel %vm254, %v1636, %v1644
      %v1672 = vrot.slane %v1670, 2
      %v1673 = vrot.slane %v1647, 7
      %v1674 = vrot.slane %v1673, 2
      %v1675 = vrot.slane %v1651, 7
      %v1676 = vsel %vm495, %v1674, %v1675
      %v1677 = vrot.slane %v1654, 7
      %v1678 = vrot.slane %v1677, 2
      %v1679 = vrot.slane %v1658, 7
      %v1680 = vsel %vm495, %v1678, %v1679
      %v1681 = vrot.slane %v1661, 7
      %v1682 = vrot.slane %v1681, 2
      %v1683 = vrot.slane %v1665, 7
      %v1684 = vsel %vm495, %v1682, %v1683
      %v1685 = vrot.slane %v1668, 7
      %v1686 = vrot.slane %v1685, 2
      %v1687 = vrot.slane %v1672, 7
      %v1688 = vsel %vm495, %v1686, %v1687
      %s1689 = scalar_lea.vmem %s3, 64
      %v1690 = vld [vmem:[%s1689] sm:$0xf]
      %v1691 = vld [vmem:[%s1689 + $0x4] sm:$0xf]
      %v1692 = vld [vmem:[%s1689 + $0x8] sm:$0xf]
      %v1693 = vld [vmem:[%s1689 + $0xc] sm:$0xf]
      %v1694 = vld [vmem:[%s1689 + $0x10] sm:$0xf]
      %v1695 = vld [vmem:[%s1689 + $0x14] sm:$0xf]
      %v1696 = vld [vmem:[%s1689 + $0x18] sm:$0xf]
      %v1697 = vld [vmem:[%s1689 + $0x1c] sm:$0xf]
      %1699 = vst [vmem:[#allocation1] ss:$4 sm:$0xff] %v1676
      %s1701 = scalar_lea.vmem [#allocation1], 1
      %1702 = vst [vmem:[%s1701] ss:$4 sm:$0xff] %v1680
      %s1704 = scalar_lea.vmem [#allocation1], 2
      %1705 = vst [vmem:[%s1704] ss:$4 sm:$0xff] %v1684
      %s1707 = scalar_lea.vmem [#allocation1], 3
      %1708 = vst [vmem:[%s1707] ss:$4 sm:$0xff] %v1688
      %v1709 = vld.sshfl [vmem:[#allocation1] sm:$0xff pattern:$0x73625140]
      %v1718 = vunpack.c.l.b16 %v1690
      %v1719 = vunpack.c.l.b16 %v1691
      %v1720 = vunpack.c.l.b16 %v1692
      %v1721 = vunpack.c.l.b16 %v1693
      %v1722 = vunpack.c.l.b16 %v1694
      %v1723 = vunpack.c.l.b16 %v1695
      %v1724 = vunpack.c.l.b16 %v1696
      %v1725 = vunpack.c.l.b16 %v1697
      %v1726 = vpack.c.b16 %v1719, %v1718
      %v1727 = vpack.c.b16 %v1721, %v1720
      %v1728 = vpack.c.b16 %v1723, %v1722
      %v1729 = vpack.c.b16 %v1725, %v1724
      %v1734 = vsel %vm380, %v1709, 0
      %1736 = vmatpush.bf16.msra.mxu0 0
      %1737 = vmatpush.bf16.msra.mxu0 0
      %1738 = vmatpush.bf16.msra.mxu0 0
      %1739 = vmatpush.bf16.msra.mxu0 0
      %1740 = vmatpush.bf16.msra.mxu0 %v1729
      %1741 = vmatpush.bf16.msra.mxu0 %v1728
      %1742 = vmatpush.bf16.msra.mxu0 %v1727
      %1743 = vmatpush.bf16.msra.mxu0 %v1726
      %1744 = vmatmul.bf16.gmra.mxu0 %v1734
      %v1745 = vpop.f32.mrf.mxu0
      %v1746 = vadd.f32 0.0, %v1745
      %v1747 = vpop.f32.mrf.mxu0
      %v1748 = vadd.f32 0.0, %v1747
      %1749 = vdwg.mxu0
      %v1750 = vadd.f32 %v1629, %v1746
      %v1751 = vadd.f32 %v1631, %v1748
      %v1752 = vld [vmem:[%s1308] sm:$0x3]
      %v1753 = vld [vmem:[%s1308 + $0x4] sm:$0x3]
      %v1754 = vld [vmem:[%s1308 + $0x8] sm:$0x3]
      %v1755 = vld [vmem:[%s1308 + $0xc] sm:$0x3]
      %s1756 = scalar_lea.vmem %s3, 96
      %v1757 = vld [vmem:[%s1756] sm:$0xf]
      %v1758 = vld [vmem:[%s1756 + $0x4] sm:$0xf]
      %v1759 = vld [vmem:[%s1756 + $0x8] sm:$0xf]
      %v1760 = vld [vmem:[%s1756 + $0xc] sm:$0xf]
      %v1761 = vld [vmem:[%s1756 + $0x10] sm:$0xf]
      %v1762 = vld [vmem:[%s1756 + $0x14] sm:$0xf]
      %v1763 = vld [vmem:[%s1756 + $0x18] sm:$0xf]
      %v1764 = vld [vmem:[%s1756 + $0x1c] sm:$0xf]
      %1766 = vst [vmem:[#allocation1] ss:$4 sm:$0xff] %v1752
      %s1768 = scalar_lea.vmem [#allocation1], 1
      %1769 = vst [vmem:[%s1768] ss:$4 sm:$0xff] %v1753
      %s1771 = scalar_lea.vmem [#allocation1], 2
      %1772 = vst [vmem:[%s1771] ss:$4 sm:$0xff] %v1754
      %s1774 = scalar_lea.vmem [#allocation1], 3
      %1775 = vst [vmem:[%s1774] ss:$4 sm:$0xff] %v1755
      %v1776 = vld.sshfl [vmem:[#allocation1] sm:$0xff pattern:$0x73625140]
      %v1785 = vunpack.c.l.b16 %v1757
      %v1786 = vunpack.c.l.b16 %v1758
      %v1787 = vunpack.c.l.b16 %v1759
      %v1788 = vunpack.c.l.b16 %v1760
      %v1789 = vunpack.c.l.b16 %v1761
      %v1790 = vunpack.c.l.b16 %v1762
      %v1791 = vunpack.c.l.b16 %v1763
      %v1792 = vunpack.c.l.b16 %v1764
      %v1793 = vpack.c.b16 %v1786, %v1785
      %v1794 = vpack.c.b16 %v1788, %v1787
      %v1795 = vpack.c.b16 %v1790, %v1789
      %v1796 = vpack.c.b16 %v1792, %v1791
      %v1801 = vsel %vm380, %v1776, 0
      %1803 = vmatpush.bf16.msra.mxu0 0
      %1804 = vmatpush.bf16.msra.mxu0 0
      %1805 = vmatpush.bf16.msra.mxu0 0
      %1806 = vmatpush.bf16.msra.mxu0 0
      %1807 = vmatpush.bf16.msra.mxu0 %v1796
      %1808 = vmatpush.bf16.msra.mxu0 %v1795
      %1809 = vmatpush.bf16.msra.mxu0 %v1794
      %1810 = vmatpush.bf16.msra.mxu0 %v1793
      %1811 = vmatmul.bf16.gmra.mxu0 %v1801
      %v1812 = vpop.f32.mrf.mxu0
      %v1813 = vadd.f32 0.0, %v1812
      %v1814 = vpop.f32.mrf.mxu0
      %v1815 = vadd.f32 0.0, %v1814
      %1816 = vdwg.mxu0
      %v1817 = vadd.f32 %v1750, %v1813
      %v1818 = vadd.f32 %v1751, %v1815
      %v1819 = vld [vmem:[%s1308] sm:$0x7]
      %v1820 = vld [vmem:[%s1308 + $0x4] sm:$0x7]
      %v1821 = vld [vmem:[%s1308 + $0x8] sm:$0x7]
      %v1822 = vld [vmem:[%s1308 + $0xc] sm:$0x7]
      %v1827 = vrot.slane %v1819, 2
      %v1828 = vrot.slane %v1820, 2
      %v1829 = vrot.slane %v1821, 2
      %v1830 = vrot.slane %v1822, 2
      %v1833 = vsel %vm250, %v1819, %v1827
      %v1834 = vsel %vm254, %v1819, %v1827
      %v1836 = vrot.slane %v1834, 2
      %v1839 = vsel %vm250, %v1820, %v1828
      %v1840 = vsel %vm254, %v1820, %v1828
      %v1842 = vrot.slane %v1840, 2
      %v1845 = vsel %vm250, %v1821, %v1829
      %v1846 = vsel %vm254, %v1821, %v1829
      %v1848 = vrot.slane %v1846, 2
      %v1851 = vsel %vm250, %v1822, %v1830
      %v1852 = vsel %vm254, %v1822, %v1830
      %v1854 = vrot.slane %v1852, 2
      %v1855 = vshrl.u32 %v1833, 16
      %v1857 = vrot.slane %v1855, 6
      %v1858 = vshll.u32 %v1833, 16
      %v1860 = vrot.slane %v1858, 7
      %v1861 = vor.u32 %v1857, %v1860
      %v1862 = vrot.slane %v1861, 2
      %v1864 = vshll.u32 %v1836, 16
      %v1866 = vrot.slane %v1864, 7
      %v1867 = vsel %vm282, %v1862, %v1866
      %v1868 = vshrl.u32 %v1839, 16
      %v1870 = vrot.slane %v1868, 6
      %v1871 = vshll.u32 %v1839, 16
      %v1873 = vrot.slane %v1871, 7
      %v1874 = vor.u32 %v1870, %v1873
      %v1875 = vrot.slane %v1874, 2
      %v1877 = vshll.u32 %v1842, 16
      %v1879 = vrot.slane %v1877, 7
      %v1880 = vsel %vm282, %v1875, %v1879
      %v1881 = vshrl.u32 %v1845, 16
      %v1883 = vrot.slane %v1881, 6
      %v1884 = vshll.u32 %v1845, 16
      %v1886 = vrot.slane %v1884, 7
      %v1887 = vor.u32 %v1883, %v1886
      %v1888 = vrot.slane %v1887, 2
      %v1890 = vshll.u32 %v1848, 16
      %v1892 = vrot.slane %v1890, 7
      %v1893 = vsel %vm282, %v1888, %v1892
      %v1894 = vshrl.u32 %v1851, 16
      %v1896 = vrot.slane %v1894, 6
      %v1897 = vshll.u32 %v1851, 16
      %v1899 = vrot.slane %v1897, 7
      %v1900 = vor.u32 %v1896, %v1899
      %v1901 = vrot.slane %v1900, 2
      %v1903 = vshll.u32 %v1854, 16
      %v1905 = vrot.slane %v1903, 7
      %v1906 = vsel %vm282, %v1901, %v1905
      %s1907 = scalar_lea.vmem %s3, 128
      %v1908 = vld [vmem:[%s1907] sm:$0xf]
      %v1909 = vld [vmem:[%s1907 + $0x4] sm:$0xf]
      %v1910 = vld [vmem:[%s1907 + $0x8] sm:$0xf]
      %v1911 = vld [vmem:[%s1907 + $0xc] sm:$0xf]
      %v1912 = vld [vmem:[%s1907 + $0x10] sm:$0xf]
      %v1913 = vld [vmem:[%s1907 + $0x14] sm:$0xf]
      %v1914 = vld [vmem:[%s1907 + $0x18] sm:$0xf]
      %v1915 = vld [vmem:[%s1907 + $0x1c] sm:$0xf]
      %1917 = vst [vmem:[#allocation1] ss:$4 sm:$0xff] %v1867
      %s1919 = scalar_lea.vmem [#allocation1], 1
      %1920 = vst [vmem:[%s1919] ss:$4 sm:$0xff] %v1880
      %s1922 = scalar_lea.vmem [#allocation1], 2
      %1923 = vst [vmem:[%s1922] ss:$4 sm:$0xff] %v1893
      %s1925 = scalar_lea.vmem [#allocation1], 3
      %1926 = vst [vmem:[%s1925] ss:$4 sm:$0xff] %v1906
      %v1927 = vld.sshfl [vmem:[#allocation1] sm:$0xff pattern:$0x73625140]
      %v1936 = vunpack.c.l.b16 %v1908
      %v1937 = vunpack.c.l.b16 %v1909
      %v1938 = vunpack.c.l.b16 %v1910
      %v1939 = vunpack.c.l.b16 %v1911
      %v1940 = vunpack.c.l.b16 %v1912
      %v1941 = vunpack.c.l.b16 %v1913
      %v1942 = vunpack.c.l.b16 %v1914
      %v1943 = vunpack.c.l.b16 %v1915
      %v1944 = vpack.c.b16 %v1937, %v1936
      %v1945 = vpack.c.b16 %v1939, %v1938
      %v1946 = vpack.c.b16 %v1941, %v1940
      %v1947 = vpack.c.b16 %v1943, %v1942
      %v1952 = vsel %vm380, %v1927, 0
      %1954 = vmatpush.bf16.msra.mxu0 0
      %1955 = vmatpush.bf16.msra.mxu0 0
      %1956 = vmatpush.bf16.msra.mxu0 0
      %1957 = vmatpush.bf16.msra.mxu0 0
      %1958 = vmatpush.bf16.msra.mxu0 %v1947
      %1959 = vmatpush.bf16.msra.mxu0 %v1946
      %1960 = vmatpush.bf16.msra.mxu0 %v1945
      %1961 = vmatpush.bf16.msra.mxu0 %v1944
      %1962 = vmatmul.bf16.gmra.mxu0 %v1952
      %v1963 = vpop.f32.mrf.mxu0
      %v1964 = vadd.f32 0.0, %v1963
      %v1965 = vpop.f32.mrf.mxu0
      %v1966 = vadd.f32 0.0, %v1965
      %1967 = vdwg.mxu0
      %v1968 = vadd.f32 %v1817, %v1964
      %v1969 = vadd.f32 %v1818, %v1966
      %v1970 = vld [vmem:[%s1308] sm:$0x6]
      %v1971 = vld [vmem:[%s1308 + $0x4] sm:$0x6]
      %v1972 = vld [vmem:[%s1308 + $0x8] sm:$0x6]
      %v1973 = vld [vmem:[%s1308 + $0xc] sm:$0x6]
      %v1978 = vrot.slane %v1970, 2
      %v1979 = vrot.slane %v1971, 2
      %v1980 = vrot.slane %v1972, 2
      %v1981 = vrot.slane %v1973, 2
      %v1984 = vsel %vm250, %v1970, %v1978
      %v1986 = vsel %vm254, %v1970, %v1978
      %v1988 = vrot.slane %v1986, 2
      %v1991 = vsel %vm250, %v1971, %v1979
      %v1993 = vsel %vm254, %v1971, %v1979
      %v1995 = vrot.slane %v1993, 2
      %v1998 = vsel %vm250, %v1972, %v1980
      %v2000 = vsel %vm254, %v1972, %v1980
      %v2002 = vrot.slane %v2000, 2
      %v2005 = vsel %vm250, %v1973, %v1981
      %v2007 = vsel %vm254, %v1973, %v1981
      %v2009 = vrot.slane %v2007, 2
      %v2010 = vrot.slane %v1984, 7
      %v2011 = vrot.slane %v2010, 2
      %v2012 = vrot.slane %v1988, 7
      %v2013 = vsel %vm495, %v2011, %v2012
      %v2014 = vrot.slane %v1991, 7
      %v2015 = vrot.slane %v2014, 2
      %v2016 = vrot.slane %v1995, 7
      %v2017 = vsel %vm495, %v2015, %v2016
      %v2018 = vrot.slane %v1998, 7
      %v2019 = vrot.slane %v2018, 2
      %v2020 = vrot.slane %v2002, 7
      %v2021 = vsel %vm495, %v2019, %v2020
      %v2022 = vrot.slane %v2005, 7
      %v2023 = vrot.slane %v2022, 2
      %v2024 = vrot.slane %v2009, 7
      %v2025 = vsel %vm495, %v2023, %v2024
      %s2026 = scalar_lea.vmem %s3, 160
      %v2027 = vld [vmem:[%s2026] sm:$0xf]
      %v2028 = vld [vmem:[%s2026 + $0x4] sm:$0xf]
      %v2029 = vld [vmem:[%s2026 + $0x8] sm:$0xf]
      %v2030 = vld [vmem:[%s2026 + $0xc] sm:$0xf]
      %v2031 = vld [vmem:[%s2026 + $0x10] sm:$0xf]
      %v2032 = vld [vmem:[%s2026 + $0x14] sm:$0xf]
      %v2033 = vld [vmem:[%s2026 + $0x18] sm:$0xf]
      %v2034 = vld [vmem:[%s2026 + $0x1c] sm:$0xf]
      %2036 = vst [vmem:[#allocation1] ss:$4 sm:$0xff] %v2013
      %s2038 = scalar_lea.vmem [#allocation1], 1
      %2039 = vst [vmem:[%s2038] ss:$4 sm:$0xff] %v2017
      %s2041 = scalar_lea.vmem [#allocation1], 2
      %2042 = vst [vmem:[%s2041] ss:$4 sm:$0xff] %v2021
      %s2044 = scalar_lea.vmem [#allocation1], 3
      %2045 = vst [vmem:[%s2044] ss:$4 sm:$0xff] %v2025
      %v2046 = vld.sshfl [vmem:[#allocation1] sm:$0xff pattern:$0x73625140]
      %v2055 = vunpack.c.l.b16 %v2027
      %v2056 = vunpack.c.l.b16 %v2028
      %v2057 = vunpack.c.l.b16 %v2029
      %v2058 = vunpack.c.l.b16 %v2030
      %v2059 = vunpack.c.l.b16 %v2031
      %v2060 = vunpack.c.l.b16 %v2032
      %v2061 = vunpack.c.l.b16 %v2033
      %v2062 = vunpack.c.l.b16 %v2034
      %v2063 = vpack.c.b16 %v2056, %v2055
      %v2064 = vpack.c.b16 %v2058, %v2057
      %v2065 = vpack.c.b16 %v2060, %v2059
      %v2066 = vpack.c.b16 %v2062, %v2061
      %v2071 = vsel %vm380, %v2046, 0
      %2073 = vmatpush.bf16.msra.mxu0 0
      %2074 = vmatpush.bf16.msra.mxu0 0
      %2075 = vmatpush.bf16.msra.mxu0 0
      %2076 = vmatpush.bf16.msra.mxu0 0
      %2077 = vmatpush.bf16.msra.mxu0 %v2066
      %2078 = vmatpush.bf16.msra.mxu0 %v2065
      %2079 = vmatpush.bf16.msra.mxu0 %v2064
      %2080 = vmatpush.bf16.msra.mxu0 %v2063
      %2081 = vmatmul.bf16.gmra.mxu0 %v2071
      %v2082 = vpop.f32.mrf.mxu0
      %v2083 = vadd.f32 0.0, %v2082
      %v2084 = vpop.f32.mrf.mxu0
      %v2085 = vadd.f32 0.0, %v2084
      %2086 = vdwg.mxu0
      %v2087 = vadd.f32 %v1968, %v2083
      %v2088 = vadd.f32 %v1969, %v2085
      %s2089 = scalar_lea.vmem [#allocation2], 8
      %v2090 = vld [vmem:[%s2089] sm:$0x3]
      %v2091 = vld [vmem:[%s2089 + $0x4] sm:$0x3]
      %v2092 = vld [vmem:[%s2089 + $0x8] sm:$0x3]
      %v2093 = vld [vmem:[%s2089 + $0xc] sm:$0x3]
      %s2094 = scalar_lea.vmem %s3, 192
      %v2095 = vld [vmem:[%s2094] sm:$0xf]
      %v2096 = vld [vmem:[%s2094 + $0x4] sm:$0xf]
      %v2097 = vld [vmem:[%s2094 + $0x8] sm:$0xf]
      %v2098 = vld [vmem:[%s2094 + $0xc] sm:$0xf]
      %v2099 = vld [vmem:[%s2094 + $0x10] sm:$0xf]
      %v2100 = vld [vmem:[%s2094 + $0x14] sm:$0xf]
      %v2101 = vld [vmem:[%s2094 + $0x18] sm:$0xf]
      %v2102 = vld [vmem:[%s2094 + $0x1c] sm:$0xf]
      %2104 = vst [vmem:[#allocation1] ss:$4 sm:$0xff] %v2090
      %s2106 = scalar_lea.vmem [#allocation1], 1
      %2107 = vst [vmem:[%s2106] ss:$4 sm:$0xff] %v2091
      %s2109 = scalar_lea.vmem [#allocation1], 2
      %2110 = vst [vmem:[%s2109] ss:$4 sm:$0xff] %v2092
      %s2112 = scalar_lea.vmem [#allocation1], 3
      %2113 = vst [vmem:[%s2112] ss:$4 sm:$0xff] %v2093
      %v2114 = vld.sshfl [vmem:[#allocation1] sm:$0xff pattern:$0x73625140]
      %v2123 = vunpack.c.l.b16 %v2095
      %v2124 = vunpack.c.l.b16 %v2096
      %v2125 = vunpack.c.l.b16 %v2097
      %v2126 = vunpack.c.l.b16 %v2098
      %v2127 = vunpack.c.l.b16 %v2099
      %v2128 = vunpack.c.l.b16 %v2100
      %v2129 = vunpack.c.l.b16 %v2101
      %v2130 = vunpack.c.l.b16 %v2102
      %v2131 = vpack.c.b16 %v2124, %v2123
      %v2132 = vpack.c.b16 %v2126, %v2125
      %v2133 = vpack.c.b16 %v2128, %v2127
      %v2134 = vpack.c.b16 %v2130, %v2129
      %v2139 = vsel %vm380, %v2114, 0
      %2141 = vmatpush.bf16.msra.mxu0 0
      %2142 = vmatpush.bf16.msra.mxu0 0
      %2143 = vmatpush.bf16.msra.mxu0 0
      %2144 = vmatpush.bf16.msra.mxu0 0
      %2145 = vmatpush.bf16.msra.mxu0 %v2134
      %2146 = vmatpush.bf16.msra.mxu0 %v2133
      %2147 = vmatpush.bf16.msra.mxu0 %v2132
      %2148 = vmatpush.bf16.msra.mxu0 %v2131
      %2149 = vmatmul.bf16.gmra.mxu0 %v2139
      %v2150 = vpop.f32.mrf.mxu0
      %v2151 = vadd.f32 0.0, %v2150
      %v2152 = vpop.f32.mrf.mxu0
      %v2153 = vadd.f32 0.0, %v2152
      %2154 = vdwg.mxu0
      %v2155 = vadd.f32 %v2087, %v2151
      %v2156 = vadd.f32 %v2088, %v2153
      %v2157 = vld [vmem:[%s2089] sm:$0x7]
      %v2158 = vld [vmem:[%s2089 + $0x4] sm:$0x7]
      %v2159 = vld [vmem:[%s2089 + $0x8] sm:$0x7]
      %v2160 = vld [vmem:[%s2089 + $0xc] sm:$0x7]
      %v2165 = vrot.slane %v2157, 2
      %v2166 = vrot.slane %v2158, 2
      %v2167 = vrot.slane %v2159, 2
      %v2168 = vrot.slane %v2160, 2
      %v2171 = vsel %vm250, %v2157, %v2165
      %v2172 = vsel %vm254, %v2157, %v2165
      %v2174 = vrot.slane %v2172, 2
      %v2177 = vsel %vm250, %v2158, %v2166
      %v2178 = vsel %vm254, %v2158, %v2166
      %v2180 = vrot.slane %v2178, 2
      %v2183 = vsel %vm250, %v2159, %v2167
      %v2184 = vsel %vm254, %v2159, %v2167
      %v2186 = vrot.slane %v2184, 2
      %v2189 = vsel %vm250, %v2160, %v2168
      %v2190 = vsel %vm254, %v2160, %v2168
      %v2192 = vrot.slane %v2190, 2
      %v2193 = vshrl.u32 %v2171, 16
      %v2195 = vrot.slane %v2193, 6
      %v2196 = vshll.u32 %v2171, 16
      %v2198 = vrot.slane %v2196, 7
      %v2199 = vor.u32 %v2195, %v2198
      %v2200 = vrot.slane %v2199, 2
      %v2202 = vshll.u32 %v2174, 16
      %v2204 = vrot.slane %v2202, 7
      %v2205 = vsel %vm282, %v2200, %v2204
      %v2206 = vshrl.u32 %v2177, 16
      %v2208 = vrot.slane %v2206, 6
      %v2209 = vshll.u32 %v2177, 16
      %v2211 = vrot.slane %v2209, 7
      %v2212 = vor.u32 %v2208, %v2211
      %v2213 = vrot.slane %v2212, 2
      %v2215 = vshll.u32 %v2180, 16
      %v2217 = vrot.slane %v2215, 7
      %v2218 = vsel %vm282, %v2213, %v2217
      %v2219 = vshrl.u32 %v2183, 16
      %v2221 = vrot.slane %v2219, 6
      %v2222 = vshll.u32 %v2183, 16
      %v2224 = vrot.slane %v2222, 7
      %v2225 = vor.u32 %v2221, %v2224
      %v2226 = vrot.slane %v2225, 2
      %v2228 = vshll.u32 %v2186, 16
      %v2230 = vrot.slane %v2228, 7
      %v2231 = vsel %vm282, %v2226, %v2230
      %v2232 = vshrl.u32 %v2189, 16
      %v2234 = vrot.slane %v2232, 6
      %v2235 = vshll.u32 %v2189, 16
      %v2237 = vrot.slane %v2235, 7
      %v2238 = vor.u32 %v2234, %v2237
      %v2239 = vrot.slane %v2238, 2
      %v2241 = vshll.u32 %v2192, 16
      %v2243 = vrot.slane %v2241, 7
      %v2244 = vsel %vm282, %v2239, %v2243
      %s2245 = scalar_lea.vmem %s3, 224
      %v2246 = vld [vmem:[%s2245] sm:$0xf]
      %v2247 = vld [vmem:[%s2245 + $0x4] sm:$0xf]
      %v2248 = vld [vmem:[%s2245 + $0x8] sm:$0xf]
      %v2249 = vld [vmem:[%s2245 + $0xc] sm:$0xf]
      %v2250 = vld [vmem:[%s2245 + $0x10] sm:$0xf]
      %v2251 = vld [vmem:[%s2245 + $0x14] sm:$0xf]
      %v2252 = vld [vmem:[%s2245 + $0x18] sm:$0xf]
      %v2253 = vld [vmem:[%s2245 + $0x1c] sm:$0xf]
      %2255 = vst [vmem:[#allocation1] ss:$4 sm:$0xff] %v2205
      %s2257 = scalar_lea.vmem [#allocation1], 1
      %2258 = vst [vmem:[%s2257] ss:$4 sm:$0xff] %v2218
      %s2260 = scalar_lea.vmem [#allocation1], 2
      %2261 = vst [vmem:[%s2260] ss:$4 sm:$0xff] %v2231
      %s2263 = scalar_lea.vmem [#allocation1], 3
      %2264 = vst [vmem:[%s2263] ss:$4 sm:$0xff] %v2244
      %v2265 = vld.sshfl [vmem:[#allocation1] sm:$0xff pattern:$0x73625140]
      %v2274 = vunpack.c.l.b16 %v2246
      %v2275 = vunpack.c.l.b16 %v2247
      %v2276 = vunpack.c.l.b16 %v2248
      %v2277 = vunpack.c.l.b16 %v2249
      %v2278 = vunpack.c.l.b16 %v2250
      %v2279 = vunpack.c.l.b16 %v2251
      %v2280 = vunpack.c.l.b16 %v2252
      %v2281 = vunpack.c.l.b16 %v2253
      %v2282 = vpack.c.b16 %v2275, %v2274
      %v2283 = vpack.c.b16 %v2277, %v2276
      %v2284 = vpack.c.b16 %v2279, %v2278
      %v2285 = vpack.c.b16 %v2281, %v2280
      %v2290 = vsel %vm380, %v2265, 0
      %2292 = vmatpush.bf16.msra.mxu0 0
      %2293 = vmatpush.bf16.msra.mxu0 0
      %2294 = vmatpush.bf16.msra.mxu0 0
      %2295 = vmatpush.bf16.msra.mxu0 0
      %2296 = vmatpush.bf16.msra.mxu0 %v2285
      %2297 = vmatpush.bf16.msra.mxu0 %v2284
      %2298 = vmatpush.bf16.msra.mxu0 %v2283
      %2299 = vmatpush.bf16.msra.mxu0 %v2282
      %2300 = vmatmul.bf16.gmra.mxu0 %v2290
      %v2301 = vpop.f32.mrf.mxu0
      %v2302 = vadd.f32 0.0, %v2301
      %v2303 = vpop.f32.mrf.mxu0
      %v2304 = vadd.f32 0.0, %v2303
      %2305 = vdwg.mxu0
      %v2306 = vadd.f32 %v2155, %v2302
      %v2307 = vadd.f32 %v2156, %v2304
      %v2308 = vld [vmem:[%s2089] sm:$0x6]
      %v2309 = vld [vmem:[%s2089 + $0x4] sm:$0x6]
      %v2310 = vld [vmem:[%s2089 + $0x8] sm:$0x6]
      %v2311 = vld [vmem:[%s2089 + $0xc] sm:$0x6]
      %v2316 = vrot.slane %v2308, 2
      %v2317 = vrot.slane %v2309, 2
      %v2318 = vrot.slane %v2310, 2
      %v2319 = vrot.slane %v2311, 2
      %v2322 = vsel %vm250, %v2308, %v2316
      %v2324 = vsel %vm254, %v2308, %v2316
      %v2326 = vrot.slane %v2324, 2
      %v2329 = vsel %vm250, %v2309, %v2317
      %v2331 = vsel %vm254, %v2309, %v2317
      %v2333 = vrot.slane %v2331, 2
      %v2336 = vsel %vm250, %v2310, %v2318
      %v2338 = vsel %vm254, %v2310, %v2318
      %v2340 = vrot.slane %v2338, 2
      %v2343 = vsel %vm250, %v2311, %v2319
      %v2345 = vsel %vm254, %v2311, %v2319
      %v2347 = vrot.slane %v2345, 2
      %v2348 = vrot.slane %v2322, 7
      %v2349 = vrot.slane %v2348, 2
      %v2350 = vrot.slane %v2326, 7
      %v2351 = vsel %vm495, %v2349, %v2350
      %v2352 = vrot.slane %v2329, 7
      %v2353 = vrot.slane %v2352, 2
      %v2354 = vrot.slane %v2333, 7
      %v2355 = vsel %vm495, %v2353, %v2354
      %v2356 = vrot.slane %v2336, 7
      %v2357 = vrot.slane %v2356, 2
      %v2358 = vrot.slane %v2340, 7
      %v2359 = vsel %vm495, %v2357, %v2358
      %v2360 = vrot.slane %v2343, 7
      %v2361 = vrot.slane %v2360, 2
      %v2362 = vrot.slane %v2347, 7
      %v2363 = vsel %vm495, %v2361, %v2362
      %s2364 = scalar_lea.vmem %s3, 256
      %v2365 = vld [vmem:[%s2364] sm:$0xf]
      %v2366 = vld [vmem:[%s2364 + $0x4] sm:$0xf]
      %v2367 = vld [vmem:[%s2364 + $0x8] sm:$0xf]
      %v2368 = vld [vmem:[%s2364 + $0xc] sm:$0xf]
      %v2369 = vld [vmem:[%s2364 + $0x10] sm:$0xf]
      %v2370 = vld [vmem:[%s2364 + $0x14] sm:$0xf]
      %v2371 = vld [vmem:[%s2364 + $0x18] sm:$0xf]
      %v2372 = vld [vmem:[%s2364 + $0x1c] sm:$0xf]
      %2374 = vst [vmem:[#allocation1] ss:$4 sm:$0xff] %v2351
      %s2376 = scalar_lea.vmem [#allocation1], 1
      %2377 = vst [vmem:[%s2376] ss:$4 sm:$0xff] %v2355
      %s2379 = scalar_lea.vmem [#allocation1], 2
      %2380 = vst [vmem:[%s2379] ss:$4 sm:$0xff] %v2359
      %s2382 = scalar_lea.vmem [#allocation1], 3
      %2383 = vst [vmem:[%s2382] ss:$4 sm:$0xff] %v2363
      %v2384 = vld.sshfl [vmem:[#allocation1] sm:$0xff pattern:$0x73625140]
      %v2393 = vunpack.c.l.b16 %v2365
      %v2394 = vunpack.c.l.b16 %v2366
      %v2395 = vunpack.c.l.b16 %v2367
      %v2396 = vunpack.c.l.b16 %v2368
      %v2397 = vunpack.c.l.b16 %v2369
      %v2398 = vunpack.c.l.b16 %v2370
      %v2399 = vunpack.c.l.b16 %v2371
      %v2400 = vunpack.c.l.b16 %v2372
      %v2401 = vpack.c.b16 %v2394, %v2393
      %v2402 = vpack.c.b16 %v2396, %v2395
      %v2403 = vpack.c.b16 %v2398, %v2397
      %v2404 = vpack.c.b16 %v2400, %v2399
      %v2409 = vsel %vm380, %v2384, 0
      %2411 = vmatpush.bf16.msra.mxu0 0
      %2412 = vmatpush.bf16.msra.mxu0 0
      %2413 = vmatpush.bf16.msra.mxu0 0
      %2414 = vmatpush.bf16.msra.mxu0 0
      %2415 = vmatpush.bf16.msra.mxu0 %v2404
      %2416 = vmatpush.bf16.msra.mxu0 %v2403
      %2417 = vmatpush.bf16.msra.mxu0 %v2402
      %2418 = vmatpush.bf16.msra.mxu0 %v2401
      %2419 = vmatmul.bf16.gmra.mxu0 %v2409
      %v2420 = vpop.f32.mrf.mxu0
      %v2421 = vadd.f32 0.0, %v2420
      %v2422 = vpop.f32.mrf.mxu0
      %v2423 = vadd.f32 0.0, %v2422
      %2424 = vdwg.mxu0
      %v2425 = vadd.f32 %v2306, %v2421
      %v2426 = vadd.f32 %v2307, %v2423
      %v2427 = vld [vmem:[%s4] sm:$0x1]
      %v2429 = vperm.slane %v2427, 0
      %v2431 = vadd.f32 %v2425, %v2429
      %v2432 = vadd.f32 %v2426, %v2429
      %2437 = vst [vmem:[#allocation1] ss:$2 sm:$0xff] %v1416
      %s2438 = scalar_lea.vmem [#allocation1], 1
      %2439 = vst [vmem:[%s2438] ss:$2 sm:$0xff] %v1417
      %s2440 = scalar_lea.vmem [#allocation1], 16
      %2441 = vst [vmem:[%s2440] ss:$2 sm:$0xff] %v1418
      %s2442 = scalar_lea.vmem [#allocation1], 17
      %2443 = vst [vmem:[%s2442] ss:$2 sm:$0xff] %v1419
      %v2444 = vld.sshfl [vmem:[#allocation1] sm:$0xff pattern:$0x75316420]
      %v2445 = vld.sshfl [vmem:[#allocation1 + $0x10] sm:$0xff pattern:$0x75316420]
      %v2448 = vadd.f32 %v2431, %v2444
      %v2449 = vadd.f32 %v2432, %v2445
      %v2450 = vmax.f32 %v2448, 0.0
      %v2451 = vmax.f32 %v2449, 0.0
      %v2452 = vpack.c.bf16 %v2450, %v2450
      %v2453 = vpack.c.bf16 %v2451, %v2451
      %vm2454 = vcmask 519168
      %2455 = vst.msk [vmem:[%s224] sm:$0xf] %vm2454, %v2452
      %2456 = vst.msk [vmem:[%s224 + $0x4] sm:$0xf] %vm2454, %v2453
      %p2457 = scmp.lt.s32.totalorder %s16, 1
      %s2458 = scalar_select %p2457, %s16, 1
      %s2459 = smul.addr %s2458, 2
      %s2460 = smul.addr %s2459, 4
      %s2461 = scalar_lea.vmem %s5, %s2460
      // Predicated region
      $region41: #{backbone_base_forward.8} parent=39 // pred_check
        %p2462 = pneg %p144
      $region42: #{backbone_base_forward.8} parent=39 // pred_check_branch
        %2464 = sbr.rel (%p2462) target = $region44
      $region43: #{backbone_base_forward.8} parent=39 // pred_region
        _
      $region44: #{backbone_base_forward.8} parent=39 // pred_fallthru
        _
    $region40: #{backbone_base_forward.8} parent=5 // pred_fallthru
      _
    %p2465 = scmp.le.s32.totalorder 2, %s11
    // Predicated region
    $region45: #{backbone_base_forward.8} parent=5 // pred_check
      %p2466 = pneg %p2465
    $region46: #{backbone_base_forward.8} parent=5 // pred_check_branch
      %2468 = sbr.rel (%p2466) target = $region48
    $region47: #{backbone_base_forward.8} parent=5 // pred_region
      %s2469 = ssub.s32 %s11, 2
      // Predicated region
      $region49: #{backbone_base_forward.8} parent=47 // pred_check
        %p2470 = pneg %p150
      $region50: #{backbone_base_forward.8} parent=47 // pred_check_branch
        %2472 = sbr.rel (%p2470) target = $region52
      $region51: #{backbone_base_forward.8} parent=47 // pred_region
        %p2473 = scmp.lt.s32.totalorder %s17, 1
        %s2474 = scalar_select %p2473, %s17, 1
        %s2475 = smul.addr %s2474, 2
        %s2476 = smul.addr %s2475, 4
        %s2477 = scalar_lea.vmem %s5, %s2476
      $region52: #{backbone_base_forward.8} parent=47 // pred_fallthru
        _
    $region48: #{backbone_base_forward.8} parent=5 // pred_fallthru
      _
  $region6: #{backbone_base_forward.8} parent=0 // loop_footer
    %s15 = sadd.s32 1, %s11
  $region7: #{backbone_base_forward.8} parent=0 // loop_footer_branch
    %10 = sbr.rel target = $region3
  $region8: #{backbone_base_forward.8} parent=0 // loop_exit
    _

// kernel: backbone_base_forward.11
$region0: #{backbone_base_forward.11}
  #allocation0 [shape = 'u32[]', space=smem, size = 0x4, offset = 0x4, fixed_abs, tag = 'smem constant byte address 0x4 - core index']
  #allocation1 [shape = 'u32[72,128]{1,0:T(1,128)}', space=vmem, size = 0x9000, scoped, tag = 'internal scratch']
  #allocation2 [shape = 'bf16[4,4,128]{2,1,0:T(4,128)(2,1)}', space=vmem, size = 0x1000, scoped, tag = 'scratch operand']
  %s0 = inlined_call_operand.vmem [shape: bf16[2,4,4,128], index: 0, kind: input, shape index: {}]
  %s1 = inlined_call_operand.vmem [shape: bf16[9,128,128], index: 1, kind: input, shape index: {}]
  %s2 = inlined_call_operand.vmem [shape: f32[1,128], index: 2, kind: input, shape index: {}]
  %s3 = inlined_call_operand.vmem [shape: bf16[9,128,128], index: 3, kind: input, shape index: {}]
  %s4 = inlined_call_operand.vmem [shape: f32[1,128], index: 4, kind: input, shape index: {}]
  %s5 = inlined_call_operand.vmem [shape: bf16[2,4,128], index: 5, kind: output, shape index: {}]
  %s6 = sld [smem:[#allocation0]]
  $region53: #{backbone_base_forward.11} parent=0
    _
  %s8 = ssub.s32 1, %s6
  %s9 = scalar_select 0, %s8, %s6
  loop: start=0, step=1, limit=4
  $region2: #{backbone_base_forward.11} parent=0 // loop_pre_header
    _
  $region3: #{backbone_base_forward.11} parent=0 // loop_header
    %s11 = sphi 0, %s15
    %p12 = scmp.ge.s32.totalorder %s11, 4
    %s21 = sphi 0, %s23
    %s24 = sphi 0, %s21
    %s25 = sphi 0, %s24
    %s41 = sphi 0, %s25
    %s45 = sphi 0, %s45
    %s47 = sphi 0, %s45
    %s48 = sphi 0, %s47
    %s62 = sphi 0, %s48
    %s66 = sphi 0, %s66
    %s68 = sphi 0, %s66
    %s69 = sphi 0, %s68
    %s83 = sphi 0, %s69
    %s87 = sphi 0, %s87
    %s89 = sphi 0, %s87
    %s90 = sphi 0, %s89
    %s104 = sphi 0, %s90
    %s108 = sphi 0, %s108
    %s110 = sphi 0, %s108
    %s111 = sphi 0, %s110
    %s125 = sphi 0, %s111
    %s131 = sphi 0, %s133
    %s134 = sphi 0, %s131
    %s135 = sphi 0, %s134
    %s151 = sphi 0, %s135
  $region4: #{backbone_base_forward.11} parent=0 // loop_header_branch
    %14 = sbr.rel (%p12) target = $region8
  $region5: #{backbone_base_forward.11} parent=0 // loop_body
    %s16 = ssub.s32 %s11, 1
    %s17 = ssub.s32 %s11, 2
    %s18 = sadd.s32 %s11, 1
    %s19 = ssub.s32 %s11, %s18
    %p20 = scmp.eq.s32.totalorder %s19, 0
    %s22 = sadd.s32 %s21, 1
    %s23 = scalar_select %p20, %s21, %s22
    %p26 = pneg %p20
    %p27 = scmp.eq.s32.totalorder %s11, 1
    %p28 = por %p26, %p27
    %p29 = scmp.ne.s32.totalorder %s21, %s24
    %p30 = scmp.eq.s32.totalorder %s11, 0
    %p31 = por %p29, %p30
    %p32 = scmp.ne.s32.totalorder %s21, %s24
    %p33 = scmp.eq.s32.totalorder %s16, 1
    %p34 = por %p32, %p33
    %p35 = scmp.ne.s32.totalorder %s24, %s25
    %p36 = scmp.eq.s32.totalorder %s16, 0
    %p37 = por %p35, %p36
    %p38 = scmp.ne.s32.totalorder %s24, %s25
    %p39 = scmp.eq.s32.totalorder %s17, 1
    %p40 = por %p38, %p39
    %p42 = scmp.ne.s32.totalorder %s25, %s41
    %p43 = scmp.eq.s32.totalorder %s17, 0
    %p44 = por %p42, %p43
    %s46 = sadd.s32 %s45, 1
    %p49 = scmp.eq.s32.totalorder %s11, 1
    %p50 = scmp.ne.s32.totalorder %s45, %s47
    %p51 = scmp.eq.s32.totalorder %s11, 0
    %p52 = por %p50, %p51
    %p53 = scmp.ne.s32.totalorder %s45, %s47
    %p54 = scmp.eq.s32.totalorder %s16, 1
    %p55 = por %p53, %p54
    %p56 = scmp.ne.s32.totalorder %s47, %s48
    %p57 = scmp.eq.s32.totalorder %s16, 0
    %p58 = por %p56, %p57
    %p59 = scmp.ne.s32.totalorder %s47, %s48
    %p60 = scmp.eq.s32.totalorder %s17, 1
    %p61 = por %p59, %p60
    %p63 = scmp.ne.s32.totalorder %s48, %s62
    %p64 = scmp.eq.s32.totalorder %s17, 0
    %p65 = por %p63, %p64
    %s67 = sadd.s32 %s66, 1
    %p70 = scmp.eq.s32.totalorder %s11, 1
    %p71 = scmp.ne.s32.totalorder %s66, %s68
    %p72 = scmp.eq.s32.totalorder %s11, 0
    %p73 = por %p71, %p72
    %p74 = scmp.ne.s32.totalorder %s66, %s68
    %p75 = scmp.eq.s32.totalorder %s16, 1
    %p76 = por %p74, %p75
    %p77 = scmp.ne.s32.totalorder %s68, %s69
    %p78 = scmp.eq.s32.totalorder %s16, 0
    %p79 = por %p77, %p78
    %p80 = scmp.ne.s32.totalorder %s68, %s69
    %p81 = scmp.eq.s32.totalorder %s17, 1
    %p82 = por %p80, %p81
    %p84 = scmp.ne.s32.totalorder %s69, %s83
    %p85 = scmp.eq.s32.totalorder %s17, 0
    %p86 = por %p84, %p85
    %s88 = sadd.s32 %s87, 1
    %p91 = scmp.eq.s32.totalorder %s11, 1
    %p92 = scmp.ne.s32.totalorder %s87, %s89
    %p93 = scmp.eq.s32.totalorder %s11, 0
    %p94 = por %p92, %p93
    %p95 = scmp.ne.s32.totalorder %s87, %s89
    %p96 = scmp.eq.s32.totalorder %s16, 1
    %p97 = por %p95, %p96
    %p98 = scmp.ne.s32.totalorder %s89, %s90
    %p99 = scmp.eq.s32.totalorder %s16, 0
    %p100 = por %p98, %p99
    %p101 = scmp.ne.s32.totalorder %s89, %s90
    %p102 = scmp.eq.s32.totalorder %s17, 1
    %p103 = por %p101, %p102
    %p105 = scmp.ne.s32.totalorder %s90, %s104
    %p106 = scmp.eq.s32.totalorder %s17, 0
    %p107 = por %p105, %p106
    %s109 = sadd.s32 %s108, 1
    %p112 = scmp.eq.s32.totalorder %s11, 1
    %p113 = scmp.ne.s32.totalorder %s108, %s110
    %p114 = scmp.eq.s32.totalorder %s11, 0
    %p115 = por %p113, %p114
    %p116 = scmp.ne.s32.totalorder %s108, %s110
    %p117 = scmp.eq.s32.totalorder %s16, 1
    %p118 = por %p116, %p117
    %p119 = scmp.ne.s32.totalorder %s110, %s111
    %p120 = scmp.eq.s32.totalorder %s16, 0
    %p121 = por %p119, %p120
    %p122 = scmp.ne.s32.totalorder %s110, %s111
    %p123 = scmp.eq.s32.totalorder %s17, 1
    %p124 = por %p122, %p123
    %p126 = scmp.ne.s32.totalorder %s111, %s125
    %p127 = scmp.eq.s32.totalorder %s17, 0
    %p128 = por %p126, %p127
    %s129 = ssub.s32 %s11, %s18
    %p130 = scmp.eq.s32.totalorder %s129, 0
    %s132 = sadd.s32 %s131, 1
    %s133 = scalar_select %p130, %s131, %s132
    %p136 = pneg %p130
    %p137 = scmp.eq.s32.totalorder %s11, 1
    %p138 = por %p136, %p137
    %p139 = scmp.ne.s32.totalorder %s131, %s134
    %p140 = scmp.eq.s32.totalorder %s11, 0
    %p141 = por %p139, %p140
    %p142 = scmp.ne.s32.totalorder %s131, %s134
    %p143 = scmp.eq.s32.totalorder %s16, 1
    %p144 = por %p142, %p143
    %p145 = scmp.ne.s32.totalorder %s134, %s135
    %p146 = scmp.eq.s32.totalorder %s16, 0
    %p147 = por %p145, %p146
    %p148 = scmp.ne.s32.totalorder %s134, %s135
    %p149 = scmp.eq.s32.totalorder %s17, 1
    %p150 = por %p148, %p149
    %p152 = scmp.ne.s32.totalorder %s135, %s151
    %p153 = scmp.eq.s32.totalorder %s17, 0
    %p154 = por %p152, %p153
    %p155 = scmp.le.s32.totalorder 1, %s11
    %p156 = scmp.lt.s32.totalorder %s11, 3
    %p157 = pnand %p155, %p156
    %p158 = pneg %p157
    // Predicated region
    $region9: #{backbone_base_forward.11} parent=5 // pred_check
      _
    $region10: #{backbone_base_forward.11} parent=5 // pred_check_branch
      %160 = sbr.rel (%p157) target = $region12
    $region11: #{backbone_base_forward.11} parent=5 // pred_region
      %s161 = ssub.s32 %s11, 1
      // Predicated region
      $region13: #{backbone_base_forward.11} parent=11 // pred_check
        %p162 = pneg %p58
      $region14: #{backbone_base_forward.11} parent=11 // pred_check_branch
        %164 = sbr.rel (%p162) target = $region16
      $region15: #{backbone_base_forward.11} parent=11 // pred_region
        _
      $region16: #{backbone_base_forward.11} parent=11 // pred_fallthru
        _
      // Predicated region
      $region17: #{backbone_base_forward.11} parent=11 // pred_check
        %p165 = pneg %p79
      $region18: #{backbone_base_forward.11} parent=11 // pred_check_branch
        %167 = sbr.rel (%p165) target = $region20
      $region19: #{backbone_base_forward.11} parent=11 // pred_region
        _
      $region20: #{backbone_base_forward.11} parent=11 // pred_fallthru
        _
      // Predicated region
      $region21: #{backbone_base_forward.11} parent=11 // pred_check
        %p168 = pneg %p100
      $region22: #{backbone_base_forward.11} parent=11 // pred_check_branch
        %170 = sbr.rel (%p168) target = $region24
      $region23: #{backbone_base_forward.11} parent=11 // pred_region
        _
      $region24: #{backbone_base_forward.11} parent=11 // pred_fallthru
        _
      // Predicated region
      $region25: #{backbone_base_forward.11} parent=11 // pred_check
        %p171 = pneg %p121
      $region26: #{backbone_base_forward.11} parent=11 // pred_check_branch
        %173 = sbr.rel (%p171) target = $region28
      $region27: #{backbone_base_forward.11} parent=11 // pred_region
        _
      $region28: #{backbone_base_forward.11} parent=11 // pred_fallthru
        _
    $region12: #{backbone_base_forward.11} parent=5 // pred_fallthru
      _
    %p174 = scmp.lt.s32.totalorder %s11, 2
    // Predicated region
    $region29: #{backbone_base_forward.11} parent=5 // pred_check
      %p175 = pneg %p174
    $region30: #{backbone_base_forward.11} parent=5 // pred_check_branch
      %177 = sbr.rel (%p175) target = $region32
    $region31: #{backbone_base_forward.11} parent=5 // pred_region
      // Predicated region
      $region33: #{backbone_base_forward.11} parent=31 // pred_check
        %p178 = pneg %p31
      $region34: #{backbone_base_forward.11} parent=31 // pred_check_branch
        %180 = sbr.rel (%p178) target = $region36
      $region35: #{backbone_base_forward.11} parent=31 // pred_region
        %p181 = scmp.lt.s32.totalorder %s11, 1
        %s182 = scalar_select %p181, %s11, 1
        %s183 = smul.addr %s182, 4
        %s184 = smul.addr %s183, 2
        %s185 = scalar_lea.vmem %s0, %s184
      $region36: #{backbone_base_forward.11} parent=31 // pred_fallthru
        _
    $region32: #{backbone_base_forward.11} parent=5 // pred_fallthru
      _
    %p186 = scmp.le.s32.totalorder 1, %s11
    %p187 = scmp.lt.s32.totalorder %s11, 3
    %p188 = pnand %p186, %p187
    %p189 = pneg %p188
    // Predicated region
    $region37: #{backbone_base_forward.11} parent=5 // pred_check
      _
    $region38: #{backbone_base_forward.11} parent=5 // pred_check_branch
      %191 = sbr.rel (%p188) target = $region40
    $region39: #{backbone_base_forward.11} parent=5 // pred_region
      %s192 = ssub.s32 %s11, 1
      %p193 = scmp.lt.s32.totalorder %s16, 1
      %s194 = scalar_select %p193, %s16, 1
      %s195 = smul.addr %s194, 4
      %s196 = smul.addr %s195, 2
      %s197 = scalar_lea.vmem %s0, %s196
      %p198 = pneg %p37
      %p199 = pneg %p34
      %p200 = pneg %p58
      %p201 = pneg %p55
      %p202 = pneg %p79
      %p203 = pneg %p76
      %p204 = pneg %p100
      %p205 = pneg %p97
      %p206 = pneg %p121
      %p207 = pneg %p118
      %p208 = pneg %p147
      %p209 = pneg %p144
      %p210 = scmp.lt.s32.totalorder %s16, 1
      %s211 = scalar_select %p210, %s16, 1
      %s212 = smul.addr %s211, 2
      %s213 = scalar_lea.vmem %s5, %s212
      %p214 = scmp.lt.s32.totalorder %s16, 1
      %s215 = scalar_select %p214, %s16, 1
      %s216 = smul.addr %s215, 4
      %s217 = smul.addr %s216, 2
      %s218 = scalar_lea.vmem %s0, %s217
      %p219 = scmp.lt.s32.totalorder %s16, 1
      %s220 = scalar_select %p219, %s16, 1
      %s221 = smul.addr %s220, 2
      %s222 = scalar_lea.vmem %s5, %s221
      %v224 = vld [vmem:[%s218] sm:$0x1]
      %v225 = vld [vmem:[%s218 + $0x2] sm:$0x1]
      %v226 = vld [vmem:[%s1] sm:$0xf]
      %v227 = vld [vmem:[%s1 + $0x4] sm:$0xf]
      %v228 = vld [vmem:[%s1 + $0x8] sm:$0xf]
      %v229 = vld [vmem:[%s1 + $0xc] sm:$0xf]
      %v230 = vld [vmem:[%s1 + $0x10] sm:$0xf]
      %v231 = vld [vmem:[%s1 + $0x14] sm:$0xf]
      %v232 = vld [vmem:[%s1 + $0x18] sm:$0xf]
      %v233 = vld [vmem:[%s1 + $0x1c] sm:$0xf]
      %v234 = vld [vmem:[%s1 + $0x20] sm:$0xf]
      %v235 = vld [vmem:[%s1 + $0x24] sm:$0xf]
      %v236 = vld [vmem:[%s1 + $0x28] sm:$0xf]
      %v237 = vld [vmem:[%s1 + $0x2c] sm:$0xf]
      %v238 = vld [vmem:[%s1 + $0x30] sm:$0xf]
      %v239 = vld [vmem:[%s1 + $0x34] sm:$0xf]
      %v240 = vld [vmem:[%s1 + $0x38] sm:$0xf]
      %v241 = vld [vmem:[%s1 + $0x3c] sm:$0xf]
      %v242 = vld [vmem:[%s218] sm:$0x3]
      %v243 = vld [vmem:[%s218 + $0x2] sm:$0x3]
      %v246 = vrot.slane %v242, 1
      %v247 = vrot.slane %v242, 2
      %v248 = vrot.slane %v242, 3
      %v249 = vrot.slane %v243, 1
      %v250 = vrot.slane %v243, 2
      %v251 = vrot.slane %v243, 3
      %vm252 = vcmask 1040384
      %v255 = vsel %vm252, %v242, %v246
      %vm256 = vcmask 1042434
      %v259 = vsel %vm256, %v247, %v248
      %vm260 = vcmask 1041408
      %v261 = vsel %vm260, %v255, %v259
      %vm262 = vcmask 1041409
      %v263 = vsel %vm262, %v242, %v246
      %vm264 = vcmask 1043459
      %v265 = vsel %vm264, %v247, %v248
      %vm266 = vcmask 1042433
      %v267 = vsel %vm266, %v263, %v265
      %v269 = vrot.slane %v267, 1
      %v272 = vsel %vm252, %v243, %v249
      %v275 = vsel %vm256, %v250, %v251
      %v276 = vsel %vm260, %v272, %v275
      %v277 = vsel %vm262, %v243, %v249
      %v278 = vsel %vm264, %v250, %v251
      %v279 = vsel %vm266, %v277, %v278
      %v281 = vrot.slane %v279, 1
      %vm282 = vsmask.f32 256
      %vm283 = vsmask.f32 1284
      %vm284 = vmor %vm282, %vm283
      %vm285 = vsmask.f32 2312
      %vm286 = vmor %vm284, %vm285
      %vm287 = vsmask.f32 3340
      %vm288 = vmor %vm286, %vm287
      %vm289 = vsmask.f32 4368
      %vm290 = vmor %vm288, %vm289
      %vm291 = vsmask.f32 5396
      %vm292 = vmor %vm290, %vm291
      %vm293 = vsmask.f32 6424
      %vm294 = vmor %vm292, %vm293
      %vm295 = vsmask.f32 7452
      %vm296 = vmor %vm294, %vm295
      %v297 = vshrl.u32 %v261, 16
      %v299 = vrot.slane %v297, 7
      %v300 = vrot.slane %v299, 1
      %v302 = vshll.u32 %v269, 16
      %v304 = vsel %vm296, %v300, %v302
      %v305 = vshrl.u32 %v276, 16
      %v307 = vrot.slane %v305, 7
      %v308 = vrot.slane %v307, 1
      %v310 = vshll.u32 %v281, 16
      %v312 = vsel %vm296, %v308, %v310
      %s313 = scalar_lea.vmem %s1, 64
      %v314 = vld [vmem:[%s313] sm:$0xf]
      %v315 = vld [vmem:[%s313 + $0x4] sm:$0xf]
      %v316 = vld [vmem:[%s313 + $0x8] sm:$0xf]
      %v317 = vld [vmem:[%s313 + $0xc] sm:$0xf]
      %v318 = vld [vmem:[%s313 + $0x10] sm:$0xf]
      %v319 = vld [vmem:[%s313 + $0x14] sm:$0xf]
      %v320 = vld [vmem:[%s313 + $0x18] sm:$0xf]
      %v321 = vld [vmem:[%s313 + $0x1c] sm:$0xf]
      %v322 = vld [vmem:[%s313 + $0x20] sm:$0xf]
      %v323 = vld [vmem:[%s313 + $0x24] sm:$0xf]
      %v324 = vld [vmem:[%s313 + $0x28] sm:$0xf]
      %v325 = vld [vmem:[%s313 + $0x2c] sm:$0xf]
      %v326 = vld [vmem:[%s313 + $0x30] sm:$0xf]
      %v327 = vld [vmem:[%s313 + $0x34] sm:$0xf]
      %v328 = vld [vmem:[%s313 + $0x38] sm:$0xf]
      %v329 = vld [vmem:[%s313 + $0x3c] sm:$0xf]
      %331 = vst [vmem:[#allocation1] ss:$9 sm:$0xff] %v304
      %s333 = scalar_lea.vmem [#allocation1], 1
      %334 = vst [vmem:[%s333] ss:$9 sm:$0xff] %v312
      %v335 = vld [vmem:[#allocation1] sm:$0xff]
      %v353 = vunpack.c.l.b16 %v314
      %v354 = vunpack.c.l.b16 %v315
      %v355 = vunpack.c.l.b16 %v316
      %v356 = vunpack.c.l.b16 %v317
      %v357 = vunpack.c.l.b16 %v318
      %v358 = vunpack.c.l.b16 %v319
      %v359 = vunpack.c.l.b16 %v320
      %v360 = vunpack.c.l.b16 %v321
      %v361 = vunpack.c.l.b16 %v322
      %v362 = vunpack.c.l.b16 %v323
      %v363 = vunpack.c.l.b16 %v324
      %v364 = vunpack.c.l.b16 %v325
      %v365 = vunpack.c.l.b16 %v326
      %v366 = vunpack.c.l.b16 %v327
      %v367 = vunpack.c.l.b16 %v328
      %v368 = vunpack.c.l.b16 %v329
      %v369 = vpack.c.b16 %v354, %v353
      %v370 = vpack.c.b16 %v356, %v355
      %v371 = vpack.c.b16 %v358, %v357
      %v372 = vpack.c.b16 %v360, %v359
      %v373 = vpack.c.b16 %v362, %v361
      %v374 = vpack.c.b16 %v364, %v363
      %v375 = vpack.c.b16 %v366, %v365
      %v376 = vpack.c.b16 %v368, %v367
      %385 = vmatpush.bf16.msra.mxu0 %v376
      %386 = vmatpush.bf16.msra.mxu0 %v375
      %387 = vmatpush.bf16.msra.mxu0 %v374
      %388 = vmatpush.bf16.msra.mxu0 %v373
      %389 = vmatpush.bf16.msra.mxu0 %v372
      %390 = vmatpush.bf16.msra.mxu0 %v371
      %391 = vmatpush.bf16.msra.mxu0 %v370
      %392 = vmatpush.bf16.msra.mxu0 %v369
      %393 = vmatmul.bf16.gmra.mxu0 %v335
      %v394 = vpop.f32.mrf.mxu0
      %v395 = vadd.f32 0.0, %v394
      %v396 = vpop.f32.mrf.mxu0
      %397 = vdwg.mxu0
      %399 = vst [vmem:[#allocation1] ss:$9 sm:$0xff] %v224
      %s401 = scalar_lea.vmem [#allocation1], 1
      %402 = vst [vmem:[%s401] ss:$9 sm:$0xff] %v225
      %v403 = vld [vmem:[#allocation1] sm:$0xff]
      %v421 = vunpack.c.l.b16 %v226
      %v422 = vunpack.c.l.b16 %v227
      %v423 = vunpack.c.l.b16 %v228
      %v424 = vunpack.c.l.b16 %v229
      %v425 = vunpack.c.l.b16 %v230
      %v426 = vunpack.c.l.b16 %v231
      %v427 = vunpack.c.l.b16 %v232
      %v428 = vunpack.c.l.b16 %v233
      %v429 = vunpack.c.l.b16 %v234
      %v430 = vunpack.c.l.b16 %v235
      %v431 = vunpack.c.l.b16 %v236
      %v432 = vunpack.c.l.b16 %v237
      %v433 = vunpack.c.l.b16 %v238
      %v434 = vunpack.c.l.b16 %v239
      %v435 = vunpack.c.l.b16 %v240
      %v436 = vunpack.c.l.b16 %v241
      %v437 = vpack.c.b16 %v422, %v421
      %v438 = vpack.c.b16 %v424, %v423
      %v439 = vpack.c.b16 %v426, %v425
      %v440 = vpack.c.b16 %v428, %v427
      %v441 = vpack.c.b16 %v430, %v429
      %v442 = vpack.c.b16 %v432, %v431
      %v443 = vpack.c.b16 %v434, %v433
      %v444 = vpack.c.b16 %v436, %v435
      %453 = vmatpush.bf16.msra.mxu0 %v444
      %454 = vmatpush.bf16.msra.mxu0 %v443
      %455 = vmatpush.bf16.msra.mxu0 %v442
      %456 = vmatpush.bf16.msra.mxu0 %v441
      %457 = vmatpush.bf16.msra.mxu0 %v440
      %458 = vmatpush.bf16.msra.mxu0 %v439
      %459 = vmatpush.bf16.msra.mxu0 %v438
      %460 = vmatpush.bf16.msra.mxu0 %v437
      %461 = vmatmul.bf16.gmra.mxu0 %v403
      %v462 = vpop.f32.mrf.mxu0
      %v463 = vadd.f32 %v395, %v462
      %v464 = vpop.f32.mrf.mxu0
      %465 = vdwg.mxu0
      %v466 = vld [vmem:[%s218] sm:$0x2]
      %v467 = vld [vmem:[%s218 + $0x2] sm:$0x2]
      %469 = vst [vmem:[#allocation1] sm:$0xff] %v466
      %s470 = scalar_lea.vmem [#allocation1], 1
      %v471 = vld [vmem:[%s470] ss:$2 sm:$0xff]
      %473 = vst [vmem:[#allocation1 + $0x10] sm:$0xff] %v467
      %s474 = scalar_lea.vmem [#allocation1], 17
      %v475 = vld [vmem:[%s474] ss:$2 sm:$0xff]
      %s476 = scalar_lea.vmem %s1, 128
      %v477 = vld [vmem:[%s476] sm:$0xf]
      %v478 = vld [vmem:[%s476 + $0x4] sm:$0xf]
      %v479 = vld [vmem:[%s476 + $0x8] sm:$0xf]
      %v480 = vld [vmem:[%s476 + $0xc] sm:$0xf]
      %v481 = vld [vmem:[%s476 + $0x10] sm:$0xf]
      %v482 = vld [vmem:[%s476 + $0x14] sm:$0xf]
      %v483 = vld [vmem:[%s476 + $0x18] sm:$0xf]
      %v484 = vld [vmem:[%s476 + $0x1c] sm:$0xf]
      %v485 = vld [vmem:[%s476 + $0x20] sm:$0xf]
      %v486 = vld [vmem:[%s476 + $0x24] sm:$0xf]
      %v487 = vld [vmem:[%s476 + $0x28] sm:$0xf]
      %v488 = vld [vmem:[%s476 + $0x2c] sm:$0xf]
      %v489 = vld [vmem:[%s476 + $0x30] sm:$0xf]
      %v490 = vld [vmem:[%s476 + $0x34] sm:$0xf]
      %v491 = vld [vmem:[%s476 + $0x38] sm:$0xf]
      %v492 = vld [vmem:[%s476 + $0x3c] sm:$0xf]
      %493 = vst [vmem:[#allocation1] ss:$9 sm:$0xff] %v471
      %s494 = scalar_lea.vmem [#allocation1], 1
      %495 = vst [vmem:[%s494] ss:$9 sm:$0xff] %v475
      %v496 = vld [vmem:[#allocation1] sm:$0xff]
      %v514 = vunpack.c.l.b16 %v477
      %v515 = vunpack.c.l.b16 %v478
      %v516 = vunpack.c.l.b16 %v479
      %v517 = vunpack.c.l.b16 %v480
      %v518 = vunpack.c.l.b16 %v481
      %v519 = vunpack.c.l.b16 %v482
      %v520 = vunpack.c.l.b16 %v483
      %v521 = vunpack.c.l.b16 %v484
      %v522 = vunpack.c.l.b16 %v485
      %v523 = vunpack.c.l.b16 %v486
      %v524 = vunpack.c.l.b16 %v487
      %v525 = vunpack.c.l.b16 %v488
      %v526 = vunpack.c.l.b16 %v489
      %v527 = vunpack.c.l.b16 %v490
      %v528 = vunpack.c.l.b16 %v491
      %v529 = vunpack.c.l.b16 %v492
      %v530 = vpack.c.b16 %v515, %v514
      %v531 = vpack.c.b16 %v517, %v516
      %v532 = vpack.c.b16 %v519, %v518
      %v533 = vpack.c.b16 %v521, %v520
      %v534 = vpack.c.b16 %v523, %v522
      %v535 = vpack.c.b16 %v525, %v524
      %v536 = vpack.c.b16 %v527, %v526
      %v537 = vpack.c.b16 %v529, %v528
      %546 = vmatpush.bf16.msra.mxu0 %v537
      %547 = vmatpush.bf16.msra.mxu0 %v536
      %548 = vmatpush.bf16.msra.mxu0 %v535
      %549 = vmatpush.bf16.msra.mxu0 %v534
      %550 = vmatpush.bf16.msra.mxu0 %v533
      %551 = vmatpush.bf16.msra.mxu0 %v532
      %552 = vmatpush.bf16.msra.mxu0 %v531
      %553 = vmatpush.bf16.msra.mxu0 %v530
      %554 = vmatmul.bf16.gmra.mxu0 %v496
      %v555 = vpop.f32.mrf.mxu0
      %v556 = vadd.f32 0.0, %v555
      %v557 = vpop.f32.mrf.mxu0
      %558 = vdwg.mxu0
      %v559 = vadd.f32 %v463, %v556
      %s560 = scalar_lea.vmem %s218, 2
      %v561 = vld [vmem:[%s560] sm:$0x1]
      %v562 = vld [vmem:[%s560 + $0x2] sm:$0x1]
      %s563 = scalar_lea.vmem %s1, 192
      %v564 = vld [vmem:[%s563] sm:$0xf]
      %v565 = vld [vmem:[%s563 + $0x4] sm:$0xf]
      %v566 = vld [vmem:[%s563 + $0x8] sm:$0xf]
      %v567 = vld [vmem:[%s563 + $0xc] sm:$0xf]
      %v568 = vld [vmem:[%s563 + $0x10] sm:$0xf]
      %v569 = vld [vmem:[%s563 + $0x14] sm:$0xf]
      %v570 = vld [vmem:[%s563 + $0x18] sm:$0xf]
      %v571 = vld [vmem:[%s563 + $0x1c] sm:$0xf]
      %v572 = vld [vmem:[%s563 + $0x20] sm:$0xf]
      %v573 = vld [vmem:[%s563 + $0x24] sm:$0xf]
      %v574 = vld [vmem:[%s563 + $0x28] sm:$0xf]
      %v575 = vld [vmem:[%s563 + $0x2c] sm:$0xf]
      %v576 = vld [vmem:[%s563 + $0x30] sm:$0xf]
      %v577 = vld [vmem:[%s563 + $0x34] sm:$0xf]
      %v578 = vld [vmem:[%s563 + $0x38] sm:$0xf]
      %v579 = vld [vmem:[%s563 + $0x3c] sm:$0xf]
      %581 = vst [vmem:[#allocation1] ss:$9 sm:$0xff] %v561
      %s583 = scalar_lea.vmem [#allocation1], 1
      %584 = vst [vmem:[%s583] ss:$9 sm:$0xff] %v562
      %v585 = vld [vmem:[#allocation1] sm:$0xff]
      %v603 = vunpack.c.l.b16 %v564
      %v604 = vunpack.c.l.b16 %v565
      %v605 = vunpack.c.l.b16 %v566
      %v606 = vunpack.c.l.b16 %v567
      %v607 = vunpack.c.l.b16 %v568
      %v608 = vunpack.c.l.b16 %v569
      %v609 = vunpack.c.l.b16 %v570
      %v610 = vunpack.c.l.b16 %v571
      %v611 = vunpack.c.l.b16 %v572
      %v612 = vunpack.c.l.b16 %v573
      %v613 = vunpack.c.l.b16 %v574
      %v614 = vunpack.c.l.b16 %v575
      %v615 = vunpack.c.l.b16 %v576
      %v616 = vunpack.c.l.b16 %v577
      %v617 = vunpack.c.l.b16 %v578
      %v618 = vunpack.c.l.b16 %v579
      %v619 = vpack.c.b16 %v604, %v603
      %v620 = vpack.c.b16 %v606, %v605
      %v621 = vpack.c.b16 %v608, %v607
      %v622 = vpack.c.b16 %v610, %v609
      %v623 = vpack.c.b16 %v612, %v611
      %v624 = vpack.c.b16 %v614, %v613
      %v625 = vpack.c.b16 %v616, %v615
      %v626 = vpack.c.b16 %v618, %v617
      %635 = vmatpush.bf16.msra.mxu0 %v626
      %636 = vmatpush.bf16.msra.mxu0 %v625
      %637 = vmatpush.bf16.msra.mxu0 %v624
      %638 = vmatpush.bf16.msra.mxu0 %v623
      %639 = vmatpush.bf16.msra.mxu0 %v622
      %640 = vmatpush.bf16.msra.mxu0 %v621
      %641 = vmatpush.bf16.msra.mxu0 %v620
      %642 = vmatpush.bf16.msra.mxu0 %v619
      %643 = vmatmul.bf16.gmra.mxu0 %v585
      %v644 = vpop.f32.mrf.mxu0
      %v645 = vadd.f32 0.0, %v644
      %v646 = vpop.f32.mrf.mxu0
      %647 = vdwg.mxu0
      %v648 = vadd.f32 %v559, %v645
      %v649 = vld [vmem:[%s560] sm:$0x3]
      %v650 = vld [vmem:[%s560 + $0x2] sm:$0x3]
      %v653 = vrot.slane %v649, 1
      %v654 = vrot.slane %v649, 2
      %v655 = vrot.slane %v649, 3
      %v656 = vrot.slane %v650, 1
      %v657 = vrot.slane %v650, 2
      %v658 = vrot.slane %v650, 3
      %v661 = vsel %vm252, %v649, %v653
      %v664 = vsel %vm256, %v654, %v655
      %v665 = vsel %vm260, %v661, %v664
      %v666 = vsel %vm262, %v649, %v653
      %v667 = vsel %vm264, %v654, %v655
      %v668 = vsel %vm266, %v666, %v667
      %v670 = vrot.slane %v668, 1
      %v673 = vsel %vm252, %v650, %v656
      %v676 = vsel %vm256, %v657, %v658
      %v677 = vsel %vm260, %v673, %v676
      %v678 = vsel %vm262, %v650, %v656
      %v679 = vsel %vm264, %v657, %v658
      %v680 = vsel %vm266, %v678, %v679
      %v682 = vrot.slane %v680, 1
      %v683 = vshrl.u32 %v665, 16
      %v685 = vrot.slane %v683, 7
      %v686 = vrot.slane %v685, 1
      %v688 = vshll.u32 %v670, 16
      %v690 = vsel %vm296, %v686, %v688
      %v691 = vshrl.u32 %v677, 16
      %v693 = vrot.slane %v691, 7
      %v694 = vrot.slane %v693, 1
      %v696 = vshll.u32 %v682, 16
      %v698 = vsel %vm296, %v694, %v696
      %s699 = scalar_lea.vmem %s1, 256
      %v700 = vld [vmem:[%s699] sm:$0xf]
      %v701 = vld [vmem:[%s699 + $0x4] sm:$0xf]
      %v702 = vld [vmem:[%s699 + $0x8] sm:$0xf]
      %v703 = vld [vmem:[%s699 + $0xc] sm:$0xf]
      %v704 = vld [vmem:[%s699 + $0x10] sm:$0xf]
      %v705 = vld [vmem:[%s699 + $0x14] sm:$0xf]
      %v706 = vld [vmem:[%s699 + $0x18] sm:$0xf]
      %v707 = vld [vmem:[%s699 + $0x1c] sm:$0xf]
      %v708 = vld [vmem:[%s699 + $0x20] sm:$0xf]
      %v709 = vld [vmem:[%s699 + $0x24] sm:$0xf]
      %v710 = vld [vmem:[%s699 + $0x28] sm:$0xf]
      %v711 = vld [vmem:[%s699 + $0x2c] sm:$0xf]
      %v712 = vld [vmem:[%s699 + $0x30] sm:$0xf]
      %v713 = vld [vmem:[%s699 + $0x34] sm:$0xf]
      %v714 = vld [vmem:[%s699 + $0x38] sm:$0xf]
      %v715 = vld [vmem:[%s699 + $0x3c] sm:$0xf]
      %717 = vst [vmem:[#allocation1] ss:$9 sm:$0xff] %v690
      %s719 = scalar_lea.vmem [#allocation1], 1
      %720 = vst [vmem:[%s719] ss:$9 sm:$0xff] %v698
      %v721 = vld [vmem:[#allocation1] sm:$0xff]
      %v739 = vunpack.c.l.b16 %v700
      %v740 = vunpack.c.l.b16 %v701
      %v741 = vunpack.c.l.b16 %v702
      %v742 = vunpack.c.l.b16 %v703
      %v743 = vunpack.c.l.b16 %v704
      %v744 = vunpack.c.l.b16 %v705
      %v745 = vunpack.c.l.b16 %v706
      %v746 = vunpack.c.l.b16 %v707
      %v747 = vunpack.c.l.b16 %v708
      %v748 = vunpack.c.l.b16 %v709
      %v749 = vunpack.c.l.b16 %v710
      %v750 = vunpack.c.l.b16 %v711
      %v751 = vunpack.c.l.b16 %v712
      %v752 = vunpack.c.l.b16 %v713
      %v753 = vunpack.c.l.b16 %v714
      %v754 = vunpack.c.l.b16 %v715
      %v755 = vpack.c.b16 %v740, %v739
      %v756 = vpack.c.b16 %v742, %v741
      %v757 = vpack.c.b16 %v744, %v743
      %v758 = vpack.c.b16 %v746, %v745
      %v759 = vpack.c.b16 %v748, %v747
      %v760 = vpack.c.b16 %v750, %v749
      %v761 = vpack.c.b16 %v752, %v751
      %v762 = vpack.c.b16 %v754, %v753
      %771 = vmatpush.bf16.msra.mxu0 %v762
      %772 = vmatpush.bf16.msra.mxu0 %v761
      %773 = vmatpush.bf16.msra.mxu0 %v760
      %774 = vmatpush.bf16.msra.mxu0 %v759
      %775 = vmatpush.bf16.msra.mxu0 %v758
      %776 = vmatpush.bf16.msra.mxu0 %v757
      %777 = vmatpush.bf16.msra.mxu0 %v756
      %778 = vmatpush.bf16.msra.mxu0 %v755
      %779 = vmatmul.bf16.gmra.mxu0 %v721
      %v780 = vpop.f32.mrf.mxu0
      %v781 = vadd.f32 0.0, %v780
      %v782 = vpop.f32.mrf.mxu0
      %783 = vdwg.mxu0
      %v784 = vadd.f32 %v648, %v781
      %v785 = vld [vmem:[%s560] sm:$0x2]
      %v786 = vld [vmem:[%s560 + $0x2] sm:$0x2]
      %788 = vst [vmem:[#allocation1] sm:$0xff] %v785
      %s789 = scalar_lea.vmem [#allocation1], 1
      %v790 = vld [vmem:[%s789] ss:$2 sm:$0xff]
      %792 = vst [vmem:[#allocation1 + $0x10] sm:$0xff] %v786
      %s793 = scalar_lea.vmem [#allocation1], 17
      %v794 = vld [vmem:[%s793] ss:$2 sm:$0xff]
      %s795 = scalar_lea.vmem %s1, 320
      %v796 = vld [vmem:[%s795] sm:$0xf]
      %v797 = vld [vmem:[%s795 + $0x4] sm:$0xf]
      %v798 = vld [vmem:[%s795 + $0x8] sm:$0xf]
      %v799 = vld [vmem:[%s795 + $0xc] sm:$0xf]
      %v800 = vld [vmem:[%s795 + $0x10] sm:$0xf]
      %v801 = vld [vmem:[%s795 + $0x14] sm:$0xf]
      %v802 = vld [vmem:[%s795 + $0x18] sm:$0xf]
      %v803 = vld [vmem:[%s795 + $0x1c] sm:$0xf]
      %v804 = vld [vmem:[%s795 + $0x20] sm:$0xf]
      %v805 = vld [vmem:[%s795 + $0x24] sm:$0xf]
      %v806 = vld [vmem:[%s795 + $0x28] sm:$0xf]
      %v807 = vld [vmem:[%s795 + $0x2c] sm:$0xf]
      %v808 = vld [vmem:[%s795 + $0x30] sm:$0xf]
      %v809 = vld [vmem:[%s795 + $0x34] sm:$0xf]
      %v810 = vld [vmem:[%s795 + $0x38] sm:$0xf]
      %v811 = vld [vmem:[%s795 + $0x3c] sm:$0xf]
      %812 = vst [vmem:[#allocation1] ss:$9 sm:$0xff] %v790
      %s813 = scalar_lea.vmem [#allocation1], 1
      %814 = vst [vmem:[%s813] ss:$9 sm:$0xff] %v794
      %v815 = vld [vmem:[#allocation1] sm:$0xff]
      %v833 = vunpack.c.l.b16 %v796
      %v834 = vunpack.c.l.b16 %v797
      %v835 = vunpack.c.l.b16 %v798
      %v836 = vunpack.c.l.b16 %v799
      %v837 = vunpack.c.l.b16 %v800
      %v838 = vunpack.c.l.b16 %v801
      %v839 = vunpack.c.l.b16 %v802
      %v840 = vunpack.c.l.b16 %v803
      %v841 = vunpack.c.l.b16 %v804
      %v842 = vunpack.c.l.b16 %v805
      %v843 = vunpack.c.l.b16 %v806
      %v844 = vunpack.c.l.b16 %v807
      %v845 = vunpack.c.l.b16 %v808
      %v846 = vunpack.c.l.b16 %v809
      %v847 = vunpack.c.l.b16 %v810
      %v848 = vunpack.c.l.b16 %v811
      %v849 = vpack.c.b16 %v834, %v833
      %v850 = vpack.c.b16 %v836, %v835
      %v851 = vpack.c.b16 %v838, %v837
      %v852 = vpack.c.b16 %v840, %v839
      %v853 = vpack.c.b16 %v842, %v841
      %v854 = vpack.c.b16 %v844, %v843
      %v855 = vpack.c.b16 %v846, %v845
      %v856 = vpack.c.b16 %v848, %v847
      %865 = vmatpush.bf16.msra.mxu0 %v856
      %866 = vmatpush.bf16.msra.mxu0 %v855
      %867 = vmatpush.bf16.msra.mxu0 %v854
      %868 = vmatpush.bf16.msra.mxu0 %v853
      %869 = vmatpush.bf16.msra.mxu0 %v852
      %870 = vmatpush.bf16.msra.mxu0 %v851
      %871 = vmatpush.bf16.msra.mxu0 %v850
      %872 = vmatpush.bf16.msra.mxu0 %v849
      %873 = vmatmul.bf16.gmra.mxu0 %v815
      %v874 = vpop.f32.mrf.mxu0
      %v875 = vadd.f32 0.0, %v874
      %v876 = vpop.f32.mrf.mxu0
      %877 = vdwg.mxu0
      %v878 = vadd.f32 %v784, %v875
      %s879 = scalar_lea.vmem %s218, 4
      %v880 = vld [vmem:[%s879] sm:$0x1]
      %v881 = vld [vmem:[%s879 + $0x2] sm:$0x1]
      %s882 = scalar_lea.vmem %s1, 384
      %v883 = vld [vmem:[%s882] sm:$0xf]
      %v884 = vld [vmem:[%s882 + $0x4] sm:$0xf]
      %v885 = vld [vmem:[%s882 + $0x8] sm:$0xf]
      %v886 = vld [vmem:[%s882 + $0xc] sm:$0xf]
      %v887 = vld [vmem:[%s882 + $0x10] sm:$0xf]
      %v888 = vld [vmem:[%s882 + $0x14] sm:$0xf]
      %v889 = vld [vmem:[%s882 + $0x18] sm:$0xf]
      %v890 = vld [vmem:[%s882 + $0x1c] sm:$0xf]
      %v891 = vld [vmem:[%s882 + $0x20] sm:$0xf]
      %v892 = vld [vmem:[%s882 + $0x24] sm:$0xf]
      %v893 = vld [vmem:[%s882 + $0x28] sm:$0xf]
      %v894 = vld [vmem:[%s882 + $0x2c] sm:$0xf]
      %v895 = vld [vmem:[%s882 + $0x30] sm:$0xf]
      %v896 = vld [vmem:[%s882 + $0x34] sm:$0xf]
      %v897 = vld [vmem:[%s882 + $0x38] sm:$0xf]
      %v898 = vld [vmem:[%s882 + $0x3c] sm:$0xf]
      %900 = vst [vmem:[#allocation1] ss:$9 sm:$0xff] %v880
      %s902 = scalar_lea.vmem [#allocation1], 1
      %903 = vst [vmem:[%s902] ss:$9 sm:$0xff] %v881
      %v904 = vld [vmem:[#allocation1] sm:$0xff]
      %v922 = vunpack.c.l.b16 %v883
      %v923 = vunpack.c.l.b16 %v884
      %v924 = vunpack.c.l.b16 %v885
      %v925 = vunpack.c.l.b16 %v886
      %v926 = vunpack.c.l.b16 %v887
      %v927 = vunpack.c.l.b16 %v888
      %v928 = vunpack.c.l.b16 %v889
      %v929 = vunpack.c.l.b16 %v890
      %v930 = vunpack.c.l.b16 %v891
      %v931 = vunpack.c.l.b16 %v892
      %v932 = vunpack.c.l.b16 %v893
      %v933 = vunpack.c.l.b16 %v894
      %v934 = vunpack.c.l.b16 %v895
      %v935 = vunpack.c.l.b16 %v896
      %v936 = vunpack.c.l.b16 %v897
      %v937 = vunpack.c.l.b16 %v898
      %v938 = vpack.c.b16 %v923, %v922
      %v939 = vpack.c.b16 %v925, %v924
      %v940 = vpack.c.b16 %v927, %v926
      %v941 = vpack.c.b16 %v929, %v928
      %v942 = vpack.c.b16 %v931, %v930
      %v943 = vpack.c.b16 %v933, %v932
      %v944 = vpack.c.b16 %v935, %v934
      %v945 = vpack.c.b16 %v937, %v936
      %954 = vmatpush.bf16.msra.mxu0 %v945
      %955 = vmatpush.bf16.msra.mxu0 %v944
      %956 = vmatpush.bf16.msra.mxu0 %v943
      %957 = vmatpush.bf16.msra.mxu0 %v942
      %958 = vmatpush.bf16.msra.mxu0 %v941
      %959 = vmatpush.bf16.msra.mxu0 %v940
      %960 = vmatpush.bf16.msra.mxu0 %v939
      %961 = vmatpush.bf16.msra.mxu0 %v938
      %962 = vmatmul.bf16.gmra.mxu0 %v904
      %v963 = vpop.f32.mrf.mxu0
      %v964 = vadd.f32 0.0, %v963
      %v965 = vpop.f32.mrf.mxu0
      %966 = vdwg.mxu0
      %v967 = vadd.f32 %v878, %v964
      %v968 = vld [vmem:[%s879] sm:$0x3]
      %v969 = vld [vmem:[%s879 + $0x2] sm:$0x3]
      %v972 = vrot.slane %v968, 1
      %v973 = vrot.slane %v968, 2
      %v974 = vrot.slane %v968, 3
      %v975 = vrot.slane %v969, 1
      %v976 = vrot.slane %v969, 2
      %v977 = vrot.slane %v969, 3
      %v980 = vsel %vm252, %v968, %v972
      %v983 = vsel %vm256, %v973, %v974
      %v984 = vsel %vm260, %v980, %v983
      %v985 = vsel %vm262, %v968, %v972
      %v986 = vsel %vm264, %v973, %v974
      %v987 = vsel %vm266, %v985, %v986
      %v989 = vrot.slane %v987, 1
      %v992 = vsel %vm252, %v969, %v975
      %v995 = vsel %vm256, %v976, %v977
      %v996 = vsel %vm260, %v992, %v995
      %v997 = vsel %vm262, %v969, %v975
      %v998 = vsel %vm264, %v976, %v977
      %v999 = vsel %vm266, %v997, %v998
      %v1001 = vrot.slane %v999, 1
      %v1002 = vshrl.u32 %v984, 16
      %v1004 = vrot.slane %v1002, 7
      %v1005 = vrot.slane %v1004, 1
      %v1007 = vshll.u32 %v989, 16
      %v1009 = vsel %vm296, %v1005, %v1007
      %v1010 = vshrl.u32 %v996, 16
      %v1012 = vrot.slane %v1010, 7
      %v1013 = vrot.slane %v1012, 1
      %v1015 = vshll.u32 %v1001, 16
      %v1017 = vsel %vm296, %v1013, %v1015
      %s1018 = scalar_lea.vmem %s1, 448
      %v1019 = vld [vmem:[%s1018] sm:$0xf]
      %v1020 = vld [vmem:[%s1018 + $0x4] sm:$0xf]
      %v1021 = vld [vmem:[%s1018 + $0x8] sm:$0xf]
      %v1022 = vld [vmem:[%s1018 + $0xc] sm:$0xf]
      %v1023 = vld [vmem:[%s1018 + $0x10] sm:$0xf]
      %v1024 = vld [vmem:[%s1018 + $0x14] sm:$0xf]
      %v1025 = vld [vmem:[%s1018 + $0x18] sm:$0xf]
      %v1026 = vld [vmem:[%s1018 + $0x1c] sm:$0xf]
      %v1027 = vld [vmem:[%s1018 + $0x20] sm:$0xf]
      %v1028 = vld [vmem:[%s1018 + $0x24] sm:$0xf]
      %v1029 = vld [vmem:[%s1018 + $0x28] sm:$0xf]
      %v1030 = vld [vmem:[%s1018 + $0x2c] sm:$0xf]
      %v1031 = vld [vmem:[%s1018 + $0x30] sm:$0xf]
      %v1032 = vld [vmem:[%s1018 + $0x34] sm:$0xf]
      %v1033 = vld [vmem:[%s1018 + $0x38] sm:$0xf]
      %v1034 = vld [vmem:[%s1018 + $0x3c] sm:$0xf]
      %1036 = vst [vmem:[#allocation1] ss:$9 sm:$0xff] %v1009
      %s1038 = scalar_lea.vmem [#allocation1], 1
      %1039 = vst [vmem:[%s1038] ss:$9 sm:$0xff] %v1017
      %v1040 = vld [vmem:[#allocation1] sm:$0xff]
      %v1058 = vunpack.c.l.b16 %v1019
      %v1059 = vunpack.c.l.b16 %v1020
      %v1060 = vunpack.c.l.b16 %v1021
      %v1061 = vunpack.c.l.b16 %v1022
      %v1062 = vunpack.c.l.b16 %v1023
      %v1063 = vunpack.c.l.b16 %v1024
      %v1064 = vunpack.c.l.b16 %v1025
      %v1065 = vunpack.c.l.b16 %v1026
      %v1066 = vunpack.c.l.b16 %v1027
      %v1067 = vunpack.c.l.b16 %v1028
      %v1068 = vunpack.c.l.b16 %v1029
      %v1069 = vunpack.c.l.b16 %v1030
      %v1070 = vunpack.c.l.b16 %v1031
      %v1071 = vunpack.c.l.b16 %v1032
      %v1072 = vunpack.c.l.b16 %v1033
      %v1073 = vunpack.c.l.b16 %v1034
      %v1074 = vpack.c.b16 %v1059, %v1058
      %v1075 = vpack.c.b16 %v1061, %v1060
      %v1076 = vpack.c.b16 %v1063, %v1062
      %v1077 = vpack.c.b16 %v1065, %v1064
      %v1078 = vpack.c.b16 %v1067, %v1066
      %v1079 = vpack.c.b16 %v1069, %v1068
      %v1080 = vpack.c.b16 %v1071, %v1070
      %v1081 = vpack.c.b16 %v1073, %v1072
      %1090 = vmatpush.bf16.msra.mxu0 %v1081
      %1091 = vmatpush.bf16.msra.mxu0 %v1080
      %1092 = vmatpush.bf16.msra.mxu0 %v1079
      %1093 = vmatpush.bf16.msra.mxu0 %v1078
      %1094 = vmatpush.bf16.msra.mxu0 %v1077
      %1095 = vmatpush.bf16.msra.mxu0 %v1076
      %1096 = vmatpush.bf16.msra.mxu0 %v1075
      %1097 = vmatpush.bf16.msra.mxu0 %v1074
      %1098 = vmatmul.bf16.gmra.mxu0 %v1040
      %v1099 = vpop.f32.mrf.mxu0
      %v1100 = vadd.f32 0.0, %v1099
      %v1101 = vpop.f32.mrf.mxu0
      %1102 = vdwg.mxu0
      %v1103 = vadd.f32 %v967, %v1100
      %v1104 = vld [vmem:[%s879] sm:$0x2]
      %v1105 = vld [vmem:[%s879 + $0x2] sm:$0x2]
      %1107 = vst [vmem:[#allocation1] sm:$0xff] %v1104
      %s1108 = scalar_lea.vmem [#allocation1], 1
      %v1109 = vld [vmem:[%s1108] ss:$2 sm:$0xff]
      %1111 = vst [vmem:[#allocation1 + $0x10] sm:$0xff] %v1105
      %s1112 = scalar_lea.vmem [#allocation1], 17
      %v1113 = vld [vmem:[%s1112] ss:$2 sm:$0xff]
      %s1114 = scalar_lea.vmem %s1, 512
      %v1115 = vld [vmem:[%s1114] sm:$0xf]
      %v1116 = vld [vmem:[%s1114 + $0x4] sm:$0xf]
      %v1117 = vld [vmem:[%s1114 + $0x8] sm:$0xf]
      %v1118 = vld [vmem:[%s1114 + $0xc] sm:$0xf]
      %v1119 = vld [vmem:[%s1114 + $0x10] sm:$0xf]
      %v1120 = vld [vmem:[%s1114 + $0x14] sm:$0xf]
      %v1121 = vld [vmem:[%s1114 + $0x18] sm:$0xf]
      %v1122 = vld [vmem:[%s1114 + $0x1c] sm:$0xf]
      %v1123 = vld [vmem:[%s1114 + $0x20] sm:$0xf]
      %v1124 = vld [vmem:[%s1114 + $0x24] sm:$0xf]
      %v1125 = vld [vmem:[%s1114 + $0x28] sm:$0xf]
      %v1126 = vld [vmem:[%s1114 + $0x2c] sm:$0xf]
      %v1127 = vld [vmem:[%s1114 + $0x30] sm:$0xf]
      %v1128 = vld [vmem:[%s1114 + $0x34] sm:$0xf]
      %v1129 = vld [vmem:[%s1114 + $0x38] sm:$0xf]
      %v1130 = vld [vmem:[%s1114 + $0x3c] sm:$0xf]
      %1131 = vst [vmem:[#allocation1] ss:$9 sm:$0xff] %v1109
      %s1132 = scalar_lea.vmem [#allocation1], 1
      %1133 = vst [vmem:[%s1132] ss:$9 sm:$0xff] %v1113
      %v1134 = vld [vmem:[#allocation1] sm:$0xff]
      %v1152 = vunpack.c.l.b16 %v1115
      %v1153 = vunpack.c.l.b16 %v1116
      %v1154 = vunpack.c.l.b16 %v1117
      %v1155 = vunpack.c.l.b16 %v1118
      %v1156 = vunpack.c.l.b16 %v1119
      %v1157 = vunpack.c.l.b16 %v1120
      %v1158 = vunpack.c.l.b16 %v1121
      %v1159 = vunpack.c.l.b16 %v1122
      %v1160 = vunpack.c.l.b16 %v1123
      %v1161 = vunpack.c.l.b16 %v1124
      %v1162 = vunpack.c.l.b16 %v1125
      %v1163 = vunpack.c.l.b16 %v1126
      %v1164 = vunpack.c.l.b16 %v1127
      %v1165 = vunpack.c.l.b16 %v1128
      %v1166 = vunpack.c.l.b16 %v1129
      %v1167 = vunpack.c.l.b16 %v1130
      %v1168 = vpack.c.b16 %v1153, %v1152
      %v1169 = vpack.c.b16 %v1155, %v1154
      %v1170 = vpack.c.b16 %v1157, %v1156
      %v1171 = vpack.c.b16 %v1159, %v1158
      %v1172 = vpack.c.b16 %v1161, %v1160
      %v1173 = vpack.c.b16 %v1163, %v1162
      %v1174 = vpack.c.b16 %v1165, %v1164
      %v1175 = vpack.c.b16 %v1167, %v1166
      %1184 = vmatpush.bf16.msra.mxu0 %v1175
      %1185 = vmatpush.bf16.msra.mxu0 %v1174
      %1186 = vmatpush.bf16.msra.mxu0 %v1173
      %1187 = vmatpush.bf16.msra.mxu0 %v1172
      %1188 = vmatpush.bf16.msra.mxu0 %v1171
      %1189 = vmatpush.bf16.msra.mxu0 %v1170
      %1190 = vmatpush.bf16.msra.mxu0 %v1169
      %1191 = vmatpush.bf16.msra.mxu0 %v1168
      %1192 = vmatmul.bf16.gmra.mxu0 %v1134
      %v1193 = vpop.f32.mrf.mxu0
      %v1194 = vadd.f32 0.0, %v1193
      %v1195 = vpop.f32.mrf.mxu0
      %1196 = vdwg.mxu0
      %v1197 = vadd.f32 %v1103, %v1194
      %v1198 = vld [vmem:[%s2] sm:$0x1]
      %v1200 = vperm.slane %v1198, 0
      %v1202 = vadd.f32 %v1197, %v1200
      %v1203 = vmax.f32 %v1202, 0.0
      %1204 = vst [vmem:[#allocation2] sm:$0x3] 0
      %1205 = vst [vmem:[#allocation2 + $0x2] sm:$0x3] 0
      %1206 = vst [vmem:[#allocation2 + $0x4] sm:$0x3] 0
      %1207 = vst [vmem:[#allocation2 + $0x6] sm:$0x3] 0
      %v1209 = vrot.slane %v1203, 2
      %v1211 = vpack.c.bf16 %v1203, %v1203
      %v1212 = vpack.c.bf16 %v1209, %v1209
      %v1215 = vrot.slane %v1211, 2
      %v1216 = vrot.slane %v1212, 2
      %v1219 = vsel %vm260, %v1211, %v1215
      %v1222 = vsel %vm260, %v1212, %v1216
      %v1223 = vshrl.u32 %v1219, 16
      %v1225 = vrot.slane %v1223, 7
      %v1226 = vshll.u32 %v1219, 16
      %v1228 = vor.u32 %v1225, %v1226
      %v1229 = vshrl.u32 %v1222, 16
      %v1231 = vrot.slane %v1229, 7
      %v1232 = vshll.u32 %v1222, 16
      %v1234 = vor.u32 %v1231, %v1232
      %s1237 = scalar_lea.vmem [#allocation2], 2
      %vm1238 = vcmask 1041408
      %vm1239 = vsmask.f32 1282
      %vm1240 = vmand %vm1238, %vm1239
      %v1241 = vld [vmem:[%s1237] sm:$0x3]
      %v1242 = vsel %vm1240, %v1228, %v1241
      %1243 = vst [vmem:[%s1237] sm:$0x3] %v1242
      %v1244 = vld [vmem:[%s1237 + $0x2] sm:$0x3]
      %v1245 = vsel %vm1240, %v1234, %v1244
      %1246 = vst [vmem:[%s1237 + $0x2] sm:$0x3] %v1245
      %v1247 = vld [vmem:[%s560] sm:$0x3]
      %v1248 = vld [vmem:[%s560 + $0x2] sm:$0x3]
      %v1251 = vrot.slane %v1247, 1
      %v1252 = vrot.slane %v1247, 2
      %v1253 = vrot.slane %v1247, 3
      %v1254 = vrot.slane %v1248, 1
      %v1255 = vrot.slane %v1248, 2
      %v1256 = vrot.slane %v1248, 3
      %v1259 = vsel %vm252, %v1247, %v1251
      %v1262 = vsel %vm256, %v1252, %v1253
      %v1263 = vsel %vm260, %v1259, %v1262
      %v1264 = vsel %vm262, %v1247, %v1251
      %v1265 = vsel %vm264, %v1252, %v1253
      %v1266 = vsel %vm266, %v1264, %v1265
      %v1268 = vrot.slane %v1266, 1
      %v1271 = vsel %vm252, %v1248, %v1254
      %v1274 = vsel %vm256, %v1255, %v1256
      %v1275 = vsel %vm260, %v1271, %v1274
      %v1276 = vsel %vm262, %v1248, %v1254
      %v1277 = vsel %vm264, %v1255, %v1256
      %v1278 = vsel %vm266, %v1276, %v1277
      %v1280 = vrot.slane %v1278, 1
      %v1281 = vshrl.u32 %v1263, 16
      %v1283 = vrot.slane %v1281, 7
      %v1284 = vrot.slane %v1283, 1
      %v1286 = vshll.u32 %v1268, 16
      %v1288 = vsel %vm296, %v1284, %v1286
      %v1289 = vshrl.u32 %v1275, 16
      %v1291 = vrot.slane %v1289, 7
      %v1292 = vrot.slane %v1291, 1
      %v1294 = vshll.u32 %v1280, 16
      %v1296 = vsel %vm296, %v1292, %v1294
      %v1299 = vunpack.c.l.bf16 %v1288
      %v1300 = vunpack.c.l.bf16 %v1296
      %v1301 = vld [vmem:[#allocation2] sm:$0x1]
      %v1302 = vld [vmem:[#allocation2 + $0x2] sm:$0x1]
      %v1303 = vld [vmem:[%s3] sm:$0xf]
      %v1304 = vld [vmem:[%s3 + $0x4] sm:$0xf]
      %v1305 = vld [vmem:[%s3 + $0x8] sm:$0xf]
      %v1306 = vld [vmem:[%s3 + $0xc] sm:$0xf]
      %v1307 = vld [vmem:[%s3 + $0x10] sm:$0xf]
      %v1308 = vld [vmem:[%s3 + $0x14] sm:$0xf]
      %v1309 = vld [vmem:[%s3 + $0x18] sm:$0xf]
      %v1310 = vld [vmem:[%s3 + $0x1c] sm:$0xf]
      %v1311 = vld [vmem:[%s3 + $0x20] sm:$0xf]
      %v1312 = vld [vmem:[%s3 + $0x24] sm:$0xf]
      %v1313 = vld [vmem:[%s3 + $0x28] sm:$0xf]
      %v1314 = vld [vmem:[%s3 + $0x2c] sm:$0xf]
      %v1315 = vld [vmem:[%s3 + $0x30] sm:$0xf]
      %v1316 = vld [vmem:[%s3 + $0x34] sm:$0xf]
      %v1317 = vld [vmem:[%s3 + $0x38] sm:$0xf]
      %v1318 = vld [vmem:[%s3 + $0x3c] sm:$0xf]
      %v1319 = vld [vmem:[#allocation2] sm:$0x3]
      %v1320 = vld [vmem:[#allocation2 + $0x2] sm:$0x3]
      %v1323 = vrot.slane %v1319, 1
      %v1324 = vrot.slane %v1319, 2
      %v1325 = vrot.slane %v1319, 3
      %v1326 = vrot.slane %v1320, 1
      %v1327 = vrot.slane %v1320, 2
      %v1328 = vrot.slane %v1320, 3
      %v1331 = vsel %vm252, %v1319, %v1323
      %v1334 = vsel %vm256, %v1324, %v1325
      %v1335 = vsel %vm260, %v1331, %v1334
      %v1336 = vsel %vm262, %v1319, %v1323
      %v1337 = vsel %vm264, %v1324, %v1325
      %v1338 = vsel %vm266, %v1336, %v1337
      %v1340 = vrot.slane %v1338, 1
      %v1343 = vsel %vm252, %v1320, %v1326
      %v1346 = vsel %vm256, %v1327, %v1328
      %v1347 = vsel %vm260, %v1343, %v1346
      %v1348 = vsel %vm262, %v1320, %v1326
      %v1349 = vsel %vm264, %v1327, %v1328
      %v1350 = vsel %vm266, %v1348, %v1349
      %v1352 = vrot.slane %v1350, 1
      %v1353 = vshrl.u32 %v1335, 16
      %v1355 = vrot.slane %v1353, 7
      %v1356 = vrot.slane %v1355, 1
      %v1358 = vshll.u32 %v1340, 16
      %v1360 = vsel %vm296, %v1356, %v1358
      %v1361 = vshrl.u32 %v1347, 16
      %v1363 = vrot.slane %v1361, 7
      %v1364 = vrot.slane %v1363, 1
      %v1366 = vshll.u32 %v1352, 16
      %v1368 = vsel %vm296, %v1364, %v1366
      %s1369 = scalar_lea.vmem %s3, 64
      %v1370 = vld [vmem:[%s1369] sm:$0xf]
      %v1371 = vld [vmem:[%s1369 + $0x4] sm:$0xf]
      %v1372 = vld [vmem:[%s1369 + $0x8] sm:$0xf]
      %v1373 = vld [vmem:[%s1369 + $0xc] sm:$0xf]
      %v1374 = vld [vmem:[%s1369 + $0x10] sm:$0xf]
      %v1375 = vld [vmem:[%s1369 + $0x14] sm:$0xf]
      %v1376 = vld [vmem:[%s1369 + $0x18] sm:$0xf]
      %v1377 = vld [vmem:[%s1369 + $0x1c] sm:$0xf]
      %v1378 = vld [vmem:[%s1369 + $0x20] sm:$0xf]
      %v1379 = vld [vmem:[%s1369 + $0x24] sm:$0xf]
      %v1380 = vld [vmem:[%s1369 + $0x28] sm:$0xf]
      %v1381 = vld [vmem:[%s1369 + $0x2c] sm:$0xf]
      %v1382 = vld [vmem:[%s1369 + $0x30] sm:$0xf]
      %v1383 = vld [vmem:[%s1369 + $0x34] sm:$0xf]
      %v1384 = vld [vmem:[%s1369 + $0x38] sm:$0xf]
      %v1385 = vld [vmem:[%s1369 + $0x3c] sm:$0xf]
      %1387 = vst [vmem:[#allocation1] ss:$9 sm:$0xff] %v1360
      %s1389 = scalar_lea.vmem [#allocation1], 1
      %1390 = vst [vmem:[%s1389] ss:$9 sm:$0xff] %v1368
      %v1391 = vld [vmem:[#allocation1] sm:$0xff]
      %v1409 = vunpack.c.l.b16 %v1370
      %v1410 = vunpack.c.l.b16 %v1371
      %v1411 = vunpack.c.l.b16 %v1372
      %v1412 = vunpack.c.l.b16 %v1373
      %v1413 = vunpack.c.l.b16 %v1374
      %v1414 = vunpack.c.l.b16 %v1375
      %v1415 = vunpack.c.l.b16 %v1376
      %v1416 = vunpack.c.l.b16 %v1377
      %v1417 = vunpack.c.l.b16 %v1378
      %v1418 = vunpack.c.l.b16 %v1379
      %v1419 = vunpack.c.l.b16 %v1380
      %v1420 = vunpack.c.l.b16 %v1381
      %v1421 = vunpack.c.l.b16 %v1382
      %v1422 = vunpack.c.l.b16 %v1383
      %v1423 = vunpack.c.l.b16 %v1384
      %v1424 = vunpack.c.l.b16 %v1385
      %v1425 = vpack.c.b16 %v1410, %v1409
      %v1426 = vpack.c.b16 %v1412, %v1411
      %v1427 = vpack.c.b16 %v1414, %v1413
      %v1428 = vpack.c.b16 %v1416, %v1415
      %v1429 = vpack.c.b16 %v1418, %v1417
      %v1430 = vpack.c.b16 %v1420, %v1419
      %v1431 = vpack.c.b16 %v1422, %v1421
      %v1432 = vpack.c.b16 %v1424, %v1423
      %1441 = vmatpush.bf16.msra.mxu0 %v1432
      %1442 = vmatpush.bf16.msra.mxu0 %v1431
      %1443 = vmatpush.bf16.msra.mxu0 %v1430
      %1444 = vmatpush.bf16.msra.mxu0 %v1429
      %1445 = vmatpush.bf16.msra.mxu0 %v1428
      %1446 = vmatpush.bf16.msra.mxu0 %v1427
      %1447 = vmatpush.bf16.msra.mxu0 %v1426
      %1448 = vmatpush.bf16.msra.mxu0 %v1425
      %1449 = vmatmul.bf16.gmra.mxu0 %v1391
      %v1450 = vpop.f32.mrf.mxu0
      %v1451 = vadd.f32 0.0, %v1450
      %v1452 = vpop.f32.mrf.mxu0
      %1453 = vdwg.mxu0
      %1455 = vst [vmem:[#allocation1] ss:$9 sm:$0xff] %v1301
      %s1457 = scalar_lea.vmem [#allocation1], 1
      %1458 = vst [vmem:[%s1457] ss:$9 sm:$0xff] %v1302
      %v1459 = vld [vmem:[#allocation1] sm:$0xff]
      %v1477 = vunpack.c.l.b16 %v1303
      %v1478 = vunpack.c.l.b16 %v1304
      %v1479 = vunpack.c.l.b16 %v1305
      %v1480 = vunpack.c.l.b16 %v1306
      %v1481 = vunpack.c.l.b16 %v1307
      %v1482 = vunpack.c.l.b16 %v1308
      %v1483 = vunpack.c.l.b16 %v1309
      %v1484 = vunpack.c.l.b16 %v1310
      %v1485 = vunpack.c.l.b16 %v1311
      %v1486 = vunpack.c.l.b16 %v1312
      %v1487 = vunpack.c.l.b16 %v1313
      %v1488 = vunpack.c.l.b16 %v1314
      %v1489 = vunpack.c.l.b16 %v1315
      %v1490 = vunpack.c.l.b16 %v1316
      %v1491 = vunpack.c.l.b16 %v1317
      %v1492 = vunpack.c.l.b16 %v1318
      %v1493 = vpack.c.b16 %v1478, %v1477
      %v1494 = vpack.c.b16 %v1480, %v1479
      %v1495 = vpack.c.b16 %v1482, %v1481
      %v1496 = vpack.c.b16 %v1484, %v1483
      %v1497 = vpack.c.b16 %v1486, %v1485
      %v1498 = vpack.c.b16 %v1488, %v1487
      %v1499 = vpack.c.b16 %v1490, %v1489
      %v1500 = vpack.c.b16 %v1492, %v1491
      %1509 = vmatpush.bf16.msra.mxu0 %v1500
      %1510 = vmatpush.bf16.msra.mxu0 %v1499
      %1511 = vmatpush.bf16.msra.mxu0 %v1498
      %1512 = vmatpush.bf16.msra.mxu0 %v1497
      %1513 = vmatpush.bf16.msra.mxu0 %v1496
      %1514 = vmatpush.bf16.msra.mxu0 %v1495
      %1515 = vmatpush.bf16.msra.mxu0 %v1494
      %1516 = vmatpush.bf16.msra.mxu0 %v1493
      %1517 = vmatmul.bf16.gmra.mxu0 %v1459
      %v1518 = vpop.f32.mrf.mxu0
      %v1519 = vadd.f32 %v1451, %v1518
      %v1520 = vpop.f32.mrf.mxu0
      %1521 = vdwg.mxu0
      %v1522 = vld [vmem:[#allocation2] sm:$0x2]
      %v1523 = vld [vmem:[#allocation2 + $0x2] sm:$0x2]
      %1525 = vst [vmem:[#allocation1] sm:$0xff] %v1522
      %s1526 = scalar_lea.vmem [#allocation1], 1
      %v1527 = vld [vmem:[%s1526] ss:$2 sm:$0xff]
      %1529 = vst [vmem:[#allocation1 + $0x10] sm:$0xff] %v1523
      %s1530 = scalar_lea.vmem [#allocation1], 17
      %v1531 = vld [vmem:[%s1530] ss:$2 sm:$0xff]
      %s1532 = scalar_lea.vmem %s3, 128
      %v1533 = vld [vmem:[%s1532] sm:$0xf]
      %v1534 = vld [vmem:[%s1532 + $0x4] sm:$0xf]
      %v1535 = vld [vmem:[%s1532 + $0x8] sm:$0xf]
      %v1536 = vld [vmem:[%s1532 + $0xc] sm:$0xf]
      %v1537 = vld [vmem:[%s1532 + $0x10] sm:$0xf]
      %v1538 = vld [vmem:[%s1532 + $0x14] sm:$0xf]
      %v1539 = vld [vmem:[%s1532 + $0x18] sm:$0xf]
      %v1540 = vld [vmem:[%s1532 + $0x1c] sm:$0xf]
      %v1541 = vld [vmem:[%s1532 + $0x20] sm:$0xf]
      %v1542 = vld [vmem:[%s1532 + $0x24] sm:$0xf]
      %v1543 = vld [vmem:[%s1532 + $0x28] sm:$0xf]
      %v1544 = vld [vmem:[%s1532 + $0x2c] sm:$0xf]
      %v1545 = vld [vmem:[%s1532 + $0x30] sm:$0xf]
      %v1546 = vld [vmem:[%s1532 + $0x34] sm:$0xf]
      %v1547 = vld [vmem:[%s1532 + $0x38] sm:$0xf]
      %v1548 = vld [vmem:[%s1532 + $0x3c] sm:$0xf]
      %1549 = vst [vmem:[#allocation1] ss:$9 sm:$0xff] %v1527
      %s1550 = scalar_lea.vmem [#allocation1], 1
      %1551 = vst [vmem:[%s1550] ss:$9 sm:$0xff] %v1531
      %v1552 = vld [vmem:[#allocation1] sm:$0xff]
      %v1570 = vunpack.c.l.b16 %v1533
      %v1571 = vunpack.c.l.b16 %v1534
      %v1572 = vunpack.c.l.b16 %v1535
      %v1573 = vunpack.c.l.b16 %v1536
      %v1574 = vunpack.c.l.b16 %v1537
      %v1575 = vunpack.c.l.b16 %v1538
      %v1576 = vunpack.c.l.b16 %v1539
      %v1577 = vunpack.c.l.b16 %v1540
      %v1578 = vunpack.c.l.b16 %v1541
      %v1579 = vunpack.c.l.b16 %v1542
      %v1580 = vunpack.c.l.b16 %v1543
      %v1581 = vunpack.c.l.b16 %v1544
      %v1582 = vunpack.c.l.b16 %v1545
      %v1583 = vunpack.c.l.b16 %v1546
      %v1584 = vunpack.c.l.b16 %v1547
      %v1585 = vunpack.c.l.b16 %v1548
      %v1586 = vpack.c.b16 %v1571, %v1570
      %v1587 = vpack.c.b16 %v1573, %v1572
      %v1588 = vpack.c.b16 %v1575, %v1574
      %v1589 = vpack.c.b16 %v1577, %v1576
      %v1590 = vpack.c.b16 %v1579, %v1578
      %v1591 = vpack.c.b16 %v1581, %v1580
      %v1592 = vpack.c.b16 %v1583, %v1582
      %v1593 = vpack.c.b16 %v1585, %v1584
      %1602 = vmatpush.bf16.msra.mxu0 %v1593
      %1603 = vmatpush.bf16.msra.mxu0 %v1592
      %1604 = vmatpush.bf16.msra.mxu0 %v1591
      %1605 = vmatpush.bf16.msra.mxu0 %v1590
      %1606 = vmatpush.bf16.msra.mxu0 %v1589
      %1607 = vmatpush.bf16.msra.mxu0 %v1588
      %1608 = vmatpush.bf16.msra.mxu0 %v1587
      %1609 = vmatpush.bf16.msra.mxu0 %v1586
      %1610 = vmatmul.bf16.gmra.mxu0 %v1552
      %v1611 = vpop.f32.mrf.mxu0
      %v1612 = vadd.f32 0.0, %v1611
      %v1613 = vpop.f32.mrf.mxu0
      %1614 = vdwg.mxu0
      %v1615 = vadd.f32 %v1519, %v1612
      %v1616 = vld [vmem:[%s1237] sm:$0x1]
      %v1617 = vld [vmem:[%s1237 + $0x2] sm:$0x1]
      %s1618 = scalar_lea.vmem %s3, 192
      %v1619 = vld [vmem:[%s1618] sm:$0xf]
      %v1620 = vld [vmem:[%s1618 + $0x4] sm:$0xf]
      %v1621 = vld [vmem:[%s1618 + $0x8] sm:$0xf]
      %v1622 = vld [vmem:[%s1618 + $0xc] sm:$0xf]
      %v1623 = vld [vmem:[%s1618 + $0x10] sm:$0xf]
      %v1624 = vld [vmem:[%s1618 + $0x14] sm:$0xf]
      %v1625 = vld [vmem:[%s1618 + $0x18] sm:$0xf]
      %v1626 = vld [vmem:[%s1618 + $0x1c] sm:$0xf]
      %v1627 = vld [vmem:[%s1618 + $0x20] sm:$0xf]
      %v1628 = vld [vmem:[%s1618 + $0x24] sm:$0xf]
      %v1629 = vld [vmem:[%s1618 + $0x28] sm:$0xf]
      %v1630 = vld [vmem:[%s1618 + $0x2c] sm:$0xf]
      %v1631 = vld [vmem:[%s1618 + $0x30] sm:$0xf]
      %v1632 = vld [vmem:[%s1618 + $0x34] sm:$0xf]
      %v1633 = vld [vmem:[%s1618 + $0x38] sm:$0xf]
      %v1634 = vld [vmem:[%s1618 + $0x3c] sm:$0xf]
      %1636 = vst [vmem:[#allocation1] ss:$9 sm:$0xff] %v1616
      %s1638 = scalar_lea.vmem [#allocation1], 1
      %1639 = vst [vmem:[%s1638] ss:$9 sm:$0xff] %v1617
      %v1640 = vld [vmem:[#allocation1] sm:$0xff]
      %v1658 = vunpack.c.l.b16 %v1619
      %v1659 = vunpack.c.l.b16 %v1620
      %v1660 = vunpack.c.l.b16 %v1621
      %v1661 = vunpack.c.l.b16 %v1622
      %v1662 = vunpack.c.l.b16 %v1623
      %v1663 = vunpack.c.l.b16 %v1624
      %v1664 = vunpack.c.l.b16 %v1625
      %v1665 = vunpack.c.l.b16 %v1626
      %v1666 = vunpack.c.l.b16 %v1627
      %v1667 = vunpack.c.l.b16 %v1628
      %v1668 = vunpack.c.l.b16 %v1629
      %v1669 = vunpack.c.l.b16 %v1630
      %v1670 = vunpack.c.l.b16 %v1631
      %v1671 = vunpack.c.l.b16 %v1632
      %v1672 = vunpack.c.l.b16 %v1633
      %v1673 = vunpack.c.l.b16 %v1634
      %v1674 = vpack.c.b16 %v1659, %v1658
      %v1675 = vpack.c.b16 %v1661, %v1660
      %v1676 = vpack.c.b16 %v1663, %v1662
      %v1677 = vpack.c.b16 %v1665, %v1664
      %v1678 = vpack.c.b16 %v1667, %v1666
      %v1679 = vpack.c.b16 %v1669, %v1668
      %v1680 = vpack.c.b16 %v1671, %v1670
      %v1681 = vpack.c.b16 %v1673, %v1672
      %1690 = vmatpush.bf16.msra.mxu0 %v1681
      %1691 = vmatpush.bf16.msra.mxu0 %v1680
      %1692 = vmatpush.bf16.msra.mxu0 %v1679
      %1693 = vmatpush.bf16.msra.mxu0 %v1678
      %1694 = vmatpush.bf16.msra.mxu0 %v1677
      %1695 = vmatpush.bf16.msra.mxu0 %v1676
      %1696 = vmatpush.bf16.msra.mxu0 %v1675
      %1697 = vmatpush.bf16.msra.mxu0 %v1674
      %1698 = vmatmul.bf16.gmra.mxu0 %v1640
      %v1699 = vpop.f32.mrf.mxu0
      %v1700 = vadd.f32 0.0, %v1699
      %v1701 = vpop.f32.mrf.mxu0
      %1702 = vdwg.mxu0
      %v1703 = vadd.f32 %v1615, %v1700
      %v1704 = vld [vmem:[%s1237] sm:$0x3]
      %v1705 = vld [vmem:[%s1237 + $0x2] sm:$0x3]
      %v1708 = vrot.slane %v1704, 1
      %v1709 = vrot.slane %v1704, 2
      %v1710 = vrot.slane %v1704, 3
      %v1711 = vrot.slane %v1705, 1
      %v1712 = vrot.slane %v1705, 2
      %v1713 = vrot.slane %v1705, 3
      %v1716 = vsel %vm252, %v1704, %v1708
      %v1719 = vsel %vm256, %v1709, %v1710
      %v1720 = vsel %vm260, %v1716, %v1719
      %v1721 = vsel %vm262, %v1704, %v1708
      %v1722 = vsel %vm264, %v1709, %v1710
      %v1723 = vsel %vm266, %v1721, %v1722
      %v1725 = vrot.slane %v1723, 1
      %v1728 = vsel %vm252, %v1705, %v1711
      %v1731 = vsel %vm256, %v1712, %v1713
      %v1732 = vsel %vm260, %v1728, %v1731
      %v1733 = vsel %vm262, %v1705, %v1711
      %v1734 = vsel %vm264, %v1712, %v1713
      %v1735 = vsel %vm266, %v1733, %v1734
      %v1737 = vrot.slane %v1735, 1
      %v1738 = vshrl.u32 %v1720, 16
      %v1740 = vrot.slane %v1738, 7
      %v1741 = vrot.slane %v1740, 1
      %v1743 = vshll.u32 %v1725, 16
      %v1745 = vsel %vm296, %v1741, %v1743
      %v1746 = vshrl.u32 %v1732, 16
      %v1748 = vrot.slane %v1746, 7
      %v1749 = vrot.slane %v1748, 1
      %v1751 = vshll.u32 %v1737, 16
      %v1753 = vsel %vm296, %v1749, %v1751
      %s1754 = scalar_lea.vmem %s3, 256
      %v1755 = vld [vmem:[%s1754] sm:$0xf]
      %v1756 = vld [vmem:[%s1754 + $0x4] sm:$0xf]
      %v1757 = vld [vmem:[%s1754 + $0x8] sm:$0xf]
      %v1758 = vld [vmem:[%s1754 + $0xc] sm:$0xf]
      %v1759 = vld [vmem:[%s1754 + $0x10] sm:$0xf]
      %v1760 = vld [vmem:[%s1754 + $0x14] sm:$0xf]
      %v1761 = vld [vmem:[%s1754 + $0x18] sm:$0xf]
      %v1762 = vld [vmem:[%s1754 + $0x1c] sm:$0xf]
      %v1763 = vld [vmem:[%s1754 + $0x20] sm:$0xf]
      %v1764 = vld [vmem:[%s1754 + $0x24] sm:$0xf]
      %v1765 = vld [vmem:[%s1754 + $0x28] sm:$0xf]
      %v1766 = vld [vmem:[%s1754 + $0x2c] sm:$0xf]
      %v1767 = vld [vmem:[%s1754 + $0x30] sm:$0xf]
      %v1768 = vld [vmem:[%s1754 + $0x34] sm:$0xf]
      %v1769 = vld [vmem:[%s1754 + $0x38] sm:$0xf]
      %v1770 = vld [vmem:[%s1754 + $0x3c] sm:$0xf]
      %1772 = vst [vmem:[#allocation1] ss:$9 sm:$0xff] %v1745
      %s1774 = scalar_lea.vmem [#allocation1], 1
      %1775 = vst [vmem:[%s1774] ss:$9 sm:$0xff] %v1753
      %v1776 = vld [vmem:[#allocation1] sm:$0xff]
      %v1794 = vunpack.c.l.b16 %v1755
      %v1795 = vunpack.c.l.b16 %v1756
      %v1796 = vunpack.c.l.b16 %v1757
      %v1797 = vunpack.c.l.b16 %v1758
      %v1798 = vunpack.c.l.b16 %v1759
      %v1799 = vunpack.c.l.b16 %v1760
      %v1800 = vunpack.c.l.b16 %v1761
      %v1801 = vunpack.c.l.b16 %v1762
      %v1802 = vunpack.c.l.b16 %v1763
      %v1803 = vunpack.c.l.b16 %v1764
      %v1804 = vunpack.c.l.b16 %v1765
      %v1805 = vunpack.c.l.b16 %v1766
      %v1806 = vunpack.c.l.b16 %v1767
      %v1807 = vunpack.c.l.b16 %v1768
      %v1808 = vunpack.c.l.b16 %v1769
      %v1809 = vunpack.c.l.b16 %v1770
      %v1810 = vpack.c.b16 %v1795, %v1794
      %v1811 = vpack.c.b16 %v1797, %v1796
      %v1812 = vpack.c.b16 %v1799, %v1798
      %v1813 = vpack.c.b16 %v1801, %v1800
      %v1814 = vpack.c.b16 %v1803, %v1802
      %v1815 = vpack.c.b16 %v1805, %v1804
      %v1816 = vpack.c.b16 %v1807, %v1806
      %v1817 = vpack.c.b16 %v1809, %v1808
      %1826 = vmatpush.bf16.msra.mxu0 %v1817
      %1827 = vmatpush.bf16.msra.mxu0 %v1816
      %1828 = vmatpush.bf16.msra.mxu0 %v1815
      %1829 = vmatpush.bf16.msra.mxu0 %v1814
      %1830 = vmatpush.bf16.msra.mxu0 %v1813
      %1831 = vmatpush.bf16.msra.mxu0 %v1812
      %1832 = vmatpush.bf16.msra.mxu0 %v1811
      %1833 = vmatpush.bf16.msra.mxu0 %v1810
      %1834 = vmatmul.bf16.gmra.mxu0 %v1776
      %v1835 = vpop.f32.mrf.mxu0
      %v1836 = vadd.f32 0.0, %v1835
      %v1837 = vpop.f32.mrf.mxu0
      %1838 = vdwg.mxu0
      %v1839 = vadd.f32 %v1703, %v1836
      %v1840 = vld [vmem:[%s1237] sm:$0x2]
      %v1841 = vld [vmem:[%s1237 + $0x2] sm:$0x2]
      %1843 = vst [vmem:[#allocation1] sm:$0xff] %v1840
      %s1844 = scalar_lea.vmem [#allocation1], 1
      %v1845 = vld [vmem:[%s1844] ss:$2 sm:$0xff]
      %1847 = vst [vmem:[#allocation1 + $0x10] sm:$0xff] %v1841
      %s1848 = scalar_lea.vmem [#allocation1], 17
      %v1849 = vld [vmem:[%s1848] ss:$2 sm:$0xff]
      %s1850 = scalar_lea.vmem %s3, 320
      %v1851 = vld [vmem:[%s1850] sm:$0xf]
      %v1852 = vld [vmem:[%s1850 + $0x4] sm:$0xf]
      %v1853 = vld [vmem:[%s1850 + $0x8] sm:$0xf]
      %v1854 = vld [vmem:[%s1850 + $0xc] sm:$0xf]
      %v1855 = vld [vmem:[%s1850 + $0x10] sm:$0xf]
      %v1856 = vld [vmem:[%s1850 + $0x14] sm:$0xf]
      %v1857 = vld [vmem:[%s1850 + $0x18] sm:$0xf]
      %v1858 = vld [vmem:[%s1850 + $0x1c] sm:$0xf]
      %v1859 = vld [vmem:[%s1850 + $0x20] sm:$0xf]
      %v1860 = vld [vmem:[%s1850 + $0x24] sm:$0xf]
      %v1861 = vld [vmem:[%s1850 + $0x28] sm:$0xf]
      %v1862 = vld [vmem:[%s1850 + $0x2c] sm:$0xf]
      %v1863 = vld [vmem:[%s1850 + $0x30] sm:$0xf]
      %v1864 = vld [vmem:[%s1850 + $0x34] sm:$0xf]
      %v1865 = vld [vmem:[%s1850 + $0x38] sm:$0xf]
      %v1866 = vld [vmem:[%s1850 + $0x3c] sm:$0xf]
      %1867 = vst [vmem:[#allocation1] ss:$9 sm:$0xff] %v1845
      %s1868 = scalar_lea.vmem [#allocation1], 1
      %1869 = vst [vmem:[%s1868] ss:$9 sm:$0xff] %v1849
      %v1870 = vld [vmem:[#allocation1] sm:$0xff]
      %v1888 = vunpack.c.l.b16 %v1851
      %v1889 = vunpack.c.l.b16 %v1852
      %v1890 = vunpack.c.l.b16 %v1853
      %v1891 = vunpack.c.l.b16 %v1854
      %v1892 = vunpack.c.l.b16 %v1855
      %v1893 = vunpack.c.l.b16 %v1856
      %v1894 = vunpack.c.l.b16 %v1857
      %v1895 = vunpack.c.l.b16 %v1858
      %v1896 = vunpack.c.l.b16 %v1859
      %v1897 = vunpack.c.l.b16 %v1860
      %v1898 = vunpack.c.l.b16 %v1861
      %v1899 = vunpack.c.l.b16 %v1862
      %v1900 = vunpack.c.l.b16 %v1863
      %v1901 = vunpack.c.l.b16 %v1864
      %v1902 = vunpack.c.l.b16 %v1865
      %v1903 = vunpack.c.l.b16 %v1866
      %v1904 = vpack.c.b16 %v1889, %v1888
      %v1905 = vpack.c.b16 %v1891, %v1890
      %v1906 = vpack.c.b16 %v1893, %v1892
      %v1907 = vpack.c.b16 %v1895, %v1894
      %v1908 = vpack.c.b16 %v1897, %v1896
      %v1909 = vpack.c.b16 %v1899, %v1898
      %v1910 = vpack.c.b16 %v1901, %v1900
      %v1911 = vpack.c.b16 %v1903, %v1902
      %1920 = vmatpush.bf16.msra.mxu0 %v1911
      %1921 = vmatpush.bf16.msra.mxu0 %v1910
      %1922 = vmatpush.bf16.msra.mxu0 %v1909
      %1923 = vmatpush.bf16.msra.mxu0 %v1908
      %1924 = vmatpush.bf16.msra.mxu0 %v1907
      %1925 = vmatpush.bf16.msra.mxu0 %v1906
      %1926 = vmatpush.bf16.msra.mxu0 %v1905
      %1927 = vmatpush.bf16.msra.mxu0 %v1904
      %1928 = vmatmul.bf16.gmra.mxu0 %v1870
      %v1929 = vpop.f32.mrf.mxu0
      %v1930 = vadd.f32 0.0, %v1929
      %v1931 = vpop.f32.mrf.mxu0
      %1932 = vdwg.mxu0
      %v1933 = vadd.f32 %v1839, %v1930
      %s1934 = scalar_lea.vmem [#allocation2], 4
      %v1935 = vld [vmem:[%s1934] sm:$0x1]
      %v1936 = vld [vmem:[%s1934 + $0x2] sm:$0x1]
      %s1937 = scalar_lea.vmem %s3, 384
      %v1938 = vld [vmem:[%s1937] sm:$0xf]
      %v1939 = vld [vmem:[%s1937 + $0x4] sm:$0xf]
      %v1940 = vld [vmem:[%s1937 + $0x8] sm:$0xf]
      %v1941 = vld [vmem:[%s1937 + $0xc] sm:$0xf]
      %v1942 = vld [vmem:[%s1937 + $0x10] sm:$0xf]
      %v1943 = vld [vmem:[%s1937 + $0x14] sm:$0xf]
      %v1944 = vld [vmem:[%s1937 + $0x18] sm:$0xf]
      %v1945 = vld [vmem:[%s1937 + $0x1c] sm:$0xf]
      %v1946 = vld [vmem:[%s1937 + $0x20] sm:$0xf]
      %v1947 = vld [vmem:[%s1937 + $0x24] sm:$0xf]
      %v1948 = vld [vmem:[%s1937 + $0x28] sm:$0xf]
      %v1949 = vld [vmem:[%s1937 + $0x2c] sm:$0xf]
      %v1950 = vld [vmem:[%s1937 + $0x30] sm:$0xf]
      %v1951 = vld [vmem:[%s1937 + $0x34] sm:$0xf]
      %v1952 = vld [vmem:[%s1937 + $0x38] sm:$0xf]
      %v1953 = vld [vmem:[%s1937 + $0x3c] sm:$0xf]
      %1955 = vst [vmem:[#allocation1] ss:$9 sm:$0xff] %v1935
      %s1957 = scalar_lea.vmem [#allocation1], 1
      %1958 = vst [vmem:[%s1957] ss:$9 sm:$0xff] %v1936
      %v1959 = vld [vmem:[#allocation1] sm:$0xff]
      %v1977 = vunpack.c.l.b16 %v1938
      %v1978 = vunpack.c.l.b16 %v1939
      %v1979 = vunpack.c.l.b16 %v1940
      %v1980 = vunpack.c.l.b16 %v1941
      %v1981 = vunpack.c.l.b16 %v1942
      %v1982 = vunpack.c.l.b16 %v1943
      %v1983 = vunpack.c.l.b16 %v1944
      %v1984 = vunpack.c.l.b16 %v1945
      %v1985 = vunpack.c.l.b16 %v1946
      %v1986 = vunpack.c.l.b16 %v1947
      %v1987 = vunpack.c.l.b16 %v1948
      %v1988 = vunpack.c.l.b16 %v1949
      %v1989 = vunpack.c.l.b16 %v1950
      %v1990 = vunpack.c.l.b16 %v1951
      %v1991 = vunpack.c.l.b16 %v1952
      %v1992 = vunpack.c.l.b16 %v1953
      %v1993 = vpack.c.b16 %v1978, %v1977
      %v1994 = vpack.c.b16 %v1980, %v1979
      %v1995 = vpack.c.b16 %v1982, %v1981
      %v1996 = vpack.c.b16 %v1984, %v1983
      %v1997 = vpack.c.b16 %v1986, %v1985
      %v1998 = vpack.c.b16 %v1988, %v1987
      %v1999 = vpack.c.b16 %v1990, %v1989
      %v2000 = vpack.c.b16 %v1992, %v1991
      %2009 = vmatpush.bf16.msra.mxu0 %v2000
      %2010 = vmatpush.bf16.msra.mxu0 %v1999
      %2011 = vmatpush.bf16.msra.mxu0 %v1998
      %2012 = vmatpush.bf16.msra.mxu0 %v1997
      %2013 = vmatpush.bf16.msra.mxu0 %v1996
      %2014 = vmatpush.bf16.msra.mxu0 %v1995
      %2015 = vmatpush.bf16.msra.mxu0 %v1994
      %2016 = vmatpush.bf16.msra.mxu0 %v1993
      %2017 = vmatmul.bf16.gmra.mxu0 %v1959
      %v2018 = vpop.f32.mrf.mxu0
      %v2019 = vadd.f32 0.0, %v2018
      %v2020 = vpop.f32.mrf.mxu0
      %2021 = vdwg.mxu0
      %v2022 = vadd.f32 %v1933, %v2019
      %v2023 = vld [vmem:[%s1934] sm:$0x3]
      %v2024 = vld [vmem:[%s1934 + $0x2] sm:$0x3]
      %v2027 = vrot.slane %v2023, 1
      %v2028 = vrot.slane %v2023, 2
      %v2029 = vrot.slane %v2023, 3
      %v2030 = vrot.slane %v2024, 1
      %v2031 = vrot.slane %v2024, 2
      %v2032 = vrot.slane %v2024, 3
      %v2035 = vsel %vm252, %v2023, %v2027
      %v2038 = vsel %vm256, %v2028, %v2029
      %v2039 = vsel %vm260, %v2035, %v2038
      %v2040 = vsel %vm262, %v2023, %v2027
      %v2041 = vsel %vm264, %v2028, %v2029
      %v2042 = vsel %vm266, %v2040, %v2041
      %v2044 = vrot.slane %v2042, 1
      %v2047 = vsel %vm252, %v2024, %v2030
      %v2050 = vsel %vm256, %v2031, %v2032
      %v2051 = vsel %vm260, %v2047, %v2050
      %v2052 = vsel %vm262, %v2024, %v2030
      %v2053 = vsel %vm264, %v2031, %v2032
      %v2054 = vsel %vm266, %v2052, %v2053
      %v2056 = vrot.slane %v2054, 1
      %v2057 = vshrl.u32 %v2039, 16
      %v2059 = vrot.slane %v2057, 7
      %v2060 = vrot.slane %v2059, 1
      %v2062 = vshll.u32 %v2044, 16
      %v2064 = vsel %vm296, %v2060, %v2062
      %v2065 = vshrl.u32 %v2051, 16
      %v2067 = vrot.slane %v2065, 7
      %v2068 = vrot.slane %v2067, 1
      %v2070 = vshll.u32 %v2056, 16
      %v2072 = vsel %vm296, %v2068, %v2070
      %s2073 = scalar_lea.vmem %s3, 448
      %v2074 = vld [vmem:[%s2073] sm:$0xf]
      %v2075 = vld [vmem:[%s2073 + $0x4] sm:$0xf]
      %v2076 = vld [vmem:[%s2073 + $0x8] sm:$0xf]
      %v2077 = vld [vmem:[%s2073 + $0xc] sm:$0xf]
      %v2078 = vld [vmem:[%s2073 + $0x10] sm:$0xf]
      %v2079 = vld [vmem:[%s2073 + $0x14] sm:$0xf]
      %v2080 = vld [vmem:[%s2073 + $0x18] sm:$0xf]
      %v2081 = vld [vmem:[%s2073 + $0x1c] sm:$0xf]
      %v2082 = vld [vmem:[%s2073 + $0x20] sm:$0xf]
      %v2083 = vld [vmem:[%s2073 + $0x24] sm:$0xf]
      %v2084 = vld [vmem:[%s2073 + $0x28] sm:$0xf]
      %v2085 = vld [vmem:[%s2073 + $0x2c] sm:$0xf]
      %v2086 = vld [vmem:[%s2073 + $0x30] sm:$0xf]
      %v2087 = vld [vmem:[%s2073 + $0x34] sm:$0xf]
      %v2088 = vld [vmem:[%s2073 + $0x38] sm:$0xf]
      %v2089 = vld [vmem:[%s2073 + $0x3c] sm:$0xf]
      %2091 = vst [vmem:[#allocation1] ss:$9 sm:$0xff] %v2064
      %s2093 = scalar_lea.vmem [#allocation1], 1
      %2094 = vst [vmem:[%s2093] ss:$9 sm:$0xff] %v2072
      %v2095 = vld [vmem:[#allocation1] sm:$0xff]
      %v2113 = vunpack.c.l.b16 %v2074
      %v2114 = vunpack.c.l.b16 %v2075
      %v2115 = vunpack.c.l.b16 %v2076
      %v2116 = vunpack.c.l.b16 %v2077
      %v2117 = vunpack.c.l.b16 %v2078
      %v2118 = vunpack.c.l.b16 %v2079
      %v2119 = vunpack.c.l.b16 %v2080
      %v2120 = vunpack.c.l.b16 %v2081
      %v2121 = vunpack.c.l.b16 %v2082
      %v2122 = vunpack.c.l.b16 %v2083
      %v2123 = vunpack.c.l.b16 %v2084
      %v2124 = vunpack.c.l.b16 %v2085
      %v2125 = vunpack.c.l.b16 %v2086
      %v2126 = vunpack.c.l.b16 %v2087
      %v2127 = vunpack.c.l.b16 %v2088
      %v2128 = vunpack.c.l.b16 %v2089
      %v2129 = vpack.c.b16 %v2114, %v2113
      %v2130 = vpack.c.b16 %v2116, %v2115
      %v2131 = vpack.c.b16 %v2118, %v2117
      %v2132 = vpack.c.b16 %v2120, %v2119
      %v2133 = vpack.c.b16 %v2122, %v2121
      %v2134 = vpack.c.b16 %v2124, %v2123
      %v2135 = vpack.c.b16 %v2126, %v2125
      %v2136 = vpack.c.b16 %v2128, %v2127
      %2145 = vmatpush.bf16.msra.mxu0 %v2136
      %2146 = vmatpush.bf16.msra.mxu0 %v2135
      %2147 = vmatpush.bf16.msra.mxu0 %v2134
      %2148 = vmatpush.bf16.msra.mxu0 %v2133
      %2149 = vmatpush.bf16.msra.mxu0 %v2132
      %2150 = vmatpush.bf16.msra.mxu0 %v2131
      %2151 = vmatpush.bf16.msra.mxu0 %v2130
      %2152 = vmatpush.bf16.msra.mxu0 %v2129
      %2153 = vmatmul.bf16.gmra.mxu0 %v2095
      %v2154 = vpop.f32.mrf.mxu0
      %v2155 = vadd.f32 0.0, %v2154
      %v2156 = vpop.f32.mrf.mxu0
      %2157 = vdwg.mxu0
      %v2158 = vadd.f32 %v2022, %v2155
      %v2159 = vld [vmem:[%s1934] sm:$0x2]
      %v2160 = vld [vmem:[%s1934 + $0x2] sm:$0x2]
      %2162 = vst [vmem:[#allocation1] sm:$0xff] %v2159
      %s2163 = scalar_lea.vmem [#allocation1], 1
      %v2164 = vld [vmem:[%s2163] ss:$2 sm:$0xff]
      %2166 = vst [vmem:[#allocation1 + $0x10] sm:$0xff] %v2160
      %s2167 = scalar_lea.vmem [#allocation1], 17
      %v2168 = vld [vmem:[%s2167] ss:$2 sm:$0xff]
      %s2169 = scalar_lea.vmem %s3, 512
      %v2170 = vld [vmem:[%s2169] sm:$0xf]
      %v2171 = vld [vmem:[%s2169 + $0x4] sm:$0xf]
      %v2172 = vld [vmem:[%s2169 + $0x8] sm:$0xf]
      %v2173 = vld [vmem:[%s2169 + $0xc] sm:$0xf]
      %v2174 = vld [vmem:[%s2169 + $0x10] sm:$0xf]
      %v2175 = vld [vmem:[%s2169 + $0x14] sm:$0xf]
      %v2176 = vld [vmem:[%s2169 + $0x18] sm:$0xf]
      %v2177 = vld [vmem:[%s2169 + $0x1c] sm:$0xf]
      %v2178 = vld [vmem:[%s2169 + $0x20] sm:$0xf]
      %v2179 = vld [vmem:[%s2169 + $0x24] sm:$0xf]
      %v2180 = vld [vmem:[%s2169 + $0x28] sm:$0xf]
      %v2181 = vld [vmem:[%s2169 + $0x2c] sm:$0xf]
      %v2182 = vld [vmem:[%s2169 + $0x30] sm:$0xf]
      %v2183 = vld [vmem:[%s2169 + $0x34] sm:$0xf]
      %v2184 = vld [vmem:[%s2169 + $0x38] sm:$0xf]
      %v2185 = vld [vmem:[%s2169 + $0x3c] sm:$0xf]
      %2186 = vst [vmem:[#allocation1] ss:$9 sm:$0xff] %v2164
      %s2187 = scalar_lea.vmem [#allocation1], 1
      %2188 = vst [vmem:[%s2187] ss:$9 sm:$0xff] %v2168
      %v2189 = vld [vmem:[#allocation1] sm:$0xff]
      %v2207 = vunpack.c.l.b16 %v2170
      %v2208 = vunpack.c.l.b16 %v2171
      %v2209 = vunpack.c.l.b16 %v2172
      %v2210 = vunpack.c.l.b16 %v2173
      %v2211 = vunpack.c.l.b16 %v2174
      %v2212 = vunpack.c.l.b16 %v2175
      %v2213 = vunpack.c.l.b16 %v2176
      %v2214 = vunpack.c.l.b16 %v2177
      %v2215 = vunpack.c.l.b16 %v2178
      %v2216 = vunpack.c.l.b16 %v2179
      %v2217 = vunpack.c.l.b16 %v2180
      %v2218 = vunpack.c.l.b16 %v2181
      %v2219 = vunpack.c.l.b16 %v2182
      %v2220 = vunpack.c.l.b16 %v2183
      %v2221 = vunpack.c.l.b16 %v2184
      %v2222 = vunpack.c.l.b16 %v2185
      %v2223 = vpack.c.b16 %v2208, %v2207
      %v2224 = vpack.c.b16 %v2210, %v2209
      %v2225 = vpack.c.b16 %v2212, %v2211
      %v2226 = vpack.c.b16 %v2214, %v2213
      %v2227 = vpack.c.b16 %v2216, %v2215
      %v2228 = vpack.c.b16 %v2218, %v2217
      %v2229 = vpack.c.b16 %v2220, %v2219
      %v2230 = vpack.c.b16 %v2222, %v2221
      %2239 = vmatpush.bf16.msra.mxu0 %v2230
      %2240 = vmatpush.bf16.msra.mxu0 %v2229
      %2241 = vmatpush.bf16.msra.mxu0 %v2228
      %2242 = vmatpush.bf16.msra.mxu0 %v2227
      %2243 = vmatpush.bf16.msra.mxu0 %v2226
      %2244 = vmatpush.bf16.msra.mxu0 %v2225
      %2245 = vmatpush.bf16.msra.mxu0 %v2224
      %2246 = vmatpush.bf16.msra.mxu0 %v2223
      %2247 = vmatmul.bf16.gmra.mxu0 %v2189
      %v2248 = vpop.f32.mrf.mxu0
      %v2249 = vadd.f32 0.0, %v2248
      %v2250 = vpop.f32.mrf.mxu0
      %2251 = vdwg.mxu0
      %v2252 = vadd.f32 %v2158, %v2249
      %v2253 = vld [vmem:[%s4] sm:$0x1]
      %v2255 = vperm.slane %v2253, 0
      %v2257 = vadd.f32 %v2252, %v2255
      %2260 = vst [vmem:[#allocation1] ss:$4 sm:$0xff] %v1299
      %s2261 = scalar_lea.vmem [#allocation1], 1
      %2262 = vst [vmem:[%s2261] ss:$4 sm:$0xff] %v1300
      %v2263 = vld.sshfl [vmem:[#allocation1] sm:$0xff pattern:$0x73625140]
      %v2265 = vadd.f32 %v2257, %v2263
      %v2266 = vmax.f32 %v2265, 0.0
      %v2267 = vpack.c.bf16 %v2266, %v2266
      %2268 = vst [vmem:[%s222] sm:$0x3] %v2267
      %p2269 = scmp.lt.s32.totalorder %s16, 1
      %s2270 = scalar_select %p2269, %s16, 1
      %s2271 = smul.addr %s2270, 2
      %s2272 = scalar_lea.vmem %s5, %s2271
      // Predicated region
      $region41: #{backbone_base_forward.11} parent=39 // pred_check
        %p2273 = pneg %p144
      $region42: #{backbone_base_forward.11} parent=39 // pred_check_branch
        %2275 = sbr.rel (%p2273) target = $region44
      $region43: #{backbone_base_forward.11} parent=39 // pred_region
        _
      $region44: #{backbone_base_forward.11} parent=39 // pred_fallthru
        _
    $region40: #{backbone_base_forward.11} parent=5 // pred_fallthru
      _
    %p2276 = scmp.le.s32.totalorder 2, %s11
    // Predicated region
    $region45: #{backbone_base_forward.11} parent=5 // pred_check
      %p2277 = pneg %p2276
    $region46: #{backbone_base_forward.11} parent=5 // pred_check_branch
      %2279 = sbr.rel (%p2277) target = $region48
    $region47: #{backbone_base_forward.11} parent=5 // pred_region
      %s2280 = ssub.s32 %s11, 2
      // Predicated region
      $region49: #{backbone_base_forward.11} parent=47 // pred_check
        %p2281 = pneg %p150
      $region50: #{backbone_base_forward.11} parent=47 // pred_check_branch
        %2283 = sbr.rel (%p2281) target = $region52
      $region51: #{backbone_base_forward.11} parent=47 // pred_region
        %p2284 = scmp.lt.s32.totalorder %s17, 1
        %s2285 = scalar_select %p2284, %s17, 1
        %s2286 = smul.addr %s2285, 2
        %s2287 = scalar_lea.vmem %s5, %s2286
      $region52: #{backbone_base_forward.11} parent=47 // pred_fallthru
        _
    $region48: #{backbone_base_forward.11} parent=5 // pred_fallthru
      _
  $region6: #{backbone_base_forward.11} parent=0 // loop_footer
    %s15 = sadd.s32 1, %s11
  $region7: #{backbone_base_forward.11} parent=0 // loop_footer_branch
    %10 = sbr.rel target = $region3
  $region8: #{backbone_base_forward.11} parent=0 // loop_exit
    _

</llo_original>
